<compile_context>
chip_gen: v7x
topology: tpu7x:2x2x1
jax: 0.10.0
libtpu: 0.0.40
codegen_flags: <defaults>
</compile_context>

<pallas_src>
import functools
import math

import jax
import jax.numpy as jnp
from jax.experimental import pallas as pl
from jax.experimental.pallas import tpu as pltpu


def _lane_pack_factor(C, HW):
    """Pack L consecutive spatial positions onto lanes so L*C is a multiple of 128."""
    L = 128 // math.gcd(C, 128)
    if HW % L != 0:
        return 1   # fall back to the (possibly lane-sparse) unpacked layout
    return L


# --------------------------------------------------------------------------
# Fused 3x3 conv (stride 1, padding 1), optional fused 1x1 shortcut conv.
#   x_ref:    (1, H, W, Cin)  bf16     (one sample per grid step)
#   w_ref:    (9, Cin, Cout)  bf16     (VMEM-resident, tap t = kh*3 + kw)
#   ws_ref:   (Cin, Cout)     bf16     (optional 1x1 shortcut weight)
#   o_ref:    (1, H*W, Cout)  bf16/f32
#   sc_ref:   (1, H*W, Cout)           (optional shortcut output)
#   xpad_ref: (H+2, W+2, Cin) f32 VMEM scratch (in-kernel zero padding; f32 so
#             the offset sublane store stays a plain masked store)
# --------------------------------------------------------------------------
def _conv3x3_kernel(x_ref, w_ref, *rest, has_sc):
    if has_sc:
        ws_ref, o_ref, sc_ref, xpad_ref = rest
    else:
        o_ref, xpad_ref = rest
        ws_ref = sc_ref = None

    _, H, W, Cin = x_ref.shape
    _, HW, Cout = o_ref.shape

    # Zero-pad the activation inside VMEM: no HBM pad pass, no im2col.
    xpad_ref[...] = jnp.zeros_like(xpad_ref)
    xpad_ref[1:H + 1, 1:W + 1, :] = x_ref[0].astype(jnp.float32)

    acc = jnp.zeros((HW, Cout), jnp.float32)
    for kh in range(3):
        for kw in range(3):
            a = xpad_ref[kh:kh + H, kw:kw + W, :].reshape(HW, Cin)
            a = a.astype(jnp.bfloat16)
            acc = acc + jnp.dot(a, w_ref[kh * 3 + kw],
                                preferred_element_type=jnp.float32)
            if has_sc and kh == 1 and kw == 1:
                # 1x1 shortcut conv == centre-tap GEMM; slice already in VMEM.
                sc_ref[0] = jnp.dot(
                    a, ws_ref[...], preferred_element_type=jnp.float32
                ).astype(sc_ref.dtype)
    o_ref[0] = acc.astype(o_ref.dtype)


def pallas_conv3x3(x_nhwc, w, ws=None, *, out_dtype=jnp.bfloat16):
    """3x3 conv, stride 1, padding 1.  Returns (N, H*W, Cout) [, shortcut out]."""
    N, H, W, Cin = x_nhwc.shape
    Cout = w.shape[0]
    HW = H * W
    has_sc = ws is not None

    x_bf = x_nhwc.astype(jnp.bfloat16)
    # (Cout, Cin, 3, 3) -> (9, Cin, Cout) with tap index t = kh*3 + kw.
    w_taps = jnp.transpose(w, (2, 3, 1, 0)).reshape(9, Cin, Cout).astype(jnp.bfloat16)

    args = [x_bf, w_taps]
    in_specs = [
        pl.BlockSpec((1, H, W, Cin), lambda n: (n, 0, 0, 0)),
        pl.BlockSpec((9, Cin, Cout), lambda n: (0, 0, 0)),   # resident weights
    ]
    out_shapes = [jax.ShapeDtypeStruct((N, HW, Cout), out_dtype)]
    out_specs = [pl.BlockSpec((1, HW, Cout), lambda n: (n, 0, 0))]
    if has_sc:
        ws_mat = ws.reshape(Cout, Cin).T.astype(jnp.bfloat16)          # (Cin, Cout)
        args.append(ws_mat)
        in_specs.append(pl.BlockSpec((Cin, Cout), lambda n: (0, 0)))
        out_shapes.append(jax.ShapeDtypeStruct((N, HW, Cout), out_dtype))
        out_specs.append(pl.BlockSpec((1, HW, Cout), lambda n: (n, 0, 0)))

    out_bytes = jnp.dtype(out_dtype).itemsize
    flops = 2 * N * HW * 9 * Cin * Cout + (2 * N * HW * Cin * Cout if has_sc else 0)
    cost = pl.CostEstimate(
        flops=flops, transcendentals=0,
        bytes_accessed=(N * HW * Cin * 2 + 9 * Cin * Cout * 2
                        + len(out_shapes) * N * HW * Cout * out_bytes))

    outs = pl.pallas_call(
        functools.partial(_conv3x3_kernel, has_sc=has_sc),
        out_shape=tuple(out_shapes) if has_sc else out_shapes[0],
        grid=(N,),
        in_specs=in_specs,
        out_specs=tuple(out_specs) if has_sc else out_specs[0],
        scratch_shapes=[pltpu.VMEM((H + 2, W + 2, Cin), jnp.float32)],
        compiler_params=pltpu.CompilerParams(dimension_semantics=("parallel",)),
        cost_estimate=cost,
    )(*args)
    return outs


# --------------------------------------------------------------------------
# Fused GroupNorm (+ optional residual add) (+ optional ReLU), per-sample grid.
# Input repacked (free HBM reshape) to (N, R, LC), LC = L*C multiple of 128.
# --------------------------------------------------------------------------
def _gn_kernel(*refs, inv_cnt, eps, apply_relu, has_residual):
    if has_residual:
        x_ref, res_ref, gamma_ref, beta_ref, smat_ref, bmat_ref, o_ref = refs
    else:
        x_ref, gamma_ref, beta_ref, smat_ref, bmat_ref, o_ref = refs
        res_ref = None

    x = x_ref[0].astype(jnp.float32)                          # (R, LC)
    smat = smat_ref[...]                                      # (LC, G)
    bmat = bmat_ref[...]                                      # (G, LC)

    lane_sum = jnp.sum(x, axis=0, keepdims=True)              # (1, LC)
    g_mean = jnp.dot(lane_sum, smat,
                     preferred_element_type=jnp.float32) * inv_cnt       # (1, G)
    mean_l = jnp.dot(g_mean, bmat, preferred_element_type=jnp.float32)   # (1, LC)

    xc = x - mean_l                                           # shifted (two-pass) var
    lane_sq = jnp.sum(xc * xc, axis=0, keepdims=True)
    g_var = jnp.dot(lane_sq, smat, preferred_element_type=jnp.float32) * inv_cnt
    rstd_l = jnp.dot(jax.lax.rsqrt(g_var + eps), bmat,
                     preferred_element_type=jnp.float32)                 # (1, LC)

    y = xc * (rstd_l * gamma_ref[...]) + beta_ref[...]
    if has_residual:
        y = y + res_ref[0].astype(jnp.float32)
    if apply_relu:
        y = jnp.maximum(y, 0.0)
    o_ref[0] = y.astype(o_ref.dtype)


def pallas_groupnorm(x, gamma, beta, *, num_groups, apply_relu, residual=None,
                     eps=1e-5, out_dtype=jnp.float32):
    N, HW, C = x.shape
    G = num_groups
    cg = C // G
    L = _lane_pack_factor(C, HW)
    R, LC = HW // L, L * C

    xp = x.reshape(N, R, LC)                                  # free metadata reshape
    gamma_l = jnp.tile(gamma.astype(jnp.float32), L).reshape(1, LC)
    beta_l = jnp.tile(beta.astype(jnp.float32), L).reshape(1, LC)

    # Group reduction / broadcast matrices, hoisted out of the kernel body.
    lane_grp = (jnp.arange(LC, dtype=jnp.int32) % C) // cg
    grp = jnp.arange(G, dtype=jnp.int32)
    smat = (lane_grp[:, None] == grp[None, :]).astype(jnp.float32)   # (LC, G)
    bmat = smat.T                                                     # (G, LC)

    has_residual = residual is not None
    args = [xp]
    in_specs = [pl.BlockSpec((1, R, LC), lambda n: (n, 0, 0))]
    if has_residual:
        args.append(residual.reshape(N, R, LC))
        in_specs.append(pl.BlockSpec((1, R, LC), lambda n: (n, 0, 0)))
    args += [gamma_l, beta_l, smat, bmat]
    in_specs += [pl.BlockSpec((1, LC), lambda n: (0, 0)),
                 pl.BlockSpec((1, LC), lambda n: (0, 0)),
                 pl.BlockSpec((LC, G), lambda n: (0, 0)),
                 pl.BlockSpec((G, LC), lambda n: (0, 0))]

    n_slabs = 2 + (1 if has_residual else 0)
    cost = pl.CostEstimate(
        flops=10 * N * HW * C, transcendentals=N * G,
        bytes_accessed=n_slabs * N * HW * C * 2 + 4 * LC * 4)

    # TODO(synk): tile the R axis (partial-sum scratch) for large HW*C so the
    # per-sample slab stays under v5e's 16 MiB / v7x's 32 MiB scoped VMEM, and
    # to give megacore a second parallel axis when N == 1.
    kernel = functools.partial(_gn_kernel, inv_cnt=1.0 / float(HW * cg), eps=eps,
                               apply_relu=apply_relu, has_residual=has_residual)
    out = pl.pallas_call(
        kernel,
        out_shape=jax.ShapeDtypeStruct((N, R, LC), out_dtype),
        grid=(N,),
        in_specs=in_specs,
        out_specs=pl.BlockSpec((1, R, LC), lambda n: (n, 0, 0)),
        compiler_params=pltpu.CompilerParams(dimension_semantics=("parallel",)),
        cost_estimate=cost,
    )(*args)
    return out.reshape(N, HW, C)


# --------------------------------------------------------------------------
# BasicBlock forward (semantics of the PyTorch module).
# --------------------------------------------------------------------------
def _subsample(x_flat, H, W, stride):
    N, _, C = x_flat.shape
    x4 = x_flat.reshape(N, H, W, C)[:, ::stride, ::stride, :]
    Ho, Wo = x4.shape[1], x4.shape[2]
    return x4.reshape(N, Ho * Wo, C), Ho, Wo


def basic_block_forward(x_nchw, params, stride=1, num_groups=8):
    x = jnp.transpose(x_nchw, (0, 2, 3, 1)).astype(jnp.float32)   # NCHW -> NHWC
    N, H, W, Cin = x.shape
    planes = params["w1"].shape[0]
    has_sc_conv = (stride != 1) or (Cin != planes)

    # conv1 (with the 1x1 shortcut GEMM fused on the centre tap) -> GN1 -> ReLU
    if has_sc_conv:
        out1, sc = pallas_conv3x3(x, params["w1"], params["ws"])
    else:
        out1 = pallas_conv3x3(x, params["w1"])
        sc = None

    Ho, Wo = H, W
    if stride != 1:
        out1, Ho, Wo = _subsample(out1, H, W, stride)
        if sc is not None:
            sc, _, _ = _subsample(sc, H, W, stride)

    out1 = pallas_groupnorm(out1, params["g1"], params["b1"],
                            num_groups=num_groups, apply_relu=True,
                            out_dtype=jnp.bfloat16)

    # conv2 (stride 1); bn2 + residual add + final ReLU fused into one GN call.
    out2 = pallas_conv3x3(out1.reshape(N, Ho, Wo, planes), params["w2"])

    if has_sc_conv:
        sc = pallas_groupnorm(sc, params["gs"], params["bs"],
                              num_groups=num_groups, apply_relu=False,
                              out_dtype=jnp.bfloat16)
    else:
        sc = x.reshape(N, Ho * Wo, Cin)

    out = pallas_groupnorm(out2, params["g2"], params["b2"],
                           num_groups=num_groups, apply_relu=True,
                           residual=sc, out_dtype=jnp.float32)
    out = out.reshape(N, Ho, Wo, planes)
    return jnp.transpose(out, (0, 3, 1, 2))                        # NHWC -> NCHW


# --------------------------------------------------------------------------
# Pure-JAX f32 reference (correctness check only).
# --------------------------------------------------------------------------
def _ref_forward(x, params, stride, num_groups=8, eps=1e-5):
    def conv(x, w, s, pad):
        return jax.lax.conv_general_dilated(
            x, w, (s, s), [(pad, pad), (pad, pad)],
            dimension_numbers=("NCHW", "OIHW", "NCHW"),
            precision=jax.lax.Precision.HIGHEST)

    def gn(x, gamma, beta):
        N, C, H, W = x.shape
        xr = x.reshape(N, num_groups, -1)
        m = xr.mean(-1, keepdims=True)
        v = xr.var(-1, keepdims=True)
        xn = ((xr - m) / jnp.sqrt(v + eps)).reshape(N, C, H, W)
        return xn * gamma.reshape(1, C, 1, 1) + beta.reshape(1, C, 1, 1)

    out = jax.nn.relu(gn(conv(x, params["w1"], stride, 1), params["g1"], params["b1"]))
    out = gn(conv(out, params["w2"], 1, 1), params["g2"], params["b2"])
    if stride != 1 or x.shape[1] != params["w1"].shape[0]:
        sc = gn(conv(x, params["ws"], stride, 0), params["gs"], params["bs"])
    else:
        sc = x
    return jax.nn.relu(out + sc)


if __name__ == "__main__":
    in_planes, planes, stride = 8, 16, 1      # exercises the fused shortcut path
    N, H, W = 2, 16, 16

    key = jax.random.PRNGKey(0)
    ks = jax.random.split(key, 10)
    x = jax.random.normal(ks[0], (N, in_planes, H, W), jnp.float32)

    params = {
        "w1": 0.1 * jax.random.normal(ks[1], (planes, in_planes, 3, 3), jnp.float32),
        "g1": 1.0 + 0.1 * jax.random.normal(ks[2], (planes,), jnp.float32),
        "b1": 0.1 * jax.random.normal(ks[3], (planes,), jnp.float32),
        "w2": 0.1 * jax.random.normal(ks[4], (planes, planes, 3, 3), jnp.float32),
        "g2": 1.0 + 0.1 * jax.random.normal(ks[5], (planes,), jnp.float32),
        "b2": 0.1 * jax.random.normal(ks[6], (planes,), jnp.float32),
        "ws": 0.1 * jax.random.normal(ks[7], (planes, in_planes, 1, 1), jnp.float32),
        "gs": 1.0 + 0.1 * jax.random.normal(ks[8], (planes,), jnp.float32),
        "bs": 0.1 * jax.random.normal(ks[9], (planes,), jnp.float32),
    }

    fwd = jax.jit(functools.partial(basic_block_forward, stride=stride))
    out = jax.block_until_ready(fwd(x, params))
    assert out.shape == (N, planes, H, W), out.shape

    ref = jax.block_until_ready(_ref_forward(x, params, stride))
    # Precision contract: bf16 activations/weights at the MXU and bf16
    # intermediate tensors vs. a HIGHEST-precision f32 reference.
    assert jnp.allclose(out, ref, atol=7.5e-2, rtol=7.5e-2), (
        float(jnp.max(jnp.abs(out - ref))))

    print("KERNEL_OK")
</pallas_src>

<mosaic_0001>
module attributes {stable_mosaic.version = 11 : i64} {
  func.func @_conv3x3_kernel(%arg0: i32, %arg1: memref<1x16x16x8xbf16, #tpu.memory_space<vmem>>, %arg2: memref<9x8x16xbf16, #tpu.memory_space<vmem>>, %arg3: memref<8x16xbf16, #tpu.memory_space<vmem>>, %arg4: memref<1x256x16xbf16, #tpu.memory_space<vmem>>, %arg5: memref<1x256x16xbf16, #tpu.memory_space<vmem>>, %arg6: memref<18x18x8xf32, #tpu.memory_space<vmem>>) attributes {dimension_semantics = [#tpu.dimension_semantics<parallel>], iteration_bounds = array<i64: 2>, scalar_prefetch = 0 : i64, scratch_operands = 1 : i64, tpu.core_type = #tpu.core_type<tc>, window_params = [{transform_indices = @transform_0, window_bounds = array<i64: 1, 16, 16, 8>}, {pipeline_mode = #tpu.pipeline_mode<synchronous>, transform_indices = @transform_1, window_bounds = array<i64: 9, 8, 16>}, {pipeline_mode = #tpu.pipeline_mode<synchronous>, transform_indices = @transform_2, window_bounds = array<i64: 8, 16>}, {transform_indices = @transform_3, window_bounds = array<i64: 1, 256, 16>}, {transform_indices = @transform_4, window_bounds = array<i64: 1, 256, 16>}]} {
    %cst = arith.constant 0.000000e+00 : f32
    %0 = vector.broadcast %cst : f32 to vector<18x18x8xf32>
    %c0 = arith.constant 0 : index
    %c0_0 = arith.constant 0 : index
    %c0_1 = arith.constant 0 : index
    %1 = vector.load %arg6[%c0, %c0_0, %c0_1] : memref<18x18x8xf32, #tpu.memory_space<vmem>>, vector<18x18x8xf32>
    tpu.vector_store %arg6[%c0, %c0_0, %c0_1], %0 {strides = array<i32>} : memref<18x18x8xf32, #tpu.memory_space<vmem>>, vector<18x18x8xf32>,
    %c0_2 = arith.constant 0 : index
    %c0_3 = arith.constant 0 : index
    %c0_4 = arith.constant 0 : index
    %c0_5 = arith.constant 0 : index
    %2 = vector.load %arg1[%c0_2, %c0_3, %c0_4, %c0_5] : memref<1x16x16x8xbf16, #tpu.memory_space<vmem>>, vector<1x16x16x8xbf16>
    %3 = vector.shape_cast %2 : vector<1x16x16x8xbf16> to vector<16x16x8xbf16>
    %4 = arith.extf %3 : vector<16x16x8xbf16> to vector<16x16x8xf32>
    %c1 = arith.constant 1 : index
    %c1_6 = arith.constant 1 : index
    %c0_7 = arith.constant 0 : index
    %5 = vector.load %arg6[%c1, %c1_6, %c0_7] : memref<18x18x8xf32, #tpu.memory_space<vmem>>, vector<16x16x8xf32>
    tpu.vector_store %arg6[%c1, %c1_6, %c0_7], %4 {strides = array<i32>} : memref<18x18x8xf32, #tpu.memory_space<vmem>>, vector<16x16x8xf32>,
    %cst_8 = arith.constant 0.000000e+00 : f32
    %6 = vector.broadcast %cst_8 : f32 to vector<256x16xf32>
    %c0_9 = arith.constant 0 : index
    %c0_10 = arith.constant 0 : index
    %c0_11 = arith.constant 0 : index
    %7 = vector.load %arg6[%c0_9, %c0_10, %c0_11] : memref<18x18x8xf32, #tpu.memory_space<vmem>>, vector<16x16x8xf32>
    %8 = vector.shape_cast %7 : vector<16x16x8xf32> to vector<256x8xf32>
    %9 = arith.truncf %8 : vector<256x8xf32> to vector<256x8xbf16>
    %c0_12 = arith.constant 0 : index
    %c0_13 = arith.constant 0 : index
    %c0_14 = arith.constant 0 : index
    %10 = vector.load %arg2[%c0_12, %c0_13, %c0_14] : memref<9x8x16xbf16, #tpu.memory_space<vmem>>, vector<1x8x16xbf16>
    %11 = vector.shape_cast %10 : vector<1x8x16xbf16> to vector<8x16xbf16>
    %cst_15 = arith.constant dense<0.000000e+00> : vector<256x16xf32>
    %12 = tpu.matmul %9, %11, %cst_15 {dimension_numbers = #tpu.dot_dimension_numbers<[1], [0], [0], [1], [0, 0, 1, 1], [], []>} : vector<256x8xbf16>, vector<8x16xbf16>, vector<256x16xf32> -> vector<256x16xf32>
    %13 = arith.addf %6, %12 : vector<256x16xf32>
    %c0_16 = arith.constant 0 : index
    %c1_17 = arith.constant 1 : index
    %c0_18 = arith.constant 0 : index
    %14 = vector.load %arg6[%c0_16, %c1_17, %c0_18] : memref<18x18x8xf32, #tpu.memory_space<vmem>>, vector<16x16x8xf32>
    %15 = vector.shape_cast %14 : vector<16x16x8xf32> to vector<256x8xf32>
    %16 = arith.truncf %15 : vector<256x8xf32> to vector<256x8xbf16>
    %c1_19 = arith.constant 1 : index
    %c0_20 = arith.constant 0 : index
    %c0_21 = arith.constant 0 : index
    %17 = vector.load %arg2[%c1_19, %c0_20, %c0_21] : memref<9x8x16xbf16, #tpu.memory_space<vmem>>, vector<1x8x16xbf16>
    %18 = vector.shape_cast %17 : vector<1x8x16xbf16> to vector<8x16xbf16>
    %cst_22 = arith.constant dense<0.000000e+00> : vector<256x16xf32>
    %19 = tpu.matmul %16, %18, %cst_22 {dimension_numbers = #tpu.dot_dimension_numbers<[1], [0], [0], [1], [0, 0, 1, 1], [], []>} : vector<256x8xbf16>, vector<8x16xbf16>, vector<256x16xf32> -> vector<256x16xf32>
    %20 = arith.addf %13, %19 : vector<256x16xf32>
    %c0_23 = arith.constant 0 : index
    %c2 = arith.constant 2 : index
    %c0_24 = arith.constant 0 : index
    %21 = vector.load %arg6[%c0_23, %c2, %c0_24] : memref<18x18x8xf32, #tpu.memory_space<vmem>>, vector<16x16x8xf32>
    %22 = vector.shape_cast %21 : vector<16x16x8xf32> to vector<256x8xf32>
    %23 = arith.truncf %22 : vector<256x8xf32> to vector<256x8xbf16>
    %c2_25 = arith.constant 2 : index
    %c0_26 = arith.constant 0 : index
    %c0_27 = arith.constant 0 : index
    %24 = vector.load %arg2[%c2_25, %c0_26, %c0_27] : memref<9x8x16xbf16, #tpu.memory_space<vmem>>, vector<1x8x16xbf16>
    %25 = vector.shape_cast %24 : vector<1x8x16xbf16> to vector<8x16xbf16>
    %cst_28 = arith.constant dense<0.000000e+00> : vector<256x16xf32>
    %26 = tpu.matmul %23, %25, %cst_28 {dimension_numbers = #tpu.dot_dimension_numbers<[1], [0], [0], [1], [0, 0, 1, 1], [], []>} : vector<256x8xbf16>, vector<8x16xbf16>, vector<256x16xf32> -> vector<256x16xf32>
    %27 = arith.addf %20, %26 : vector<256x16xf32>
    %c1_29 = arith.constant 1 : index
    %c0_30 = arith.constant 0 : index
    %c0_31 = arith.constant 0 : index
    %28 = vector.load %arg6[%c1_29, %c0_30, %c0_31] : memref<18x18x8xf32, #tpu.memory_space<vmem>>, vector<16x16x8xf32>
    %29 = vector.shape_cast %28 : vector<16x16x8xf32> to vector<256x8xf32>
    %30 = arith.truncf %29 : vector<256x8xf32> to vector<256x8xbf16>
    %c3 = arith.constant 3 : index
    %c0_32 = arith.constant 0 : index
    %c0_33 = arith.constant 0 : index
    %31 = vector.load %arg2[%c3, %c0_32, %c0_33] : memref<9x8x16xbf16, #tpu.memory_space<vmem>>, vector<1x8x16xbf16>
    %32 = vector.shape_cast %31 : vector<1x8x16xbf16> to vector<8x16xbf16>
    %cst_34 = arith.constant dense<0.000000e+00> : vector<256x16xf32>
    %33 = tpu.matmul %30, %32, %cst_34 {dimension_numbers = #tpu.dot_dimension_numbers<[1], [0], [0], [1], [0, 0, 1, 1], [], []>} : vector<256x8xbf16>, vector<8x16xbf16>, vector<256x16xf32> -> vector<256x16xf32>
    %34 = arith.addf %27, %33 : vector<256x16xf32>
    %c1_35 = arith.constant 1 : index
    %c1_36 = arith.constant 1 : index
    %c0_37 = arith.constant 0 : index
    %35 = vector.load %arg6[%c1_35, %c1_36, %c0_37] : memref<18x18x8xf32, #tpu.memory_space<vmem>>, vector<16x16x8xf32>
    %36 = vector.shape_cast %35 : vector<16x16x8xf32> to vector<256x8xf32>
    %37 = arith.truncf %36 : vector<256x8xf32> to vector<256x8xbf16>
    %c4 = arith.constant 4 : index
    %c0_38 = arith.constant 0 : index
    %c0_39 = arith.constant 0 : index
    %38 = vector.load %arg2[%c4, %c0_38, %c0_39] : memref<9x8x16xbf16, #tpu.memory_space<vmem>>, vector<1x8x16xbf16>
    %39 = vector.shape_cast %38 : vector<1x8x16xbf16> to vector<8x16xbf16>
    %cst_40 = arith.constant dense<0.000000e+00> : vector<256x16xf32>
    %40 = tpu.matmul %37, %39, %cst_40 {dimension_numbers = #tpu.dot_dimension_numbers<[1], [0], [0], [1], [0, 0, 1, 1], [], []>} : vector<256x8xbf16>, vector<8x16xbf16>, vector<256x16xf32> -> vector<256x16xf32>
    %41 = arith.addf %34, %40 : vector<256x16xf32>
    %c0_41 = arith.constant 0 : index
    %c0_42 = arith.constant 0 : index
    %42 = vector.load %arg3[%c0_41, %c0_42] : memref<8x16xbf16, #tpu.memory_space<vmem>>, vector<8x16xbf16>
    %cst_43 = arith.constant dense<0.000000e+00> : vector<256x16xf32>
    %43 = tpu.matmul %37, %42, %cst_43 {dimension_numbers = #tpu.dot_dimension_numbers<[1], [0], [0], [1], [0, 0, 1, 1], [], []>} : vector<256x8xbf16>, vector<8x16xbf16>, vector<256x16xf32> -> vector<256x16xf32>
    %44 = arith.truncf %43 : vector<256x16xf32> to vector<256x16xbf16>
    %c0_44 = arith.constant 0 : index
    %c0_45 = arith.constant 0 : index
    %c0_46 = arith.constant 0 : index
    %45 = vector.load %arg5[%c0_44, %c0_45, %c0_46] : memref<1x256x16xbf16, #tpu.memory_space<vmem>>, vector<1x256x16xbf16>
    %46 = vector.shape_cast %45 : vector<1x256x16xbf16> to vector<256x16xbf16>
    %47 = vector.shape_cast %44 : vector<256x16xbf16> to vector<1x256x16xbf16>
    tpu.vector_store %arg5[%c0_44, %c0_45, %c0_46], %47 {strides = array<i32>} : memref<1x256x16xbf16, #tpu.memory_space<vmem>>, vector<1x256x16xbf16>,
    %c1_47 = arith.constant 1 : index
    %c2_48 = arith.constant 2 : index
    %c0_49 = arith.constant 0 : index
    %48 = vector.load %arg6[%c1_47, %c2_48, %c0_49] : memref<18x18x8xf32, #tpu.memory_space<vmem>>, vector<16x16x8xf32>
    %49 = vector.shape_cast %48 : vector<16x16x8xf32> to vector<256x8xf32>
    %50 = arith.truncf %49 : vector<256x8xf32> to vector<256x8xbf16>
    %c5 = arith.constant 5 : index
    %c0_50 = arith.constant 0 : index
    %c0_51 = arith.constant 0 : index
    %51 = vector.load %arg2[%c5, %c0_50, %c0_51] : memref<9x8x16xbf16, #tpu.memory_space<vmem>>, vector<1x8x16xbf16>
    %52 = vector.shape_cast %51 : vector<1x8x16xbf16> to vector<8x16xbf16>
    %cst_52 = arith.constant dense<0.000000e+00> : vector<256x16xf32>
    %53 = tpu.matmul %50, %52, %cst_52 {dimension_numbers = #tpu.dot_dimension_numbers<[1], [0], [0], [1], [0, 0, 1, 1], [], []>} : vector<256x8xbf16>, vector<8x16xbf16>, vector<256x16xf32> -> vector<256x16xf32>
    %54 = arith.addf %41, %53 : vector<256x16xf32>
    %c2_53 = arith.constant 2 : index
    %c0_54 = arith.constant 0 : index
    %c0_55 = arith.constant 0 : index
    %55 = vector.load %arg6[%c2_53, %c0_54, %c0_55] : memref<18x18x8xf32, #tpu.memory_space<vmem>>, vector<16x16x8xf32>
    %56 = vector.shape_cast %55 : vector<16x16x8xf32> to vector<256x8xf32>
    %57 = arith.truncf %56 : vector<256x8xf32> to vector<256x8xbf16>
    %c6 = arith.constant 6 : index
    %c0_56 = arith.constant 0 : index
    %c0_57 = arith.constant 0 : index
    %58 = vector.load %arg2[%c6, %c0_56, %c0_57] : memref<9x8x16xbf16, #tpu.memory_space<vmem>>, vector<1x8x16xbf16>
    %59 = vector.shape_cast %58 : vector<1x8x16xbf16> to vector<8x16xbf16>
    %cst_58 = arith.constant dense<0.000000e+00> : vector<256x16xf32>
    %60 = tpu.matmul %57, %59, %cst_58 {dimension_numbers = #tpu.dot_dimension_numbers<[1], [0], [0], [1], [0, 0, 1, 1], [], []>} : vector<256x8xbf16>, vector<8x16xbf16>, vector<256x16xf32> -> vector<256x16xf32>
    %61 = arith.addf %54, %60 : vector<256x16xf32>
    %c2_59 = arith.constant 2 : index
    %c1_60 = arith.constant 1 : index
    %c0_61 = arith.constant 0 : index
    %62 = vector.load %arg6[%c2_59, %c1_60, %c0_61] : memref<18x18x8xf32, #tpu.memory_space<vmem>>, vector<16x16x8xf32>
    %63 = vector.shape_cast %62 : vector<16x16x8xf32> to vector<256x8xf32>
    %64 = arith.truncf %63 : vector<256x8xf32> to vector<256x8xbf16>
    %c7 = arith.constant 7 : index
    %c0_62 = arith.constant 0 : index
    %c0_63 = arith.constant 0 : index
    %65 = vector.load %arg2[%c7, %c0_62, %c0_63] : memref<9x8x16xbf16, #tpu.memory_space<vmem>>, vector<1x8x16xbf16>
    %66 = vector.shape_cast %65 : vector<1x8x16xbf16> to vector<8x16xbf16>
    %cst_64 = arith.constant dense<0.000000e+00> : vector<256x16xf32>
    %67 = tpu.matmul %64, %66, %cst_64 {dimension_numbers = #tpu.dot_dimension_numbers<[1], [0], [0], [1], [0, 0, 1, 1], [], []>} : vector<256x8xbf16>, vector<8x16xbf16>, vector<256x16xf32> -> vector<256x16xf32>
    %68 = arith.addf %61, %67 : vector<256x16xf32>
    %c2_65 = arith.constant 2 : index
    %c2_66 = arith.constant 2 : index
    %c0_67 = arith.constant 0 : index
    %69 = vector.load %arg6[%c2_65, %c2_66, %c0_67] : memref<18x18x8xf32, #tpu.memory_space<vmem>>, vector<16x16x8xf32>
    %70 = vector.shape_cast %69 : vector<16x16x8xf32> to vector<256x8xf32>
    %71 = arith.truncf %70 : vector<256x8xf32> to vector<256x8xbf16>
    %c8 = arith.constant 8 : index
    %c0_68 = arith.constant 0 : index
    %c0_69 = arith.constant 0 : index
    %72 = vector.load %arg2[%c8, %c0_68, %c0_69] : memref<9x8x16xbf16, #tpu.memory_space<vmem>>, vector<1x8x16xbf16>
    %73 = vector.shape_cast %72 : vector<1x8x16xbf16> to vector<8x16xbf16>
    %cst_70 = arith.constant dense<0.000000e+00> : vector<256x16xf32>
    %74 = tpu.matmul %71, %73, %cst_70 {dimension_numbers = #tpu.dot_dimension_numbers<[1], [0], [0], [1], [0, 0, 1, 1], [], []>} : vector<256x8xbf16>, vector<8x16xbf16>, vector<256x16xf32> -> vector<256x16xf32>
    %75 = arith.addf %68, %74 : vector<256x16xf32>
    %76 = arith.truncf %75 : vector<256x16xf32> to vector<256x16xbf16>
    %c0_71 = arith.constant 0 : index
    %c0_72 = arith.constant 0 : index
    %c0_73 = arith.constant 0 : index
    %77 = vector.load %arg4[%c0_71, %c0_72, %c0_73] : memref<1x256x16xbf16, #tpu.memory_space<vmem>>, vector<1x256x16xbf16>
    %78 = vector.shape_cast %77 : vector<1x256x16xbf16> to vector<256x16xbf16>
    %79 = vector.shape_cast %76 : vector<256x16xbf16> to vector<1x256x16xbf16>
    tpu.vector_store %arg4[%c0_71, %c0_72, %c0_73], %79 {strides = array<i32>} : memref<1x256x16xbf16, #tpu.memory_space<vmem>>, vector<1x256x16xbf16>,
    return
  }
  func.func @transform_0(%arg0: i32) -> (i32, i32, i32, i32) {
    %c0_i32 = arith.constant 0 : i32
    %c0_i32_0 = arith.constant 0 : i32
    %c0_i32_1 = arith.constant 0 : i32
    %c0_i32_2 = arith.constant 0 : i32
    return %arg0, %c0_i32, %c0_i32_0, %c0_i32_1 : i32, i32, i32, i32
  }
  func.func @transform_1(%arg0: i32) -> (i32, i32, i32) {
    %c0_i32 = arith.constant 0 : i32
    %c0_i32_0 = arith.constant 0 : i32
    %c0_i32_1 = arith.constant 0 : i32
    %c0_i32_2 = arith.constant 0 : i32
    return %c0_i32, %c0_i32_0, %c0_i32_1 : i32, i32, i32
  }
  func.func @transform_2(%arg0: i32) -> (i32, i32) {
    %c0_i32 = arith.constant 0 : i32
    %c0_i32_0 = arith.constant 0 : i32
    %c0_i32_1 = arith.constant 0 : i32
    return %c0_i32, %c0_i32_0 : i32, i32
  }
  func.func @transform_3(%arg0: i32) -> (i32, i32, i32) {
    %c0_i32 = arith.constant 0 : i32
    %c0_i32_0 = arith.constant 0 : i32
    %c0_i32_1 = arith.constant 0 : i32
    return %arg0, %c0_i32, %c0_i32_0 : i32, i32, i32
  }
  func.func @transform_4(%arg0: i32) -> (i32, i32, i32) {
    %c0_i32 = arith.constant 0 : i32
    %c0_i32_0 = arith.constant 0 : i32
    %c0_i32_1 = arith.constant 0 : i32
    return %arg0, %c0_i32, %c0_i32_0 : i32, i32, i32
  }
}

module attributes {stable_mosaic.version = 11 : i64} {
  func.func @_gn_kernel(%arg0: i32, %arg1: memref<1x32x128xbf16, #tpu.memory_space<vmem>>, %arg2: memref<1x128xf32, #tpu.memory_space<vmem>>, %arg3: memref<1x128xf32, #tpu.memory_space<vmem>>, %arg4: memref<128x8xf32, #tpu.memory_space<vmem>>, %arg5: memref<8x128xf32, #tpu.memory_space<vmem>>, %arg6: memref<1x32x128xbf16, #tpu.memory_space<vmem>>) attributes {dimension_semantics = [#tpu.dimension_semantics<parallel>], iteration_bounds = array<i64: 2>, scalar_prefetch = 0 : i64, scratch_operands = 0 : i64, tpu.core_type = #tpu.core_type<tc>, window_params = [{transform_indices = @transform_0, window_bounds = array<i64: 1, 32, 128>}, {pipeline_mode = #tpu.pipeline_mode<synchronous>, transform_indices = @transform_1, window_bounds = array<i64: 1, 128>}, {pipeline_mode = #tpu.pipeline_mode<synchronous>, transform_indices = @transform_2, window_bounds = array<i64: 1, 128>}, {pipeline_mode = #tpu.pipeline_mode<synchronous>, transform_indices = @transform_3, window_bounds = array<i64: 128, 8>}, {pipeline_mode = #tpu.pipeline_mode<synchronous>, transform_indices = @transform_4, window_bounds = array<i64: 8, 128>}, {transform_indices = @transform_5, window_bounds = array<i64: 1, 32, 128>}]} {
    %c0 = arith.constant 0 : index
    %c0_0 = arith.constant 0 : index
    %c0_1 = arith.constant 0 : index
    %0 = vector.load %arg1[%c0, %c0_0, %c0_1] : memref<1x32x128xbf16, #tpu.memory_space<vmem>>, vector<1x32x128xbf16>
    %1 = vector.shape_cast %0 : vector<1x32x128xbf16> to vector<32x128xbf16>
    %2 = arith.extf %1 : vector<32x128xbf16> to vector<32x128xf32>
    %c0_2 = arith.constant 0 : index
    %c0_3 = arith.constant 0 : index
    %3 = vector.load %arg4[%c0_2, %c0_3] : memref<128x8xf32, #tpu.memory_space<vmem>>, vector<128x8xf32>
    %c0_4 = arith.constant 0 : index
    %c0_5 = arith.constant 0 : index
    %4 = vector.load %arg5[%c0_4, %c0_5] : memref<8x128xf32, #tpu.memory_space<vmem>>, vector<8x128xf32>
    %cst = arith.constant dense<0.000000e+00> : vector<128xf32>
    %5 = vector.multi_reduction <add>, %2, %cst [0] : vector<32x128xf32> to vector<128xf32>
    %6 = vector.shape_cast %5 : vector<128xf32> to vector<1x128xf32>
    %cst_6 = arith.constant dense<0.000000e+00> : vector<1x8xf32>
    %7 = tpu.matmul %6, %3, %cst_6 {dimension_numbers = #tpu.dot_dimension_numbers<[1], [0], [0], [1], [0, 0, 1, 1], [], []>} : vector<1x128xf32>, vector<128x8xf32>, vector<1x8xf32> -> vector<1x8xf32>
    %cst_7 = arith.constant 0.001953125 : f32
    %8 = vector.broadcast %cst_7 : f32 to vector<1x8xf32>
    %9 = arith.mulf %7, %8 : vector<1x8xf32>
    %cst_8 = arith.constant dense<0.000000e+00> : vector<1x128xf32>
    %10 = tpu.matmul %9, %4, %cst_8 {dimension_numbers = #tpu.dot_dimension_numbers<[1], [0], [0], [1], [0, 0, 1, 1], [], []>} : vector<1x8xf32>, vector<8x128xf32>, vector<1x128xf32> -> vector<1x128xf32>
    %11 = vector.broadcast %10 : vector<1x128xf32> to vector<32x128xf32>
    %12 = arith.subf %2, %11 : vector<32x128xf32>
    %13 = arith.mulf %12, %12 : vector<32x128xf32>
    %cst_9 = arith.constant dense<0.000000e+00> : vector<128xf32>
    %14 = vector.multi_reduction <add>, %13, %cst_9 [0] : vector<32x128xf32> to vector<128xf32>
    %15 = vector.shape_cast %14 : vector<128xf32> to vector<1x128xf32>
    %cst_10 = arith.constant dense<0.000000e+00> : vector<1x8xf32>
    %16 = tpu.matmul %15, %3, %cst_10 {dimension_numbers = #tpu.dot_dimension_numbers<[1], [0], [0], [1], [0, 0, 1, 1], [], []>} : vector<1x128xf32>, vector<128x8xf32>, vector<1x8xf32> -> vector<1x8xf32>
    %cst_11 = arith.constant 0.001953125 : f32
    %17 = vector.broadcast %cst_11 : f32 to vector<1x8xf32>
    %18 = arith.mulf %16, %17 : vector<1x8xf32>
    %cst_12 = arith.constant 9.99999974E-6 : f32
    %19 = vector.broadcast %cst_12 : f32 to vector<1x8xf32>
    %20 = arith.addf %18, %19 : vector<1x8xf32>
    %21 = math.rsqrt %20 : vector<1x8xf32>
    %cst_13 = arith.constant dense<0.000000e+00> : vector<1x128xf32>
    %22 = tpu.matmul %21, %4, %cst_13 {dimension_numbers = #tpu.dot_dimension_numbers<[1], [0], [0], [1], [0, 0, 1, 1], [], []>} : vector<1x8xf32>, vector<8x128xf32>, vector<1x128xf32> -> vector<1x128xf32>
    %c0_14 = arith.constant 0 : index
    %c0_15 = arith.constant 0 : index
    %23 = vector.load %arg2[%c0_14, %c0_15] : memref<1x128xf32, #tpu.memory_space<vmem>>, vector<1x128xf32>
    %24 = arith.mulf %22, %23 : vector<1x128xf32>
    %25 = vector.broadcast %24 : vector<1x128xf32> to vector<32x128xf32>
    %26 = arith.mulf %12, %25 : vector<32x128xf32>
    %c0_16 = arith.constant 0 : index
    %c0_17 = arith.constant 0 : index
    %27 = vector.load %arg3[%c0_16, %c0_17] : memref<1x128xf32, #tpu.memory_space<vmem>>, vector<1x128xf32>
    %28 = vector.broadcast %27 : vector<1x128xf32> to vector<32x128xf32>
    %29 = arith.addf %26, %28 : vector<32x128xf32>
    %cst_18 = arith.constant 0.000000e+00 : f32
    %30 = vector.broadcast %cst_18 : f32 to vector<32x128xf32>
    %31 = arith.maximumf %29, %30 : vector<32x128xf32>
    %32 = arith.truncf %31 : vector<32x128xf32> to vector<32x128xbf16>
    %c0_19 = arith.constant 0 : index
    %c0_20 = arith.constant 0 : index
    %c0_21 = arith.constant 0 : index
    %33 = vector.load %arg6[%c0_19, %c0_20, %c0_21] : memref<1x32x128xbf16, #tpu.memory_space<vmem>>, vector<1x32x128xbf16>
    %34 = vector.shape_cast %33 : vector<1x32x128xbf16> to vector<32x128xbf16>
    %35 = vector.shape_cast %32 : vector<32x128xbf16> to vector<1x32x128xbf16>
    tpu.vector_store %arg6[%c0_19, %c0_20, %c0_21], %35 {strides = array<i32>} : memref<1x32x128xbf16, #tpu.memory_space<vmem>>, vector<1x32x128xbf16>,
    return
  }
  func.func @transform_0(%arg0: i32) -> (i32, i32, i32) {
    %c0_i32 = arith.constant 0 : i32
    %c0_i32_0 = arith.constant 0 : i32
    %c0_i32_1 = arith.constant 0 : i32
    return %arg0, %c0_i32, %c0_i32_0 : i32, i32, i32
  }
  func.func @transform_1(%arg0: i32) -> (i32, i32) {
    %c0_i32 = arith.constant 0 : i32
    %c0_i32_0 = arith.constant 0 : i32
    %c0_i32_1 = arith.constant 0 : i32
    return %c0_i32, %c0_i32_0 : i32, i32
  }
  func.func @transform_2(%arg0: i32) -> (i32, i32) {
    %c0_i32 = arith.constant 0 : i32
    %c0_i32_0 = arith.constant 0 : i32
    %c0_i32_1 = arith.constant 0 : i32
    return %c0_i32, %c0_i32_0 : i32, i32
  }
  func.func @transform_3(%arg0: i32) -> (i32, i32) {
    %c0_i32 = arith.constant 0 : i32
    %c0_i32_0 = arith.constant 0 : i32
    %c0_i32_1 = arith.constant 0 : i32
    return %c0_i32, %c0_i32_0 : i32, i32
  }
  func.func @transform_4(%arg0: i32) -> (i32, i32) {
    %c0_i32 = arith.constant 0 : i32
    %c0_i32_0 = arith.constant 0 : i32
    %c0_i32_1 = arith.constant 0 : i32
    return %c0_i32, %c0_i32_0 : i32, i32
  }
  func.func @transform_5(%arg0: i32) -> (i32, i32, i32) {
    %c0_i32 = arith.constant 0 : i32
    %c0_i32_0 = arith.constant 0 : i32
    %c0_i32_1 = arith.constant 0 : i32
    return %arg0, %c0_i32, %c0_i32_0 : i32, i32, i32
  }
}

module attributes {stable_mosaic.version = 11 : i64} {
  func.func @_gn_kernel(%arg0: i32, %arg1: memref<1x32x128xbf16, #tpu.memory_space<vmem>>, %arg2: memref<1x128xf32, #tpu.memory_space<vmem>>, %arg3: memref<1x128xf32, #tpu.memory_space<vmem>>, %arg4: memref<128x8xf32, #tpu.memory_space<vmem>>, %arg5: memref<8x128xf32, #tpu.memory_space<vmem>>, %arg6: memref<1x32x128xbf16, #tpu.memory_space<vmem>>) attributes {dimension_semantics = [#tpu.dimension_semantics<parallel>], iteration_bounds = array<i64: 2>, scalar_prefetch = 0 : i64, scratch_operands = 0 : i64, tpu.core_type = #tpu.core_type<tc>, window_params = [{transform_indices = @transform_0, window_bounds = array<i64: 1, 32, 128>}, {pipeline_mode = #tpu.pipeline_mode<synchronous>, transform_indices = @transform_1, window_bounds = array<i64: 1, 128>}, {pipeline_mode = #tpu.pipeline_mode<synchronous>, transform_indices = @transform_2, window_bounds = array<i64: 1, 128>}, {pipeline_mode = #tpu.pipeline_mode<synchronous>, transform_indices = @transform_3, window_bounds = array<i64: 128, 8>}, {pipeline_mode = #tpu.pipeline_mode<synchronous>, transform_indices = @transform_4, window_bounds = array<i64: 8, 128>}, {transform_indices = @transform_5, window_bounds = array<i64: 1, 32, 128>}]} {
    %c0 = arith.constant 0 : index
    %c0_0 = arith.constant 0 : index
    %c0_1 = arith.constant 0 : index
    %0 = vector.load %arg1[%c0, %c0_0, %c0_1] : memref<1x32x128xbf16, #tpu.memory_space<vmem>>, vector<1x32x128xbf16>
    %1 = vector.shape_cast %0 : vector<1x32x128xbf16> to vector<32x128xbf16>
    %2 = arith.extf %1 : vector<32x128xbf16> to vector<32x128xf32>
    %c0_2 = arith.constant 0 : index
    %c0_3 = arith.constant 0 : index
    %3 = vector.load %arg4[%c0_2, %c0_3] : memref<128x8xf32, #tpu.memory_space<vmem>>, vector<128x8xf32>
    %c0_4 = arith.constant 0 : index
    %c0_5 = arith.constant 0 : index
    %4 = vector.load %arg5[%c0_4, %c0_5] : memref<8x128xf32, #tpu.memory_space<vmem>>, vector<8x128xf32>
    %cst = arith.constant dense<0.000000e+00> : vector<128xf32>
    %5 = vector.multi_reduction <add>, %2, %cst [0] : vector<32x128xf32> to vector<128xf32>
    %6 = vector.shape_cast %5 : vector<128xf32> to vector<1x128xf32>
    %cst_6 = arith.constant dense<0.000000e+00> : vector<1x8xf32>
    %7 = tpu.matmul %6, %3, %cst_6 {dimension_numbers = #tpu.dot_dimension_numbers<[1], [0], [0], [1], [0, 0, 1, 1], [], []>} : vector<1x128xf32>, vector<128x8xf32>, vector<1x8xf32> -> vector<1x8xf32>
    %cst_7 = arith.constant 0.001953125 : f32
    %8 = vector.broadcast %cst_7 : f32 to vector<1x8xf32>
    %9 = arith.mulf %7, %8 : vector<1x8xf32>
    %cst_8 = arith.constant dense<0.000000e+00> : vector<1x128xf32>
    %10 = tpu.matmul %9, %4, %cst_8 {dimension_numbers = #tpu.dot_dimension_numbers<[1], [0], [0], [1], [0, 0, 1, 1], [], []>} : vector<1x8xf32>, vector<8x128xf32>, vector<1x128xf32> -> vector<1x128xf32>
    %11 = vector.broadcast %10 : vector<1x128xf32> to vector<32x128xf32>
    %12 = arith.subf %2, %11 : vector<32x128xf32>
    %13 = arith.mulf %12, %12 : vector<32x128xf32>
    %cst_9 = arith.constant dense<0.000000e+00> : vector<128xf32>
    %14 = vector.multi_reduction <add>, %13, %cst_9 [0] : vector<32x128xf32> to vector<128xf32>
    %15 = vector.shape_cast %14 : vector<128xf32> to vector<1x128xf32>
    %cst_10 = arith.constant dense<0.000000e+00> : vector<1x8xf32>
    %16 = tpu.matmul %15, %3, %cst_10 {dimension_numbers = #tpu.dot_dimension_numbers<[1], [0], [0], [1], [0, 0, 1, 1], [], []>} : vector<1x128xf32>, vector<128x8xf32>, vector<1x8xf32> -> vector<1x8xf32>
    %cst_11 = arith.constant 0.001953125 : f32
    %17 = vector.broadcast %cst_11 : f32 to vector<1x8xf32>
    %18 = arith.mulf %16, %17 : vector<1x8xf32>
    %cst_12 = arith.constant 9.99999974E-6 : f32
    %19 = vector.broadcast %cst_12 : f32 to vector<1x8xf32>
    %20 = arith.addf %18, %19 : vector<1x8xf32>
    %21 = math.rsqrt %20 : vector<1x8xf32>
    %cst_13 = arith.constant dense<0.000000e+00> : vector<1x128xf32>
    %22 = tpu.matmul %21, %4, %cst_13 {dimension_numbers = #tpu.dot_dimension_numbers<[1], [0], [0], [1], [0, 0, 1, 1], [], []>} : vector<1x8xf32>, vector<8x128xf32>, vector<1x128xf32> -> vector<1x128xf32>
    %c0_14 = arith.constant 0 : index
    %c0_15 = arith.constant 0 : index
    %23 = vector.load %arg2[%c0_14, %c0_15] : memref<1x128xf32, #tpu.memory_space<vmem>>, vector<1x128xf32>
    %24 = arith.mulf %22, %23 : vector<1x128xf32>
    %25 = vector.broadcast %24 : vector<1x128xf32> to vector<32x128xf32>
    %26 = arith.mulf %12, %25 : vector<32x128xf32>
    %c0_16 = arith.constant 0 : index
    %c0_17 = arith.constant 0 : index
    %27 = vector.load %arg3[%c0_16, %c0_17] : memref<1x128xf32, #tpu.memory_space<vmem>>, vector<1x128xf32>
    %28 = vector.broadcast %27 : vector<1x128xf32> to vector<32x128xf32>
    %29 = arith.addf %26, %28 : vector<32x128xf32>
    %30 = arith.truncf %29 : vector<32x128xf32> to vector<32x128xbf16>
    %c0_18 = arith.constant 0 : index
    %c0_19 = arith.constant 0 : index
    %c0_20 = arith.constant 0 : index
    %31 = vector.load %arg6[%c0_18, %c0_19, %c0_20] : memref<1x32x128xbf16, #tpu.memory_space<vmem>>, vector<1x32x128xbf16>
    %32 = vector.shape_cast %31 : vector<1x32x128xbf16> to vector<32x128xbf16>
    %33 = vector.shape_cast %30 : vector<32x128xbf16> to vector<1x32x128xbf16>
    tpu.vector_store %arg6[%c0_18, %c0_19, %c0_20], %33 {strides = array<i32>} : memref<1x32x128xbf16, #tpu.memory_space<vmem>>, vector<1x32x128xbf16>,
    return
  }
  func.func @transform_0(%arg0: i32) -> (i32, i32, i32) {
    %c0_i32 = arith.constant 0 : i32
    %c0_i32_0 = arith.constant 0 : i32
    %c0_i32_1 = arith.constant 0 : i32
    return %arg0, %c0_i32, %c0_i32_0 : i32, i32, i32
  }
  func.func @transform_1(%arg0: i32) -> (i32, i32) {
    %c0_i32 = arith.constant 0 : i32
    %c0_i32_0 = arith.constant 0 : i32
    %c0_i32_1 = arith.constant 0 : i32
    return %c0_i32, %c0_i32_0 : i32, i32
  }
  func.func @transform_2(%arg0: i32) -> (i32, i32) {
    %c0_i32 = arith.constant 0 : i32
    %c0_i32_0 = arith.constant 0 : i32
    %c0_i32_1 = arith.constant 0 : i32
    return %c0_i32, %c0_i32_0 : i32, i32
  }
  func.func @transform_3(%arg0: i32) -> (i32, i32) {
    %c0_i32 = arith.constant 0 : i32
    %c0_i32_0 = arith.constant 0 : i32
    %c0_i32_1 = arith.constant 0 : i32
    return %c0_i32, %c0_i32_0 : i32, i32
  }
  func.func @transform_4(%arg0: i32) -> (i32, i32) {
    %c0_i32 = arith.constant 0 : i32
    %c0_i32_0 = arith.constant 0 : i32
    %c0_i32_1 = arith.constant 0 : i32
    return %c0_i32, %c0_i32_0 : i32, i32
  }
  func.func @transform_5(%arg0: i32) -> (i32, i32, i32) {
    %c0_i32 = arith.constant 0 : i32
    %c0_i32_0 = arith.constant 0 : i32
    %c0_i32_1 = arith.constant 0 : i32
    return %arg0, %c0_i32, %c0_i32_0 : i32, i32, i32
  }
}

module attributes {stable_mosaic.version = 11 : i64} {
  func.func @_conv3x3_kernel(%arg0: i32, %arg1: memref<1x16x16x16xbf16, #tpu.memory_space<vmem>>, %arg2: memref<9x16x16xbf16, #tpu.memory_space<vmem>>, %arg3: memref<1x256x16xbf16, #tpu.memory_space<vmem>>, %arg4: memref<18x18x16xf32, #tpu.memory_space<vmem>>) attributes {dimension_semantics = [#tpu.dimension_semantics<parallel>], iteration_bounds = array<i64: 2>, scalar_prefetch = 0 : i64, scratch_operands = 1 : i64, tpu.core_type = #tpu.core_type<tc>, window_params = [{transform_indices = @transform_0, window_bounds = array<i64: 1, 16, 16, 16>}, {pipeline_mode = #tpu.pipeline_mode<synchronous>, transform_indices = @transform_1, window_bounds = array<i64: 9, 16, 16>}, {transform_indices = @transform_2, window_bounds = array<i64: 1, 256, 16>}]} {
    %cst = arith.constant 0.000000e+00 : f32
    %0 = vector.broadcast %cst : f32 to vector<18x18x16xf32>
    %c0 = arith.constant 0 : index
    %c0_0 = arith.constant 0 : index
    %c0_1 = arith.constant 0 : index
    %1 = vector.load %arg4[%c0, %c0_0, %c0_1] : memref<18x18x16xf32, #tpu.memory_space<vmem>>, vector<18x18x16xf32>
    tpu.vector_store %arg4[%c0, %c0_0, %c0_1], %0 {strides = array<i32>} : memref<18x18x16xf32, #tpu.memory_space<vmem>>, vector<18x18x16xf32>,
    %c0_2 = arith.constant 0 : index
    %c0_3 = arith.constant 0 : index
    %c0_4 = arith.constant 0 : index
    %c0_5 = arith.constant 0 : index
    %2 = vector.load %arg1[%c0_2, %c0_3, %c0_4, %c0_5] : memref<1x16x16x16xbf16, #tpu.memory_space<vmem>>, vector<1x16x16x16xbf16>
    %3 = vector.shape_cast %2 : vector<1x16x16x16xbf16> to vector<16x16x16xbf16>
    %4 = arith.extf %3 : vector<16x16x16xbf16> to vector<16x16x16xf32>
    %c1 = arith.constant 1 : index
    %c1_6 = arith.constant 1 : index
    %c0_7 = arith.constant 0 : index
    %5 = vector.load %arg4[%c1, %c1_6, %c0_7] : memref<18x18x16xf32, #tpu.memory_space<vmem>>, vector<16x16x16xf32>
    tpu.vector_store %arg4[%c1, %c1_6, %c0_7], %4 {strides = array<i32>} : memref<18x18x16xf32, #tpu.memory_space<vmem>>, vector<16x16x16xf32>,
    %cst_8 = arith.constant 0.000000e+00 : f32
    %6 = vector.broadcast %cst_8 : f32 to vector<256x16xf32>
    %c0_9 = arith.constant 0 : index
    %c0_10 = arith.constant 0 : index
    %c0_11 = arith.constant 0 : index
    %7 = vector.load %arg4[%c0_9, %c0_10, %c0_11] : memref<18x18x16xf32, #tpu.memory_space<vmem>>, vector<16x16x16xf32>
    %8 = vector.shape_cast %7 : vector<16x16x16xf32> to vector<256x16xf32>
    %9 = arith.truncf %8 : vector<256x16xf32> to vector<256x16xbf16>
    %c0_12 = arith.constant 0 : index
    %c0_13 = arith.constant 0 : index
    %c0_14 = arith.constant 0 : index
    %10 = vector.load %arg2[%c0_12, %c0_13, %c0_14] : memref<9x16x16xbf16, #tpu.memory_space<vmem>>, vector<1x16x16xbf16>
    %11 = vector.shape_cast %10 : vector<1x16x16xbf16> to vector<16x16xbf16>
    %cst_15 = arith.constant dense<0.000000e+00> : vector<256x16xf32>
    %12 = tpu.matmul %9, %11, %cst_15 {dimension_numbers = #tpu.dot_dimension_numbers<[1], [0], [0], [1], [0, 0, 1, 1], [], []>} : vector<256x16xbf16>, vector<16x16xbf16>, vector<256x16xf32> -> vector<256x16xf32>
    %13 = arith.addf %6, %12 : vector<256x16xf32>
    %c0_16 = arith.constant 0 : index
    %c1_17 = arith.constant 1 : index
    %c0_18 = arith.constant 0 : index
    %14 = vector.load %arg4[%c0_16, %c1_17, %c0_18] : memref<18x18x16xf32, #tpu.memory_space<vmem>>, vector<16x16x16xf32>
    %15 = vector.shape_cast %14 : vector<16x16x16xf32> to vector<256x16xf32>
    %16 = arith.truncf %15 : vector<256x16xf32> to vector<256x16xbf16>
    %c1_19 = arith.constant 1 : index
    %c0_20 = arith.constant 0 : index
    %c0_21 = arith.constant 0 : index
    %17 = vector.load %arg2[%c1_19, %c0_20, %c0_21] : memref<9x16x16xbf16, #tpu.memory_space<vmem>>, vector<1x16x16xbf16>
    %18 = vector.shape_cast %17 : vector<1x16x16xbf16> to vector<16x16xbf16>
    %cst_22 = arith.constant dense<0.000000e+00> : vector<256x16xf32>
    %19 = tpu.matmul %16, %18, %cst_22 {dimension_numbers = #tpu.dot_dimension_numbers<[1], [0], [0], [1], [0, 0, 1, 1], [], []>} : vector<256x16xbf16>, vector<16x16xbf16>, vector<256x16xf32> -> vector<256x16xf32>
    %20 = arith.addf %13, %19 : vector<256x16xf32>
    %c0_23 = arith.constant 0 : index
    %c2 = arith.constant 2 : index
    %c0_24 = arith.constant 0 : index
    %21 = vector.load %arg4[%c0_23, %c2, %c0_24] : memref<18x18x16xf32, #tpu.memory_space<vmem>>, vector<16x16x16xf32>
    %22 = vector.shape_cast %21 : vector<16x16x16xf32> to vector<256x16xf32>
    %23 = arith.truncf %22 : vector<256x16xf32> to vector<256x16xbf16>
    %c2_25 = arith.constant 2 : index
    %c0_26 = arith.constant 0 : index
    %c0_27 = arith.constant 0 : index
    %24 = vector.load %arg2[%c2_25, %c0_26, %c0_27] : memref<9x16x16xbf16, #tpu.memory_space<vmem>>, vector<1x16x16xbf16>
    %25 = vector.shape_cast %24 : vector<1x16x16xbf16> to vector<16x16xbf16>
    %cst_28 = arith.constant dense<0.000000e+00> : vector<256x16xf32>
    %26 = tpu.matmul %23, %25, %cst_28 {dimension_numbers = #tpu.dot_dimension_numbers<[1], [0], [0], [1], [0, 0, 1, 1], [], []>} : vector<256x16xbf16>, vector<16x16xbf16>, vector<256x16xf32> -> vector<256x16xf32>
    %27 = arith.addf %20, %26 : vector<256x16xf32>
    %c1_29 = arith.constant 1 : index
    %c0_30 = arith.constant 0 : index
    %c0_31 = arith.constant 0 : index
    %28 = vector.load %arg4[%c1_29, %c0_30, %c0_31] : memref<18x18x16xf32, #tpu.memory_space<vmem>>, vector<16x16x16xf32>
    %29 = vector.shape_cast %28 : vector<16x16x16xf32> to vector<256x16xf32>
    %30 = arith.truncf %29 : vector<256x16xf32> to vector<256x16xbf16>
    %c3 = arith.constant 3 : index
    %c0_32 = arith.constant 0 : index
    %c0_33 = arith.constant 0 : index
    %31 = vector.load %arg2[%c3, %c0_32, %c0_33] : memref<9x16x16xbf16, #tpu.memory_space<vmem>>, vector<1x16x16xbf16>
    %32 = vector.shape_cast %31 : vector<1x16x16xbf16> to vector<16x16xbf16>
    %cst_34 = arith.constant dense<0.000000e+00> : vector<256x16xf32>
    %33 = tpu.matmul %30, %32, %cst_34 {dimension_numbers = #tpu.dot_dimension_numbers<[1], [0], [0], [1], [0, 0, 1, 1], [], []>} : vector<256x16xbf16>, vector<16x16xbf16>, vector<256x16xf32> -> vector<256x16xf32>
    %34 = arith.addf %27, %33 : vector<256x16xf32>
    %c1_35 = arith.constant 1 : index
    %c1_36 = arith.constant 1 : index
    %c0_37 = arith.constant 0 : index
    %35 = vector.load %arg4[%c1_35, %c1_36, %c0_37] : memref<18x18x16xf32, #tpu.memory_space<vmem>>, vector<16x16x16xf32>
    %36 = vector.shape_cast %35 : vector<16x16x16xf32> to vector<256x16xf32>
    %37 = arith.truncf %36 : vector<256x16xf32> to vector<256x16xbf16>
    %c4 = arith.constant 4 : index
    %c0_38 = arith.constant 0 : index
    %c0_39 = arith.constant 0 : index
    %38 = vector.load %arg2[%c4, %c0_38, %c0_39] : memref<9x16x16xbf16, #tpu.memory_space<vmem>>, vector<1x16x16xbf16>
    %39 = vector.shape_cast %38 : vector<1x16x16xbf16> to vector<16x16xbf16>
    %cst_40 = arith.constant dense<0.000000e+00> : vector<256x16xf32>
    %40 = tpu.matmul %37, %39, %cst_40 {dimension_numbers = #tpu.dot_dimension_numbers<[1], [0], [0], [1], [0, 0, 1, 1], [], []>} : vector<256x16xbf16>, vector<16x16xbf16>, vector<256x16xf32> -> vector<256x16xf32>
    %41 = arith.addf %34, %40 : vector<256x16xf32>
    %c1_41 = arith.constant 1 : index
    %c2_42 = arith.constant 2 : index
    %c0_43 = arith.constant 0 : index
    %42 = vector.load %arg4[%c1_41, %c2_42, %c0_43] : memref<18x18x16xf32, #tpu.memory_space<vmem>>, vector<16x16x16xf32>
    %43 = vector.shape_cast %42 : vector<16x16x16xf32> to vector<256x16xf32>
    %44 = arith.truncf %43 : vector<256x16xf32> to vector<256x16xbf16>
    %c5 = arith.constant 5 : index
    %c0_44 = arith.constant 0 : index
    %c0_45 = arith.constant 0 : index
    %45 = vector.load %arg2[%c5, %c0_44, %c0_45] : memref<9x16x16xbf16, #tpu.memory_space<vmem>>, vector<1x16x16xbf16>
    %46 = vector.shape_cast %45 : vector<1x16x16xbf16> to vector<16x16xbf16>
    %cst_46 = arith.constant dense<0.000000e+00> : vector<256x16xf32>
    %47 = tpu.matmul %44, %46, %cst_46 {dimension_numbers = #tpu.dot_dimension_numbers<[1], [0], [0], [1], [0, 0, 1, 1], [], []>} : vector<256x16xbf16>, vector<16x16xbf16>, vector<256x16xf32> -> vector<256x16xf32>
    %48 = arith.addf %41, %47 : vector<256x16xf32>
    %c2_47 = arith.constant 2 : index
    %c0_48 = arith.constant 0 : index
    %c0_49 = arith.constant 0 : index
    %49 = vector.load %arg4[%c2_47, %c0_48, %c0_49] : memref<18x18x16xf32, #tpu.memory_space<vmem>>, vector<16x16x16xf32>
    %50 = vector.shape_cast %49 : vector<16x16x16xf32> to vector<256x16xf32>
    %51 = arith.truncf %50 : vector<256x16xf32> to vector<256x16xbf16>
    %c6 = arith.constant 6 : index
    %c0_50 = arith.constant 0 : index
    %c0_51 = arith.constant 0 : index
    %52 = vector.load %arg2[%c6, %c0_50, %c0_51] : memref<9x16x16xbf16, #tpu.memory_space<vmem>>, vector<1x16x16xbf16>
    %53 = vector.shape_cast %52 : vector<1x16x16xbf16> to vector<16x16xbf16>
    %cst_52 = arith.constant dense<0.000000e+00> : vector<256x16xf32>
    %54 = tpu.matmul %51, %53, %cst_52 {dimension_numbers = #tpu.dot_dimension_numbers<[1], [0], [0], [1], [0, 0, 1, 1], [], []>} : vector<256x16xbf16>, vector<16x16xbf16>, vector<256x16xf32> -> vector<256x16xf32>
    %55 = arith.addf %48, %54 : vector<256x16xf32>
    %c2_53 = arith.constant 2 : index
    %c1_54 = arith.constant 1 : index
    %c0_55 = arith.constant 0 : index
    %56 = vector.load %arg4[%c2_53, %c1_54, %c0_55] : memref<18x18x16xf32, #tpu.memory_space<vmem>>, vector<16x16x16xf32>
    %57 = vector.shape_cast %56 : vector<16x16x16xf32> to vector<256x16xf32>
    %58 = arith.truncf %57 : vector<256x16xf32> to vector<256x16xbf16>
    %c7 = arith.constant 7 : index
    %c0_56 = arith.constant 0 : index
    %c0_57 = arith.constant 0 : index
    %59 = vector.load %arg2[%c7, %c0_56, %c0_57] : memref<9x16x16xbf16, #tpu.memory_space<vmem>>, vector<1x16x16xbf16>
    %60 = vector.shape_cast %59 : vector<1x16x16xbf16> to vector<16x16xbf16>
    %cst_58 = arith.constant dense<0.000000e+00> : vector<256x16xf32>
    %61 = tpu.matmul %58, %60, %cst_58 {dimension_numbers = #tpu.dot_dimension_numbers<[1], [0], [0], [1], [0, 0, 1, 1], [], []>} : vector<256x16xbf16>, vector<16x16xbf16>, vector<256x16xf32> -> vector<256x16xf32>
    %62 = arith.addf %55, %61 : vector<256x16xf32>
    %c2_59 = arith.constant 2 : index
    %c2_60 = arith.constant 2 : index
    %c0_61 = arith.constant 0 : index
    %63 = vector.load %arg4[%c2_59, %c2_60, %c0_61] : memref<18x18x16xf32, #tpu.memory_space<vmem>>, vector<16x16x16xf32>
    %64 = vector.shape_cast %63 : vector<16x16x16xf32> to vector<256x16xf32>
    %65 = arith.truncf %64 : vector<256x16xf32> to vector<256x16xbf16>
    %c8 = arith.constant 8 : index
    %c0_62 = arith.constant 0 : index
    %c0_63 = arith.constant 0 : index
    %66 = vector.load %arg2[%c8, %c0_62, %c0_63] : memref<9x16x16xbf16, #tpu.memory_space<vmem>>, vector<1x16x16xbf16>
    %67 = vector.shape_cast %66 : vector<1x16x16xbf16> to vector<16x16xbf16>
    %cst_64 = arith.constant dense<0.000000e+00> : vector<256x16xf32>
    %68 = tpu.matmul %65, %67, %cst_64 {dimension_numbers = #tpu.dot_dimension_numbers<[1], [0], [0], [1], [0, 0, 1, 1], [], []>} : vector<256x16xbf16>, vector<16x16xbf16>, vector<256x16xf32> -> vector<256x16xf32>
    %69 = arith.addf %62, %68 : vector<256x16xf32>
    %70 = arith.truncf %69 : vector<256x16xf32> to vector<256x16xbf16>
    %c0_65 = arith.constant 0 : index
    %c0_66 = arith.constant 0 : index
    %c0_67 = arith.constant 0 : index
    %71 = vector.load %arg3[%c0_65, %c0_66, %c0_67] : memref<1x256x16xbf16, #tpu.memory_space<vmem>>, vector<1x256x16xbf16>
    %72 = vector.shape_cast %71 : vector<1x256x16xbf16> to vector<256x16xbf16>
    %73 = vector.shape_cast %70 : vector<256x16xbf16> to vector<1x256x16xbf16>
    tpu.vector_store %arg3[%c0_65, %c0_66, %c0_67], %73 {strides = array<i32>} : memref<1x256x16xbf16, #tpu.memory_space<vmem>>, vector<1x256x16xbf16>,
    return
  }
  func.func @transform_0(%arg0: i32) -> (i32, i32, i32, i32) {
    %c0_i32 = arith.constant 0 : i32
    %c0_i32_0 = arith.constant 0 : i32
    %c0_i32_1 = arith.constant 0 : i32
    %c0_i32_2 = arith.constant 0 : i32
    return %arg0, %c0_i32, %c0_i32_0, %c0_i32_1 : i32, i32, i32, i32
  }
  func.func @transform_1(%arg0: i32) -> (i32, i32, i32) {
    %c0_i32 = arith.constant 0 : i32
    %c0_i32_0 = arith.constant 0 : i32
    %c0_i32_1 = arith.constant 0 : i32
    %c0_i32_2 = arith.constant 0 : i32
    return %c0_i32, %c0_i32_0, %c0_i32_1 : i32, i32, i32
  }
  func.func @transform_2(%arg0: i32) -> (i32, i32, i32) {
    %c0_i32 = arith.constant 0 : i32
    %c0_i32_0 = arith.constant 0 : i32
    %c0_i32_1 = arith.constant 0 : i32
    return %arg0, %c0_i32, %c0_i32_0 : i32, i32, i32
  }
}

module attributes {stable_mosaic.version = 11 : i64} {
  func.func @_gn_kernel(%arg0: i32, %arg1: memref<1x32x128xbf16, #tpu.memory_space<vmem>>, %arg2: memref<1x32x128xbf16, #tpu.memory_space<vmem>>, %arg3: memref<1x128xf32, #tpu.memory_space<vmem>>, %arg4: memref<1x128xf32, #tpu.memory_space<vmem>>, %arg5: memref<128x8xf32, #tpu.memory_space<vmem>>, %arg6: memref<8x128xf32, #tpu.memory_space<vmem>>, %arg7: memref<1x32x128xf32, #tpu.memory_space<vmem>>) attributes {dimension_semantics = [#tpu.dimension_semantics<parallel>], iteration_bounds = array<i64: 2>, scalar_prefetch = 0 : i64, scratch_operands = 0 : i64, tpu.core_type = #tpu.core_type<tc>, window_params = [{transform_indices = @transform_0, window_bounds = array<i64: 1, 32, 128>}, {transform_indices = @transform_1, window_bounds = array<i64: 1, 32, 128>}, {pipeline_mode = #tpu.pipeline_mode<synchronous>, transform_indices = @transform_2, window_bounds = array<i64: 1, 128>}, {pipeline_mode = #tpu.pipeline_mode<synchronous>, transform_indices = @transform_3, window_bounds = array<i64: 1, 128>}, {pipeline_mode = #tpu.pipeline_mode<synchronous>, transform_indices = @transform_4, window_bounds = array<i64: 128, 8>}, {pipeline_mode = #tpu.pipeline_mode<synchronous>, transform_indices = @transform_5, window_bounds = array<i64: 8, 128>}, {transform_indices = @transform_6, window_bounds = array<i64: 1, 32, 128>}]} {
    %c0 = arith.constant 0 : index
    %c0_0 = arith.constant 0 : index
    %c0_1 = arith.constant 0 : index
    %0 = vector.load %arg1[%c0, %c0_0, %c0_1] : memref<1x32x128xbf16, #tpu.memory_space<vmem>>, vector<1x32x128xbf16>
    %1 = vector.shape_cast %0 : vector<1x32x128xbf16> to vector<32x128xbf16>
    %2 = arith.extf %1 : vector<32x128xbf16> to vector<32x128xf32>
    %c0_2 = arith.constant 0 : index
    %c0_3 = arith.constant 0 : index
    %3 = vector.load %arg5[%c0_2, %c0_3] : memref<128x8xf32, #tpu.memory_space<vmem>>, vector<128x8xf32>
    %c0_4 = arith.constant 0 : index
    %c0_5 = arith.constant 0 : index
    %4 = vector.load %arg6[%c0_4, %c0_5] : memref<8x128xf32, #tpu.memory_space<vmem>>, vector<8x128xf32>
    %cst = arith.constant dense<0.000000e+00> : vector<128xf32>
    %5 = vector.multi_reduction <add>, %2, %cst [0] : vector<32x128xf32> to vector<128xf32>
    %6 = vector.shape_cast %5 : vector<128xf32> to vector<1x128xf32>
    %cst_6 = arith.constant dense<0.000000e+00> : vector<1x8xf32>
    %7 = tpu.matmul %6, %3, %cst_6 {dimension_numbers = #tpu.dot_dimension_numbers<[1], [0], [0], [1], [0, 0, 1, 1], [], []>} : vector<1x128xf32>, vector<128x8xf32>, vector<1x8xf32> -> vector<1x8xf32>
    %cst_7 = arith.constant 0.001953125 : f32
    %8 = vector.broadcast %cst_7 : f32 to vector<1x8xf32>
    %9 = arith.mulf %7, %8 : vector<1x8xf32>
    %cst_8 = arith.constant dense<0.000000e+00> : vector<1x128xf32>
    %10 = tpu.matmul %9, %4, %cst_8 {dimension_numbers = #tpu.dot_dimension_numbers<[1], [0], [0], [1], [0, 0, 1, 1], [], []>} : vector<1x8xf32>, vector<8x128xf32>, vector<1x128xf32> -> vector<1x128xf32>
    %11 = vector.broadcast %10 : vector<1x128xf32> to vector<32x128xf32>
    %12 = arith.subf %2, %11 : vector<32x128xf32>
    %13 = arith.mulf %12, %12 : vector<32x128xf32>
    %cst_9 = arith.constant dense<0.000000e+00> : vector<128xf32>
    %14 = vector.multi_reduction <add>, %13, %cst_9 [0] : vector<32x128xf32> to vector<128xf32>
    %15 = vector.shape_cast %14 : vector<128xf32> to vector<1x128xf32>
    %cst_10 = arith.constant dense<0.000000e+00> : vector<1x8xf32>
    %16 = tpu.matmul %15, %3, %cst_10 {dimension_numbers = #tpu.dot_dimension_numbers<[1], [0], [0], [1], [0, 0, 1, 1], [], []>} : vector<1x128xf32>, vector<128x8xf32>, vector<1x8xf32> -> vector<1x8xf32>
    %cst_11 = arith.constant 0.001953125 : f32
    %17 = vector.broadcast %cst_11 : f32 to vector<1x8xf32>
    %18 = arith.mulf %16, %17 : vector<1x8xf32>
    %cst_12 = arith.constant 9.99999974E-6 : f32
    %19 = vector.broadcast %cst_12 : f32 to vector<1x8xf32>
    %20 = arith.addf %18, %19 : vector<1x8xf32>
    %21 = math.rsqrt %20 : vector<1x8xf32>
    %cst_13 = arith.constant dense<0.000000e+00> : vector<1x128xf32>
    %22 = tpu.matmul %21, %4, %cst_13 {dimension_numbers = #tpu.dot_dimension_numbers<[1], [0], [0], [1], [0, 0, 1, 1], [], []>} : vector<1x8xf32>, vector<8x128xf32>, vector<1x128xf32> -> vector<1x128xf32>
    %c0_14 = arith.constant 0 : index
    %c0_15 = arith.constant 0 : index
    %23 = vector.load %arg3[%c0_14, %c0_15] : memref<1x128xf32, #tpu.memory_space<vmem>>, vector<1x128xf32>
    %24 = arith.mulf %22, %23 : vector<1x128xf32>
    %25 = vector.broadcast %24 : vector<1x128xf32> to vector<32x128xf32>
    %26 = arith.mulf %12, %25 : vector<32x128xf32>
    %c0_16 = arith.constant 0 : index
    %c0_17 = arith.constant 0 : index
    %27 = vector.load %arg4[%c0_16, %c0_17] : memref<1x128xf32, #tpu.memory_space<vmem>>, vector<1x128xf32>
    %28 = vector.broadcast %27 : vector<1x128xf32> to vector<32x128xf32>
    %29 = arith.addf %26, %28 : vector<32x128xf32>
    %c0_18 = arith.constant 0 : index
    %c0_19 = arith.constant 0 : index
    %c0_20 = arith.constant 0 : index
    %30 = vector.load %arg2[%c0_18, %c0_19, %c0_20] : memref<1x32x128xbf16, #tpu.memory_space<vmem>>, vector<1x32x128xbf16>
    %31 = vector.shape_cast %30 : vector<1x32x128xbf16> to vector<32x128xbf16>
    %32 = arith.extf %31 : vector<32x128xbf16> to vector<32x128xf32>
    %33 = arith.addf %29, %32 : vector<32x128xf32>
    %cst_21 = arith.constant 0.000000e+00 : f32
    %34 = vector.broadcast %cst_21 : f32 to vector<32x128xf32>
    %35 = arith.maximumf %33, %34 : vector<32x128xf32>
    %c0_22 = arith.constant 0 : index
    %c0_23 = arith.constant 0 : index
    %c0_24 = arith.constant 0 : index
    %36 = vector.load %arg7[%c0_22, %c0_23, %c0_24] : memref<1x32x128xf32, #tpu.memory_space<vmem>>, vector<1x32x128xf32>
    %37 = vector.shape_cast %36 : vector<1x32x128xf32> to vector<32x128xf32>
    %38 = vector.shape_cast %35 : vector<32x128xf32> to vector<1x32x128xf32>
    tpu.vector_store %arg7[%c0_22, %c0_23, %c0_24], %38 {strides = array<i32>} : memref<1x32x128xf32, #tpu.memory_space<vmem>>, vector<1x32x128xf32>,
    return
  }
  func.func @transform_0(%arg0: i32) -> (i32, i32, i32) {
    %c0_i32 = arith.constant 0 : i32
    %c0_i32_0 = arith.constant 0 : i32
    %c0_i32_1 = arith.constant 0 : i32
    return %arg0, %c0_i32, %c0_i32_0 : i32, i32, i32
  }
  func.func @transform_1(%arg0: i32) -> (i32, i32, i32) {
    %c0_i32 = arith.constant 0 : i32
    %c0_i32_0 = arith.constant 0 : i32
    %c0_i32_1 = arith.constant 0 : i32
    return %arg0, %c0_i32, %c0_i32_0 : i32, i32, i32
  }
  func.func @transform_2(%arg0: i32) -> (i32, i32) {
    %c0_i32 = arith.constant 0 : i32
    %c0_i32_0 = arith.constant 0 : i32
    %c0_i32_1 = arith.constant 0 : i32
    return %c0_i32, %c0_i32_0 : i32, i32
  }
  func.func @transform_3(%arg0: i32) -> (i32, i32) {
    %c0_i32 = arith.constant 0 : i32
    %c0_i32_0 = arith.constant 0 : i32
    %c0_i32_1 = arith.constant 0 : i32
    return %c0_i32, %c0_i32_0 : i32, i32
  }
  func.func @transform_4(%arg0: i32) -> (i32, i32) {
    %c0_i32 = arith.constant 0 : i32
    %c0_i32_0 = arith.constant 0 : i32
    %c0_i32_1 = arith.constant 0 : i32
    return %c0_i32, %c0_i32_0 : i32, i32
  }
  func.func @transform_5(%arg0: i32) -> (i32, i32) {
    %c0_i32 = arith.constant 0 : i32
    %c0_i32_0 = arith.constant 0 : i32
    %c0_i32_1 = arith.constant 0 : i32
    return %c0_i32, %c0_i32_0 : i32, i32
  }
  func.func @transform_6(%arg0: i32) -> (i32, i32, i32) {
    %c0_i32 = arith.constant 0 : i32
    %c0_i32_0 = arith.constant 0 : i32
    %c0_i32_1 = arith.constant 0 : i32
    return %arg0, %c0_i32, %c0_i32_0 : i32, i32, i32
  }
}

</mosaic_0001>

<llo_original>
// kernel: tile.38
$region0: #{tile.38}
  #allocation2 [shape = 's32[1]{0}', space=sflag, size = 0x4, scoped, tag = 'scoped memory for tile.38']
  %s0 = inlined_call_operand.hbm [shape: f32[16], index: 0, kind: input, shape index: {}]
  %s1 = inlined_call_operand.vmem [shape: f32[8,16], index: 1, kind: output, shape index: {}]
  $region1: #{tile.38} parent=0
    #allocation0 [shape = 'u8[512]{0}', space=vmem, size = 0x400, scoped, tag = 'operand span for operand 0']
    #allocation1 [shape = 's32[1]{0}', space=sflag, size = 0x4, scoped, tag = 'scoped memory for tile.38']
    %2 = vsyncpa [#allocation1], 0
    // Predicated region
    $region2: #{tile.38} parent=1 // pred_check
      _
    $region3: #{tile.38} parent=1 // pred_check_branch
      %4 = sbr.rel (0) target = $region5
    $region4: #{tile.38} parent=1 // pred_region
      %s6 = ssub.s32 16, 16
      %7 = vsyncadd [#allocation1], %s6
      %s9 = sshll.u32 [#allocation0], 4
      %s10 = int_to_ptr.vmem [resolvable:$true] %s9
      %12 = dma.hbm_to_vmem [thread:$0]  %s0, 16, %s10, [#allocation1]
    $region5: #{tile.38} parent=1 // pred_fallthru
      _
    // Predicated region
    $region6: #{tile.38} parent=1 // pred_check
      _
    $region7: #{tile.38} parent=1 // pred_check_branch
      %14 = sbr.rel (0) target = $region9
    $region8: #{tile.38} parent=1 // pred_region
      %15 = dma.done [#allocation1], 16
    $region9: #{tile.38} parent=1 // pred_fallthru
      _
    %v16 = vld [vmem:[#allocation0] ss:$0 sm:$0xff]
    %17 = vst [vmem:[%s1] sm:$0xff] %v16
    %18 = vsyncpa [#allocation1], 1

// kernel: tile.39
$region0: #{tile.39}
  %s0 = inlined_call_operand.vmem [shape: f32[8,16], index: 0, kind: input, shape index: {}]
  %s1 = inlined_call_operand.vmem [shape: f32[1,128], index: 1, kind: output, shape index: {}]
  $region1: #{tile.39} parent=0
    #allocation0 [shape = 'u8[4096]{0}', space=vmem, size = 0x1000, scoped, tag = 'scoped mem for output reshape']
    %v2 = vld [vmem:[%s0] sm:$0x1]
    %vm3 = vcmask 130048
    %4 = vst.msk [vmem:[#allocation0] sm:$0x1] %vm3, %v2
    %s5 = scalar_lea.vmem %s0, 7
    %v6 = vld [vmem:[%s5] sm:$0x1]
    %7 = vrot.lane.b32.xlu0 %v6, 112
    %v8 = vpop.permute.xlu0 %7
    %vm9 = vcmask 1048448
    %10 = vst.msk [vmem:[#allocation0] sm:$0x1] %vm9, %v8
    %s11 = scalar_lea.vmem %s0, 6
    %v12 = vld [vmem:[%s11] sm:$0x1]
    %13 = vrot.lane.b32.xlu0 %v12, 96
    %v14 = vpop.permute.xlu0 %13
    %vm15 = vcmask 917248
    %16 = vst.msk [vmem:[#allocation0] sm:$0x1] %vm15, %v14
    %s17 = scalar_lea.vmem %s0, 5
    %v18 = vld [vmem:[%s17] sm:$0x1]
    %19 = vrot.lane.b32.xlu0 %v18, 80
    %v20 = vpop.permute.xlu0 %19
    %vm21 = vcmask 786048
    %22 = vst.msk [vmem:[#allocation0] sm:$0x1] %vm21, %v20
    %s23 = scalar_lea.vmem %s0, 4
    %v24 = vld [vmem:[%s23] sm:$0x1]
    %25 = vrot.lane.b32.xlu0 %v24, 64
    %v26 = vpop.permute.xlu0 %25
    %vm27 = vcmask 654848
    %28 = vst.msk [vmem:[#allocation0] sm:$0x1] %vm27, %v26
    %s29 = scalar_lea.vmem %s0, 3
    %v30 = vld [vmem:[%s29] sm:$0x1]
    %31 = vrot.lane.b32.xlu0 %v30, 48
    %v32 = vpop.permute.xlu0 %31
    %vm33 = vcmask 523648
    %34 = vst.msk [vmem:[#allocation0] sm:$0x1] %vm33, %v32
    %s35 = scalar_lea.vmem %s0, 2
    %v36 = vld [vmem:[%s35] sm:$0x1]
    %37 = vrot.lane.b32.xlu0 %v36, 32
    %v38 = vpop.permute.xlu0 %37
    %vm39 = vcmask 392448
    %40 = vst.msk [vmem:[#allocation0] sm:$0x1] %vm39, %v38
    %s41 = scalar_lea.vmem %s0, 1
    %v42 = vld [vmem:[%s41] sm:$0x1]
    %43 = vrot.lane.b32.xlu0 %v42, 16
    %v44 = vpop.permute.xlu0 %43
    %vm45 = vcmask 261248
    %46 = vst.msk [vmem:[#allocation0] sm:$0x1] %vm45, %v44
    %s48 = sshllo.u32 0, 1
    %v50 = vld [vmem:[#allocation0] sm:%s48]
    %s51 = sshllo.u32 0, 1
    %52 = vst [vmem:[%s1] sm:%s51] %v50

// kernel: basic_block_forward.6
$region0: #{basic_block_forward.6}
  #allocation0 [shape = 'u32[]', space=smem, size = 0x4, offset = 0x4, fixed_abs, tag = 'smem constant byte address 0x4 - core index']
  #allocation1 [shape = 'u32[144,128]{1,0:T(1,128)}', space=vmem, size = 0x12000, scoped, tag = 'internal scratch']
  %s0 = inlined_call_operand.vmem [shape: bf16[2,32,128], index: 0, kind: input, shape index: {}]
  %s1 = inlined_call_operand.vmem [shape: f32[1,128], index: 1, kind: input, shape index: {}]
  %s2 = inlined_call_operand.vmem [shape: f32[1,128], index: 2, kind: input, shape index: {}]
  %s3 = inlined_call_operand.vmem [shape: f32[128,8], index: 3, kind: input, shape index: {}]
  %s4 = inlined_call_operand.vmem [shape: f32[8,128], index: 4, kind: input, shape index: {}]
  %s5 = inlined_call_operand.vmem [shape: bf16[2,32,128], index: 5, kind: output, shape index: {}]
  %s6 = sld [smem:[#allocation0]]
  $region53: #{basic_block_forward.6} parent=0
    _
  %s8 = ssub.s32 1, %s6
  %s9 = scalar_select 0, %s8, %s6
  loop: start=0, step=1, limit=4
  $region2: #{basic_block_forward.6} parent=0 // loop_pre_header
    _
  $region3: #{basic_block_forward.6} parent=0 // loop_header
    %s11 = sphi 0, %s15
    %p12 = scmp.ge.s32.totalorder %s11, 4
    %s21 = sphi 0, %s23
    %s24 = sphi 0, %s21
    %s25 = sphi 0, %s24
    %s41 = sphi 0, %s25
    %s45 = sphi 0, %s45
    %s47 = sphi 0, %s45
    %s48 = sphi 0, %s47
    %s62 = sphi 0, %s48
    %s66 = sphi 0, %s66
    %s68 = sphi 0, %s66
    %s69 = sphi 0, %s68
    %s83 = sphi 0, %s69
    %s87 = sphi 0, %s87
    %s89 = sphi 0, %s87
    %s90 = sphi 0, %s89
    %s104 = sphi 0, %s90
    %s108 = sphi 0, %s108
    %s110 = sphi 0, %s108
    %s111 = sphi 0, %s110
    %s125 = sphi 0, %s111
    %s131 = sphi 0, %s133
    %s134 = sphi 0, %s131
    %s135 = sphi 0, %s134
    %s151 = sphi 0, %s135
  $region4: #{basic_block_forward.6} parent=0 // loop_header_branch
    %14 = sbr.rel (%p12) target = $region8
  $region5: #{basic_block_forward.6} parent=0 // loop_body
    %s16 = ssub.s32 %s11, 1
    %s17 = ssub.s32 %s11, 2
    %s18 = sadd.s32 %s11, 1
    %s19 = ssub.s32 %s11, %s18
    %p20 = scmp.eq.s32.totalorder %s19, 0
    %s22 = sadd.s32 %s21, 1
    %s23 = scalar_select %p20, %s21, %s22
    %p26 = pneg %p20
    %p27 = scmp.eq.s32.totalorder %s11, 1
    %p28 = por %p26, %p27
    %p29 = scmp.ne.s32.totalorder %s21, %s24
    %p30 = scmp.eq.s32.totalorder %s11, 0
    %p31 = por %p29, %p30
    %p32 = scmp.ne.s32.totalorder %s21, %s24
    %p33 = scmp.eq.s32.totalorder %s16, 1
    %p34 = por %p32, %p33
    %p35 = scmp.ne.s32.totalorder %s24, %s25
    %p36 = scmp.eq.s32.totalorder %s16, 0
    %p37 = por %p35, %p36
    %p38 = scmp.ne.s32.totalorder %s24, %s25
    %p39 = scmp.eq.s32.totalorder %s17, 1
    %p40 = por %p38, %p39
    %p42 = scmp.ne.s32.totalorder %s25, %s41
    %p43 = scmp.eq.s32.totalorder %s17, 0
    %p44 = por %p42, %p43
    %s46 = sadd.s32 %s45, 1
    %p49 = scmp.eq.s32.totalorder %s11, 1
    %p50 = scmp.ne.s32.totalorder %s45, %s47
    %p51 = scmp.eq.s32.totalorder %s11, 0
    %p52 = por %p50, %p51
    %p53 = scmp.ne.s32.totalorder %s45, %s47
    %p54 = scmp.eq.s32.totalorder %s16, 1
    %p55 = por %p53, %p54
    %p56 = scmp.ne.s32.totalorder %s47, %s48
    %p57 = scmp.eq.s32.totalorder %s16, 0
    %p58 = por %p56, %p57
    %p59 = scmp.ne.s32.totalorder %s47, %s48
    %p60 = scmp.eq.s32.totalorder %s17, 1
    %p61 = por %p59, %p60
    %p63 = scmp.ne.s32.totalorder %s48, %s62
    %p64 = scmp.eq.s32.totalorder %s17, 0
    %p65 = por %p63, %p64
    %s67 = sadd.s32 %s66, 1
    %p70 = scmp.eq.s32.totalorder %s11, 1
    %p71 = scmp.ne.s32.totalorder %s66, %s68
    %p72 = scmp.eq.s32.totalorder %s11, 0
    %p73 = por %p71, %p72
    %p74 = scmp.ne.s32.totalorder %s66, %s68
    %p75 = scmp.eq.s32.totalorder %s16, 1
    %p76 = por %p74, %p75
    %p77 = scmp.ne.s32.totalorder %s68, %s69
    %p78 = scmp.eq.s32.totalorder %s16, 0
    %p79 = por %p77, %p78
    %p80 = scmp.ne.s32.totalorder %s68, %s69
    %p81 = scmp.eq.s32.totalorder %s17, 1
    %p82 = por %p80, %p81
    %p84 = scmp.ne.s32.totalorder %s69, %s83
    %p85 = scmp.eq.s32.totalorder %s17, 0
    %p86 = por %p84, %p85
    %s88 = sadd.s32 %s87, 1
    %p91 = scmp.eq.s32.totalorder %s11, 1
    %p92 = scmp.ne.s32.totalorder %s87, %s89
    %p93 = scmp.eq.s32.totalorder %s11, 0
    %p94 = por %p92, %p93
    %p95 = scmp.ne.s32.totalorder %s87, %s89
    %p96 = scmp.eq.s32.totalorder %s16, 1
    %p97 = por %p95, %p96
    %p98 = scmp.ne.s32.totalorder %s89, %s90
    %p99 = scmp.eq.s32.totalorder %s16, 0
    %p100 = por %p98, %p99
    %p101 = scmp.ne.s32.totalorder %s89, %s90
    %p102 = scmp.eq.s32.totalorder %s17, 1
    %p103 = por %p101, %p102
    %p105 = scmp.ne.s32.totalorder %s90, %s104
    %p106 = scmp.eq.s32.totalorder %s17, 0
    %p107 = por %p105, %p106
    %s109 = sadd.s32 %s108, 1
    %p112 = scmp.eq.s32.totalorder %s11, 1
    %p113 = scmp.ne.s32.totalorder %s108, %s110
    %p114 = scmp.eq.s32.totalorder %s11, 0
    %p115 = por %p113, %p114
    %p116 = scmp.ne.s32.totalorder %s108, %s110
    %p117 = scmp.eq.s32.totalorder %s16, 1
    %p118 = por %p116, %p117
    %p119 = scmp.ne.s32.totalorder %s110, %s111
    %p120 = scmp.eq.s32.totalorder %s16, 0
    %p121 = por %p119, %p120
    %p122 = scmp.ne.s32.totalorder %s110, %s111
    %p123 = scmp.eq.s32.totalorder %s17, 1
    %p124 = por %p122, %p123
    %p126 = scmp.ne.s32.totalorder %s111, %s125
    %p127 = scmp.eq.s32.totalorder %s17, 0
    %p128 = por %p126, %p127
    %s129 = ssub.s32 %s11, %s18
    %p130 = scmp.eq.s32.totalorder %s129, 0
    %s132 = sadd.s32 %s131, 1
    %s133 = scalar_select %p130, %s131, %s132
    %p136 = pneg %p130
    %p137 = scmp.eq.s32.totalorder %s11, 1
    %p138 = por %p136, %p137
    %p139 = scmp.ne.s32.totalorder %s131, %s134
    %p140 = scmp.eq.s32.totalorder %s11, 0
    %p141 = por %p139, %p140
    %p142 = scmp.ne.s32.totalorder %s131, %s134
    %p143 = scmp.eq.s32.totalorder %s16, 1
    %p144 = por %p142, %p143
    %p145 = scmp.ne.s32.totalorder %s134, %s135
    %p146 = scmp.eq.s32.totalorder %s16, 0
    %p147 = por %p145, %p146
    %p148 = scmp.ne.s32.totalorder %s134, %s135
    %p149 = scmp.eq.s32.totalorder %s17, 1
    %p150 = por %p148, %p149
    %p152 = scmp.ne.s32.totalorder %s135, %s151
    %p153 = scmp.eq.s32.totalorder %s17, 0
    %p154 = por %p152, %p153
    %p155 = scmp.le.s32.totalorder 1, %s11
    %p156 = scmp.lt.s32.totalorder %s11, 3
    %p157 = pnand %p155, %p156
    %p158 = pneg %p157
    // Predicated region
    $region9: #{basic_block_forward.6} parent=5 // pred_check
      _
    $region10: #{basic_block_forward.6} parent=5 // pred_check_branch
      %160 = sbr.rel (%p157) target = $region12
    $region11: #{basic_block_forward.6} parent=5 // pred_region
      %s161 = ssub.s32 %s11, 1
      // Predicated region
      $region13: #{basic_block_forward.6} parent=11 // pred_check
        %p162 = pneg %p58
      $region14: #{basic_block_forward.6} parent=11 // pred_check_branch
        %164 = sbr.rel (%p162) target = $region16
      $region15: #{basic_block_forward.6} parent=11 // pred_region
        _
      $region16: #{basic_block_forward.6} parent=11 // pred_fallthru
        _
      // Predicated region
      $region17: #{basic_block_forward.6} parent=11 // pred_check
        %p165 = pneg %p79
      $region18: #{basic_block_forward.6} parent=11 // pred_check_branch
        %167 = sbr.rel (%p165) target = $region20
      $region19: #{basic_block_forward.6} parent=11 // pred_region
        _
      $region20: #{basic_block_forward.6} parent=11 // pred_fallthru
        _
      // Predicated region
      $region21: #{basic_block_forward.6} parent=11 // pred_check
        %p168 = pneg %p100
      $region22: #{basic_block_forward.6} parent=11 // pred_check_branch
        %170 = sbr.rel (%p168) target = $region24
      $region23: #{basic_block_forward.6} parent=11 // pred_region
        _
      $region24: #{basic_block_forward.6} parent=11 // pred_fallthru
        _
      // Predicated region
      $region25: #{basic_block_forward.6} parent=11 // pred_check
        %p171 = pneg %p121
      $region26: #{basic_block_forward.6} parent=11 // pred_check_branch
        %173 = sbr.rel (%p171) target = $region28
      $region27: #{basic_block_forward.6} parent=11 // pred_region
        _
      $region28: #{basic_block_forward.6} parent=11 // pred_fallthru
        _
    $region12: #{basic_block_forward.6} parent=5 // pred_fallthru
      _
    %p174 = scmp.lt.s32.totalorder %s11, 2
    // Predicated region
    $region29: #{basic_block_forward.6} parent=5 // pred_check
      %p175 = pneg %p174
    $region30: #{basic_block_forward.6} parent=5 // pred_check_branch
      %177 = sbr.rel (%p175) target = $region32
    $region31: #{basic_block_forward.6} parent=5 // pred_region
      // Predicated region
      $region33: #{basic_block_forward.6} parent=31 // pred_check
        %p178 = pneg %p31
      $region34: #{basic_block_forward.6} parent=31 // pred_check_branch
        %180 = sbr.rel (%p178) target = $region36
      $region35: #{basic_block_forward.6} parent=31 // pred_region
        %p181 = scmp.lt.s32.totalorder %s11, 1
        %s182 = scalar_select %p181, %s11, 1
        %s183 = smul.addr %s182, 4
        %s184 = smul.addr %s183, 4
        %s185 = scalar_lea.vmem %s0, %s184
      $region36: #{basic_block_forward.6} parent=31 // pred_fallthru
        _
    $region32: #{basic_block_forward.6} parent=5 // pred_fallthru
      _
    %p186 = scmp.le.s32.totalorder 1, %s11
    %p187 = scmp.lt.s32.totalorder %s11, 3
    %p188 = pnand %p186, %p187
    %p189 = pneg %p188
    // Predicated region
    $region37: #{basic_block_forward.6} parent=5 // pred_check
      _
    $region38: #{basic_block_forward.6} parent=5 // pred_check_branch
      %191 = sbr.rel (%p188) target = $region40
    $region39: #{basic_block_forward.6} parent=5 // pred_region
      %s192 = ssub.s32 %s11, 1
      %p193 = scmp.lt.s32.totalorder %s16, 1
      %s194 = scalar_select %p193, %s16, 1
      %s195 = smul.addr %s194, 4
      %s196 = smul.addr %s195, 4
      %s197 = scalar_lea.vmem %s0, %s196
      %p198 = pneg %p37
      %p199 = pneg %p34
      %p200 = pneg %p58
      %p201 = pneg %p55
      %p202 = pneg %p79
      %p203 = pneg %p76
      %p204 = pneg %p100
      %p205 = pneg %p97
      %p206 = pneg %p121
      %p207 = pneg %p118
      %p208 = pneg %p147
      %p209 = pneg %p144
      %p210 = scmp.lt.s32.totalorder %s16, 1
      %s211 = scalar_select %p210, %s16, 1
      %s212 = smul.addr %s211, 4
      %s213 = smul.addr %s212, 4
      %s214 = scalar_lea.vmem %s5, %s213
      %p215 = scmp.lt.s32.totalorder %s16, 1
      %s216 = scalar_select %p215, %s16, 1
      %s217 = smul.addr %s216, 4
      %s218 = smul.addr %s217, 4
      %s219 = scalar_lea.vmem %s0, %s218
      %p220 = scmp.lt.s32.totalorder %s16, 1
      %s221 = scalar_select %p220, %s16, 1
      %s222 = smul.addr %s221, 4
      %s223 = smul.addr %s222, 4
      %s224 = scalar_lea.vmem %s5, %s223
      %v225 = vld [vmem:[%s219] sm:$0xf]
      %v226 = vld [vmem:[%s219 + $0x4] sm:$0xf]
      %v227 = vld [vmem:[%s219 + $0x8] sm:$0xf]
      %v228 = vld [vmem:[%s219 + $0xc] sm:$0xf]
      %v229 = vunpack.c.l.bf16 %v225
      %v230 = vunpack.c.l.bf16 %v226
      %v231 = vunpack.c.l.bf16 %v227
      %v232 = vunpack.c.l.bf16 %v228
      %v233 = vld [vmem:[%s3] sm:$0xff]
      %v234 = vld [vmem:[%s3 + $0x8] sm:$0xff]
      %v235 = vld [vmem:[%s3 + $0x10] sm:$0xff]
      %v236 = vld [vmem:[%s3 + $0x18] sm:$0xff]
      %v237 = vld [vmem:[%s3 + $0x20] sm:$0xff]
      %v238 = vld [vmem:[%s3 + $0x28] sm:$0xff]
      %v239 = vld [vmem:[%s3 + $0x30] sm:$0xff]
      %v240 = vld [vmem:[%s3 + $0x38] sm:$0xff]
      %v241 = vld [vmem:[%s3 + $0x40] sm:$0xff]
      %v242 = vld [vmem:[%s3 + $0x48] sm:$0xff]
      %v243 = vld [vmem:[%s3 + $0x50] sm:$0xff]
      %v244 = vld [vmem:[%s3 + $0x58] sm:$0xff]
      %v245 = vld [vmem:[%s3 + $0x60] sm:$0xff]
      %v246 = vld [vmem:[%s3 + $0x68] sm:$0xff]
      %v247 = vld [vmem:[%s3 + $0x70] sm:$0xff]
      %v248 = vld [vmem:[%s3 + $0x78] sm:$0xff]
      %v249 = vld [vmem:[%s4] sm:$0xff]
      %v250 = vadd.f32 %v229, %v230
      %v251 = vadd.f32 %v250, %v231
      %v252 = vadd.f32 %v251, %v232
      %v253 = vrot.slane %v252, 4
      %v254 = vadd.f32 %v252, %v253
      %v255 = vrot.slane %v254, 2
      %v256 = vadd.f32 %v254, %v255
      %v257 = vrot.slane %v256, 1
      %v258 = vadd.f32 %v256, %v257
      %259 = vmatprep.subr.mxu0 0.0
      %260 = vmatpush1.msra.mxu0 %v233
      %261 = vmatprep.subr.mxu0 0.0
      %262 = vmatpush1.msra.mxu0 %v234
      %263 = vmatprep.subr.mxu0 0.0
      %264 = vmatpush1.msra.mxu0 %v235
      %265 = vmatprep.subr.mxu0 0.0
      %266 = vmatpush1.msra.mxu0 %v236
      %267 = vmatprep.subr.mxu0 0.0
      %268 = vmatpush1.msra.mxu0 %v237
      %269 = vmatprep.subr.mxu0 0.0
      %270 = vmatpush1.msra.mxu0 %v238
      %271 = vmatprep.subr.mxu0 0.0
      %272 = vmatpush1.msra.mxu0 %v239
      %273 = vmatprep.subr.mxu0 0.0
      %274 = vmatpush1.msra.mxu0 %v240
      %275 = vmatprep.subr.mxu0 0.0
      %276 = vmatpush1.msra.mxu0 %v241
      %277 = vmatprep.subr.mxu0 0.0
      %278 = vmatpush1.msra.mxu0 %v242
      %279 = vmatprep.subr.mxu0 0.0
      %280 = vmatpush1.msra.mxu0 %v243
      %281 = vmatprep.subr.mxu0 0.0
      %282 = vmatpush1.msra.mxu0 %v244
      %283 = vmatprep.subr.mxu0 0.0
      %284 = vmatpush1.msra.mxu0 %v245
      %285 = vmatprep.subr.mxu0 0.0
      %286 = vmatpush1.msra.mxu0 %v246
      %287 = vmatprep.subr.mxu0 0.0
      %288 = vmatpush1.msra.mxu0 %v247
      %289 = vmatprep.subr.mxu0 0.0
      %290 = vmatpush1.msra.mxu0 %v248
      %291 = vmatprep.subr.mxu0 0.0
      %292 = vmatpush1.msra.mxu0 0.0
      %293 = vmatprep.subr.mxu0 0.0
      %294 = vmatpush1.msra.mxu0 0.0
      %295 = vmatprep.subr.mxu0 0.0
      %296 = vmatpush1.msra.mxu0 0.0
      %297 = vmatprep.subr.mxu0 0.0
      %298 = vmatpush1.msra.mxu0 0.0
      %299 = vmatprep.subr.mxu0 0.0
      %300 = vmatpush1.msra.mxu0 0.0
      %301 = vmatprep.subr.mxu0 0.0
      %302 = vmatpush1.msra.mxu0 0.0
      %303 = vmatprep.subr.mxu0 0.0
      %304 = vmatpush1.msra.mxu0 0.0
      %305 = vmatprep.subr.mxu0 0.0
      %306 = vmatpush1.msra.mxu0 0.0
      %307 = vmatprep.subr.mxu0 0.0
      %308 = vmatpush1.msra.mxu0 0.0
      %309 = vmatprep.subr.mxu0 0.0
      %310 = vmatpush1.msra.mxu0 0.0
      %311 = vmatprep.subr.mxu0 0.0
      %312 = vmatpush1.msra.mxu0 0.0
      %313 = vmatprep.subr.mxu0 0.0
      %314 = vmatpush1.msra.mxu0 0.0
      %315 = vmatprep.subr.mxu0 0.0
      %316 = vmatpush1.msra.mxu0 0.0
      %317 = vmatprep.subr.mxu0 0.0
      %318 = vmatpush1.msra.mxu0 0.0
      %319 = vmatprep.subr.mxu0 0.0
      %320 = vmatpush1.msra.mxu0 0.0
      %321 = vmatprep.subr.mxu0 0.0
      %322 = vmatpush1.msra.mxu0 0.0
      %323 = vmatprep.mubr.f32.mxu0 0.0
      %324 = vmatmul.mubr.f32.gmra.mrb[0].mxu0 %v258
      %v325 = vpop.f32.mrb[0].mxu0
      %v326 = vadd.f32 0.0, %v325
      %v327 = vpop.f32.mrb[0].mxu0
      %328 = vdwg.mxu0
      %v329 = vmul.f32 %v326, 0.001953125
      %vm330 = vcmask 64512
      %v332 = vsel %vm330, %v329, 0
      %334 = vmatprep.subr.mxu0 0.0
      %335 = vmatpush1.msra.mxu0 %v249
      %336 = vmatprep.subr.mxu0 0.0
      %337 = vmatpush1.msra.mxu0 0.0
      %338 = vmatprep.subr.mxu0 0.0
      %339 = vmatpush1.msra.mxu0 0.0
      %340 = vmatprep.subr.mxu0 0.0
      %341 = vmatpush1.msra.mxu0 0.0
      %342 = vmatprep.subr.mxu0 0.0
      %343 = vmatpush1.msra.mxu0 0.0
      %344 = vmatprep.subr.mxu0 0.0
      %345 = vmatpush1.msra.mxu0 0.0
      %346 = vmatprep.subr.mxu0 0.0
      %347 = vmatpush1.msra.mxu0 0.0
      %348 = vmatprep.subr.mxu0 0.0
      %349 = vmatpush1.msra.mxu0 0.0
      %350 = vmatprep.subr.mxu0 0.0
      %351 = vmatpush1.msra.mxu0 0.0
      %352 = vmatprep.subr.mxu0 0.0
      %353 = vmatpush1.msra.mxu0 0.0
      %354 = vmatprep.subr.mxu0 0.0
      %355 = vmatpush1.msra.mxu0 0.0
      %356 = vmatprep.subr.mxu0 0.0
      %357 = vmatpush1.msra.mxu0 0.0
      %358 = vmatprep.subr.mxu0 0.0
      %359 = vmatpush1.msra.mxu0 0.0
      %360 = vmatprep.subr.mxu0 0.0
      %361 = vmatpush1.msra.mxu0 0.0
      %362 = vmatprep.subr.mxu0 0.0
      %363 = vmatpush1.msra.mxu0 0.0
      %364 = vmatprep.subr.mxu0 0.0
      %365 = vmatpush1.msra.mxu0 0.0
      %366 = vmatprep.subr.mxu0 0.0
      %367 = vmatpush1.msra.mxu0 0.0
      %368 = vmatprep.subr.mxu0 0.0
      %369 = vmatpush1.msra.mxu0 0.0
      %370 = vmatprep.subr.mxu0 0.0
      %371 = vmatpush1.msra.mxu0 0.0
      %372 = vmatprep.subr.mxu0 0.0
      %373 = vmatpush1.msra.mxu0 0.0
      %374 = vmatprep.subr.mxu0 0.0
      %375 = vmatpush1.msra.mxu0 0.0
      %376 = vmatprep.subr.mxu0 0.0
      %377 = vmatpush1.msra.mxu0 0.0
      %378 = vmatprep.subr.mxu0 0.0
      %379 = vmatpush1.msra.mxu0 0.0
      %380 = vmatprep.subr.mxu0 0.0
      %381 = vmatpush1.msra.mxu0 0.0
      %382 = vmatprep.subr.mxu0 0.0
      %383 = vmatpush1.msra.mxu0 0.0
      %384 = vmatprep.subr.mxu0 0.0
      %385 = vmatpush1.msra.mxu0 0.0
      %386 = vmatprep.subr.mxu0 0.0
      %387 = vmatpush1.msra.mxu0 0.0
      %388 = vmatprep.subr.mxu0 0.0
      %389 = vmatpush1.msra.mxu0 0.0
      %390 = vmatprep.subr.mxu0 0.0
      %391 = vmatpush1.msra.mxu0 0.0
      %392 = vmatprep.subr.mxu0 0.0
      %393 = vmatpush1.msra.mxu0 0.0
      %394 = vmatprep.subr.mxu0 0.0
      %395 = vmatpush1.msra.mxu0 0.0
      %396 = vmatprep.subr.mxu0 0.0
      %397 = vmatpush1.msra.mxu0 0.0
      %398 = vmatprep.mubr.f32.mxu0 0.0
      %399 = vmatmul.mubr.f32.gmra.mrb[0].mxu0 %v332
      %v400 = vpop.f32.mrb[0].mxu0
      %v401 = vadd.f32 0.0, %v400
      %v402 = vpop.f32.mrb[0].mxu0
      %403 = vdwg.mxu0
      %v404 = vlaneseq
      %v405 = vshrl.u32 %v404, 7
      %v406 = vsub.s32 0, %v405
      %v407 = vrot.slane %v401, %v406
      %v408 = vsub.f32 %v229, %v407
      %v409 = vsub.f32 %v230, %v407
      %v410 = vsub.f32 %v231, %v407
      %v411 = vsub.f32 %v232, %v407
      %v412 = vmul.f32 %v408, %v408
      %v413 = vmul.f32 %v409, %v409
      %v414 = vmul.f32 %v410, %v410
      %v415 = vmul.f32 %v411, %v411
      %v416 = vadd.f32 %v412, %v413
      %v417 = vadd.f32 %v416, %v414
      %v418 = vadd.f32 %v417, %v415
      %v419 = vrot.slane %v418, 4
      %v420 = vadd.f32 %v418, %v419
      %v421 = vrot.slane %v420, 2
      %v422 = vadd.f32 %v420, %v421
      %v423 = vrot.slane %v422, 1
      %v424 = vadd.f32 %v422, %v423
      %425 = vmatprep.subr.mxu0 0.0
      %426 = vmatpush1.msra.mxu0 %v233
      %427 = vmatprep.subr.mxu0 0.0
      %428 = vmatpush1.msra.mxu0 %v234
      %429 = vmatprep.subr.mxu0 0.0
      %430 = vmatpush1.msra.mxu0 %v235
      %431 = vmatprep.subr.mxu0 0.0
      %432 = vmatpush1.msra.mxu0 %v236
      %433 = vmatprep.subr.mxu0 0.0
      %434 = vmatpush1.msra.mxu0 %v237
      %435 = vmatprep.subr.mxu0 0.0
      %436 = vmatpush1.msra.mxu0 %v238
      %437 = vmatprep.subr.mxu0 0.0
      %438 = vmatpush1.msra.mxu0 %v239
      %439 = vmatprep.subr.mxu0 0.0
      %440 = vmatpush1.msra.mxu0 %v240
      %441 = vmatprep.subr.mxu0 0.0
      %442 = vmatpush1.msra.mxu0 %v241
      %443 = vmatprep.subr.mxu0 0.0
      %444 = vmatpush1.msra.mxu0 %v242
      %445 = vmatprep.subr.mxu0 0.0
      %446 = vmatpush1.msra.mxu0 %v243
      %447 = vmatprep.subr.mxu0 0.0
      %448 = vmatpush1.msra.mxu0 %v244
      %449 = vmatprep.subr.mxu0 0.0
      %450 = vmatpush1.msra.mxu0 %v245
      %451 = vmatprep.subr.mxu0 0.0
      %452 = vmatpush1.msra.mxu0 %v246
      %453 = vmatprep.subr.mxu0 0.0
      %454 = vmatpush1.msra.mxu0 %v247
      %455 = vmatprep.subr.mxu0 0.0
      %456 = vmatpush1.msra.mxu0 %v248
      %457 = vmatprep.subr.mxu0 0.0
      %458 = vmatpush1.msra.mxu0 0.0
      %459 = vmatprep.subr.mxu0 0.0
      %460 = vmatpush1.msra.mxu0 0.0
      %461 = vmatprep.subr.mxu0 0.0
      %462 = vmatpush1.msra.mxu0 0.0
      %463 = vmatprep.subr.mxu0 0.0
      %464 = vmatpush1.msra.mxu0 0.0
      %465 = vmatprep.subr.mxu0 0.0
      %466 = vmatpush1.msra.mxu0 0.0
      %467 = vmatprep.subr.mxu0 0.0
      %468 = vmatpush1.msra.mxu0 0.0
      %469 = vmatprep.subr.mxu0 0.0
      %470 = vmatpush1.msra.mxu0 0.0
      %471 = vmatprep.subr.mxu0 0.0
      %472 = vmatpush1.msra.mxu0 0.0
      %473 = vmatprep.subr.mxu0 0.0
      %474 = vmatpush1.msra.mxu0 0.0
      %475 = vmatprep.subr.mxu0 0.0
      %476 = vmatpush1.msra.mxu0 0.0
      %477 = vmatprep.subr.mxu0 0.0
      %478 = vmatpush1.msra.mxu0 0.0
      %479 = vmatprep.subr.mxu0 0.0
      %480 = vmatpush1.msra.mxu0 0.0
      %481 = vmatprep.subr.mxu0 0.0
      %482 = vmatpush1.msra.mxu0 0.0
      %483 = vmatprep.subr.mxu0 0.0
      %484 = vmatpush1.msra.mxu0 0.0
      %485 = vmatprep.subr.mxu0 0.0
      %486 = vmatpush1.msra.mxu0 0.0
      %487 = vmatprep.subr.mxu0 0.0
      %488 = vmatpush1.msra.mxu0 0.0
      %489 = vmatprep.mubr.f32.mxu0 0.0
      %490 = vmatmul.mubr.f32.gmra.mrb[0].mxu0 %v424
      %v491 = vpop.f32.mrb[0].mxu0
      %v492 = vadd.f32 0.0, %v491
      %v493 = vpop.f32.mrb[0].mxu0
      %494 = vdwg.mxu0
      %v495 = vmul.f32 %v492, 0.001953125
      %v496 = vadd.f32 %v495, 1e-05
      %v497 = vrsqrt.pop %v496
      %v499 = vsel %vm330, %v497, 0
      %501 = vmatprep.subr.mxu0 0.0
      %502 = vmatpush1.msra.mxu0 %v249
      %503 = vmatprep.subr.mxu0 0.0
      %504 = vmatpush1.msra.mxu0 0.0
      %505 = vmatprep.subr.mxu0 0.0
      %506 = vmatpush1.msra.mxu0 0.0
      %507 = vmatprep.subr.mxu0 0.0
      %508 = vmatpush1.msra.mxu0 0.0
      %509 = vmatprep.subr.mxu0 0.0
      %510 = vmatpush1.msra.mxu0 0.0
      %511 = vmatprep.subr.mxu0 0.0
      %512 = vmatpush1.msra.mxu0 0.0
      %513 = vmatprep.subr.mxu0 0.0
      %514 = vmatpush1.msra.mxu0 0.0
      %515 = vmatprep.subr.mxu0 0.0
      %516 = vmatpush1.msra.mxu0 0.0
      %517 = vmatprep.subr.mxu0 0.0
      %518 = vmatpush1.msra.mxu0 0.0
      %519 = vmatprep.subr.mxu0 0.0
      %520 = vmatpush1.msra.mxu0 0.0
      %521 = vmatprep.subr.mxu0 0.0
      %522 = vmatpush1.msra.mxu0 0.0
      %523 = vmatprep.subr.mxu0 0.0
      %524 = vmatpush1.msra.mxu0 0.0
      %525 = vmatprep.subr.mxu0 0.0
      %526 = vmatpush1.msra.mxu0 0.0
      %527 = vmatprep.subr.mxu0 0.0
      %528 = vmatpush1.msra.mxu0 0.0
      %529 = vmatprep.subr.mxu0 0.0
      %530 = vmatpush1.msra.mxu0 0.0
      %531 = vmatprep.subr.mxu0 0.0
      %532 = vmatpush1.msra.mxu0 0.0
      %533 = vmatprep.subr.mxu0 0.0
      %534 = vmatpush1.msra.mxu0 0.0
      %535 = vmatprep.subr.mxu0 0.0
      %536 = vmatpush1.msra.mxu0 0.0
      %537 = vmatprep.subr.mxu0 0.0
      %538 = vmatpush1.msra.mxu0 0.0
      %539 = vmatprep.subr.mxu0 0.0
      %540 = vmatpush1.msra.mxu0 0.0
      %541 = vmatprep.subr.mxu0 0.0
      %542 = vmatpush1.msra.mxu0 0.0
      %543 = vmatprep.subr.mxu0 0.0
      %544 = vmatpush1.msra.mxu0 0.0
      %545 = vmatprep.subr.mxu0 0.0
      %546 = vmatpush1.msra.mxu0 0.0
      %547 = vmatprep.subr.mxu0 0.0
      %548 = vmatpush1.msra.mxu0 0.0
      %549 = vmatprep.subr.mxu0 0.0
      %550 = vmatpush1.msra.mxu0 0.0
      %551 = vmatprep.subr.mxu0 0.0
      %552 = vmatpush1.msra.mxu0 0.0
      %553 = vmatprep.subr.mxu0 0.0
      %554 = vmatpush1.msra.mxu0 0.0
      %555 = vmatprep.subr.mxu0 0.0
      %556 = vmatpush1.msra.mxu0 0.0
      %557 = vmatprep.subr.mxu0 0.0
      %558 = vmatpush1.msra.mxu0 0.0
      %559 = vmatprep.subr.mxu0 0.0
      %560 = vmatpush1.msra.mxu0 0.0
      %561 = vmatprep.subr.mxu0 0.0
      %562 = vmatpush1.msra.mxu0 0.0
      %563 = vmatprep.subr.mxu0 0.0
      %564 = vmatpush1.msra.mxu0 0.0
      %565 = vmatprep.mubr.f32.mxu0 0.0
      %566 = vmatmul.mubr.f32.gmra.mrb[0].mxu0 %v499
      %v567 = vpop.f32.mrb[0].mxu0
      %v568 = vadd.f32 0.0, %v567
      %v569 = vpop.f32.mrb[0].mxu0
      %570 = vdwg.mxu0
      %v571 = vld [vmem:[%s1] sm:$0x1]
      %v572 = vmul.f32 %v568, %v571
      %v573 = vlaneseq
      %v574 = vshrl.u32 %v573, 7
      %v575 = vsub.s32 0, %v574
      %v576 = vrot.slane %v572, %v575
      %v577 = vmul.f32 %v408, %v576
      %v578 = vmul.f32 %v409, %v576
      %v579 = vmul.f32 %v410, %v576
      %v580 = vmul.f32 %v411, %v576
      %v581 = vld [vmem:[%s2] sm:$0x1]
      %v583 = vlaneseq
      %v584 = vshrl.u32 %v583, 7
      %v585 = vsub.s32 0, %v584
      %v586 = vrot.slane %v581, %v585
      %v588 = vadd.f32 %v577, %v586
      %v589 = vadd.f32 %v578, %v586
      %v590 = vadd.f32 %v579, %v586
      %v591 = vadd.f32 %v580, %v586
      %v592 = vmax.f32 %v588, 0.0
      %v593 = vmax.f32 %v589, 0.0
      %v594 = vmax.f32 %v590, 0.0
      %v595 = vmax.f32 %v591, 0.0
      %v596 = vpack.c.bf16 %v593, %v592
      %v597 = vpack.c.bf16 %v595, %v594
      %v600 = vunpack.c.l.b16 %v596
      %v601 = vunpack.c.h.b16 %v596
      %v602 = vunpack.c.l.b16 %v597
      %v603 = vunpack.c.h.b16 %v597
      %v604 = vpack.c.b16 %v600, %v600
      %v605 = vpack.c.b16 %v601, %v601
      %v606 = vpack.c.b16 %v602, %v602
      %v607 = vpack.c.b16 %v603, %v603
      %612 = vst [vmem:[%s224] sm:$0xf] %v604
      %613 = vst [vmem:[%s224 + $0x4] sm:$0xf] %v605
      %614 = vst [vmem:[%s224 + $0x8] sm:$0xf] %v606
      %615 = vst [vmem:[%s224 + $0xc] sm:$0xf] %v607
      %p616 = scmp.lt.s32.totalorder %s16, 1
      %s617 = scalar_select %p616, %s16, 1
      %s618 = smul.addr %s617, 4
      %s619 = smul.addr %s618, 4
      %s620 = scalar_lea.vmem %s5, %s619
      // Predicated region
      $region41: #{basic_block_forward.6} parent=39 // pred_check
        %p621 = pneg %p144
      $region42: #{basic_block_forward.6} parent=39 // pred_check_branch
        %623 = sbr.rel (%p621) target = $region44
      $region43: #{basic_block_forward.6} parent=39 // pred_region
        _
      $region44: #{basic_block_forward.6} parent=39 // pred_fallthru
        _
    $region40: #{basic_block_forward.6} parent=5 // pred_fallthru
      _
    %p624 = scmp.le.s32.totalorder 2, %s11
    // Predicated region
    $region45: #{basic_block_forward.6} parent=5 // pred_check
      %p625 = pneg %p624
    $region46: #{basic_block_forward.6} parent=5 // pred_check_branch
      %627 = sbr.rel (%p625) target = $region48
    $region47: #{basic_block_forward.6} parent=5 // pred_region
      %s628 = ssub.s32 %s11, 2
      // Predicated region
      $region49: #{basic_block_forward.6} parent=47 // pred_check
        %p629 = pneg %p150
      $region50: #{basic_block_forward.6} parent=47 // pred_check_branch
        %631 = sbr.rel (%p629) target = $region52
      $region51: #{basic_block_forward.6} parent=47 // pred_region
        %p632 = scmp.lt.s32.totalorder %s17, 1
        %s633 = scalar_select %p632, %s17, 1
        %s634 = smul.addr %s633, 4
        %s635 = smul.addr %s634, 4
        %s636 = scalar_lea.vmem %s5, %s635
      $region52: #{basic_block_forward.6} parent=47 // pred_fallthru
        _
    $region48: #{basic_block_forward.6} parent=5 // pred_fallthru
      _
  $region6: #{basic_block_forward.6} parent=0 // loop_footer
    %s15 = sadd.s32 1, %s11
  $region7: #{basic_block_forward.6} parent=0 // loop_footer_branch
    %10 = sbr.rel target = $region3
  $region8: #{basic_block_forward.6} parent=0 // loop_exit
    _

// kernel: basic_block_forward.8
$region0: #{basic_block_forward.8}
  #allocation0 [shape = 'u32[]', space=smem, size = 0x4, offset = 0x4, fixed_abs, tag = 'smem constant byte address 0x4 - core index']
  #allocation1 [shape = 'u32[144,128]{1,0:T(1,128)}', space=vmem, size = 0x12000, scoped, tag = 'internal scratch']
  %s0 = inlined_call_operand.vmem [shape: bf16[2,32,128], index: 0, kind: input, shape index: {}]
  %s1 = inlined_call_operand.vmem [shape: f32[1,128], index: 1, kind: input, shape index: {}]
  %s2 = inlined_call_operand.vmem [shape: f32[1,128], index: 2, kind: input, shape index: {}]
  %s3 = inlined_call_operand.vmem [shape: f32[128,8], index: 3, kind: input, shape index: {}]
  %s4 = inlined_call_operand.vmem [shape: f32[8,128], index: 4, kind: input, shape index: {}]
  %s5 = inlined_call_operand.vmem [shape: bf16[2,32,128], index: 5, kind: output, shape index: {}]
  %s6 = sld [smem:[#allocation0]]
  $region53: #{basic_block_forward.8} parent=0
    _
  %s8 = ssub.s32 1, %s6
  %s9 = scalar_select 0, %s8, %s6
  loop: start=0, step=1, limit=4
  $region2: #{basic_block_forward.8} parent=0 // loop_pre_header
    _
  $region3: #{basic_block_forward.8} parent=0 // loop_header
    %s11 = sphi 0, %s15
    %p12 = scmp.ge.s32.totalorder %s11, 4
    %s21 = sphi 0, %s23
    %s24 = sphi 0, %s21
    %s25 = sphi 0, %s24
    %s41 = sphi 0, %s25
    %s45 = sphi 0, %s45
    %s47 = sphi 0, %s45
    %s48 = sphi 0, %s47
    %s62 = sphi 0, %s48
    %s66 = sphi 0, %s66
    %s68 = sphi 0, %s66
    %s69 = sphi 0, %s68
    %s83 = sphi 0, %s69
    %s87 = sphi 0, %s87
    %s89 = sphi 0, %s87
    %s90 = sphi 0, %s89
    %s104 = sphi 0, %s90
    %s108 = sphi 0, %s108
    %s110 = sphi 0, %s108
    %s111 = sphi 0, %s110
    %s125 = sphi 0, %s111
    %s131 = sphi 0, %s133
    %s134 = sphi 0, %s131
    %s135 = sphi 0, %s134
    %s151 = sphi 0, %s135
  $region4: #{basic_block_forward.8} parent=0 // loop_header_branch
    %14 = sbr.rel (%p12) target = $region8
  $region5: #{basic_block_forward.8} parent=0 // loop_body
    %s16 = ssub.s32 %s11, 1
    %s17 = ssub.s32 %s11, 2
    %s18 = sadd.s32 %s11, 1
    %s19 = ssub.s32 %s11, %s18
    %p20 = scmp.eq.s32.totalorder %s19, 0
    %s22 = sadd.s32 %s21, 1
    %s23 = scalar_select %p20, %s21, %s22
    %p26 = pneg %p20
    %p27 = scmp.eq.s32.totalorder %s11, 1
    %p28 = por %p26, %p27
    %p29 = scmp.ne.s32.totalorder %s21, %s24
    %p30 = scmp.eq.s32.totalorder %s11, 0
    %p31 = por %p29, %p30
    %p32 = scmp.ne.s32.totalorder %s21, %s24
    %p33 = scmp.eq.s32.totalorder %s16, 1
    %p34 = por %p32, %p33
    %p35 = scmp.ne.s32.totalorder %s24, %s25
    %p36 = scmp.eq.s32.totalorder %s16, 0
    %p37 = por %p35, %p36
    %p38 = scmp.ne.s32.totalorder %s24, %s25
    %p39 = scmp.eq.s32.totalorder %s17, 1
    %p40 = por %p38, %p39
    %p42 = scmp.ne.s32.totalorder %s25, %s41
    %p43 = scmp.eq.s32.totalorder %s17, 0
    %p44 = por %p42, %p43
    %s46 = sadd.s32 %s45, 1
    %p49 = scmp.eq.s32.totalorder %s11, 1
    %p50 = scmp.ne.s32.totalorder %s45, %s47
    %p51 = scmp.eq.s32.totalorder %s11, 0
    %p52 = por %p50, %p51
    %p53 = scmp.ne.s32.totalorder %s45, %s47
    %p54 = scmp.eq.s32.totalorder %s16, 1
    %p55 = por %p53, %p54
    %p56 = scmp.ne.s32.totalorder %s47, %s48
    %p57 = scmp.eq.s32.totalorder %s16, 0
    %p58 = por %p56, %p57
    %p59 = scmp.ne.s32.totalorder %s47, %s48
    %p60 = scmp.eq.s32.totalorder %s17, 1
    %p61 = por %p59, %p60
    %p63 = scmp.ne.s32.totalorder %s48, %s62
    %p64 = scmp.eq.s32.totalorder %s17, 0
    %p65 = por %p63, %p64
    %s67 = sadd.s32 %s66, 1
    %p70 = scmp.eq.s32.totalorder %s11, 1
    %p71 = scmp.ne.s32.totalorder %s66, %s68
    %p72 = scmp.eq.s32.totalorder %s11, 0
    %p73 = por %p71, %p72
    %p74 = scmp.ne.s32.totalorder %s66, %s68
    %p75 = scmp.eq.s32.totalorder %s16, 1
    %p76 = por %p74, %p75
    %p77 = scmp.ne.s32.totalorder %s68, %s69
    %p78 = scmp.eq.s32.totalorder %s16, 0
    %p79 = por %p77, %p78
    %p80 = scmp.ne.s32.totalorder %s68, %s69
    %p81 = scmp.eq.s32.totalorder %s17, 1
    %p82 = por %p80, %p81
    %p84 = scmp.ne.s32.totalorder %s69, %s83
    %p85 = scmp.eq.s32.totalorder %s17, 0
    %p86 = por %p84, %p85
    %s88 = sadd.s32 %s87, 1
    %p91 = scmp.eq.s32.totalorder %s11, 1
    %p92 = scmp.ne.s32.totalorder %s87, %s89
    %p93 = scmp.eq.s32.totalorder %s11, 0
    %p94 = por %p92, %p93
    %p95 = scmp.ne.s32.totalorder %s87, %s89
    %p96 = scmp.eq.s32.totalorder %s16, 1
    %p97 = por %p95, %p96
    %p98 = scmp.ne.s32.totalorder %s89, %s90
    %p99 = scmp.eq.s32.totalorder %s16, 0
    %p100 = por %p98, %p99
    %p101 = scmp.ne.s32.totalorder %s89, %s90
    %p102 = scmp.eq.s32.totalorder %s17, 1
    %p103 = por %p101, %p102
    %p105 = scmp.ne.s32.totalorder %s90, %s104
    %p106 = scmp.eq.s32.totalorder %s17, 0
    %p107 = por %p105, %p106
    %s109 = sadd.s32 %s108, 1
    %p112 = scmp.eq.s32.totalorder %s11, 1
    %p113 = scmp.ne.s32.totalorder %s108, %s110
    %p114 = scmp.eq.s32.totalorder %s11, 0
    %p115 = por %p113, %p114
    %p116 = scmp.ne.s32.totalorder %s108, %s110
    %p117 = scmp.eq.s32.totalorder %s16, 1
    %p118 = por %p116, %p117
    %p119 = scmp.ne.s32.totalorder %s110, %s111
    %p120 = scmp.eq.s32.totalorder %s16, 0
    %p121 = por %p119, %p120
    %p122 = scmp.ne.s32.totalorder %s110, %s111
    %p123 = scmp.eq.s32.totalorder %s17, 1
    %p124 = por %p122, %p123
    %p126 = scmp.ne.s32.totalorder %s111, %s125
    %p127 = scmp.eq.s32.totalorder %s17, 0
    %p128 = por %p126, %p127
    %s129 = ssub.s32 %s11, %s18
    %p130 = scmp.eq.s32.totalorder %s129, 0
    %s132 = sadd.s32 %s131, 1
    %s133 = scalar_select %p130, %s131, %s132
    %p136 = pneg %p130
    %p137 = scmp.eq.s32.totalorder %s11, 1
    %p138 = por %p136, %p137
    %p139 = scmp.ne.s32.totalorder %s131, %s134
    %p140 = scmp.eq.s32.totalorder %s11, 0
    %p141 = por %p139, %p140
    %p142 = scmp.ne.s32.totalorder %s131, %s134
    %p143 = scmp.eq.s32.totalorder %s16, 1
    %p144 = por %p142, %p143
    %p145 = scmp.ne.s32.totalorder %s134, %s135
    %p146 = scmp.eq.s32.totalorder %s16, 0
    %p147 = por %p145, %p146
    %p148 = scmp.ne.s32.totalorder %s134, %s135
    %p149 = scmp.eq.s32.totalorder %s17, 1
    %p150 = por %p148, %p149
    %p152 = scmp.ne.s32.totalorder %s135, %s151
    %p153 = scmp.eq.s32.totalorder %s17, 0
    %p154 = por %p152, %p153
    %p155 = scmp.le.s32.totalorder 1, %s11
    %p156 = scmp.lt.s32.totalorder %s11, 3
    %p157 = pnand %p155, %p156
    %p158 = pneg %p157
    // Predicated region
    $region9: #{basic_block_forward.8} parent=5 // pred_check
      _
    $region10: #{basic_block_forward.8} parent=5 // pred_check_branch
      %160 = sbr.rel (%p157) target = $region12
    $region11: #{basic_block_forward.8} parent=5 // pred_region
      %s161 = ssub.s32 %s11, 1
      // Predicated region
      $region13: #{basic_block_forward.8} parent=11 // pred_check
        %p162 = pneg %p58
      $region14: #{basic_block_forward.8} parent=11 // pred_check_branch
        %164 = sbr.rel (%p162) target = $region16
      $region15: #{basic_block_forward.8} parent=11 // pred_region
        _
      $region16: #{basic_block_forward.8} parent=11 // pred_fallthru
        _
      // Predicated region
      $region17: #{basic_block_forward.8} parent=11 // pred_check
        %p165 = pneg %p79
      $region18: #{basic_block_forward.8} parent=11 // pred_check_branch
        %167 = sbr.rel (%p165) target = $region20
      $region19: #{basic_block_forward.8} parent=11 // pred_region
        _
      $region20: #{basic_block_forward.8} parent=11 // pred_fallthru
        _
      // Predicated region
      $region21: #{basic_block_forward.8} parent=11 // pred_check
        %p168 = pneg %p100
      $region22: #{basic_block_forward.8} parent=11 // pred_check_branch
        %170 = sbr.rel (%p168) target = $region24
      $region23: #{basic_block_forward.8} parent=11 // pred_region
        _
      $region24: #{basic_block_forward.8} parent=11 // pred_fallthru
        _
      // Predicated region
      $region25: #{basic_block_forward.8} parent=11 // pred_check
        %p171 = pneg %p121
      $region26: #{basic_block_forward.8} parent=11 // pred_check_branch
        %173 = sbr.rel (%p171) target = $region28
      $region27: #{basic_block_forward.8} parent=11 // pred_region
        _
      $region28: #{basic_block_forward.8} parent=11 // pred_fallthru
        _
    $region12: #{basic_block_forward.8} parent=5 // pred_fallthru
      _
    %p174 = scmp.lt.s32.totalorder %s11, 2
    // Predicated region
    $region29: #{basic_block_forward.8} parent=5 // pred_check
      %p175 = pneg %p174
    $region30: #{basic_block_forward.8} parent=5 // pred_check_branch
      %177 = sbr.rel (%p175) target = $region32
    $region31: #{basic_block_forward.8} parent=5 // pred_region
      // Predicated region
      $region33: #{basic_block_forward.8} parent=31 // pred_check
        %p178 = pneg %p31
      $region34: #{basic_block_forward.8} parent=31 // pred_check_branch
        %180 = sbr.rel (%p178) target = $region36
      $region35: #{basic_block_forward.8} parent=31 // pred_region
        %p181 = scmp.lt.s32.totalorder %s11, 1
        %s182 = scalar_select %p181, %s11, 1
        %s183 = smul.addr %s182, 4
        %s184 = smul.addr %s183, 4
        %s185 = scalar_lea.vmem %s0, %s184
      $region36: #{basic_block_forward.8} parent=31 // pred_fallthru
        _
    $region32: #{basic_block_forward.8} parent=5 // pred_fallthru
      _
    %p186 = scmp.le.s32.totalorder 1, %s11
    %p187 = scmp.lt.s32.totalorder %s11, 3
    %p188 = pnand %p186, %p187
    %p189 = pneg %p188
    // Predicated region
    $region37: #{basic_block_forward.8} parent=5 // pred_check
      _
    $region38: #{basic_block_forward.8} parent=5 // pred_check_branch
      %191 = sbr.rel (%p188) target = $region40
    $region39: #{basic_block_forward.8} parent=5 // pred_region
      %s192 = ssub.s32 %s11, 1
      %p193 = scmp.lt.s32.totalorder %s16, 1
      %s194 = scalar_select %p193, %s16, 1
      %s195 = smul.addr %s194, 4
      %s196 = smul.addr %s195, 4
      %s197 = scalar_lea.vmem %s0, %s196
      %p198 = pneg %p37
      %p199 = pneg %p34
      %p200 = pneg %p58
      %p201 = pneg %p55
      %p202 = pneg %p79
      %p203 = pneg %p76
      %p204 = pneg %p100
      %p205 = pneg %p97
      %p206 = pneg %p121
      %p207 = pneg %p118
      %p208 = pneg %p147
      %p209 = pneg %p144
      %p210 = scmp.lt.s32.totalorder %s16, 1
      %s211 = scalar_select %p210, %s16, 1
      %s212 = smul.addr %s211, 4
      %s213 = smul.addr %s212, 4
      %s214 = scalar_lea.vmem %s5, %s213
      %p215 = scmp.lt.s32.totalorder %s16, 1
      %s216 = scalar_select %p215, %s16, 1
      %s217 = smul.addr %s216, 4
      %s218 = smul.addr %s217, 4
      %s219 = scalar_lea.vmem %s0, %s218
      %p220 = scmp.lt.s32.totalorder %s16, 1
      %s221 = scalar_select %p220, %s16, 1
      %s222 = smul.addr %s221, 4
      %s223 = smul.addr %s222, 4
      %s224 = scalar_lea.vmem %s5, %s223
      %v225 = vld [vmem:[%s219] sm:$0xf]
      %v226 = vld [vmem:[%s219 + $0x4] sm:$0xf]
      %v227 = vld [vmem:[%s219 + $0x8] sm:$0xf]
      %v228 = vld [vmem:[%s219 + $0xc] sm:$0xf]
      %v229 = vunpack.c.l.bf16 %v225
      %v230 = vunpack.c.l.bf16 %v226
      %v231 = vunpack.c.l.bf16 %v227
      %v232 = vunpack.c.l.bf16 %v228
      %v233 = vld [vmem:[%s3] sm:$0xff]
      %v234 = vld [vmem:[%s3 + $0x8] sm:$0xff]
      %v235 = vld [vmem:[%s3 + $0x10] sm:$0xff]
      %v236 = vld [vmem:[%s3 + $0x18] sm:$0xff]
      %v237 = vld [vmem:[%s3 + $0x20] sm:$0xff]
      %v238 = vld [vmem:[%s3 + $0x28] sm:$0xff]
      %v239 = vld [vmem:[%s3 + $0x30] sm:$0xff]
      %v240 = vld [vmem:[%s3 + $0x38] sm:$0xff]
      %v241 = vld [vmem:[%s3 + $0x40] sm:$0xff]
      %v242 = vld [vmem:[%s3 + $0x48] sm:$0xff]
      %v243 = vld [vmem:[%s3 + $0x50] sm:$0xff]
      %v244 = vld [vmem:[%s3 + $0x58] sm:$0xff]
      %v245 = vld [vmem:[%s3 + $0x60] sm:$0xff]
      %v246 = vld [vmem:[%s3 + $0x68] sm:$0xff]
      %v247 = vld [vmem:[%s3 + $0x70] sm:$0xff]
      %v248 = vld [vmem:[%s3 + $0x78] sm:$0xff]
      %v249 = vld [vmem:[%s4] sm:$0xff]
      %v250 = vadd.f32 %v229, %v230
      %v251 = vadd.f32 %v250, %v231
      %v252 = vadd.f32 %v251, %v232
      %v253 = vrot.slane %v252, 4
      %v254 = vadd.f32 %v252, %v253
      %v255 = vrot.slane %v254, 2
      %v256 = vadd.f32 %v254, %v255
      %v257 = vrot.slane %v256, 1
      %v258 = vadd.f32 %v256, %v257
      %259 = vmatprep.subr.mxu0 0.0
      %260 = vmatpush1.msra.mxu0 %v233
      %261 = vmatprep.subr.mxu0 0.0
      %262 = vmatpush1.msra.mxu0 %v234
      %263 = vmatprep.subr.mxu0 0.0
      %264 = vmatpush1.msra.mxu0 %v235
      %265 = vmatprep.subr.mxu0 0.0
      %266 = vmatpush1.msra.mxu0 %v236
      %267 = vmatprep.subr.mxu0 0.0
      %268 = vmatpush1.msra.mxu0 %v237
      %269 = vmatprep.subr.mxu0 0.0
      %270 = vmatpush1.msra.mxu0 %v238
      %271 = vmatprep.subr.mxu0 0.0
      %272 = vmatpush1.msra.mxu0 %v239
      %273 = vmatprep.subr.mxu0 0.0
      %274 = vmatpush1.msra.mxu0 %v240
      %275 = vmatprep.subr.mxu0 0.0
      %276 = vmatpush1.msra.mxu0 %v241
      %277 = vmatprep.subr.mxu0 0.0
      %278 = vmatpush1.msra.mxu0 %v242
      %279 = vmatprep.subr.mxu0 0.0
      %280 = vmatpush1.msra.mxu0 %v243
      %281 = vmatprep.subr.mxu0 0.0
      %282 = vmatpush1.msra.mxu0 %v244
      %283 = vmatprep.subr.mxu0 0.0
      %284 = vmatpush1.msra.mxu0 %v245
      %285 = vmatprep.subr.mxu0 0.0
      %286 = vmatpush1.msra.mxu0 %v246
      %287 = vmatprep.subr.mxu0 0.0
      %288 = vmatpush1.msra.mxu0 %v247
      %289 = vmatprep.subr.mxu0 0.0
      %290 = vmatpush1.msra.mxu0 %v248
      %291 = vmatprep.subr.mxu0 0.0
      %292 = vmatpush1.msra.mxu0 0.0
      %293 = vmatprep.subr.mxu0 0.0
      %294 = vmatpush1.msra.mxu0 0.0
      %295 = vmatprep.subr.mxu0 0.0
      %296 = vmatpush1.msra.mxu0 0.0
      %297 = vmatprep.subr.mxu0 0.0
      %298 = vmatpush1.msra.mxu0 0.0
      %299 = vmatprep.subr.mxu0 0.0
      %300 = vmatpush1.msra.mxu0 0.0
      %301 = vmatprep.subr.mxu0 0.0
      %302 = vmatpush1.msra.mxu0 0.0
      %303 = vmatprep.subr.mxu0 0.0
      %304 = vmatpush1.msra.mxu0 0.0
      %305 = vmatprep.subr.mxu0 0.0
      %306 = vmatpush1.msra.mxu0 0.0
      %307 = vmatprep.subr.mxu0 0.0
      %308 = vmatpush1.msra.mxu0 0.0
      %309 = vmatprep.subr.mxu0 0.0
      %310 = vmatpush1.msra.mxu0 0.0
      %311 = vmatprep.subr.mxu0 0.0
      %312 = vmatpush1.msra.mxu0 0.0
      %313 = vmatprep.subr.mxu0 0.0
      %314 = vmatpush1.msra.mxu0 0.0
      %315 = vmatprep.subr.mxu0 0.0
      %316 = vmatpush1.msra.mxu0 0.0
      %317 = vmatprep.subr.mxu0 0.0
      %318 = vmatpush1.msra.mxu0 0.0
      %319 = vmatprep.subr.mxu0 0.0
      %320 = vmatpush1.msra.mxu0 0.0
      %321 = vmatprep.subr.mxu0 0.0
      %322 = vmatpush1.msra.mxu0 0.0
      %323 = vmatprep.mubr.f32.mxu0 0.0
      %324 = vmatmul.mubr.f32.gmra.mrb[0].mxu0 %v258
      %v325 = vpop.f32.mrb[0].mxu0
      %v326 = vadd.f32 0.0, %v325
      %v327 = vpop.f32.mrb[0].mxu0
      %328 = vdwg.mxu0
      %v329 = vmul.f32 %v326, 0.001953125
      %vm330 = vcmask 64512
      %v332 = vsel %vm330, %v329, 0
      %334 = vmatprep.subr.mxu0 0.0
      %335 = vmatpush1.msra.mxu0 %v249
      %336 = vmatprep.subr.mxu0 0.0
      %337 = vmatpush1.msra.mxu0 0.0
      %338 = vmatprep.subr.mxu0 0.0
      %339 = vmatpush1.msra.mxu0 0.0
      %340 = vmatprep.subr.mxu0 0.0
      %341 = vmatpush1.msra.mxu0 0.0
      %342 = vmatprep.subr.mxu0 0.0
      %343 = vmatpush1.msra.mxu0 0.0
      %344 = vmatprep.subr.mxu0 0.0
      %345 = vmatpush1.msra.mxu0 0.0
      %346 = vmatprep.subr.mxu0 0.0
      %347 = vmatpush1.msra.mxu0 0.0
      %348 = vmatprep.subr.mxu0 0.0
      %349 = vmatpush1.msra.mxu0 0.0
      %350 = vmatprep.subr.mxu0 0.0
      %351 = vmatpush1.msra.mxu0 0.0
      %352 = vmatprep.subr.mxu0 0.0
      %353 = vmatpush1.msra.mxu0 0.0
      %354 = vmatprep.subr.mxu0 0.0
      %355 = vmatpush1.msra.mxu0 0.0
      %356 = vmatprep.subr.mxu0 0.0
      %357 = vmatpush1.msra.mxu0 0.0
      %358 = vmatprep.subr.mxu0 0.0
      %359 = vmatpush1.msra.mxu0 0.0
      %360 = vmatprep.subr.mxu0 0.0
      %361 = vmatpush1.msra.mxu0 0.0
      %362 = vmatprep.subr.mxu0 0.0
      %363 = vmatpush1.msra.mxu0 0.0
      %364 = vmatprep.subr.mxu0 0.0
      %365 = vmatpush1.msra.mxu0 0.0
      %366 = vmatprep.subr.mxu0 0.0
      %367 = vmatpush1.msra.mxu0 0.0
      %368 = vmatprep.subr.mxu0 0.0
      %369 = vmatpush1.msra.mxu0 0.0
      %370 = vmatprep.subr.mxu0 0.0
      %371 = vmatpush1.msra.mxu0 0.0
      %372 = vmatprep.subr.mxu0 0.0
      %373 = vmatpush1.msra.mxu0 0.0
      %374 = vmatprep.subr.mxu0 0.0
      %375 = vmatpush1.msra.mxu0 0.0
      %376 = vmatprep.subr.mxu0 0.0
      %377 = vmatpush1.msra.mxu0 0.0
      %378 = vmatprep.subr.mxu0 0.0
      %379 = vmatpush1.msra.mxu0 0.0
      %380 = vmatprep.subr.mxu0 0.0
      %381 = vmatpush1.msra.mxu0 0.0
      %382 = vmatprep.subr.mxu0 0.0
      %383 = vmatpush1.msra.mxu0 0.0
      %384 = vmatprep.subr.mxu0 0.0
      %385 = vmatpush1.msra.mxu0 0.0
      %386 = vmatprep.subr.mxu0 0.0
      %387 = vmatpush1.msra.mxu0 0.0
      %388 = vmatprep.subr.mxu0 0.0
      %389 = vmatpush1.msra.mxu0 0.0
      %390 = vmatprep.subr.mxu0 0.0
      %391 = vmatpush1.msra.mxu0 0.0
      %392 = vmatprep.subr.mxu0 0.0
      %393 = vmatpush1.msra.mxu0 0.0
      %394 = vmatprep.subr.mxu0 0.0
      %395 = vmatpush1.msra.mxu0 0.0
      %396 = vmatprep.subr.mxu0 0.0
      %397 = vmatpush1.msra.mxu0 0.0
      %398 = vmatprep.mubr.f32.mxu0 0.0
      %399 = vmatmul.mubr.f32.gmra.mrb[0].mxu0 %v332
      %v400 = vpop.f32.mrb[0].mxu0
      %v401 = vadd.f32 0.0, %v400
      %v402 = vpop.f32.mrb[0].mxu0
      %403 = vdwg.mxu0
      %v404 = vlaneseq
      %v405 = vshrl.u32 %v404, 7
      %v406 = vsub.s32 0, %v405
      %v407 = vrot.slane %v401, %v406
      %v408 = vsub.f32 %v229, %v407
      %v409 = vsub.f32 %v230, %v407
      %v410 = vsub.f32 %v231, %v407
      %v411 = vsub.f32 %v232, %v407
      %v412 = vmul.f32 %v408, %v408
      %v413 = vmul.f32 %v409, %v409
      %v414 = vmul.f32 %v410, %v410
      %v415 = vmul.f32 %v411, %v411
      %v416 = vadd.f32 %v412, %v413
      %v417 = vadd.f32 %v416, %v414
      %v418 = vadd.f32 %v417, %v415
      %v419 = vrot.slane %v418, 4
      %v420 = vadd.f32 %v418, %v419
      %v421 = vrot.slane %v420, 2
      %v422 = vadd.f32 %v420, %v421
      %v423 = vrot.slane %v422, 1
      %v424 = vadd.f32 %v422, %v423
      %425 = vmatprep.subr.mxu0 0.0
      %426 = vmatpush1.msra.mxu0 %v233
      %427 = vmatprep.subr.mxu0 0.0
      %428 = vmatpush1.msra.mxu0 %v234
      %429 = vmatprep.subr.mxu0 0.0
      %430 = vmatpush1.msra.mxu0 %v235
      %431 = vmatprep.subr.mxu0 0.0
      %432 = vmatpush1.msra.mxu0 %v236
      %433 = vmatprep.subr.mxu0 0.0
      %434 = vmatpush1.msra.mxu0 %v237
      %435 = vmatprep.subr.mxu0 0.0
      %436 = vmatpush1.msra.mxu0 %v238
      %437 = vmatprep.subr.mxu0 0.0
      %438 = vmatpush1.msra.mxu0 %v239
      %439 = vmatprep.subr.mxu0 0.0
      %440 = vmatpush1.msra.mxu0 %v240
      %441 = vmatprep.subr.mxu0 0.0
      %442 = vmatpush1.msra.mxu0 %v241
      %443 = vmatprep.subr.mxu0 0.0
      %444 = vmatpush1.msra.mxu0 %v242
      %445 = vmatprep.subr.mxu0 0.0
      %446 = vmatpush1.msra.mxu0 %v243
      %447 = vmatprep.subr.mxu0 0.0
      %448 = vmatpush1.msra.mxu0 %v244
      %449 = vmatprep.subr.mxu0 0.0
      %450 = vmatpush1.msra.mxu0 %v245
      %451 = vmatprep.subr.mxu0 0.0
      %452 = vmatpush1.msra.mxu0 %v246
      %453 = vmatprep.subr.mxu0 0.0
      %454 = vmatpush1.msra.mxu0 %v247
      %455 = vmatprep.subr.mxu0 0.0
      %456 = vmatpush1.msra.mxu0 %v248
      %457 = vmatprep.subr.mxu0 0.0
      %458 = vmatpush1.msra.mxu0 0.0
      %459 = vmatprep.subr.mxu0 0.0
      %460 = vmatpush1.msra.mxu0 0.0
      %461 = vmatprep.subr.mxu0 0.0
      %462 = vmatpush1.msra.mxu0 0.0
      %463 = vmatprep.subr.mxu0 0.0
      %464 = vmatpush1.msra.mxu0 0.0
      %465 = vmatprep.subr.mxu0 0.0
      %466 = vmatpush1.msra.mxu0 0.0
      %467 = vmatprep.subr.mxu0 0.0
      %468 = vmatpush1.msra.mxu0 0.0
      %469 = vmatprep.subr.mxu0 0.0
      %470 = vmatpush1.msra.mxu0 0.0
      %471 = vmatprep.subr.mxu0 0.0
      %472 = vmatpush1.msra.mxu0 0.0
      %473 = vmatprep.subr.mxu0 0.0
      %474 = vmatpush1.msra.mxu0 0.0
      %475 = vmatprep.subr.mxu0 0.0
      %476 = vmatpush1.msra.mxu0 0.0
      %477 = vmatprep.subr.mxu0 0.0
      %478 = vmatpush1.msra.mxu0 0.0
      %479 = vmatprep.subr.mxu0 0.0
      %480 = vmatpush1.msra.mxu0 0.0
      %481 = vmatprep.subr.mxu0 0.0
      %482 = vmatpush1.msra.mxu0 0.0
      %483 = vmatprep.subr.mxu0 0.0
      %484 = vmatpush1.msra.mxu0 0.0
      %485 = vmatprep.subr.mxu0 0.0
      %486 = vmatpush1.msra.mxu0 0.0
      %487 = vmatprep.subr.mxu0 0.0
      %488 = vmatpush1.msra.mxu0 0.0
      %489 = vmatprep.mubr.f32.mxu0 0.0
      %490 = vmatmul.mubr.f32.gmra.mrb[0].mxu0 %v424
      %v491 = vpop.f32.mrb[0].mxu0
      %v492 = vadd.f32 0.0, %v491
      %v493 = vpop.f32.mrb[0].mxu0
      %494 = vdwg.mxu0
      %v495 = vmul.f32 %v492, 0.001953125
      %v496 = vadd.f32 %v495, 1e-05
      %v497 = vrsqrt.pop %v496
      %v499 = vsel %vm330, %v497, 0
      %501 = vmatprep.subr.mxu0 0.0
      %502 = vmatpush1.msra.mxu0 %v249
      %503 = vmatprep.subr.mxu0 0.0
      %504 = vmatpush1.msra.mxu0 0.0
      %505 = vmatprep.subr.mxu0 0.0
      %506 = vmatpush1.msra.mxu0 0.0
      %507 = vmatprep.subr.mxu0 0.0
      %508 = vmatpush1.msra.mxu0 0.0
      %509 = vmatprep.subr.mxu0 0.0
      %510 = vmatpush1.msra.mxu0 0.0
      %511 = vmatprep.subr.mxu0 0.0
      %512 = vmatpush1.msra.mxu0 0.0
      %513 = vmatprep.subr.mxu0 0.0
      %514 = vmatpush1.msra.mxu0 0.0
      %515 = vmatprep.subr.mxu0 0.0
      %516 = vmatpush1.msra.mxu0 0.0
      %517 = vmatprep.subr.mxu0 0.0
      %518 = vmatpush1.msra.mxu0 0.0
      %519 = vmatprep.subr.mxu0 0.0
      %520 = vmatpush1.msra.mxu0 0.0
      %521 = vmatprep.subr.mxu0 0.0
      %522 = vmatpush1.msra.mxu0 0.0
      %523 = vmatprep.subr.mxu0 0.0
      %524 = vmatpush1.msra.mxu0 0.0
      %525 = vmatprep.subr.mxu0 0.0
      %526 = vmatpush1.msra.mxu0 0.0
      %527 = vmatprep.subr.mxu0 0.0
      %528 = vmatpush1.msra.mxu0 0.0
      %529 = vmatprep.subr.mxu0 0.0
      %530 = vmatpush1.msra.mxu0 0.0
      %531 = vmatprep.subr.mxu0 0.0
      %532 = vmatpush1.msra.mxu0 0.0
      %533 = vmatprep.subr.mxu0 0.0
      %534 = vmatpush1.msra.mxu0 0.0
      %535 = vmatprep.subr.mxu0 0.0
      %536 = vmatpush1.msra.mxu0 0.0
      %537 = vmatprep.subr.mxu0 0.0
      %538 = vmatpush1.msra.mxu0 0.0
      %539 = vmatprep.subr.mxu0 0.0
      %540 = vmatpush1.msra.mxu0 0.0
      %541 = vmatprep.subr.mxu0 0.0
      %542 = vmatpush1.msra.mxu0 0.0
      %543 = vmatprep.subr.mxu0 0.0
      %544 = vmatpush1.msra.mxu0 0.0
      %545 = vmatprep.subr.mxu0 0.0
      %546 = vmatpush1.msra.mxu0 0.0
      %547 = vmatprep.subr.mxu0 0.0
      %548 = vmatpush1.msra.mxu0 0.0
      %549 = vmatprep.subr.mxu0 0.0
      %550 = vmatpush1.msra.mxu0 0.0
      %551 = vmatprep.subr.mxu0 0.0
      %552 = vmatpush1.msra.mxu0 0.0
      %553 = vmatprep.subr.mxu0 0.0
      %554 = vmatpush1.msra.mxu0 0.0
      %555 = vmatprep.subr.mxu0 0.0
      %556 = vmatpush1.msra.mxu0 0.0
      %557 = vmatprep.subr.mxu0 0.0
      %558 = vmatpush1.msra.mxu0 0.0
      %559 = vmatprep.subr.mxu0 0.0
      %560 = vmatpush1.msra.mxu0 0.0
      %561 = vmatprep.subr.mxu0 0.0
      %562 = vmatpush1.msra.mxu0 0.0
      %563 = vmatprep.subr.mxu0 0.0
      %564 = vmatpush1.msra.mxu0 0.0
      %565 = vmatprep.mubr.f32.mxu0 0.0
      %566 = vmatmul.mubr.f32.gmra.mrb[0].mxu0 %v499
      %v567 = vpop.f32.mrb[0].mxu0
      %v568 = vadd.f32 0.0, %v567
      %v569 = vpop.f32.mrb[0].mxu0
      %570 = vdwg.mxu0
      %v571 = vld [vmem:[%s1] sm:$0x1]
      %v572 = vmul.f32 %v568, %v571
      %v573 = vlaneseq
      %v574 = vshrl.u32 %v573, 7
      %v575 = vsub.s32 0, %v574
      %v576 = vrot.slane %v572, %v575
      %v577 = vmul.f32 %v408, %v576
      %v578 = vmul.f32 %v409, %v576
      %v579 = vmul.f32 %v410, %v576
      %v580 = vmul.f32 %v411, %v576
      %v581 = vld [vmem:[%s2] sm:$0x1]
      %v583 = vlaneseq
      %v584 = vshrl.u32 %v583, 7
      %v585 = vsub.s32 0, %v584
      %v586 = vrot.slane %v581, %v585
      %v588 = vadd.f32 %v577, %v586
      %v589 = vadd.f32 %v578, %v586
      %v590 = vadd.f32 %v579, %v586
      %v591 = vadd.f32 %v580, %v586
      %v592 = vpack.c.bf16 %v589, %v588
      %v593 = vpack.c.bf16 %v591, %v590
      %v596 = vunpack.c.l.b16 %v592
      %v597 = vunpack.c.h.b16 %v592
      %v598 = vunpack.c.l.b16 %v593
      %v599 = vunpack.c.h.b16 %v593
      %v600 = vpack.c.b16 %v596, %v596
      %v601 = vpack.c.b16 %v597, %v597
      %v602 = vpack.c.b16 %v598, %v598
      %v603 = vpack.c.b16 %v599, %v599
      %608 = vst [vmem:[%s224] sm:$0xf] %v600
      %609 = vst [vmem:[%s224 + $0x4] sm:$0xf] %v601
      %610 = vst [vmem:[%s224 + $0x8] sm:$0xf] %v602
      %611 = vst [vmem:[%s224 + $0xc] sm:$0xf] %v603
      %p612 = scmp.lt.s32.totalorder %s16, 1
      %s613 = scalar_select %p612, %s16, 1
      %s614 = smul.addr %s613, 4
      %s615 = smul.addr %s614, 4
      %s616 = scalar_lea.vmem %s5, %s615
      // Predicated region
      $region41: #{basic_block_forward.8} parent=39 // pred_check
        %p617 = pneg %p144
      $region42: #{basic_block_forward.8} parent=39 // pred_check_branch
        %619 = sbr.rel (%p617) target = $region44
      $region43: #{basic_block_forward.8} parent=39 // pred_region
        _
      $region44: #{basic_block_forward.8} parent=39 // pred_fallthru
        _
    $region40: #{basic_block_forward.8} parent=5 // pred_fallthru
      _
    %p620 = scmp.le.s32.totalorder 2, %s11
    // Predicated region
    $region45: #{basic_block_forward.8} parent=5 // pred_check
      %p621 = pneg %p620
    $region46: #{basic_block_forward.8} parent=5 // pred_check_branch
      %623 = sbr.rel (%p621) target = $region48
    $region47: #{basic_block_forward.8} parent=5 // pred_region
      %s624 = ssub.s32 %s11, 2
      // Predicated region
      $region49: #{basic_block_forward.8} parent=47 // pred_check
        %p625 = pneg %p150
      $region50: #{basic_block_forward.8} parent=47 // pred_check_branch
        %627 = sbr.rel (%p625) target = $region52
      $region51: #{basic_block_forward.8} parent=47 // pred_region
        %p628 = scmp.lt.s32.totalorder %s17, 1
        %s629 = scalar_select %p628, %s17, 1
        %s630 = smul.addr %s629, 4
        %s631 = smul.addr %s630, 4
        %s632 = scalar_lea.vmem %s5, %s631
      $region52: #{basic_block_forward.8} parent=47 // pred_fallthru
        _
    $region48: #{basic_block_forward.8} parent=5 // pred_fallthru
      _
  $region6: #{basic_block_forward.8} parent=0 // loop_footer
    %s15 = sadd.s32 1, %s11
  $region7: #{basic_block_forward.8} parent=0 // loop_footer_branch
    %10 = sbr.rel target = $region3
  $region8: #{basic_block_forward.8} parent=0 // loop_exit
    _

// kernel: basic_block_forward.9
$region0: #{basic_block_forward.9}
  #allocation0 [shape = 'u32[]', space=smem, size = 0x4, offset = 0x4, fixed_abs, tag = 'smem constant byte address 0x4 - core index']
  #allocation1 [shape = 'u32[144,128]{1,0:T(1,128)}', space=vmem, size = 0x12000, scoped, tag = 'internal scratch']
  %s0 = inlined_call_operand.vmem [shape: bf16[2,32,128], index: 0, kind: input, shape index: {}]
  %s1 = inlined_call_operand.vmem [shape: bf16[2,32,128], index: 1, kind: input, shape index: {}]
  %s2 = inlined_call_operand.vmem [shape: f32[1,128], index: 2, kind: input, shape index: {}]
  %s3 = inlined_call_operand.vmem [shape: f32[1,128], index: 3, kind: input, shape index: {}]
  %s4 = inlined_call_operand.vmem [shape: f32[128,8], index: 4, kind: input, shape index: {}]
  %s5 = inlined_call_operand.vmem [shape: f32[8,128], index: 5, kind: input, shape index: {}]
  %s6 = inlined_call_operand.vmem [shape: f32[2,32,128], index: 6, kind: output, shape index: {}]
  %s7 = sld [smem:[#allocation0]]
  $region57: #{basic_block_forward.9} parent=0
    _
  %s9 = ssub.s32 1, %s7
  %s10 = scalar_select 0, %s9, %s7
  loop: start=0, step=1, limit=4
  $region2: #{basic_block_forward.9} parent=0 // loop_pre_header
    _
  $region3: #{basic_block_forward.9} parent=0 // loop_header
    %s12 = sphi 0, %s16
    %p13 = scmp.ge.s32.totalorder %s12, 4
    %s22 = sphi 0, %s24
    %s25 = sphi 0, %s22
    %s26 = sphi 0, %s25
    %s42 = sphi 0, %s26
    %s48 = sphi 0, %s50
    %s51 = sphi 0, %s48
    %s52 = sphi 0, %s51
    %s68 = sphi 0, %s52
    %s72 = sphi 0, %s72
    %s74 = sphi 0, %s72
    %s75 = sphi 0, %s74
    %s89 = sphi 0, %s75
    %s93 = sphi 0, %s93
    %s95 = sphi 0, %s93
    %s96 = sphi 0, %s95
    %s110 = sphi 0, %s96
    %s114 = sphi 0, %s114
    %s116 = sphi 0, %s114
    %s117 = sphi 0, %s116
    %s131 = sphi 0, %s117
    %s135 = sphi 0, %s135
    %s137 = sphi 0, %s135
    %s138 = sphi 0, %s137
    %s152 = sphi 0, %s138
    %s158 = sphi 0, %s160
    %s161 = sphi 0, %s158
    %s162 = sphi 0, %s161
    %s178 = sphi 0, %s162
  $region4: #{basic_block_forward.9} parent=0 // loop_header_branch
    %15 = sbr.rel (%p13) target = $region8
  $region5: #{basic_block_forward.9} parent=0 // loop_body
    %s17 = ssub.s32 %s12, 1
    %s18 = ssub.s32 %s12, 2
    %s19 = sadd.s32 %s12, 1
    %s20 = ssub.s32 %s12, %s19
    %p21 = scmp.eq.s32.totalorder %s20, 0
    %s23 = sadd.s32 %s22, 1
    %s24 = scalar_select %p21, %s22, %s23
    %p27 = pneg %p21
    %p28 = scmp.eq.s32.totalorder %s12, 1
    %p29 = por %p27, %p28
    %p30 = scmp.ne.s32.totalorder %s22, %s25
    %p31 = scmp.eq.s32.totalorder %s12, 0
    %p32 = por %p30, %p31
    %p33 = scmp.ne.s32.totalorder %s22, %s25
    %p34 = scmp.eq.s32.totalorder %s17, 1
    %p35 = por %p33, %p34
    %p36 = scmp.ne.s32.totalorder %s25, %s26
    %p37 = scmp.eq.s32.totalorder %s17, 0
    %p38 = por %p36, %p37
    %p39 = scmp.ne.s32.totalorder %s25, %s26
    %p40 = scmp.eq.s32.totalorder %s18, 1
    %p41 = por %p39, %p40
    %p43 = scmp.ne.s32.totalorder %s26, %s42
    %p44 = scmp.eq.s32.totalorder %s18, 0
    %p45 = por %p43, %p44
    %s46 = ssub.s32 %s12, %s19
    %p47 = scmp.eq.s32.totalorder %s46, 0
    %s49 = sadd.s32 %s48, 1
    %s50 = scalar_select %p47, %s48, %s49
    %p53 = pneg %p47
    %p54 = scmp.eq.s32.totalorder %s12, 1
    %p55 = por %p53, %p54
    %p56 = scmp.ne.s32.totalorder %s48, %s51
    %p57 = scmp.eq.s32.totalorder %s12, 0
    %p58 = por %p56, %p57
    %p59 = scmp.ne.s32.totalorder %s48, %s51
    %p60 = scmp.eq.s32.totalorder %s17, 1
    %p61 = por %p59, %p60
    %p62 = scmp.ne.s32.totalorder %s51, %s52
    %p63 = scmp.eq.s32.totalorder %s17, 0
    %p64 = por %p62, %p63
    %p65 = scmp.ne.s32.totalorder %s51, %s52
    %p66 = scmp.eq.s32.totalorder %s18, 1
    %p67 = por %p65, %p66
    %p69 = scmp.ne.s32.totalorder %s52, %s68
    %p70 = scmp.eq.s32.totalorder %s18, 0
    %p71 = por %p69, %p70
    %s73 = sadd.s32 %s72, 1
    %p76 = scmp.eq.s32.totalorder %s12, 1
    %p77 = scmp.ne.s32.totalorder %s72, %s74
    %p78 = scmp.eq.s32.totalorder %s12, 0
    %p79 = por %p77, %p78
    %p80 = scmp.ne.s32.totalorder %s72, %s74
    %p81 = scmp.eq.s32.totalorder %s17, 1
    %p82 = por %p80, %p81
    %p83 = scmp.ne.s32.totalorder %s74, %s75
    %p84 = scmp.eq.s32.totalorder %s17, 0
    %p85 = por %p83, %p84
    %p86 = scmp.ne.s32.totalorder %s74, %s75
    %p87 = scmp.eq.s32.totalorder %s18, 1
    %p88 = por %p86, %p87
    %p90 = scmp.ne.s32.totalorder %s75, %s89
    %p91 = scmp.eq.s32.totalorder %s18, 0
    %p92 = por %p90, %p91
    %s94 = sadd.s32 %s93, 1
    %p97 = scmp.eq.s32.totalorder %s12, 1
    %p98 = scmp.ne.s32.totalorder %s93, %s95
    %p99 = scmp.eq.s32.totalorder %s12, 0
    %p100 = por %p98, %p99
    %p101 = scmp.ne.s32.totalorder %s93, %s95
    %p102 = scmp.eq.s32.totalorder %s17, 1
    %p103 = por %p101, %p102
    %p104 = scmp.ne.s32.totalorder %s95, %s96
    %p105 = scmp.eq.s32.totalorder %s17, 0
    %p106 = por %p104, %p105
    %p107 = scmp.ne.s32.totalorder %s95, %s96
    %p108 = scmp.eq.s32.totalorder %s18, 1
    %p109 = por %p107, %p108
    %p111 = scmp.ne.s32.totalorder %s96, %s110
    %p112 = scmp.eq.s32.totalorder %s18, 0
    %p113 = por %p111, %p112
    %s115 = sadd.s32 %s114, 1
    %p118 = scmp.eq.s32.totalorder %s12, 1
    %p119 = scmp.ne.s32.totalorder %s114, %s116
    %p120 = scmp.eq.s32.totalorder %s12, 0
    %p121 = por %p119, %p120
    %p122 = scmp.ne.s32.totalorder %s114, %s116
    %p123 = scmp.eq.s32.totalorder %s17, 1
    %p124 = por %p122, %p123
    %p125 = scmp.ne.s32.totalorder %s116, %s117
    %p126 = scmp.eq.s32.totalorder %s17, 0
    %p127 = por %p125, %p126
    %p128 = scmp.ne.s32.totalorder %s116, %s117
    %p129 = scmp.eq.s32.totalorder %s18, 1
    %p130 = por %p128, %p129
    %p132 = scmp.ne.s32.totalorder %s117, %s131
    %p133 = scmp.eq.s32.totalorder %s18, 0
    %p134 = por %p132, %p133
    %s136 = sadd.s32 %s135, 1
    %p139 = scmp.eq.s32.totalorder %s12, 1
    %p140 = scmp.ne.s32.totalorder %s135, %s137
    %p141 = scmp.eq.s32.totalorder %s12, 0
    %p142 = por %p140, %p141
    %p143 = scmp.ne.s32.totalorder %s135, %s137
    %p144 = scmp.eq.s32.totalorder %s17, 1
    %p145 = por %p143, %p144
    %p146 = scmp.ne.s32.totalorder %s137, %s138
    %p147 = scmp.eq.s32.totalorder %s17, 0
    %p148 = por %p146, %p147
    %p149 = scmp.ne.s32.totalorder %s137, %s138
    %p150 = scmp.eq.s32.totalorder %s18, 1
    %p151 = por %p149, %p150
    %p153 = scmp.ne.s32.totalorder %s138, %s152
    %p154 = scmp.eq.s32.totalorder %s18, 0
    %p155 = por %p153, %p154
    %s156 = ssub.s32 %s12, %s19
    %p157 = scmp.eq.s32.totalorder %s156, 0
    %s159 = sadd.s32 %s158, 1
    %s160 = scalar_select %p157, %s158, %s159
    %p163 = pneg %p157
    %p164 = scmp.eq.s32.totalorder %s12, 1
    %p165 = por %p163, %p164
    %p166 = scmp.ne.s32.totalorder %s158, %s161
    %p167 = scmp.eq.s32.totalorder %s12, 0
    %p168 = por %p166, %p167
    %p169 = scmp.ne.s32.totalorder %s158, %s161
    %p170 = scmp.eq.s32.totalorder %s17, 1
    %p171 = por %p169, %p170
    %p172 = scmp.ne.s32.totalorder %s161, %s162
    %p173 = scmp.eq.s32.totalorder %s17, 0
    %p174 = por %p172, %p173
    %p175 = scmp.ne.s32.totalorder %s161, %s162
    %p176 = scmp.eq.s32.totalorder %s18, 1
    %p177 = por %p175, %p176
    %p179 = scmp.ne.s32.totalorder %s162, %s178
    %p180 = scmp.eq.s32.totalorder %s18, 0
    %p181 = por %p179, %p180
    %p182 = scmp.le.s32.totalorder 1, %s12
    %p183 = scmp.lt.s32.totalorder %s12, 3
    %p184 = pnand %p182, %p183
    %p185 = pneg %p184
    // Predicated region
    $region9: #{basic_block_forward.9} parent=5 // pred_check
      _
    $region10: #{basic_block_forward.9} parent=5 // pred_check_branch
      %187 = sbr.rel (%p184) target = $region12
    $region11: #{basic_block_forward.9} parent=5 // pred_region
      %s188 = ssub.s32 %s12, 1
      // Predicated region
      $region13: #{basic_block_forward.9} parent=11 // pred_check
        %p189 = pneg %p85
      $region14: #{basic_block_forward.9} parent=11 // pred_check_branch
        %191 = sbr.rel (%p189) target = $region16
      $region15: #{basic_block_forward.9} parent=11 // pred_region
        _
      $region16: #{basic_block_forward.9} parent=11 // pred_fallthru
        _
      // Predicated region
      $region17: #{basic_block_forward.9} parent=11 // pred_check
        %p192 = pneg %p106
      $region18: #{basic_block_forward.9} parent=11 // pred_check_branch
        %194 = sbr.rel (%p192) target = $region20
      $region19: #{basic_block_forward.9} parent=11 // pred_region
        _
      $region20: #{basic_block_forward.9} parent=11 // pred_fallthru
        _
      // Predicated region
      $region21: #{basic_block_forward.9} parent=11 // pred_check
        %p195 = pneg %p127
      $region22: #{basic_block_forward.9} parent=11 // pred_check_branch
        %197 = sbr.rel (%p195) target = $region24
      $region23: #{basic_block_forward.9} parent=11 // pred_region
        _
      $region24: #{basic_block_forward.9} parent=11 // pred_fallthru
        _
      // Predicated region
      $region25: #{basic_block_forward.9} parent=11 // pred_check
        %p198 = pneg %p148
      $region26: #{basic_block_forward.9} parent=11 // pred_check_branch
        %200 = sbr.rel (%p198) target = $region28
      $region27: #{basic_block_forward.9} parent=11 // pred_region
        _
      $region28: #{basic_block_forward.9} parent=11 // pred_fallthru
        _
    $region12: #{basic_block_forward.9} parent=5 // pred_fallthru
      _
    %p201 = scmp.lt.s32.totalorder %s12, 2
    // Predicated region
    $region29: #{basic_block_forward.9} parent=5 // pred_check
      %p202 = pneg %p201
    $region30: #{basic_block_forward.9} parent=5 // pred_check_branch
      %204 = sbr.rel (%p202) target = $region32
    $region31: #{basic_block_forward.9} parent=5 // pred_region
      // Predicated region
      $region33: #{basic_block_forward.9} parent=31 // pred_check
        %p205 = pneg %p32
      $region34: #{basic_block_forward.9} parent=31 // pred_check_branch
        %207 = sbr.rel (%p205) target = $region36
      $region35: #{basic_block_forward.9} parent=31 // pred_region
        %p208 = scmp.lt.s32.totalorder %s12, 1
        %s209 = scalar_select %p208, %s12, 1
        %s210 = smul.addr %s209, 4
        %s211 = smul.addr %s210, 4
        %s212 = scalar_lea.vmem %s0, %s211
      $region36: #{basic_block_forward.9} parent=31 // pred_fallthru
        _
      // Predicated region
      $region37: #{basic_block_forward.9} parent=31 // pred_check
        %p213 = pneg %p58
      $region38: #{basic_block_forward.9} parent=31 // pred_check_branch
        %215 = sbr.rel (%p213) target = $region40
      $region39: #{basic_block_forward.9} parent=31 // pred_region
        %p216 = scmp.lt.s32.totalorder %s12, 1
        %s217 = scalar_select %p216, %s12, 1
        %s218 = smul.addr %s217, 4
        %s219 = smul.addr %s218, 4
        %s220 = scalar_lea.vmem %s1, %s219
      $region40: #{basic_block_forward.9} parent=31 // pred_fallthru
        _
    $region32: #{basic_block_forward.9} parent=5 // pred_fallthru
      _
    %p221 = scmp.le.s32.totalorder 1, %s12
    %p222 = scmp.lt.s32.totalorder %s12, 3
    %p223 = pnand %p221, %p222
    %p224 = pneg %p223
    // Predicated region
    $region41: #{basic_block_forward.9} parent=5 // pred_check
      _
    $region42: #{basic_block_forward.9} parent=5 // pred_check_branch
      %226 = sbr.rel (%p223) target = $region44
    $region43: #{basic_block_forward.9} parent=5 // pred_region
      %s227 = ssub.s32 %s12, 1
      %p228 = scmp.lt.s32.totalorder %s17, 1
      %s229 = scalar_select %p228, %s17, 1
      %s230 = smul.addr %s229, 4
      %s231 = smul.addr %s230, 4
      %s232 = scalar_lea.vmem %s0, %s231
      %p233 = pneg %p38
      %p234 = pneg %p35
      %p235 = scmp.lt.s32.totalorder %s17, 1
      %s236 = scalar_select %p235, %s17, 1
      %s237 = smul.addr %s236, 4
      %s238 = smul.addr %s237, 4
      %s239 = scalar_lea.vmem %s1, %s238
      %p240 = pneg %p64
      %p241 = pneg %p61
      %p242 = pneg %p85
      %p243 = pneg %p82
      %p244 = pneg %p106
      %p245 = pneg %p103
      %p246 = pneg %p127
      %p247 = pneg %p124
      %p248 = pneg %p148
      %p249 = pneg %p145
      %p250 = pneg %p174
      %p251 = pneg %p171
      %p252 = scmp.lt.s32.totalorder %s17, 1
      %s253 = scalar_select %p252, %s17, 1
      %s254 = smul.addr %s253, 4
      %s255 = smul.addr %s254, 8
      %s256 = scalar_lea.vmem %s6, %s255
      %p257 = scmp.lt.s32.totalorder %s17, 1
      %s258 = scalar_select %p257, %s17, 1
      %s259 = smul.addr %s258, 4
      %s260 = smul.addr %s259, 4
      %s261 = scalar_lea.vmem %s0, %s260
      %p262 = scmp.lt.s32.totalorder %s17, 1
      %s263 = scalar_select %p262, %s17, 1
      %s264 = smul.addr %s263, 4
      %s265 = smul.addr %s264, 4
      %s266 = scalar_lea.vmem %s1, %s265
      %p267 = scmp.lt.s32.totalorder %s17, 1
      %s268 = scalar_select %p267, %s17, 1
      %s269 = smul.addr %s268, 4
      %s270 = smul.addr %s269, 8
      %s271 = scalar_lea.vmem %s6, %s270
      %v272 = vld [vmem:[%s261] sm:$0xf]
      %v273 = vld [vmem:[%s261 + $0x4] sm:$0xf]
      %v274 = vld [vmem:[%s261 + $0x8] sm:$0xf]
      %v275 = vld [vmem:[%s261 + $0xc] sm:$0xf]
      %v276 = vunpack.c.l.bf16 %v272
      %v277 = vunpack.c.l.bf16 %v273
      %v278 = vunpack.c.l.bf16 %v274
      %v279 = vunpack.c.l.bf16 %v275
      %v280 = vld [vmem:[%s4] sm:$0xff]
      %v281 = vld [vmem:[%s4 + $0x8] sm:$0xff]
      %v282 = vld [vmem:[%s4 + $0x10] sm:$0xff]
      %v283 = vld [vmem:[%s4 + $0x18] sm:$0xff]
      %v284 = vld [vmem:[%s4 + $0x20] sm:$0xff]
      %v285 = vld [vmem:[%s4 + $0x28] sm:$0xff]
      %v286 = vld [vmem:[%s4 + $0x30] sm:$0xff]
      %v287 = vld [vmem:[%s4 + $0x38] sm:$0xff]
      %v288 = vld [vmem:[%s4 + $0x40] sm:$0xff]
      %v289 = vld [vmem:[%s4 + $0x48] sm:$0xff]
      %v290 = vld [vmem:[%s4 + $0x50] sm:$0xff]
      %v291 = vld [vmem:[%s4 + $0x58] sm:$0xff]
      %v292 = vld [vmem:[%s4 + $0x60] sm:$0xff]
      %v293 = vld [vmem:[%s4 + $0x68] sm:$0xff]
      %v294 = vld [vmem:[%s4 + $0x70] sm:$0xff]
      %v295 = vld [vmem:[%s4 + $0x78] sm:$0xff]
      %v296 = vld [vmem:[%s5] sm:$0xff]
      %v297 = vadd.f32 %v276, %v277
      %v298 = vadd.f32 %v297, %v278
      %v299 = vadd.f32 %v298, %v279
      %v300 = vrot.slane %v299, 4
      %v301 = vadd.f32 %v299, %v300
      %v302 = vrot.slane %v301, 2
      %v303 = vadd.f32 %v301, %v302
      %v304 = vrot.slane %v303, 1
      %v305 = vadd.f32 %v303, %v304
      %306 = vmatprep.subr.mxu0 0.0
      %307 = vmatpush1.msra.mxu0 %v280
      %308 = vmatprep.subr.mxu0 0.0
      %309 = vmatpush1.msra.mxu0 %v281
      %310 = vmatprep.subr.mxu0 0.0
      %311 = vmatpush1.msra.mxu0 %v282
      %312 = vmatprep.subr.mxu0 0.0
      %313 = vmatpush1.msra.mxu0 %v283
      %314 = vmatprep.subr.mxu0 0.0
      %315 = vmatpush1.msra.mxu0 %v284
      %316 = vmatprep.subr.mxu0 0.0
      %317 = vmatpush1.msra.mxu0 %v285
      %318 = vmatprep.subr.mxu0 0.0
      %319 = vmatpush1.msra.mxu0 %v286
      %320 = vmatprep.subr.mxu0 0.0
      %321 = vmatpush1.msra.mxu0 %v287
      %322 = vmatprep.subr.mxu0 0.0
      %323 = vmatpush1.msra.mxu0 %v288
      %324 = vmatprep.subr.mxu0 0.0
      %325 = vmatpush1.msra.mxu0 %v289
      %326 = vmatprep.subr.mxu0 0.0
      %327 = vmatpush1.msra.mxu0 %v290
      %328 = vmatprep.subr.mxu0 0.0
      %329 = vmatpush1.msra.mxu0 %v291
      %330 = vmatprep.subr.mxu0 0.0
      %331 = vmatpush1.msra.mxu0 %v292
      %332 = vmatprep.subr.mxu0 0.0
      %333 = vmatpush1.msra.mxu0 %v293
      %334 = vmatprep.subr.mxu0 0.0
      %335 = vmatpush1.msra.mxu0 %v294
      %336 = vmatprep.subr.mxu0 0.0
      %337 = vmatpush1.msra.mxu0 %v295
      %338 = vmatprep.subr.mxu0 0.0
      %339 = vmatpush1.msra.mxu0 0.0
      %340 = vmatprep.subr.mxu0 0.0
      %341 = vmatpush1.msra.mxu0 0.0
      %342 = vmatprep.subr.mxu0 0.0
      %343 = vmatpush1.msra.mxu0 0.0
      %344 = vmatprep.subr.mxu0 0.0
      %345 = vmatpush1.msra.mxu0 0.0
      %346 = vmatprep.subr.mxu0 0.0
      %347 = vmatpush1.msra.mxu0 0.0
      %348 = vmatprep.subr.mxu0 0.0
      %349 = vmatpush1.msra.mxu0 0.0
      %350 = vmatprep.subr.mxu0 0.0
      %351 = vmatpush1.msra.mxu0 0.0
      %352 = vmatprep.subr.mxu0 0.0
      %353 = vmatpush1.msra.mxu0 0.0
      %354 = vmatprep.subr.mxu0 0.0
      %355 = vmatpush1.msra.mxu0 0.0
      %356 = vmatprep.subr.mxu0 0.0
      %357 = vmatpush1.msra.mxu0 0.0
      %358 = vmatprep.subr.mxu0 0.0
      %359 = vmatpush1.msra.mxu0 0.0
      %360 = vmatprep.subr.mxu0 0.0
      %361 = vmatpush1.msra.mxu0 0.0
      %362 = vmatprep.subr.mxu0 0.0
      %363 = vmatpush1.msra.mxu0 0.0
      %364 = vmatprep.subr.mxu0 0.0
      %365 = vmatpush1.msra.mxu0 0.0
      %366 = vmatprep.subr.mxu0 0.0
      %367 = vmatpush1.msra.mxu0 0.0
      %368 = vmatprep.subr.mxu0 0.0
      %369 = vmatpush1.msra.mxu0 0.0
      %370 = vmatprep.mubr.f32.mxu0 0.0
      %371 = vmatmul.mubr.f32.gmra.mrb[0].mxu0 %v305
      %v372 = vpop.f32.mrb[0].mxu0
      %v373 = vadd.f32 0.0, %v372
      %v374 = vpop.f32.mrb[0].mxu0
      %375 = vdwg.mxu0
      %v376 = vmul.f32 %v373, 0.001953125
      %vm377 = vcmask 64512
      %v379 = vsel %vm377, %v376, 0
      %381 = vmatprep.subr.mxu0 0.0
      %382 = vmatpush1.msra.mxu0 %v296
      %383 = vmatprep.subr.mxu0 0.0
      %384 = vmatpush1.msra.mxu0 0.0
      %385 = vmatprep.subr.mxu0 0.0
      %386 = vmatpush1.msra.mxu0 0.0
      %387 = vmatprep.subr.mxu0 0.0
      %388 = vmatpush1.msra.mxu0 0.0
      %389 = vmatprep.subr.mxu0 0.0
      %390 = vmatpush1.msra.mxu0 0.0
      %391 = vmatprep.subr.mxu0 0.0
      %392 = vmatpush1.msra.mxu0 0.0
      %393 = vmatprep.subr.mxu0 0.0
      %394 = vmatpush1.msra.mxu0 0.0
      %395 = vmatprep.subr.mxu0 0.0
      %396 = vmatpush1.msra.mxu0 0.0
      %397 = vmatprep.subr.mxu0 0.0
      %398 = vmatpush1.msra.mxu0 0.0
      %399 = vmatprep.subr.mxu0 0.0
      %400 = vmatpush1.msra.mxu0 0.0
      %401 = vmatprep.subr.mxu0 0.0
      %402 = vmatpush1.msra.mxu0 0.0
      %403 = vmatprep.subr.mxu0 0.0
      %404 = vmatpush1.msra.mxu0 0.0
      %405 = vmatprep.subr.mxu0 0.0
      %406 = vmatpush1.msra.mxu0 0.0
      %407 = vmatprep.subr.mxu0 0.0
      %408 = vmatpush1.msra.mxu0 0.0
      %409 = vmatprep.subr.mxu0 0.0
      %410 = vmatpush1.msra.mxu0 0.0
      %411 = vmatprep.subr.mxu0 0.0
      %412 = vmatpush1.msra.mxu0 0.0
      %413 = vmatprep.subr.mxu0 0.0
      %414 = vmatpush1.msra.mxu0 0.0
      %415 = vmatprep.subr.mxu0 0.0
      %416 = vmatpush1.msra.mxu0 0.0
      %417 = vmatprep.subr.mxu0 0.0
      %418 = vmatpush1.msra.mxu0 0.0
      %419 = vmatprep.subr.mxu0 0.0
      %420 = vmatpush1.msra.mxu0 0.0
      %421 = vmatprep.subr.mxu0 0.0
      %422 = vmatpush1.msra.mxu0 0.0
      %423 = vmatprep.subr.mxu0 0.0
      %424 = vmatpush1.msra.mxu0 0.0
      %425 = vmatprep.subr.mxu0 0.0
      %426 = vmatpush1.msra.mxu0 0.0
      %427 = vmatprep.subr.mxu0 0.0
      %428 = vmatpush1.msra.mxu0 0.0
      %429 = vmatprep.subr.mxu0 0.0
      %430 = vmatpush1.msra.mxu0 0.0
      %431 = vmatprep.subr.mxu0 0.0
      %432 = vmatpush1.msra.mxu0 0.0
      %433 = vmatprep.subr.mxu0 0.0
      %434 = vmatpush1.msra.mxu0 0.0
      %435 = vmatprep.subr.mxu0 0.0
      %436 = vmatpush1.msra.mxu0 0.0
      %437 = vmatprep.subr.mxu0 0.0
      %438 = vmatpush1.msra.mxu0 0.0
      %439 = vmatprep.subr.mxu0 0.0
      %440 = vmatpush1.msra.mxu0 0.0
      %441 = vmatprep.subr.mxu0 0.0
      %442 = vmatpush1.msra.mxu0 0.0
      %443 = vmatprep.subr.mxu0 0.0
      %444 = vmatpush1.msra.mxu0 0.0
      %445 = vmatprep.mubr.f32.mxu0 0.0
      %446 = vmatmul.mubr.f32.gmra.mrb[0].mxu0 %v379
      %v447 = vpop.f32.mrb[0].mxu0
      %v448 = vadd.f32 0.0, %v447
      %v449 = vpop.f32.mrb[0].mxu0
      %450 = vdwg.mxu0
      %v451 = vlaneseq
      %v452 = vshrl.u32 %v451, 7
      %v453 = vsub.s32 0, %v452
      %v454 = vrot.slane %v448, %v453
      %v455 = vsub.f32 %v276, %v454
      %v456 = vsub.f32 %v277, %v454
      %v457 = vsub.f32 %v278, %v454
      %v458 = vsub.f32 %v279, %v454
      %v459 = vmul.f32 %v455, %v455
      %v460 = vmul.f32 %v456, %v456
      %v461 = vmul.f32 %v457, %v457
      %v462 = vmul.f32 %v458, %v458
      %v463 = vadd.f32 %v459, %v460
      %v464 = vadd.f32 %v463, %v461
      %v465 = vadd.f32 %v464, %v462
      %v466 = vrot.slane %v465, 4
      %v467 = vadd.f32 %v465, %v466
      %v468 = vrot.slane %v467, 2
      %v469 = vadd.f32 %v467, %v468
      %v470 = vrot.slane %v469, 1
      %v471 = vadd.f32 %v469, %v470
      %472 = vmatprep.subr.mxu0 0.0
      %473 = vmatpush1.msra.mxu0 %v280
      %474 = vmatprep.subr.mxu0 0.0
      %475 = vmatpush1.msra.mxu0 %v281
      %476 = vmatprep.subr.mxu0 0.0
      %477 = vmatpush1.msra.mxu0 %v282
      %478 = vmatprep.subr.mxu0 0.0
      %479 = vmatpush1.msra.mxu0 %v283
      %480 = vmatprep.subr.mxu0 0.0
      %481 = vmatpush1.msra.mxu0 %v284
      %482 = vmatprep.subr.mxu0 0.0
      %483 = vmatpush1.msra.mxu0 %v285
      %484 = vmatprep.subr.mxu0 0.0
      %485 = vmatpush1.msra.mxu0 %v286
      %486 = vmatprep.subr.mxu0 0.0
      %487 = vmatpush1.msra.mxu0 %v287
      %488 = vmatprep.subr.mxu0 0.0
      %489 = vmatpush1.msra.mxu0 %v288
      %490 = vmatprep.subr.mxu0 0.0
      %491 = vmatpush1.msra.mxu0 %v289
      %492 = vmatprep.subr.mxu0 0.0
      %493 = vmatpush1.msra.mxu0 %v290
      %494 = vmatprep.subr.mxu0 0.0
      %495 = vmatpush1.msra.mxu0 %v291
      %496 = vmatprep.subr.mxu0 0.0
      %497 = vmatpush1.msra.mxu0 %v292
      %498 = vmatprep.subr.mxu0 0.0
      %499 = vmatpush1.msra.mxu0 %v293
      %500 = vmatprep.subr.mxu0 0.0
      %501 = vmatpush1.msra.mxu0 %v294
      %502 = vmatprep.subr.mxu0 0.0
      %503 = vmatpush1.msra.mxu0 %v295
      %504 = vmatprep.subr.mxu0 0.0
      %505 = vmatpush1.msra.mxu0 0.0
      %506 = vmatprep.subr.mxu0 0.0
      %507 = vmatpush1.msra.mxu0 0.0
      %508 = vmatprep.subr.mxu0 0.0
      %509 = vmatpush1.msra.mxu0 0.0
      %510 = vmatprep.subr.mxu0 0.0
      %511 = vmatpush1.msra.mxu0 0.0
      %512 = vmatprep.subr.mxu0 0.0
      %513 = vmatpush1.msra.mxu0 0.0
      %514 = vmatprep.subr.mxu0 0.0
      %515 = vmatpush1.msra.mxu0 0.0
      %516 = vmatprep.subr.mxu0 0.0
      %517 = vmatpush1.msra.mxu0 0.0
      %518 = vmatprep.subr.mxu0 0.0
      %519 = vmatpush1.msra.mxu0 0.0
      %520 = vmatprep.subr.mxu0 0.0
      %521 = vmatpush1.msra.mxu0 0.0
      %522 = vmatprep.subr.mxu0 0.0
      %523 = vmatpush1.msra.mxu0 0.0
      %524 = vmatprep.subr.mxu0 0.0
      %525 = vmatpush1.msra.mxu0 0.0
      %526 = vmatprep.subr.mxu0 0.0
      %527 = vmatpush1.msra.mxu0 0.0
      %528 = vmatprep.subr.mxu0 0.0
      %529 = vmatpush1.msra.mxu0 0.0
      %530 = vmatprep.subr.mxu0 0.0
      %531 = vmatpush1.msra.mxu0 0.0
      %532 = vmatprep.subr.mxu0 0.0
      %533 = vmatpush1.msra.mxu0 0.0
      %534 = vmatprep.subr.mxu0 0.0
      %535 = vmatpush1.msra.mxu0 0.0
      %536 = vmatprep.mubr.f32.mxu0 0.0
      %537 = vmatmul.mubr.f32.gmra.mrb[0].mxu0 %v471
      %v538 = vpop.f32.mrb[0].mxu0
      %v539 = vadd.f32 0.0, %v538
      %v540 = vpop.f32.mrb[0].mxu0
      %541 = vdwg.mxu0
      %v542 = vmul.f32 %v539, 0.001953125
      %v543 = vadd.f32 %v542, 1e-05
      %v544 = vrsqrt.pop %v543
      %v546 = vsel %vm377, %v544, 0
      %548 = vmatprep.subr.mxu0 0.0
      %549 = vmatpush1.msra.mxu0 %v296
      %550 = vmatprep.subr.mxu0 0.0
      %551 = vmatpush1.msra.mxu0 0.0
      %552 = vmatprep.subr.mxu0 0.0
      %553 = vmatpush1.msra.mxu0 0.0
      %554 = vmatprep.subr.mxu0 0.0
      %555 = vmatpush1.msra.mxu0 0.0
      %556 = vmatprep.subr.mxu0 0.0
      %557 = vmatpush1.msra.mxu0 0.0
      %558 = vmatprep.subr.mxu0 0.0
      %559 = vmatpush1.msra.mxu0 0.0
      %560 = vmatprep.subr.mxu0 0.0
      %561 = vmatpush1.msra.mxu0 0.0
      %562 = vmatprep.subr.mxu0 0.0
      %563 = vmatpush1.msra.mxu0 0.0
      %564 = vmatprep.subr.mxu0 0.0
      %565 = vmatpush1.msra.mxu0 0.0
      %566 = vmatprep.subr.mxu0 0.0
      %567 = vmatpush1.msra.mxu0 0.0
      %568 = vmatprep.subr.mxu0 0.0
      %569 = vmatpush1.msra.mxu0 0.0
      %570 = vmatprep.subr.mxu0 0.0
      %571 = vmatpush1.msra.mxu0 0.0
      %572 = vmatprep.subr.mxu0 0.0
      %573 = vmatpush1.msra.mxu0 0.0
      %574 = vmatprep.subr.mxu0 0.0
      %575 = vmatpush1.msra.mxu0 0.0
      %576 = vmatprep.subr.mxu0 0.0
      %577 = vmatpush1.msra.mxu0 0.0
      %578 = vmatprep.subr.mxu0 0.0
      %579 = vmatpush1.msra.mxu0 0.0
      %580 = vmatprep.subr.mxu0 0.0
      %581 = vmatpush1.msra.mxu0 0.0
      %582 = vmatprep.subr.mxu0 0.0
      %583 = vmatpush1.msra.mxu0 0.0
      %584 = vmatprep.subr.mxu0 0.0
      %585 = vmatpush1.msra.mxu0 0.0
      %586 = vmatprep.subr.mxu0 0.0
      %587 = vmatpush1.msra.mxu0 0.0
      %588 = vmatprep.subr.mxu0 0.0
      %589 = vmatpush1.msra.mxu0 0.0
      %590 = vmatprep.subr.mxu0 0.0
      %591 = vmatpush1.msra.mxu0 0.0
      %592 = vmatprep.subr.mxu0 0.0
      %593 = vmatpush1.msra.mxu0 0.0
      %594 = vmatprep.subr.mxu0 0.0
      %595 = vmatpush1.msra.mxu0 0.0
      %596 = vmatprep.subr.mxu0 0.0
      %597 = vmatpush1.msra.mxu0 0.0
      %598 = vmatprep.subr.mxu0 0.0
      %599 = vmatpush1.msra.mxu0 0.0
      %600 = vmatprep.subr.mxu0 0.0
      %601 = vmatpush1.msra.mxu0 0.0
      %602 = vmatprep.subr.mxu0 0.0
      %603 = vmatpush1.msra.mxu0 0.0
      %604 = vmatprep.subr.mxu0 0.0
      %605 = vmatpush1.msra.mxu0 0.0
      %606 = vmatprep.subr.mxu0 0.0
      %607 = vmatpush1.msra.mxu0 0.0
      %608 = vmatprep.subr.mxu0 0.0
      %609 = vmatpush1.msra.mxu0 0.0
      %610 = vmatprep.subr.mxu0 0.0
      %611 = vmatpush1.msra.mxu0 0.0
      %612 = vmatprep.mubr.f32.mxu0 0.0
      %613 = vmatmul.mubr.f32.gmra.mrb[0].mxu0 %v546
      %v614 = vpop.f32.mrb[0].mxu0
      %v615 = vadd.f32 0.0, %v614
      %v616 = vpop.f32.mrb[0].mxu0
      %617 = vdwg.mxu0
      %v618 = vld [vmem:[%s2] sm:$0x1]
      %v619 = vmul.f32 %v615, %v618
      %v620 = vlaneseq
      %v621 = vshrl.u32 %v620, 7
      %v622 = vsub.s32 0, %v621
      %v623 = vrot.slane %v619, %v622
      %v624 = vmul.f32 %v455, %v623
      %v625 = vmul.f32 %v456, %v623
      %v626 = vmul.f32 %v457, %v623
      %v627 = vmul.f32 %v458, %v623
      %v628 = vld [vmem:[%s3] sm:$0x1]
      %v630 = vlaneseq
      %v631 = vshrl.u32 %v630, 7
      %v632 = vsub.s32 0, %v631
      %v633 = vrot.slane %v628, %v632
      %v635 = vadd.f32 %v624, %v633
      %v636 = vadd.f32 %v625, %v633
      %v637 = vadd.f32 %v626, %v633
      %v638 = vadd.f32 %v627, %v633
      %v639 = vld [vmem:[%s266] sm:$0xf]
      %v640 = vld [vmem:[%s266 + $0x4] sm:$0xf]
      %v641 = vld [vmem:[%s266 + $0x8] sm:$0xf]
      %v642 = vld [vmem:[%s266 + $0xc] sm:$0xf]
      %v643 = vunpack.c.l.bf16 %v639
      %v644 = vunpack.c.l.bf16 %v640
      %v645 = vunpack.c.l.bf16 %v641
      %v646 = vunpack.c.l.bf16 %v642
      %v647 = vadd.f32 %v635, %v643
      %v648 = vadd.f32 %v636, %v644
      %v649 = vadd.f32 %v637, %v645
      %v650 = vadd.f32 %v638, %v646
      %v651 = vmax.f32 %v647, 0.0
      %v652 = vmax.f32 %v648, 0.0
      %v653 = vmax.f32 %v649, 0.0
      %v654 = vmax.f32 %v650, 0.0
      %655 = vst [vmem:[%s271] sm:$0xff] %v651
      %656 = vst [vmem:[%s271 + $0x8] sm:$0xff] %v652
      %657 = vst [vmem:[%s271 + $0x10] sm:$0xff] %v653
      %658 = vst [vmem:[%s271 + $0x18] sm:$0xff] %v654
      %p659 = scmp.lt.s32.totalorder %s17, 1
      %s660 = scalar_select %p659, %s17, 1
      %s661 = smul.addr %s660, 4
      %s662 = smul.addr %s661, 8
      %s663 = scalar_lea.vmem %s6, %s662
      // Predicated region
      $region45: #{basic_block_forward.9} parent=43 // pred_check
        %p664 = pneg %p171
      $region46: #{basic_block_forward.9} parent=43 // pred_check_branch
        %666 = sbr.rel (%p664) target = $region48
      $region47: #{basic_block_forward.9} parent=43 // pred_region
        _
      $region48: #{basic_block_forward.9} parent=43 // pred_fallthru
        _
    $region44: #{basic_block_forward.9} parent=5 // pred_fallthru
      _
    %p667 = scmp.le.s32.totalorder 2, %s12
    // Predicated region
    $region49: #{basic_block_forward.9} parent=5 // pred_check
      %p668 = pneg %p667
    $region50: #{basic_block_forward.9} parent=5 // pred_check_branch
      %670 = sbr.rel (%p668) target = $region52
    $region51: #{basic_block_forward.9} parent=5 // pred_region
      %s671 = ssub.s32 %s12, 2
      // Predicated region
      $region53: #{basic_block_forward.9} parent=51 // pred_check
        %p672 = pneg %p177
      $region54: #{basic_block_forward.9} parent=51 // pred_check_branch
        %674 = sbr.rel (%p672) target = $region56
      $region55: #{basic_block_forward.9} parent=51 // pred_region
        %p675 = scmp.lt.s32.totalorder %s18, 1
        %s676 = scalar_select %p675, %s18, 1
        %s677 = smul.addr %s676, 4
        %s678 = smul.addr %s677, 8
        %s679 = scalar_lea.vmem %s6, %s678
      $region56: #{basic_block_forward.9} parent=51 // pred_fallthru
        _
    $region52: #{basic_block_forward.9} parent=5 // pred_fallthru
      _
  $region6: #{basic_block_forward.9} parent=0 // loop_footer
    %s16 = sadd.s32 1, %s12
  $region7: #{basic_block_forward.9} parent=0 // loop_footer_branch
    %11 = sbr.rel target = $region3
  $region8: #{basic_block_forward.9} parent=0 // loop_exit
    _

// kernel: basic_block_forward.5
$region0: #{basic_block_forward.5}
  #allocation0 [shape = 'u32[]', space=smem, size = 0x4, offset = 0x4, fixed_abs, tag = 'smem constant byte address 0x4 - core index']
  #allocation1 [shape = 'u32[144,128]{1,0:T(1,128)}', space=vmem, size = 0x12000, scoped, tag = 'internal scratch']
  #allocation2 [shape = 'f32[18,18,8]{2,1,0:T(8,128)}', space=vmem, size = 0x36000, scoped, tag = 'scratch operand']
  %s0 = inlined_call_operand.vmem [shape: bf16[2,16,16,8], index: 0, kind: input, shape index: {}]
  %s1 = inlined_call_operand.vmem [shape: bf16[9,8,16], index: 1, kind: input, shape index: {}]
  %s2 = inlined_call_operand.vmem [shape: bf16[8,16], index: 2, kind: input, shape index: {}]
  %s3 = inlined_call_operand.vmem [shape: bf16[2,256,16], index: 3, kind: output, shape index: {0}]
  %s4 = inlined_call_operand.vmem [shape: bf16[2,256,16], index: 4, kind: output, shape index: {1}]
  %5 = xla_tuple %s3, %s4
  %s6 = sld [smem:[#allocation0]]
  $region53: #{basic_block_forward.5} parent=0
    _
  %s8 = ssub.s32 1, %s6
  %s9 = scalar_select 0, %s8, %s6
  loop: start=0, step=1, limit=4
  $region2: #{basic_block_forward.5} parent=0 // loop_pre_header
    _
  $region3: #{basic_block_forward.5} parent=0 // loop_header
    %s11 = sphi 0, %s15
    %p12 = scmp.ge.s32.totalorder %s11, 4
    %s21 = sphi 0, %s23
    %s24 = sphi 0, %s21
    %s25 = sphi 0, %s24
    %s41 = sphi 0, %s25
    %s45 = sphi 0, %s45
    %s47 = sphi 0, %s45
    %s48 = sphi 0, %s47
    %s62 = sphi 0, %s48
    %s66 = sphi 0, %s66
    %s68 = sphi 0, %s66
    %s69 = sphi 0, %s68
    %s83 = sphi 0, %s69
    %s89 = sphi 0, %s91
    %s92 = sphi 0, %s89
    %s93 = sphi 0, %s92
    %s109 = sphi 0, %s93
    %s115 = sphi 0, %s117
    %s118 = sphi 0, %s115
    %s119 = sphi 0, %s118
    %s135 = sphi 0, %s119
  $region4: #{basic_block_forward.5} parent=0 // loop_header_branch
    %14 = sbr.rel (%p12) target = $region8
  $region5: #{basic_block_forward.5} parent=0 // loop_body
    %s16 = ssub.s32 %s11, 1
    %s17 = ssub.s32 %s11, 2
    %s18 = sadd.s32 %s11, 1
    %s19 = ssub.s32 %s11, %s18
    %p20 = scmp.eq.s32.totalorder %s19, 0
    %s22 = sadd.s32 %s21, 1
    %s23 = scalar_select %p20, %s21, %s22
    %p26 = pneg %p20
    %p27 = scmp.eq.s32.totalorder %s11, 1
    %p28 = por %p26, %p27
    %p29 = scmp.ne.s32.totalorder %s21, %s24
    %p30 = scmp.eq.s32.totalorder %s11, 0
    %p31 = por %p29, %p30
    %p32 = scmp.ne.s32.totalorder %s21, %s24
    %p33 = scmp.eq.s32.totalorder %s16, 1
    %p34 = por %p32, %p33
    %p35 = scmp.ne.s32.totalorder %s24, %s25
    %p36 = scmp.eq.s32.totalorder %s16, 0
    %p37 = por %p35, %p36
    %p38 = scmp.ne.s32.totalorder %s24, %s25
    %p39 = scmp.eq.s32.totalorder %s17, 1
    %p40 = por %p38, %p39
    %p42 = scmp.ne.s32.totalorder %s25, %s41
    %p43 = scmp.eq.s32.totalorder %s17, 0
    %p44 = por %p42, %p43
    %s46 = sadd.s32 %s45, 1
    %p49 = scmp.eq.s32.totalorder %s11, 1
    %p50 = scmp.ne.s32.totalorder %s45, %s47
    %p51 = scmp.eq.s32.totalorder %s11, 0
    %p52 = por %p50, %p51
    %p53 = scmp.ne.s32.totalorder %s45, %s47
    %p54 = scmp.eq.s32.totalorder %s16, 1
    %p55 = por %p53, %p54
    %p56 = scmp.ne.s32.totalorder %s47, %s48
    %p57 = scmp.eq.s32.totalorder %s16, 0
    %p58 = por %p56, %p57
    %p59 = scmp.ne.s32.totalorder %s47, %s48
    %p60 = scmp.eq.s32.totalorder %s17, 1
    %p61 = por %p59, %p60
    %p63 = scmp.ne.s32.totalorder %s48, %s62
    %p64 = scmp.eq.s32.totalorder %s17, 0
    %p65 = por %p63, %p64
    %s67 = sadd.s32 %s66, 1
    %p70 = scmp.eq.s32.totalorder %s11, 1
    %p71 = scmp.ne.s32.totalorder %s66, %s68
    %p72 = scmp.eq.s32.totalorder %s11, 0
    %p73 = por %p71, %p72
    %p74 = scmp.ne.s32.totalorder %s66, %s68
    %p75 = scmp.eq.s32.totalorder %s16, 1
    %p76 = por %p74, %p75
    %p77 = scmp.ne.s32.totalorder %s68, %s69
    %p78 = scmp.eq.s32.totalorder %s16, 0
    %p79 = por %p77, %p78
    %p80 = scmp.ne.s32.totalorder %s68, %s69
    %p81 = scmp.eq.s32.totalorder %s17, 1
    %p82 = por %p80, %p81
    %p84 = scmp.ne.s32.totalorder %s69, %s83
    %p85 = scmp.eq.s32.totalorder %s17, 0
    %p86 = por %p84, %p85
    %s87 = ssub.s32 %s11, %s18
    %p88 = scmp.eq.s32.totalorder %s87, 0
    %s90 = sadd.s32 %s89, 1
    %s91 = scalar_select %p88, %s89, %s90
    %p94 = pneg %p88
    %p95 = scmp.eq.s32.totalorder %s11, 1
    %p96 = por %p94, %p95
    %p97 = scmp.ne.s32.totalorder %s89, %s92
    %p98 = scmp.eq.s32.totalorder %s11, 0
    %p99 = por %p97, %p98
    %p100 = scmp.ne.s32.totalorder %s89, %s92
    %p101 = scmp.eq.s32.totalorder %s16, 1
    %p102 = por %p100, %p101
    %p103 = scmp.ne.s32.totalorder %s92, %s93
    %p104 = scmp.eq.s32.totalorder %s16, 0
    %p105 = por %p103, %p104
    %p106 = scmp.ne.s32.totalorder %s92, %s93
    %p107 = scmp.eq.s32.totalorder %s17, 1
    %p108 = por %p106, %p107
    %p110 = scmp.ne.s32.totalorder %s93, %s109
    %p111 = scmp.eq.s32.totalorder %s17, 0
    %p112 = por %p110, %p111
    %s113 = ssub.s32 %s11, %s18
    %p114 = scmp.eq.s32.totalorder %s113, 0
    %s116 = sadd.s32 %s115, 1
    %s117 = scalar_select %p114, %s115, %s116
    %p120 = pneg %p114
    %p121 = scmp.eq.s32.totalorder %s11, 1
    %p122 = por %p120, %p121
    %p123 = scmp.ne.s32.totalorder %s115, %s118
    %p124 = scmp.eq.s32.totalorder %s11, 0
    %p125 = por %p123, %p124
    %p126 = scmp.ne.s32.totalorder %s115, %s118
    %p127 = scmp.eq.s32.totalorder %s16, 1
    %p128 = por %p126, %p127
    %p129 = scmp.ne.s32.totalorder %s118, %s119
    %p130 = scmp.eq.s32.totalorder %s16, 0
    %p131 = por %p129, %p130
    %p132 = scmp.ne.s32.totalorder %s118, %s119
    %p133 = scmp.eq.s32.totalorder %s17, 1
    %p134 = por %p132, %p133
    %p136 = scmp.ne.s32.totalorder %s119, %s135
    %p137 = scmp.eq.s32.totalorder %s17, 0
    %p138 = por %p136, %p137
    %p139 = scmp.le.s32.totalorder 1, %s11
    %p140 = scmp.lt.s32.totalorder %s11, 3
    %p141 = pnand %p139, %p140
    %p142 = pneg %p141
    // Predicated region
    $region9: #{basic_block_forward.5} parent=5 // pred_check
      _
    $region10: #{basic_block_forward.5} parent=5 // pred_check_branch
      %144 = sbr.rel (%p141) target = $region12
    $region11: #{basic_block_forward.5} parent=5 // pred_region
      %s145 = ssub.s32 %s11, 1
      // Predicated region
      $region13: #{basic_block_forward.5} parent=11 // pred_check
        %p146 = pneg %p58
      $region14: #{basic_block_forward.5} parent=11 // pred_check_branch
        %148 = sbr.rel (%p146) target = $region16
      $region15: #{basic_block_forward.5} parent=11 // pred_region
        _
      $region16: #{basic_block_forward.5} parent=11 // pred_fallthru
        _
      // Predicated region
      $region17: #{basic_block_forward.5} parent=11 // pred_check
        %p149 = pneg %p79
      $region18: #{basic_block_forward.5} parent=11 // pred_check_branch
        %151 = sbr.rel (%p149) target = $region20
      $region19: #{basic_block_forward.5} parent=11 // pred_region
        _
      $region20: #{basic_block_forward.5} parent=11 // pred_fallthru
        _
    $region12: #{basic_block_forward.5} parent=5 // pred_fallthru
      _
    %p152 = scmp.lt.s32.totalorder %s11, 2
    // Predicated region
    $region21: #{basic_block_forward.5} parent=5 // pred_check
      %p153 = pneg %p152
    $region22: #{basic_block_forward.5} parent=5 // pred_check_branch
      %155 = sbr.rel (%p153) target = $region24
    $region23: #{basic_block_forward.5} parent=5 // pred_region
      // Predicated region
      $region25: #{basic_block_forward.5} parent=23 // pred_check
        %p156 = pneg %p31
      $region26: #{basic_block_forward.5} parent=23 // pred_check_branch
        %158 = sbr.rel (%p156) target = $region28
      $region27: #{basic_block_forward.5} parent=23 // pred_region
        %p159 = scmp.lt.s32.totalorder %s11, 1
        %s160 = scalar_select %p159, %s11, 1
        %s161 = smul.addr %s160, 32
        %s162 = smul.addr %s161, 4
        %s163 = scalar_lea.vmem %s0, %s162
      $region28: #{basic_block_forward.5} parent=23 // pred_fallthru
        _
    $region24: #{basic_block_forward.5} parent=5 // pred_fallthru
      _
    %p164 = scmp.le.s32.totalorder 1, %s11
    %p165 = scmp.lt.s32.totalorder %s11, 3
    %p166 = pnand %p164, %p165
    %p167 = pneg %p166
    // Predicated region
    $region29: #{basic_block_forward.5} parent=5 // pred_check
      _
    $region30: #{basic_block_forward.5} parent=5 // pred_check_branch
      %169 = sbr.rel (%p166) target = $region32
    $region31: #{basic_block_forward.5} parent=5 // pred_region
      %s170 = ssub.s32 %s11, 1
      %p171 = scmp.lt.s32.totalorder %s16, 1
      %s172 = scalar_select %p171, %s16, 1
      %s173 = smul.addr %s172, 32
      %s174 = smul.addr %s173, 4
      %s175 = scalar_lea.vmem %s0, %s174
      %p176 = pneg %p37
      %p177 = pneg %p34
      %p178 = pneg %p58
      %p179 = pneg %p55
      %p180 = pneg %p79
      %p181 = pneg %p76
      %p182 = pneg %p105
      %p183 = pneg %p102
      %p184 = scmp.lt.s32.totalorder %s16, 1
      %s185 = scalar_select %p184, %s16, 1
      %s186 = smul.addr %s185, 32
      %s187 = smul.addr %s186, 4
      %s188 = scalar_lea.vmem %s3, %s187
      %p189 = pneg %p131
      %p190 = pneg %p128
      %p191 = scmp.lt.s32.totalorder %s16, 1
      %s192 = scalar_select %p191, %s16, 1
      %s193 = smul.addr %s192, 32
      %s194 = smul.addr %s193, 4
      %s195 = scalar_lea.vmem %s4, %s194
      %p196 = scmp.lt.s32.totalorder %s16, 1
      %s197 = scalar_select %p196, %s16, 1
      %s198 = smul.addr %s197, 32
      %s199 = smul.addr %s198, 4
      %s200 = scalar_lea.vmem %s0, %s199
      %p201 = scmp.lt.s32.totalorder %s16, 1
      %s202 = scalar_select %p201, %s16, 1
      %s203 = smul.addr %s202, 32
      %s204 = smul.addr %s203, 4
      %s205 = scalar_lea.vmem %s3, %s204
      %p206 = scmp.lt.s32.totalorder %s16, 1
      %s207 = scalar_select %p206, %s16, 1
      %s208 = smul.addr %s207, 32
      %s209 = smul.addr %s208, 4
      %s210 = scalar_lea.vmem %s4, %s209
      %vm212 = vcmask 64512
      %213 = vst.msk [vmem:[#allocation2] sm:$0xff] %vm212, 0.0
      %214 = vst.msk [vmem:[#allocation2 + $0x8] sm:$0xff] %vm212, 0.0
      %vm215 = vcmask 58368
      %216 = vst.msk [vmem:[#allocation2 + $0x10] sm:$0x3] %vm215, 0.0
      %217 = vst.msk [vmem:[#allocation2 + $0x18] sm:$0xff] %vm212, 0.0
      %218 = vst.msk [vmem:[#allocation2 + $0x20] sm:$0xff] %vm212, 0.0
      %219 = vst.msk [vmem:[#allocation2 + $0x28] sm:$0x3] %vm215, 0.0
      %220 = vst.msk [vmem:[#allocation2 + $0x30] sm:$0xff] %vm212, 0.0
      %221 = vst.msk [vmem:[#allocation2 + $0x38] sm:$0xff] %vm212, 0.0
      %222 = vst.msk [vmem:[#allocation2 + $0x40] sm:$0x3] %vm215, 0.0
      %223 = vst.msk [vmem:[#allocation2 + $0x48] sm:$0xff] %vm212, 0.0
      %224 = vst.msk [vmem:[#allocation2 + $0x50] sm:$0xff] %vm212, 0.0
      %225 = vst.msk [vmem:[#allocation2 + $0x58] sm:$0x3] %vm215, 0.0
      %226 = vst.msk [vmem:[#allocation2 + $0x60] sm:$0xff] %vm212, 0.0
      %227 = vst.msk [vmem:[#allocation2 + $0x68] sm:$0xff] %vm212, 0.0
      %228 = vst.msk [vmem:[#allocation2 + $0x70] sm:$0x3] %vm215, 0.0
      %229 = vst.msk [vmem:[#allocation2 + $0x78] sm:$0xff] %vm212, 0.0
      %230 = vst.msk [vmem:[#allocation2 + $0x80] sm:$0xff] %vm212, 0.0
      %231 = vst.msk [vmem:[#allocation2 + $0x88] sm:$0x3] %vm215, 0.0
      %232 = vst.msk [vmem:[#allocation2 + $0x90] sm:$0xff] %vm212, 0.0
      %233 = vst.msk [vmem:[#allocation2 + $0x98] sm:$0xff] %vm212, 0.0
      %234 = vst.msk [vmem:[#allocation2 + $0xa0] sm:$0x3] %vm215, 0.0
      %235 = vst.msk [vmem:[#allocation2 + $0xa8] sm:$0xff] %vm212, 0.0
      %236 = vst.msk [vmem:[#allocation2 + $0xb0] sm:$0xff] %vm212, 0.0
      %237 = vst.msk [vmem:[#allocation2 + $0xb8] sm:$0x3] %vm215, 0.0
      %238 = vst.msk [vmem:[#allocation2 + $0xc0] sm:$0xff] %vm212, 0.0
      %239 = vst.msk [vmem:[#allocation2 + $0xc8] sm:$0xff] %vm212, 0.0
      %240 = vst.msk [vmem:[#allocation2 + $0xd0] sm:$0x3] %vm215, 0.0
      %241 = vst.msk [vmem:[#allocation2 + $0xd8] sm:$0xff] %vm212, 0.0
      %242 = vst.msk [vmem:[#allocation2 + $0xe0] sm:$0xff] %vm212, 0.0
      %243 = vst.msk [vmem:[#allocation2 + $0xe8] sm:$0x3] %vm215, 0.0
      %244 = vst.msk [vmem:[#allocation2 + $0xf0] sm:$0xff] %vm212, 0.0
      %245 = vst.msk [vmem:[#allocation2 + $0xf8] sm:$0xff] %vm212, 0.0
      %246 = vst.msk [vmem:[#allocation2 + $0x100] sm:$0x3] %vm215, 0.0
      %247 = vst.msk [vmem:[#allocation2 + $0x108] sm:$0xff] %vm212, 0.0
      %248 = vst.msk [vmem:[#allocation2 + $0x110] sm:$0xff] %vm212, 0.0
      %249 = vst.msk [vmem:[#allocation2 + $0x118] sm:$0x3] %vm215, 0.0
      %250 = vst.msk [vmem:[#allocation2 + $0x120] sm:$0xff] %vm212, 0.0
      %251 = vst.msk [vmem:[#allocation2 + $0x128] sm:$0xff] %vm212, 0.0
      %252 = vst.msk [vmem:[#allocation2 + $0x130] sm:$0x3] %vm215, 0.0
      %253 = vst.msk [vmem:[#allocation2 + $0x138] sm:$0xff] %vm212, 0.0
      %254 = vst.msk [vmem:[#allocation2 + $0x140] sm:$0xff] %vm212, 0.0
      %255 = vst.msk [vmem:[#allocation2 + $0x148] sm:$0x3] %vm215, 0.0
      %256 = vst.msk [vmem:[#allocation2 + $0x150] sm:$0xff] %vm212, 0.0
      %257 = vst.msk [vmem:[#allocation2 + $0x158] sm:$0xff] %vm212, 0.0
      %258 = vst.msk [vmem:[#allocation2 + $0x160] sm:$0x3] %vm215, 0.0
      %259 = vst.msk [vmem:[#allocation2 + $0x168] sm:$0xff] %vm212, 0.0
      %260 = vst.msk [vmem:[#allocation2 + $0x170] sm:$0xff] %vm212, 0.0
      %261 = vst.msk [vmem:[#allocation2 + $0x178] sm:$0x3] %vm215, 0.0
      %262 = vst.msk [vmem:[#allocation2 + $0x180] sm:$0xff] %vm212, 0.0
      %263 = vst.msk [vmem:[#allocation2 + $0x188] sm:$0xff] %vm212, 0.0
      %264 = vst.msk [vmem:[#allocation2 + $0x190] sm:$0x3] %vm215, 0.0
      %265 = vst.msk [vmem:[#allocation2 + $0x198] sm:$0xff] %vm212, 0.0
      %266 = vst.msk [vmem:[#allocation2 + $0x1a0] sm:$0xff] %vm212, 0.0
      %267 = vst.msk [vmem:[#allocation2 + $0x1a8] sm:$0x3] %vm215, 0.0
      %v268 = vld [vmem:[%s200] sm:$0xf]
      %v269 = vld [vmem:[%s200 + $0x4] sm:$0xf]
      %v270 = vld [vmem:[%s200 + $0x8] sm:$0xf]
      %v271 = vld [vmem:[%s200 + $0xc] sm:$0xf]
      %v272 = vld [vmem:[%s200 + $0x10] sm:$0xf]
      %v273 = vld [vmem:[%s200 + $0x14] sm:$0xf]
      %v274 = vld [vmem:[%s200 + $0x18] sm:$0xf]
      %v275 = vld [vmem:[%s200 + $0x1c] sm:$0xf]
      %v276 = vld [vmem:[%s200 + $0x20] sm:$0xf]
      %v277 = vld [vmem:[%s200 + $0x24] sm:$0xf]
      %v278 = vld [vmem:[%s200 + $0x28] sm:$0xf]
      %v279 = vld [vmem:[%s200 + $0x2c] sm:$0xf]
      %v280 = vld [vmem:[%s200 + $0x30] sm:$0xf]
      %v281 = vld [vmem:[%s200 + $0x34] sm:$0xf]
      %v282 = vld [vmem:[%s200 + $0x38] sm:$0xf]
      %v283 = vld [vmem:[%s200 + $0x3c] sm:$0xf]
      %v284 = vld [vmem:[%s200 + $0x40] sm:$0xf]
      %v285 = vld [vmem:[%s200 + $0x44] sm:$0xf]
      %v286 = vld [vmem:[%s200 + $0x48] sm:$0xf]
      %v287 = vld [vmem:[%s200 + $0x4c] sm:$0xf]
      %v288 = vld [vmem:[%s200 + $0x50] sm:$0xf]
      %v289 = vld [vmem:[%s200 + $0x54] sm:$0xf]
      %v290 = vld [vmem:[%s200 + $0x58] sm:$0xf]
      %v291 = vld [vmem:[%s200 + $0x5c] sm:$0xf]
      %v292 = vld [vmem:[%s200 + $0x60] sm:$0xf]
      %v293 = vld [vmem:[%s200 + $0x64] sm:$0xf]
      %v294 = vld [vmem:[%s200 + $0x68] sm:$0xf]
      %v295 = vld [vmem:[%s200 + $0x6c] sm:$0xf]
      %v296 = vld [vmem:[%s200 + $0x70] sm:$0xf]
      %v297 = vld [vmem:[%s200 + $0x74] sm:$0xf]
      %v298 = vld [vmem:[%s200 + $0x78] sm:$0xf]
      %v299 = vld [vmem:[%s200 + $0x7c] sm:$0xf]
      %v300 = vunpack.c.l.bf16 %v268
      %v301 = vunpack.c.l.bf16 %v269
      %v302 = vunpack.c.l.bf16 %v270
      %v303 = vunpack.c.l.bf16 %v271
      %v304 = vunpack.c.l.bf16 %v272
      %v305 = vunpack.c.l.bf16 %v273
      %v306 = vunpack.c.l.bf16 %v274
      %v307 = vunpack.c.l.bf16 %v275
      %v308 = vunpack.c.l.bf16 %v276
      %v309 = vunpack.c.l.bf16 %v277
      %v310 = vunpack.c.l.bf16 %v278
      %v311 = vunpack.c.l.bf16 %v279
      %v312 = vunpack.c.l.bf16 %v280
      %v313 = vunpack.c.l.bf16 %v281
      %v314 = vunpack.c.l.bf16 %v282
      %v315 = vunpack.c.l.bf16 %v283
      %v316 = vunpack.c.l.bf16 %v284
      %v317 = vunpack.c.l.bf16 %v285
      %v318 = vunpack.c.l.bf16 %v286
      %v319 = vunpack.c.l.bf16 %v287
      %v320 = vunpack.c.l.bf16 %v288
      %v321 = vunpack.c.l.bf16 %v289
      %v322 = vunpack.c.l.bf16 %v290
      %v323 = vunpack.c.l.bf16 %v291
      %v324 = vunpack.c.l.bf16 %v292
      %v325 = vunpack.c.l.bf16 %v293
      %v326 = vunpack.c.l.bf16 %v294
      %v327 = vunpack.c.l.bf16 %v295
      %v328 = vunpack.c.l.bf16 %v296
      %v329 = vunpack.c.l.bf16 %v297
      %v330 = vunpack.c.l.bf16 %v298
      %v331 = vunpack.c.l.bf16 %v299
      %s332 = scalar_lea.vmem [#allocation2], 24
      %333 = vst.msk [vmem:[%s332 + $0x1] sm:$0xff] %vm212, %v300
      %334 = vst.msk [vmem:[%s332 + $0x9] sm:$0xff] %vm212, %v301
      %335 = vst.msk [vmem:[%s332 + $0x19] sm:$0xff] %vm212, %v302
      %336 = vst.msk [vmem:[%s332 + $0x21] sm:$0xff] %vm212, %v303
      %337 = vst.msk [vmem:[%s332 + $0x31] sm:$0xff] %vm212, %v304
      %338 = vst.msk [vmem:[%s332 + $0x39] sm:$0xff] %vm212, %v305
      %339 = vst.msk [vmem:[%s332 + $0x49] sm:$0xff] %vm212, %v306
      %340 = vst.msk [vmem:[%s332 + $0x51] sm:$0xff] %vm212, %v307
      %341 = vst.msk [vmem:[%s332 + $0x61] sm:$0xff] %vm212, %v308
      %342 = vst.msk [vmem:[%s332 + $0x69] sm:$0xff] %vm212, %v309
      %343 = vst.msk [vmem:[%s332 + $0x79] sm:$0xff] %vm212, %v310
      %344 = vst.msk [vmem:[%s332 + $0x81] sm:$0xff] %vm212, %v311
      %345 = vst.msk [vmem:[%s332 + $0x91] sm:$0xff] %vm212, %v312
      %346 = vst.msk [vmem:[%s332 + $0x99] sm:$0xff] %vm212, %v313
      %347 = vst.msk [vmem:[%s332 + $0xa9] sm:$0xff] %vm212, %v314
      %348 = vst.msk [vmem:[%s332 + $0xb1] sm:$0xff] %vm212, %v315
      %349 = vst.msk [vmem:[%s332 + $0xc1] sm:$0xff] %vm212, %v316
      %350 = vst.msk [vmem:[%s332 + $0xc9] sm:$0xff] %vm212, %v317
      %351 = vst.msk [vmem:[%s332 + $0xd9] sm:$0xff] %vm212, %v318
      %352 = vst.msk [vmem:[%s332 + $0xe1] sm:$0xff] %vm212, %v319
      %353 = vst.msk [vmem:[%s332 + $0xf1] sm:$0xff] %vm212, %v320
      %354 = vst.msk [vmem:[%s332 + $0xf9] sm:$0xff] %vm212, %v321
      %355 = vst.msk [vmem:[%s332 + $0x109] sm:$0xff] %vm212, %v322
      %356 = vst.msk [vmem:[%s332 + $0x111] sm:$0xff] %vm212, %v323
      %357 = vst.msk [vmem:[%s332 + $0x121] sm:$0xff] %vm212, %v324
      %358 = vst.msk [vmem:[%s332 + $0x129] sm:$0xff] %vm212, %v325
      %359 = vst.msk [vmem:[%s332 + $0x139] sm:$0xff] %vm212, %v326
      %360 = vst.msk [vmem:[%s332 + $0x141] sm:$0xff] %vm212, %v327
      %361 = vst.msk [vmem:[%s332 + $0x151] sm:$0xff] %vm212, %v328
      %362 = vst.msk [vmem:[%s332 + $0x159] sm:$0xff] %vm212, %v329
      %363 = vst.msk [vmem:[%s332 + $0x169] sm:$0xff] %vm212, %v330
      %364 = vst.msk [vmem:[%s332 + $0x171] sm:$0xff] %vm212, %v331
      %v365 = vld [vmem:[#allocation2] sm:$0xff]
      %v366 = vld [vmem:[#allocation2 + $0x8] sm:$0xff]
      %v367 = vld [vmem:[#allocation2 + $0x18] sm:$0xff]
      %v368 = vld [vmem:[#allocation2 + $0x20] sm:$0xff]
      %v369 = vld [vmem:[#allocation2 + $0x30] sm:$0xff]
      %v370 = vld [vmem:[#allocation2 + $0x38] sm:$0xff]
      %v371 = vld [vmem:[#allocation2 + $0x48] sm:$0xff]
      %v372 = vld [vmem:[#allocation2 + $0x50] sm:$0xff]
      %v373 = vld [vmem:[#allocation2 + $0x60] sm:$0xff]
      %v374 = vld [vmem:[#allocation2 + $0x68] sm:$0xff]
      %v375 = vld [vmem:[#allocation2 + $0x78] sm:$0xff]
      %v376 = vld [vmem:[#allocation2 + $0x80] sm:$0xff]
      %v377 = vld [vmem:[#allocation2 + $0x90] sm:$0xff]
      %v378 = vld [vmem:[#allocation2 + $0x98] sm:$0xff]
      %v379 = vld [vmem:[#allocation2 + $0xa8] sm:$0xff]
      %v380 = vld [vmem:[#allocation2 + $0xb0] sm:$0xff]
      %v381 = vld [vmem:[#allocation2 + $0xc0] sm:$0xff]
      %v382 = vld [vmem:[#allocation2 + $0xc8] sm:$0xff]
      %v383 = vld [vmem:[#allocation2 + $0xd8] sm:$0xff]
      %v384 = vld [vmem:[#allocation2 + $0xe0] sm:$0xff]
      %v385 = vld [vmem:[#allocation2 + $0xf0] sm:$0xff]
      %v386 = vld [vmem:[#allocation2 + $0xf8] sm:$0xff]
      %v387 = vld [vmem:[#allocation2 + $0x108] sm:$0xff]
      %v388 = vld [vmem:[#allocation2 + $0x110] sm:$0xff]
      %v389 = vld [vmem:[#allocation2 + $0x120] sm:$0xff]
      %v390 = vld [vmem:[#allocation2 + $0x128] sm:$0xff]
      %v391 = vld [vmem:[#allocation2 + $0x138] sm:$0xff]
      %v392 = vld [vmem:[#allocation2 + $0x140] sm:$0xff]
      %v393 = vld [vmem:[#allocation2 + $0x150] sm:$0xff]
      %v394 = vld [vmem:[#allocation2 + $0x158] sm:$0xff]
      %v395 = vld [vmem:[#allocation2 + $0x168] sm:$0xff]
      %v396 = vld [vmem:[#allocation2 + $0x170] sm:$0xff]
      %v397 = vpack.c.bf16 %v366, %v365
      %v398 = vpack.c.bf16 %v368, %v367
      %v399 = vpack.c.bf16 %v370, %v369
      %v400 = vpack.c.bf16 %v372, %v371
      %v401 = vpack.c.bf16 %v374, %v373
      %v402 = vpack.c.bf16 %v376, %v375
      %v403 = vpack.c.bf16 %v378, %v377
      %v404 = vpack.c.bf16 %v380, %v379
      %v405 = vpack.c.bf16 %v382, %v381
      %v406 = vpack.c.bf16 %v384, %v383
      %v407 = vpack.c.bf16 %v386, %v385
      %v408 = vpack.c.bf16 %v388, %v387
      %v409 = vpack.c.bf16 %v390, %v389
      %v410 = vpack.c.bf16 %v392, %v391
      %v411 = vpack.c.bf16 %v394, %v393
      %v412 = vpack.c.bf16 %v396, %v395
      %v413 = vld [vmem:[%s1] sm:$0xf]
      %v414 = vld [vmem:[#allocation2 + $0x1] sm:$0xff]
      %v415 = vld [vmem:[#allocation2 + $0x9] sm:$0xff]
      %v416 = vld [vmem:[#allocation2 + $0x19] sm:$0xff]
      %v417 = vld [vmem:[#allocation2 + $0x21] sm:$0xff]
      %v418 = vld [vmem:[#allocation2 + $0x31] sm:$0xff]
      %v419 = vld [vmem:[#allocation2 + $0x39] sm:$0xff]
      %v420 = vld [vmem:[#allocation2 + $0x49] sm:$0xff]
      %v421 = vld [vmem:[#allocation2 + $0x51] sm:$0xff]
      %v422 = vld [vmem:[#allocation2 + $0x61] sm:$0xff]
      %v423 = vld [vmem:[#allocation2 + $0x69] sm:$0xff]
      %v424 = vld [vmem:[#allocation2 + $0x79] sm:$0xff]
      %v425 = vld [vmem:[#allocation2 + $0x81] sm:$0xff]
      %v426 = vld [vmem:[#allocation2 + $0x91] sm:$0xff]
      %v427 = vld [vmem:[#allocation2 + $0x99] sm:$0xff]
      %v428 = vld [vmem:[#allocation2 + $0xa9] sm:$0xff]
      %v429 = vld [vmem:[#allocation2 + $0xb1] sm:$0xff]
      %v430 = vld [vmem:[#allocation2 + $0xc1] sm:$0xff]
      %v431 = vld [vmem:[#allocation2 + $0xc9] sm:$0xff]
      %v432 = vld [vmem:[#allocation2 + $0xd9] sm:$0xff]
      %v433 = vld [vmem:[#allocation2 + $0xe1] sm:$0xff]
      %v434 = vld [vmem:[#allocation2 + $0xf1] sm:$0xff]
      %v435 = vld [vmem:[#allocation2 + $0xf9] sm:$0xff]
      %v436 = vld [vmem:[#allocation2 + $0x109] sm:$0xff]
      %v437 = vld [vmem:[#allocation2 + $0x111] sm:$0xff]
      %v438 = vld [vmem:[#allocation2 + $0x121] sm:$0xff]
      %v439 = vld [vmem:[#allocation2 + $0x129] sm:$0xff]
      %v440 = vld [vmem:[#allocation2 + $0x139] sm:$0xff]
      %v441 = vld [vmem:[#allocation2 + $0x141] sm:$0xff]
      %v442 = vld [vmem:[#allocation2 + $0x151] sm:$0xff]
      %v443 = vld [vmem:[#allocation2 + $0x159] sm:$0xff]
      %v444 = vld [vmem:[#allocation2 + $0x169] sm:$0xff]
      %v445 = vld [vmem:[#allocation2 + $0x171] sm:$0xff]
      %v446 = vpack.c.bf16 %v415, %v414
      %v447 = vpack.c.bf16 %v417, %v416
      %v448 = vpack.c.bf16 %v419, %v418
      %v449 = vpack.c.bf16 %v421, %v420
      %v450 = vpack.c.bf16 %v423, %v422
      %v451 = vpack.c.bf16 %v425, %v424
      %v452 = vpack.c.bf16 %v427, %v426
      %v453 = vpack.c.bf16 %v429, %v428
      %v454 = vpack.c.bf16 %v431, %v430
      %v455 = vpack.c.bf16 %v433, %v432
      %v456 = vpack.c.bf16 %v435, %v434
      %v457 = vpack.c.bf16 %v437, %v436
      %v458 = vpack.c.bf16 %v439, %v438
      %v459 = vpack.c.bf16 %v441, %v440
      %v460 = vpack.c.bf16 %v443, %v442
      %v461 = vpack.c.bf16 %v445, %v444
      %s462 = scalar_lea.vmem %s1, 4
      %v463 = vld [vmem:[%s462] sm:$0xf]
      %v465 = vsel %vm212, %v446, 0
      %v468 = vsel %vm212, %v447, 0
      %v471 = vsel %vm212, %v448, 0
      %v474 = vsel %vm212, %v449, 0
      %v477 = vsel %vm212, %v450, 0
      %v480 = vsel %vm212, %v451, 0
      %v483 = vsel %vm212, %v452, 0
      %v486 = vsel %vm212, %v453, 0
      %v489 = vsel %vm212, %v454, 0
      %v492 = vsel %vm212, %v455, 0
      %v495 = vsel %vm212, %v456, 0
      %v498 = vsel %vm212, %v457, 0
      %v501 = vsel %vm212, %v458, 0
      %v504 = vsel %vm212, %v459, 0
      %v507 = vsel %vm212, %v460, 0
      %v510 = vsel %vm212, %v461, 0
      %vm512 = vcmask 1043456
      %v514 = vsel %vm512, %v463, 0
      %516 = vmatprep.subr.bf16.mxu0 0
      %517 = vmatpush1.bf16.msra.mxu0 %v514
      %518 = vmatprep.subr.bf16.mxu0 0
      %519 = vmatpush1.bf16.msra.mxu0 0
      %520 = vmatprep.subr.bf16.mxu0 0
      %521 = vmatpush1.bf16.msra.mxu0 0
      %522 = vmatprep.subr.bf16.mxu0 0
      %523 = vmatpush1.bf16.msra.mxu0 0
      %524 = vmatprep.subr.bf16.mxu0 0
      %525 = vmatpush1.bf16.msra.mxu0 0
      %526 = vmatprep.subr.bf16.mxu0 0
      %527 = vmatpush1.bf16.msra.mxu0 0
      %528 = vmatprep.subr.bf16.mxu0 0
      %529 = vmatpush1.bf16.msra.mxu0 0
      %530 = vmatprep.subr.bf16.mxu0 0
      %531 = vmatpush1.bf16.msra.mxu0 0
      %532 = vmatprep.subr.bf16.mxu0 0
      %533 = vmatpush1.bf16.msra.mxu0 0
      %534 = vmatprep.subr.bf16.mxu0 0
      %535 = vmatpush1.bf16.msra.mxu0 0
      %536 = vmatprep.subr.bf16.mxu0 0
      %537 = vmatpush1.bf16.msra.mxu0 0
      %538 = vmatprep.subr.bf16.mxu0 0
      %539 = vmatpush1.bf16.msra.mxu0 0
      %540 = vmatprep.subr.bf16.mxu0 0
      %541 = vmatpush1.bf16.msra.mxu0 0
      %542 = vmatprep.subr.bf16.mxu0 0
      %543 = vmatpush1.bf16.msra.mxu0 0
      %544 = vmatprep.subr.bf16.mxu0 0
      %545 = vmatpush1.bf16.msra.mxu0 0
      %546 = vmatprep.subr.bf16.mxu0 0
      %547 = vmatpush1.bf16.msra.mxu0 0
      %548 = vmatprep.mubr.bf16.mxu0 0
      %549 = vmatmul.mubr.bf16.gmra.mrb[0].mxu0 %v465
      %v550 = vpop.f32.mrb[0].mxu0
      %v551 = vadd.f32 0.0, %v550
      %v552 = vpop.f32.mrb[0].mxu0
      %v553 = vpop.f32.mrb[0].mxu0
      %v554 = vadd.f32 0.0, %v553
      %v555 = vpop.f32.mrb[0].mxu0
      %556 = vmatprep.mubr.bf16.mxu0 0
      %557 = vmatmul.mubr.bf16.gmra.mrb[0].mxu0 %v468
      %v558 = vpop.f32.mrb[0].mxu0
      %v559 = vadd.f32 0.0, %v558
      %v560 = vpop.f32.mrb[0].mxu0
      %v561 = vpop.f32.mrb[0].mxu0
      %v562 = vadd.f32 0.0, %v561
      %v563 = vpop.f32.mrb[0].mxu0
      %564 = vmatprep.mubr.bf16.mxu0 0
      %565 = vmatmul.mubr.bf16.gmra.mrb[0].mxu0 %v471
      %v566 = vpop.f32.mrb[0].mxu0
      %v567 = vadd.f32 0.0, %v566
      %v568 = vpop.f32.mrb[0].mxu0
      %v569 = vpop.f32.mrb[0].mxu0
      %v570 = vadd.f32 0.0, %v569
      %v571 = vpop.f32.mrb[0].mxu0
      %572 = vmatprep.mubr.bf16.mxu0 0
      %573 = vmatmul.mubr.bf16.gmra.mrb[0].mxu0 %v474
      %v574 = vpop.f32.mrb[0].mxu0
      %v575 = vadd.f32 0.0, %v574
      %v576 = vpop.f32.mrb[0].mxu0
      %v577 = vpop.f32.mrb[0].mxu0
      %v578 = vadd.f32 0.0, %v577
      %v579 = vpop.f32.mrb[0].mxu0
      %580 = vmatprep.mubr.bf16.mxu0 0
      %581 = vmatmul.mubr.bf16.gmra.mrb[0].mxu0 %v477
      %v582 = vpop.f32.mrb[0].mxu0
      %v583 = vadd.f32 0.0, %v582
      %v584 = vpop.f32.mrb[0].mxu0
      %v585 = vpop.f32.mrb[0].mxu0
      %v586 = vadd.f32 0.0, %v585
      %v587 = vpop.f32.mrb[0].mxu0
      %588 = vmatprep.mubr.bf16.mxu0 0
      %589 = vmatmul.mubr.bf16.gmra.mrb[0].mxu0 %v480
      %v590 = vpop.f32.mrb[0].mxu0
      %v591 = vadd.f32 0.0, %v590
      %v592 = vpop.f32.mrb[0].mxu0
      %v593 = vpop.f32.mrb[0].mxu0
      %v594 = vadd.f32 0.0, %v593
      %v595 = vpop.f32.mrb[0].mxu0
      %596 = vmatprep.mubr.bf16.mxu0 0
      %597 = vmatmul.mubr.bf16.gmra.mrb[0].mxu0 %v483
      %v598 = vpop.f32.mrb[0].mxu0
      %v599 = vadd.f32 0.0, %v598
      %v600 = vpop.f32.mrb[0].mxu0
      %v601 = vpop.f32.mrb[0].mxu0
      %v602 = vadd.f32 0.0, %v601
      %v603 = vpop.f32.mrb[0].mxu0
      %604 = vmatprep.mubr.bf16.mxu0 0
      %605 = vmatmul.mubr.bf16.gmra.mrb[0].mxu0 %v486
      %v606 = vpop.f32.mrb[0].mxu0
      %v607 = vadd.f32 0.0, %v606
      %v608 = vpop.f32.mrb[0].mxu0
      %v609 = vpop.f32.mrb[0].mxu0
      %v610 = vadd.f32 0.0, %v609
      %v611 = vpop.f32.mrb[0].mxu0
      %612 = vmatprep.mubr.bf16.mxu0 0
      %613 = vmatmul.mubr.bf16.gmra.mrb[0].mxu0 %v489
      %v614 = vpop.f32.mrb[0].mxu0
      %v615 = vadd.f32 0.0, %v614
      %v616 = vpop.f32.mrb[0].mxu0
      %v617 = vpop.f32.mrb[0].mxu0
      %v618 = vadd.f32 0.0, %v617
      %v619 = vpop.f32.mrb[0].mxu0
      %620 = vmatprep.mubr.bf16.mxu0 0
      %621 = vmatmul.mubr.bf16.gmra.mrb[0].mxu0 %v492
      %v622 = vpop.f32.mrb[0].mxu0
      %v623 = vadd.f32 0.0, %v622
      %v624 = vpop.f32.mrb[0].mxu0
      %v625 = vpop.f32.mrb[0].mxu0
      %v626 = vadd.f32 0.0, %v625
      %v627 = vpop.f32.mrb[0].mxu0
      %628 = vmatprep.mubr.bf16.mxu0 0
      %629 = vmatmul.mubr.bf16.gmra.mrb[0].mxu0 %v495
      %v630 = vpop.f32.mrb[0].mxu0
      %v631 = vadd.f32 0.0, %v630
      %v632 = vpop.f32.mrb[0].mxu0
      %v633 = vpop.f32.mrb[0].mxu0
      %v634 = vadd.f32 0.0, %v633
      %v635 = vpop.f32.mrb[0].mxu0
      %636 = vmatprep.mubr.bf16.mxu0 0
      %637 = vmatmul.mubr.bf16.gmra.mrb[0].mxu0 %v498
      %v638 = vpop.f32.mrb[0].mxu0
      %v639 = vadd.f32 0.0, %v638
      %v640 = vpop.f32.mrb[0].mxu0
      %v641 = vpop.f32.mrb[0].mxu0
      %v642 = vadd.f32 0.0, %v641
      %v643 = vpop.f32.mrb[0].mxu0
      %644 = vmatprep.mubr.bf16.mxu0 0
      %645 = vmatmul.mubr.bf16.gmra.mrb[0].mxu0 %v501
      %v646 = vpop.f32.mrb[0].mxu0
      %v647 = vadd.f32 0.0, %v646
      %v648 = vpop.f32.mrb[0].mxu0
      %v649 = vpop.f32.mrb[0].mxu0
      %v650 = vadd.f32 0.0, %v649
      %v651 = vpop.f32.mrb[0].mxu0
      %652 = vmatprep.mubr.bf16.mxu0 0
      %653 = vmatmul.mubr.bf16.gmra.mrb[0].mxu0 %v504
      %v654 = vpop.f32.mrb[0].mxu0
      %v655 = vadd.f32 0.0, %v654
      %v656 = vpop.f32.mrb[0].mxu0
      %v657 = vpop.f32.mrb[0].mxu0
      %v658 = vadd.f32 0.0, %v657
      %v659 = vpop.f32.mrb[0].mxu0
      %660 = vmatprep.mubr.bf16.mxu0 0
      %661 = vmatmul.mubr.bf16.gmra.mrb[0].mxu0 %v507
      %v662 = vpop.f32.mrb[0].mxu0
      %v663 = vadd.f32 0.0, %v662
      %v664 = vpop.f32.mrb[0].mxu0
      %v665 = vpop.f32.mrb[0].mxu0
      %v666 = vadd.f32 0.0, %v665
      %v667 = vpop.f32.mrb[0].mxu0
      %668 = vmatprep.mubr.bf16.mxu0 0
      %669 = vmatmul.mubr.bf16.gmra.mrb[0].mxu0 %v510
      %v670 = vpop.f32.mrb[0].mxu0
      %v671 = vadd.f32 0.0, %v670
      %v672 = vpop.f32.mrb[0].mxu0
      %v673 = vpop.f32.mrb[0].mxu0
      %v674 = vadd.f32 0.0, %v673
      %v675 = vpop.f32.mrb[0].mxu0
      %676 = vdwg.mxu0
      %v678 = vsel %vm212, %v397, 0
      %v681 = vsel %vm212, %v398, 0
      %v684 = vsel %vm212, %v399, 0
      %v687 = vsel %vm212, %v400, 0
      %v690 = vsel %vm212, %v401, 0
      %v693 = vsel %vm212, %v402, 0
      %v696 = vsel %vm212, %v403, 0
      %v699 = vsel %vm212, %v404, 0
      %v702 = vsel %vm212, %v405, 0
      %v705 = vsel %vm212, %v406, 0
      %v708 = vsel %vm212, %v407, 0
      %v711 = vsel %vm212, %v408, 0
      %v714 = vsel %vm212, %v409, 0
      %v717 = vsel %vm212, %v410, 0
      %v720 = vsel %vm212, %v411, 0
      %v723 = vsel %vm212, %v412, 0
      %v726 = vsel %vm512, %v413, 0
      %728 = vmatprep.subr.bf16.mxu0 0
      %729 = vmatpush1.bf16.msra.mxu0 %v726
      %730 = vmatprep.subr.bf16.mxu0 0
      %731 = vmatpush1.bf16.msra.mxu0 0
      %732 = vmatprep.subr.bf16.mxu0 0
      %733 = vmatpush1.bf16.msra.mxu0 0
      %734 = vmatprep.subr.bf16.mxu0 0
      %735 = vmatpush1.bf16.msra.mxu0 0
      %736 = vmatprep.subr.bf16.mxu0 0
      %737 = vmatpush1.bf16.msra.mxu0 0
      %738 = vmatprep.subr.bf16.mxu0 0
      %739 = vmatpush1.bf16.msra.mxu0 0
      %740 = vmatprep.subr.bf16.mxu0 0
      %741 = vmatpush1.bf16.msra.mxu0 0
      %742 = vmatprep.subr.bf16.mxu0 0
      %743 = vmatpush1.bf16.msra.mxu0 0
      %744 = vmatprep.subr.bf16.mxu0 0
      %745 = vmatpush1.bf16.msra.mxu0 0
      %746 = vmatprep.subr.bf16.mxu0 0
      %747 = vmatpush1.bf16.msra.mxu0 0
      %748 = vmatprep.subr.bf16.mxu0 0
      %749 = vmatpush1.bf16.msra.mxu0 0
      %750 = vmatprep.subr.bf16.mxu0 0
      %751 = vmatpush1.bf16.msra.mxu0 0
      %752 = vmatprep.subr.bf16.mxu0 0
      %753 = vmatpush1.bf16.msra.mxu0 0
      %754 = vmatprep.subr.bf16.mxu0 0
      %755 = vmatpush1.bf16.msra.mxu0 0
      %756 = vmatprep.subr.bf16.mxu0 0
      %757 = vmatpush1.bf16.msra.mxu0 0
      %758 = vmatprep.subr.bf16.mxu0 0
      %759 = vmatpush1.bf16.msra.mxu0 0
      %760 = vmatprep.mubr.bf16.mxu0 0
      %761 = vmatmul.mubr.bf16.gmra.mrb[0].mxu0 %v678
      %v762 = vpop.f32.mrb[0].mxu0
      %v763 = vadd.f32 %v551, %v762
      %v764 = vpop.f32.mrb[0].mxu0
      %v765 = vpop.f32.mrb[0].mxu0
      %v766 = vadd.f32 %v554, %v765
      %v767 = vpop.f32.mrb[0].mxu0
      %768 = vmatprep.mubr.bf16.mxu0 0
      %769 = vmatmul.mubr.bf16.gmra.mrb[0].mxu0 %v681
      %v770 = vpop.f32.mrb[0].mxu0
      %v771 = vadd.f32 %v559, %v770
      %v772 = vpop.f32.mrb[0].mxu0
      %v773 = vpop.f32.mrb[0].mxu0
      %v774 = vadd.f32 %v562, %v773
      %v775 = vpop.f32.mrb[0].mxu0
      %776 = vmatprep.mubr.bf16.mxu0 0
      %777 = vmatmul.mubr.bf16.gmra.mrb[0].mxu0 %v684
      %v778 = vpop.f32.mrb[0].mxu0
      %v779 = vadd.f32 %v567, %v778
      %v780 = vpop.f32.mrb[0].mxu0
      %v781 = vpop.f32.mrb[0].mxu0
      %v782 = vadd.f32 %v570, %v781
      %v783 = vpop.f32.mrb[0].mxu0
      %784 = vmatprep.mubr.bf16.mxu0 0
      %785 = vmatmul.mubr.bf16.gmra.mrb[0].mxu0 %v687
      %v786 = vpop.f32.mrb[0].mxu0
      %v787 = vadd.f32 %v575, %v786
      %v788 = vpop.f32.mrb[0].mxu0
      %v789 = vpop.f32.mrb[0].mxu0
      %v790 = vadd.f32 %v578, %v789
      %v791 = vpop.f32.mrb[0].mxu0
      %792 = vmatprep.mubr.bf16.mxu0 0
      %793 = vmatmul.mubr.bf16.gmra.mrb[0].mxu0 %v690
      %v794 = vpop.f32.mrb[0].mxu0
      %v795 = vadd.f32 %v583, %v794
      %v796 = vpop.f32.mrb[0].mxu0
      %v797 = vpop.f32.mrb[0].mxu0
      %v798 = vadd.f32 %v586, %v797
      %v799 = vpop.f32.mrb[0].mxu0
      %800 = vmatprep.mubr.bf16.mxu0 0
      %801 = vmatmul.mubr.bf16.gmra.mrb[0].mxu0 %v693
      %v802 = vpop.f32.mrb[0].mxu0
      %v803 = vadd.f32 %v591, %v802
      %v804 = vpop.f32.mrb[0].mxu0
      %v805 = vpop.f32.mrb[0].mxu0
      %v806 = vadd.f32 %v594, %v805
      %v807 = vpop.f32.mrb[0].mxu0
      %808 = vmatprep.mubr.bf16.mxu0 0
      %809 = vmatmul.mubr.bf16.gmra.mrb[0].mxu0 %v696
      %v810 = vpop.f32.mrb[0].mxu0
      %v811 = vadd.f32 %v599, %v810
      %v812 = vpop.f32.mrb[0].mxu0
      %v813 = vpop.f32.mrb[0].mxu0
      %v814 = vadd.f32 %v602, %v813
      %v815 = vpop.f32.mrb[0].mxu0
      %816 = vmatprep.mubr.bf16.mxu0 0
      %817 = vmatmul.mubr.bf16.gmra.mrb[0].mxu0 %v699
      %v818 = vpop.f32.mrb[0].mxu0
      %v819 = vadd.f32 %v607, %v818
      %v820 = vpop.f32.mrb[0].mxu0
      %v821 = vpop.f32.mrb[0].mxu0
      %v822 = vadd.f32 %v610, %v821
      %v823 = vpop.f32.mrb[0].mxu0
      %824 = vmatprep.mubr.bf16.mxu0 0
      %825 = vmatmul.mubr.bf16.gmra.mrb[0].mxu0 %v702
      %v826 = vpop.f32.mrb[0].mxu0
      %v827 = vadd.f32 %v615, %v826
      %v828 = vpop.f32.mrb[0].mxu0
      %v829 = vpop.f32.mrb[0].mxu0
      %v830 = vadd.f32 %v618, %v829
      %v831 = vpop.f32.mrb[0].mxu0
      %832 = vmatprep.mubr.bf16.mxu0 0
      %833 = vmatmul.mubr.bf16.gmra.mrb[0].mxu0 %v705
      %v834 = vpop.f32.mrb[0].mxu0
      %v835 = vadd.f32 %v623, %v834
      %v836 = vpop.f32.mrb[0].mxu0
      %v837 = vpop.f32.mrb[0].mxu0
      %v838 = vadd.f32 %v626, %v837
      %v839 = vpop.f32.mrb[0].mxu0
      %840 = vmatprep.mubr.bf16.mxu0 0
      %841 = vmatmul.mubr.bf16.gmra.mrb[0].mxu0 %v708
      %v842 = vpop.f32.mrb[0].mxu0
      %v843 = vadd.f32 %v631, %v842
      %v844 = vpop.f32.mrb[0].mxu0
      %v845 = vpop.f32.mrb[0].mxu0
      %v846 = vadd.f32 %v634, %v845
      %v847 = vpop.f32.mrb[0].mxu0
      %848 = vmatprep.mubr.bf16.mxu0 0
      %849 = vmatmul.mubr.bf16.gmra.mrb[0].mxu0 %v711
      %v850 = vpop.f32.mrb[0].mxu0
      %v851 = vadd.f32 %v639, %v850
      %v852 = vpop.f32.mrb[0].mxu0
      %v853 = vpop.f32.mrb[0].mxu0
      %v854 = vadd.f32 %v642, %v853
      %v855 = vpop.f32.mrb[0].mxu0
      %856 = vmatprep.mubr.bf16.mxu0 0
      %857 = vmatmul.mubr.bf16.gmra.mrb[0].mxu0 %v714
      %v858 = vpop.f32.mrb[0].mxu0
      %v859 = vadd.f32 %v647, %v858
      %v860 = vpop.f32.mrb[0].mxu0
      %v861 = vpop.f32.mrb[0].mxu0
      %v862 = vadd.f32 %v650, %v861
      %v863 = vpop.f32.mrb[0].mxu0
      %864 = vmatprep.mubr.bf16.mxu0 0
      %865 = vmatmul.mubr.bf16.gmra.mrb[0].mxu0 %v717
      %v866 = vpop.f32.mrb[0].mxu0
      %v867 = vadd.f32 %v655, %v866
      %v868 = vpop.f32.mrb[0].mxu0
      %v869 = vpop.f32.mrb[0].mxu0
      %v870 = vadd.f32 %v658, %v869
      %v871 = vpop.f32.mrb[0].mxu0
      %872 = vmatprep.mubr.bf16.mxu0 0
      %873 = vmatmul.mubr.bf16.gmra.mrb[0].mxu0 %v720
      %v874 = vpop.f32.mrb[0].mxu0
      %v875 = vadd.f32 %v663, %v874
      %v876 = vpop.f32.mrb[0].mxu0
      %v877 = vpop.f32.mrb[0].mxu0
      %v878 = vadd.f32 %v666, %v877
      %v879 = vpop.f32.mrb[0].mxu0
      %880 = vmatprep.mubr.bf16.mxu0 0
      %881 = vmatmul.mubr.bf16.gmra.mrb[0].mxu0 %v723
      %v882 = vpop.f32.mrb[0].mxu0
      %v883 = vadd.f32 %v671, %v882
      %v884 = vpop.f32.mrb[0].mxu0
      %v885 = vpop.f32.mrb[0].mxu0
      %v886 = vadd.f32 %v674, %v885
      %v887 = vpop.f32.mrb[0].mxu0
      %888 = vdwg.mxu0
      %v889 = vld [vmem:[#allocation2 + $0x2] sm:$0xff]
      %v890 = vld [vmem:[#allocation2 + $0xa] sm:$0xff]
      %v891 = vld [vmem:[#allocation2 + $0x1a] sm:$0xff]
      %v892 = vld [vmem:[#allocation2 + $0x22] sm:$0xff]
      %v893 = vld [vmem:[#allocation2 + $0x32] sm:$0xff]
      %v894 = vld [vmem:[#allocation2 + $0x3a] sm:$0xff]
      %v895 = vld [vmem:[#allocation2 + $0x4a] sm:$0xff]
      %v896 = vld [vmem:[#allocation2 + $0x52] sm:$0xff]
      %v897 = vld [vmem:[#allocation2 + $0x62] sm:$0xff]
      %v898 = vld [vmem:[#allocation2 + $0x6a] sm:$0xff]
      %v899 = vld [vmem:[#allocation2 + $0x7a] sm:$0xff]
      %v900 = vld [vmem:[#allocation2 + $0x82] sm:$0xff]
      %v901 = vld [vmem:[#allocation2 + $0x92] sm:$0xff]
      %v902 = vld [vmem:[#allocation2 + $0x9a] sm:$0xff]
      %v903 = vld [vmem:[#allocation2 + $0xaa] sm:$0xff]
      %v904 = vld [vmem:[#allocation2 + $0xb2] sm:$0xff]
      %v905 = vld [vmem:[#allocation2 + $0xc2] sm:$0xff]
      %v906 = vld [vmem:[#allocation2 + $0xca] sm:$0xff]
      %v907 = vld [vmem:[#allocation2 + $0xda] sm:$0xff]
      %v908 = vld [vmem:[#allocation2 + $0xe2] sm:$0xff]
      %v909 = vld [vmem:[#allocation2 + $0xf2] sm:$0xff]
      %v910 = vld [vmem:[#allocation2 + $0xfa] sm:$0xff]
      %v911 = vld [vmem:[#allocation2 + $0x10a] sm:$0xff]
      %v912 = vld [vmem:[#allocation2 + $0x112] sm:$0xff]
      %v913 = vld [vmem:[#allocation2 + $0x122] sm:$0xff]
      %v914 = vld [vmem:[#allocation2 + $0x12a] sm:$0xff]
      %v915 = vld [vmem:[#allocation2 + $0x13a] sm:$0xff]
      %v916 = vld [vmem:[#allocation2 + $0x142] sm:$0xff]
      %v917 = vld [vmem:[#allocation2 + $0x152] sm:$0xff]
      %v918 = vld [vmem:[#allocation2 + $0x15a] sm:$0xff]
      %v919 = vld [vmem:[#allocation2 + $0x16a] sm:$0xff]
      %v920 = vld [vmem:[#allocation2 + $0x172] sm:$0xff]
      %v921 = vpack.c.bf16 %v890, %v889
      %v922 = vpack.c.bf16 %v892, %v891
      %v923 = vpack.c.bf16 %v894, %v893
      %v924 = vpack.c.bf16 %v896, %v895
      %v925 = vpack.c.bf16 %v898, %v897
      %v926 = vpack.c.bf16 %v900, %v899
      %v927 = vpack.c.bf16 %v902, %v901
      %v928 = vpack.c.bf16 %v904, %v903
      %v929 = vpack.c.bf16 %v906, %v905
      %v930 = vpack.c.bf16 %v908, %v907
      %v931 = vpack.c.bf16 %v910, %v909
      %v932 = vpack.c.bf16 %v912, %v911
      %v933 = vpack.c.bf16 %v914, %v913
      %v934 = vpack.c.bf16 %v916, %v915
      %v935 = vpack.c.bf16 %v918, %v917
      %v936 = vpack.c.bf16 %v920, %v919
      %s937 = scalar_lea.vmem %s1, 8
      %v938 = vld [vmem:[%s937] sm:$0xf]
      %v940 = vsel %vm212, %v921, 0
      %v943 = vsel %vm212, %v922, 0
      %v946 = vsel %vm212, %v923, 0
      %v949 = vsel %vm212, %v924, 0
      %v952 = vsel %vm212, %v925, 0
      %v955 = vsel %vm212, %v926, 0
      %v958 = vsel %vm212, %v927, 0
      %v961 = vsel %vm212, %v928, 0
      %v964 = vsel %vm212, %v929, 0
      %v967 = vsel %vm212, %v930, 0
      %v970 = vsel %vm212, %v931, 0
      %v973 = vsel %vm212, %v932, 0
      %v976 = vsel %vm212, %v933, 0
      %v979 = vsel %vm212, %v934, 0
      %v982 = vsel %vm212, %v935, 0
      %v985 = vsel %vm212, %v936, 0
      %v988 = vsel %vm512, %v938, 0
      %990 = vmatprep.subr.bf16.mxu0 0
      %991 = vmatpush1.bf16.msra.mxu0 %v988
      %992 = vmatprep.subr.bf16.mxu0 0
      %993 = vmatpush1.bf16.msra.mxu0 0
      %994 = vmatprep.subr.bf16.mxu0 0
      %995 = vmatpush1.bf16.msra.mxu0 0
      %996 = vmatprep.subr.bf16.mxu0 0
      %997 = vmatpush1.bf16.msra.mxu0 0
      %998 = vmatprep.subr.bf16.mxu0 0
      %999 = vmatpush1.bf16.msra.mxu0 0
      %1000 = vmatprep.subr.bf16.mxu0 0
      %1001 = vmatpush1.bf16.msra.mxu0 0
      %1002 = vmatprep.subr.bf16.mxu0 0
      %1003 = vmatpush1.bf16.msra.mxu0 0
      %1004 = vmatprep.subr.bf16.mxu0 0
      %1005 = vmatpush1.bf16.msra.mxu0 0
      %1006 = vmatprep.subr.bf16.mxu0 0
      %1007 = vmatpush1.bf16.msra.mxu0 0
      %1008 = vmatprep.subr.bf16.mxu0 0
      %1009 = vmatpush1.bf16.msra.mxu0 0
      %1010 = vmatprep.subr.bf16.mxu0 0
      %1011 = vmatpush1.bf16.msra.mxu0 0
      %1012 = vmatprep.subr.bf16.mxu0 0
      %1013 = vmatpush1.bf16.msra.mxu0 0
      %1014 = vmatprep.subr.bf16.mxu0 0
      %1015 = vmatpush1.bf16.msra.mxu0 0
      %1016 = vmatprep.subr.bf16.mxu0 0
      %1017 = vmatpush1.bf16.msra.mxu0 0
      %1018 = vmatprep.subr.bf16.mxu0 0
      %1019 = vmatpush1.bf16.msra.mxu0 0
      %1020 = vmatprep.subr.bf16.mxu0 0
      %1021 = vmatpush1.bf16.msra.mxu0 0
      %1022 = vmatprep.mubr.bf16.mxu0 0
      %1023 = vmatmul.mubr.bf16.gmra.mrb[0].mxu0 %v940
      %v1024 = vpop.f32.mrb[0].mxu0
      %v1025 = vadd.f32 0.0, %v1024
      %v1026 = vpop.f32.mrb[0].mxu0
      %v1027 = vpop.f32.mrb[0].mxu0
      %v1028 = vadd.f32 0.0, %v1027
      %v1029 = vpop.f32.mrb[0].mxu0
      %1030 = vmatprep.mubr.bf16.mxu0 0
      %1031 = vmatmul.mubr.bf16.gmra.mrb[0].mxu0 %v943
      %v1032 = vpop.f32.mrb[0].mxu0
      %v1033 = vadd.f32 0.0, %v1032
      %v1034 = vpop.f32.mrb[0].mxu0
      %v1035 = vpop.f32.mrb[0].mxu0
      %v1036 = vadd.f32 0.0, %v1035
      %v1037 = vpop.f32.mrb[0].mxu0
      %1038 = vmatprep.mubr.bf16.mxu0 0
      %1039 = vmatmul.mubr.bf16.gmra.mrb[0].mxu0 %v946
      %v1040 = vpop.f32.mrb[0].mxu0
      %v1041 = vadd.f32 0.0, %v1040
      %v1042 = vpop.f32.mrb[0].mxu0
      %v1043 = vpop.f32.mrb[0].mxu0
      %v1044 = vadd.f32 0.0, %v1043
      %v1045 = vpop.f32.mrb[0].mxu0
      %1046 = vmatprep.mubr.bf16.mxu0 0
      %1047 = vmatmul.mubr.bf16.gmra.mrb[0].mxu0 %v949
      %v1048 = vpop.f32.mrb[0].mxu0
      %v1049 = vadd.f32 0.0, %v1048
      %v1050 = vpop.f32.mrb[0].mxu0
      %v1051 = vpop.f32.mrb[0].mxu0
      %v1052 = vadd.f32 0.0, %v1051
      %v1053 = vpop.f32.mrb[0].mxu0
      %1054 = vmatprep.mubr.bf16.mxu0 0
      %1055 = vmatmul.mubr.bf16.gmra.mrb[0].mxu0 %v952
      %v1056 = vpop.f32.mrb[0].mxu0
      %v1057 = vadd.f32 0.0, %v1056
      %v1058 = vpop.f32.mrb[0].mxu0
      %v1059 = vpop.f32.mrb[0].mxu0
      %v1060 = vadd.f32 0.0, %v1059
      %v1061 = vpop.f32.mrb[0].mxu0
      %1062 = vmatprep.mubr.bf16.mxu0 0
      %1063 = vmatmul.mubr.bf16.gmra.mrb[0].mxu0 %v955
      %v1064 = vpop.f32.mrb[0].mxu0
      %v1065 = vadd.f32 0.0, %v1064
      %v1066 = vpop.f32.mrb[0].mxu0
      %v1067 = vpop.f32.mrb[0].mxu0
      %v1068 = vadd.f32 0.0, %v1067
      %v1069 = vpop.f32.mrb[0].mxu0
      %1070 = vmatprep.mubr.bf16.mxu0 0
      %1071 = vmatmul.mubr.bf16.gmra.mrb[0].mxu0 %v958
      %v1072 = vpop.f32.mrb[0].mxu0
      %v1073 = vadd.f32 0.0, %v1072
      %v1074 = vpop.f32.mrb[0].mxu0
      %v1075 = vpop.f32.mrb[0].mxu0
      %v1076 = vadd.f32 0.0, %v1075
      %v1077 = vpop.f32.mrb[0].mxu0
      %1078 = vmatprep.mubr.bf16.mxu0 0
      %1079 = vmatmul.mubr.bf16.gmra.mrb[0].mxu0 %v961
      %v1080 = vpop.f32.mrb[0].mxu0
      %v1081 = vadd.f32 0.0, %v1080
      %v1082 = vpop.f32.mrb[0].mxu0
      %v1083 = vpop.f32.mrb[0].mxu0
      %v1084 = vadd.f32 0.0, %v1083
      %v1085 = vpop.f32.mrb[0].mxu0
      %1086 = vmatprep.mubr.bf16.mxu0 0
      %1087 = vmatmul.mubr.bf16.gmra.mrb[0].mxu0 %v964
      %v1088 = vpop.f32.mrb[0].mxu0
      %v1089 = vadd.f32 0.0, %v1088
      %v1090 = vpop.f32.mrb[0].mxu0
      %v1091 = vpop.f32.mrb[0].mxu0
      %v1092 = vadd.f32 0.0, %v1091
      %v1093 = vpop.f32.mrb[0].mxu0
      %1094 = vmatprep.mubr.bf16.mxu0 0
      %1095 = vmatmul.mubr.bf16.gmra.mrb[0].mxu0 %v967
      %v1096 = vpop.f32.mrb[0].mxu0
      %v1097 = vadd.f32 0.0, %v1096
      %v1098 = vpop.f32.mrb[0].mxu0
      %v1099 = vpop.f32.mrb[0].mxu0
      %v1100 = vadd.f32 0.0, %v1099
      %v1101 = vpop.f32.mrb[0].mxu0
      %1102 = vmatprep.mubr.bf16.mxu0 0
      %1103 = vmatmul.mubr.bf16.gmra.mrb[0].mxu0 %v970
      %v1104 = vpop.f32.mrb[0].mxu0
      %v1105 = vadd.f32 0.0, %v1104
      %v1106 = vpop.f32.mrb[0].mxu0
      %v1107 = vpop.f32.mrb[0].mxu0
      %v1108 = vadd.f32 0.0, %v1107
      %v1109 = vpop.f32.mrb[0].mxu0
      %1110 = vmatprep.mubr.bf16.mxu0 0
      %1111 = vmatmul.mubr.bf16.gmra.mrb[0].mxu0 %v973
      %v1112 = vpop.f32.mrb[0].mxu0
      %v1113 = vadd.f32 0.0, %v1112
      %v1114 = vpop.f32.mrb[0].mxu0
      %v1115 = vpop.f32.mrb[0].mxu0
      %v1116 = vadd.f32 0.0, %v1115
      %v1117 = vpop.f32.mrb[0].mxu0
      %1118 = vmatprep.mubr.bf16.mxu0 0
      %1119 = vmatmul.mubr.bf16.gmra.mrb[0].mxu0 %v976
      %v1120 = vpop.f32.mrb[0].mxu0
      %v1121 = vadd.f32 0.0, %v1120
      %v1122 = vpop.f32.mrb[0].mxu0
      %v1123 = vpop.f32.mrb[0].mxu0
      %v1124 = vadd.f32 0.0, %v1123
      %v1125 = vpop.f32.mrb[0].mxu0
      %1126 = vmatprep.mubr.bf16.mxu0 0
      %1127 = vmatmul.mubr.bf16.gmra.mrb[0].mxu0 %v979
      %v1128 = vpop.f32.mrb[0].mxu0
      %v1129 = vadd.f32 0.0, %v1128
      %v1130 = vpop.f32.mrb[0].mxu0
      %v1131 = vpop.f32.mrb[0].mxu0
      %v1132 = vadd.f32 0.0, %v1131
      %v1133 = vpop.f32.mrb[0].mxu0
      %1134 = vmatprep.mubr.bf16.mxu0 0
      %1135 = vmatmul.mubr.bf16.gmra.mrb[0].mxu0 %v982
      %v1136 = vpop.f32.mrb[0].mxu0
      %v1137 = vadd.f32 0.0, %v1136
      %v1138 = vpop.f32.mrb[0].mxu0
      %v1139 = vpop.f32.mrb[0].mxu0
      %v1140 = vadd.f32 0.0, %v1139
      %v1141 = vpop.f32.mrb[0].mxu0
      %1142 = vmatprep.mubr.bf16.mxu0 0
      %1143 = vmatmul.mubr.bf16.gmra.mrb[0].mxu0 %v985
      %v1144 = vpop.f32.mrb[0].mxu0
      %v1145 = vadd.f32 0.0, %v1144
      %v1146 = vpop.f32.mrb[0].mxu0
      %v1147 = vpop.f32.mrb[0].mxu0
      %v1148 = vadd.f32 0.0, %v1147
      %v1149 = vpop.f32.mrb[0].mxu0
      %1150 = vdwg.mxu0
      %v1151 = vadd.f32 %v763, %v1025
      %v1152 = vadd.f32 %v766, %v1028
      %v1153 = vadd.f32 %v771, %v1033
      %v1154 = vadd.f32 %v774, %v1036
      %v1155 = vadd.f32 %v779, %v1041
      %v1156 = vadd.f32 %v782, %v1044
      %v1157 = vadd.f32 %v787, %v1049
      %v1158 = vadd.f32 %v790, %v1052
      %v1159 = vadd.f32 %v795, %v1057
      %v1160 = vadd.f32 %v798, %v1060
      %v1161 = vadd.f32 %v803, %v1065
      %v1162 = vadd.f32 %v806, %v1068
      %v1163 = vadd.f32 %v811, %v1073
      %v1164 = vadd.f32 %v814, %v1076
      %v1165 = vadd.f32 %v819, %v1081
      %v1166 = vadd.f32 %v822, %v1084
      %v1167 = vadd.f32 %v827, %v1089
      %v1168 = vadd.f32 %v830, %v1092
      %v1169 = vadd.f32 %v835, %v1097
      %v1170 = vadd.f32 %v838, %v1100
      %v1171 = vadd.f32 %v843, %v1105
      %v1172 = vadd.f32 %v846, %v1108
      %v1173 = vadd.f32 %v851, %v1113
      %v1174 = vadd.f32 %v854, %v1116
      %v1175 = vadd.f32 %v859, %v1121
      %v1176 = vadd.f32 %v862, %v1124
      %v1177 = vadd.f32 %v867, %v1129
      %v1178 = vadd.f32 %v870, %v1132
      %v1179 = vadd.f32 %v875, %v1137
      %v1180 = vadd.f32 %v878, %v1140
      %v1181 = vadd.f32 %v883, %v1145
      %v1182 = vadd.f32 %v886, %v1148
      %v1183 = vld [vmem:[%s332] sm:$0xff]
      %v1184 = vld [vmem:[%s332 + $0x8] sm:$0xff]
      %v1185 = vld [vmem:[%s332 + $0x18] sm:$0xff]
      %v1186 = vld [vmem:[%s332 + $0x20] sm:$0xff]
      %v1187 = vld [vmem:[%s332 + $0x30] sm:$0xff]
      %v1188 = vld [vmem:[%s332 + $0x38] sm:$0xff]
      %v1189 = vld [vmem:[%s332 + $0x48] sm:$0xff]
      %v1190 = vld [vmem:[%s332 + $0x50] sm:$0xff]
      %v1191 = vld [vmem:[%s332 + $0x60] sm:$0xff]
      %v1192 = vld [vmem:[%s332 + $0x68] sm:$0xff]
      %v1193 = vld [vmem:[%s332 + $0x78] sm:$0xff]
      %v1194 = vld [vmem:[%s332 + $0x80] sm:$0xff]
      %v1195 = vld [vmem:[%s332 + $0x90] sm:$0xff]
      %v1196 = vld [vmem:[%s332 + $0x98] sm:$0xff]
      %v1197 = vld [vmem:[%s332 + $0xa8] sm:$0xff]
      %v1198 = vld [vmem:[%s332 + $0xb0] sm:$0xff]
      %v1199 = vld [vmem:[%s332 + $0xc0] sm:$0xff]
      %v1200 = vld [vmem:[%s332 + $0xc8] sm:$0xff]
      %v1201 = vld [vmem:[%s332 + $0xd8] sm:$0xff]
      %v1202 = vld [vmem:[%s332 + $0xe0] sm:$0xff]
      %v1203 = vld [vmem:[%s332 + $0xf0] sm:$0xff]
      %v1204 = vld [vmem:[%s332 + $0xf8] sm:$0xff]
      %v1205 = vld [vmem:[%s332 + $0x108] sm:$0xff]
      %v1206 = vld [vmem:[%s332 + $0x110] sm:$0xff]
      %v1207 = vld [vmem:[%s332 + $0x120] sm:$0xff]
      %v1208 = vld [vmem:[%s332 + $0x128] sm:$0xff]
      %v1209 = vld [vmem:[%s332 + $0x138] sm:$0xff]
      %v1210 = vld [vmem:[%s332 + $0x140] sm:$0xff]
      %v1211 = vld [vmem:[%s332 + $0x150] sm:$0xff]
      %v1212 = vld [vmem:[%s332 + $0x158] sm:$0xff]
      %v1213 = vld [vmem:[%s332 + $0x168] sm:$0xff]
      %v1214 = vld [vmem:[%s332 + $0x170] sm:$0xff]
      %v1215 = vpack.c.bf16 %v1184, %v1183
      %v1216 = vpack.c.bf16 %v1186, %v1185
      %v1217 = vpack.c.bf16 %v1188, %v1187
      %v1218 = vpack.c.bf16 %v1190, %v1189
      %v1219 = vpack.c.bf16 %v1192, %v1191
      %v1220 = vpack.c.bf16 %v1194, %v1193
      %v1221 = vpack.c.bf16 %v1196, %v1195
      %v1222 = vpack.c.bf16 %v1198, %v1197
      %v1223 = vpack.c.bf16 %v1200, %v1199
      %v1224 = vpack.c.bf16 %v1202, %v1201
      %v1225 = vpack.c.bf16 %v1204, %v1203
      %v1226 = vpack.c.bf16 %v1206, %v1205
      %v1227 = vpack.c.bf16 %v1208, %v1207
      %v1228 = vpack.c.bf16 %v1210, %v1209
      %v1229 = vpack.c.bf16 %v1212, %v1211
      %v1230 = vpack.c.bf16 %v1214, %v1213
      %s1231 = scalar_lea.vmem %s1, 12
      %v1232 = vld [vmem:[%s1231] sm:$0xf]
      %v1234 = vsel %vm212, %v1215, 0
      %v1237 = vsel %vm212, %v1216, 0
      %v1240 = vsel %vm212, %v1217, 0
      %v1243 = vsel %vm212, %v1218, 0
      %v1246 = vsel %vm212, %v1219, 0
      %v1249 = vsel %vm212, %v1220, 0
      %v1252 = vsel %vm212, %v1221, 0
      %v1255 = vsel %vm212, %v1222, 0
      %v1258 = vsel %vm212, %v1223, 0
      %v1261 = vsel %vm212, %v1224, 0
      %v1264 = vsel %vm212, %v1225, 0
      %v1267 = vsel %vm212, %v1226, 0
      %v1270 = vsel %vm212, %v1227, 0
      %v1273 = vsel %vm212, %v1228, 0
      %v1276 = vsel %vm212, %v1229, 0
      %v1279 = vsel %vm212, %v1230, 0
      %v1282 = vsel %vm512, %v1232, 0
      %1284 = vmatprep.subr.bf16.mxu0 0
      %1285 = vmatpush1.bf16.msra.mxu0 %v1282
      %1286 = vmatprep.subr.bf16.mxu0 0
      %1287 = vmatpush1.bf16.msra.mxu0 0
      %1288 = vmatprep.subr.bf16.mxu0 0
      %1289 = vmatpush1.bf16.msra.mxu0 0
      %1290 = vmatprep.subr.bf16.mxu0 0
      %1291 = vmatpush1.bf16.msra.mxu0 0
      %1292 = vmatprep.subr.bf16.mxu0 0
      %1293 = vmatpush1.bf16.msra.mxu0 0
      %1294 = vmatprep.subr.bf16.mxu0 0
      %1295 = vmatpush1.bf16.msra.mxu0 0
      %1296 = vmatprep.subr.bf16.mxu0 0
      %1297 = vmatpush1.bf16.msra.mxu0 0
      %1298 = vmatprep.subr.bf16.mxu0 0
      %1299 = vmatpush1.bf16.msra.mxu0 0
      %1300 = vmatprep.subr.bf16.mxu0 0
      %1301 = vmatpush1.bf16.msra.mxu0 0
      %1302 = vmatprep.subr.bf16.mxu0 0
      %1303 = vmatpush1.bf16.msra.mxu0 0
      %1304 = vmatprep.subr.bf16.mxu0 0
      %1305 = vmatpush1.bf16.msra.mxu0 0
      %1306 = vmatprep.subr.bf16.mxu0 0
      %1307 = vmatpush1.bf16.msra.mxu0 0
      %1308 = vmatprep.subr.bf16.mxu0 0
      %1309 = vmatpush1.bf16.msra.mxu0 0
      %1310 = vmatprep.subr.bf16.mxu0 0
      %1311 = vmatpush1.bf16.msra.mxu0 0
      %1312 = vmatprep.subr.bf16.mxu0 0
      %1313 = vmatpush1.bf16.msra.mxu0 0
      %1314 = vmatprep.subr.bf16.mxu0 0
      %1315 = vmatpush1.bf16.msra.mxu0 0
      %1316 = vmatprep.mubr.bf16.mxu0 0
      %1317 = vmatmul.mubr.bf16.gmra.mrb[0].mxu0 %v1234
      %v1318 = vpop.f32.mrb[0].mxu0
      %v1319 = vadd.f32 0.0, %v1318
      %v1320 = vpop.f32.mrb[0].mxu0
      %v1321 = vpop.f32.mrb[0].mxu0
      %v1322 = vadd.f32 0.0, %v1321
      %v1323 = vpop.f32.mrb[0].mxu0
      %1324 = vmatprep.mubr.bf16.mxu0 0
      %1325 = vmatmul.mubr.bf16.gmra.mrb[0].mxu0 %v1237
      %v1326 = vpop.f32.mrb[0].mxu0
      %v1327 = vadd.f32 0.0, %v1326
      %v1328 = vpop.f32.mrb[0].mxu0
      %v1329 = vpop.f32.mrb[0].mxu0
      %v1330 = vadd.f32 0.0, %v1329
      %v1331 = vpop.f32.mrb[0].mxu0
      %1332 = vmatprep.mubr.bf16.mxu0 0
      %1333 = vmatmul.mubr.bf16.gmra.mrb[0].mxu0 %v1240
      %v1334 = vpop.f32.mrb[0].mxu0
      %v1335 = vadd.f32 0.0, %v1334
      %v1336 = vpop.f32.mrb[0].mxu0
      %v1337 = vpop.f32.mrb[0].mxu0
      %v1338 = vadd.f32 0.0, %v1337
      %v1339 = vpop.f32.mrb[0].mxu0
      %1340 = vmatprep.mubr.bf16.mxu0 0
      %1341 = vmatmul.mubr.bf16.gmra.mrb[0].mxu0 %v1243
      %v1342 = vpop.f32.mrb[0].mxu0
      %v1343 = vadd.f32 0.0, %v1342
      %v1344 = vpop.f32.mrb[0].mxu0
      %v1345 = vpop.f32.mrb[0].mxu0
      %v1346 = vadd.f32 0.0, %v1345
      %v1347 = vpop.f32.mrb[0].mxu0
      %1348 = vmatprep.mubr.bf16.mxu0 0
      %1349 = vmatmul.mubr.bf16.gmra.mrb[0].mxu0 %v1246
      %v1350 = vpop.f32.mrb[0].mxu0
      %v1351 = vadd.f32 0.0, %v1350
      %v1352 = vpop.f32.mrb[0].mxu0
      %v1353 = vpop.f32.mrb[0].mxu0
      %v1354 = vadd.f32 0.0, %v1353
      %v1355 = vpop.f32.mrb[0].mxu0
      %1356 = vmatprep.mubr.bf16.mxu0 0
      %1357 = vmatmul.mubr.bf16.gmra.mrb[0].mxu0 %v1249
      %v1358 = vpop.f32.mrb[0].mxu0
      %v1359 = vadd.f32 0.0, %v1358
      %v1360 = vpop.f32.mrb[0].mxu0
      %v1361 = vpop.f32.mrb[0].mxu0
      %v1362 = vadd.f32 0.0, %v1361
      %v1363 = vpop.f32.mrb[0].mxu0
      %1364 = vmatprep.mubr.bf16.mxu0 0
      %1365 = vmatmul.mubr.bf16.gmra.mrb[0].mxu0 %v1252
      %v1366 = vpop.f32.mrb[0].mxu0
      %v1367 = vadd.f32 0.0, %v1366
      %v1368 = vpop.f32.mrb[0].mxu0
      %v1369 = vpop.f32.mrb[0].mxu0
      %v1370 = vadd.f32 0.0, %v1369
      %v1371 = vpop.f32.mrb[0].mxu0
      %1372 = vmatprep.mubr.bf16.mxu0 0
      %1373 = vmatmul.mubr.bf16.gmra.mrb[0].mxu0 %v1255
      %v1374 = vpop.f32.mrb[0].mxu0
      %v1375 = vadd.f32 0.0, %v1374
      %v1376 = vpop.f32.mrb[0].mxu0
      %v1377 = vpop.f32.mrb[0].mxu0
      %v1378 = vadd.f32 0.0, %v1377
      %v1379 = vpop.f32.mrb[0].mxu0
      %1380 = vmatprep.mubr.bf16.mxu0 0
      %1381 = vmatmul.mubr.bf16.gmra.mrb[0].mxu0 %v1258
      %v1382 = vpop.f32.mrb[0].mxu0
      %v1383 = vadd.f32 0.0, %v1382
      %v1384 = vpop.f32.mrb[0].mxu0
      %v1385 = vpop.f32.mrb[0].mxu0
      %v1386 = vadd.f32 0.0, %v1385
      %v1387 = vpop.f32.mrb[0].mxu0
      %1388 = vmatprep.mubr.bf16.mxu0 0
      %1389 = vmatmul.mubr.bf16.gmra.mrb[0].mxu0 %v1261
      %v1390 = vpop.f32.mrb[0].mxu0
      %v1391 = vadd.f32 0.0, %v1390
      %v1392 = vpop.f32.mrb[0].mxu0
      %v1393 = vpop.f32.mrb[0].mxu0
      %v1394 = vadd.f32 0.0, %v1393
      %v1395 = vpop.f32.mrb[0].mxu0
      %1396 = vmatprep.mubr.bf16.mxu0 0
      %1397 = vmatmul.mubr.bf16.gmra.mrb[0].mxu0 %v1264
      %v1398 = vpop.f32.mrb[0].mxu0
      %v1399 = vadd.f32 0.0, %v1398
      %v1400 = vpop.f32.mrb[0].mxu0
      %v1401 = vpop.f32.mrb[0].mxu0
      %v1402 = vadd.f32 0.0, %v1401
      %v1403 = vpop.f32.mrb[0].mxu0
      %1404 = vmatprep.mubr.bf16.mxu0 0
      %1405 = vmatmul.mubr.bf16.gmra.mrb[0].mxu0 %v1267
      %v1406 = vpop.f32.mrb[0].mxu0
      %v1407 = vadd.f32 0.0, %v1406
      %v1408 = vpop.f32.mrb[0].mxu0
      %v1409 = vpop.f32.mrb[0].mxu0
      %v1410 = vadd.f32 0.0, %v1409
      %v1411 = vpop.f32.mrb[0].mxu0
      %1412 = vmatprep.mubr.bf16.mxu0 0
      %1413 = vmatmul.mubr.bf16.gmra.mrb[0].mxu0 %v1270
      %v1414 = vpop.f32.mrb[0].mxu0
      %v1415 = vadd.f32 0.0, %v1414
      %v1416 = vpop.f32.mrb[0].mxu0
      %v1417 = vpop.f32.mrb[0].mxu0
      %v1418 = vadd.f32 0.0, %v1417
      %v1419 = vpop.f32.mrb[0].mxu0
      %1420 = vmatprep.mubr.bf16.mxu0 0
      %1421 = vmatmul.mubr.bf16.gmra.mrb[0].mxu0 %v1273
      %v1422 = vpop.f32.mrb[0].mxu0
      %v1423 = vadd.f32 0.0, %v1422
      %v1424 = vpop.f32.mrb[0].mxu0
      %v1425 = vpop.f32.mrb[0].mxu0
      %v1426 = vadd.f32 0.0, %v1425
      %v1427 = vpop.f32.mrb[0].mxu0
      %1428 = vmatprep.mubr.bf16.mxu0 0
      %1429 = vmatmul.mubr.bf16.gmra.mrb[0].mxu0 %v1276
      %v1430 = vpop.f32.mrb[0].mxu0
      %v1431 = vadd.f32 0.0, %v1430
      %v1432 = vpop.f32.mrb[0].mxu0
      %v1433 = vpop.f32.mrb[0].mxu0
      %v1434 = vadd.f32 0.0, %v1433
      %v1435 = vpop.f32.mrb[0].mxu0
      %1436 = vmatprep.mubr.bf16.mxu0 0
      %1437 = vmatmul.mubr.bf16.gmra.mrb[0].mxu0 %v1279
      %v1438 = vpop.f32.mrb[0].mxu0
      %v1439 = vadd.f32 0.0, %v1438
      %v1440 = vpop.f32.mrb[0].mxu0
      %v1441 = vpop.f32.mrb[0].mxu0
      %v1442 = vadd.f32 0.0, %v1441
      %v1443 = vpop.f32.mrb[0].mxu0
      %1444 = vdwg.mxu0
      %v1445 = vadd.f32 %v1151, %v1319
      %v1446 = vadd.f32 %v1152, %v1322
      %v1447 = vadd.f32 %v1153, %v1327
      %v1448 = vadd.f32 %v1154, %v1330
      %v1449 = vadd.f32 %v1155, %v1335
      %v1450 = vadd.f32 %v1156, %v1338
      %v1451 = vadd.f32 %v1157, %v1343
      %v1452 = vadd.f32 %v1158, %v1346
      %v1453 = vadd.f32 %v1159, %v1351
      %v1454 = vadd.f32 %v1160, %v1354
      %v1455 = vadd.f32 %v1161, %v1359
      %v1456 = vadd.f32 %v1162, %v1362
      %v1457 = vadd.f32 %v1163, %v1367
      %v1458 = vadd.f32 %v1164, %v1370
      %v1459 = vadd.f32 %v1165, %v1375
      %v1460 = vadd.f32 %v1166, %v1378
      %v1461 = vadd.f32 %v1167, %v1383
      %v1462 = vadd.f32 %v1168, %v1386
      %v1463 = vadd.f32 %v1169, %v1391
      %v1464 = vadd.f32 %v1170, %v1394
      %v1465 = vadd.f32 %v1171, %v1399
      %v1466 = vadd.f32 %v1172, %v1402
      %v1467 = vadd.f32 %v1173, %v1407
      %v1468 = vadd.f32 %v1174, %v1410
      %v1469 = vadd.f32 %v1175, %v1415
      %v1470 = vadd.f32 %v1176, %v1418
      %v1471 = vadd.f32 %v1177, %v1423
      %v1472 = vadd.f32 %v1178, %v1426
      %v1473 = vadd.f32 %v1179, %v1431
      %v1474 = vadd.f32 %v1180, %v1434
      %v1475 = vadd.f32 %v1181, %v1439
      %v1476 = vadd.f32 %v1182, %v1442
      %v1477 = vld [vmem:[%s332 + $0x1] sm:$0xff]
      %v1478 = vld [vmem:[%s332 + $0x9] sm:$0xff]
      %v1479 = vld [vmem:[%s332 + $0x19] sm:$0xff]
      %v1480 = vld [vmem:[%s332 + $0x21] sm:$0xff]
      %v1481 = vld [vmem:[%s332 + $0x31] sm:$0xff]
      %v1482 = vld [vmem:[%s332 + $0x39] sm:$0xff]
      %v1483 = vld [vmem:[%s332 + $0x49] sm:$0xff]
      %v1484 = vld [vmem:[%s332 + $0x51] sm:$0xff]
      %v1485 = vld [vmem:[%s332 + $0x61] sm:$0xff]
      %v1486 = vld [vmem:[%s332 + $0x69] sm:$0xff]
      %v1487 = vld [vmem:[%s332 + $0x79] sm:$0xff]
      %v1488 = vld [vmem:[%s332 + $0x81] sm:$0xff]
      %v1489 = vld [vmem:[%s332 + $0x91] sm:$0xff]
      %v1490 = vld [vmem:[%s332 + $0x99] sm:$0xff]
      %v1491 = vld [vmem:[%s332 + $0xa9] sm:$0xff]
      %v1492 = vld [vmem:[%s332 + $0xb1] sm:$0xff]
      %v1493 = vld [vmem:[%s332 + $0xc1] sm:$0xff]
      %v1494 = vld [vmem:[%s332 + $0xc9] sm:$0xff]
      %v1495 = vld [vmem:[%s332 + $0xd9] sm:$0xff]
      %v1496 = vld [vmem:[%s332 + $0xe1] sm:$0xff]
      %v1497 = vld [vmem:[%s332 + $0xf1] sm:$0xff]
      %v1498 = vld [vmem:[%s332 + $0xf9] sm:$0xff]
      %v1499 = vld [vmem:[%s332 + $0x109] sm:$0xff]
      %v1500 = vld [vmem:[%s332 + $0x111] sm:$0xff]
      %v1501 = vld [vmem:[%s332 + $0x121] sm:$0xff]
      %v1502 = vld [vmem:[%s332 + $0x129] sm:$0xff]
      %v1503 = vld [vmem:[%s332 + $0x139] sm:$0xff]
      %v1504 = vld [vmem:[%s332 + $0x141] sm:$0xff]
      %v1505 = vld [vmem:[%s332 + $0x151] sm:$0xff]
      %v1506 = vld [vmem:[%s332 + $0x159] sm:$0xff]
      %v1507 = vld [vmem:[%s332 + $0x169] sm:$0xff]
      %v1508 = vld [vmem:[%s332 + $0x171] sm:$0xff]
      %v1509 = vpack.c.bf16 %v1478, %v1477
      %v1510 = vpack.c.bf16 %v1480, %v1479
      %v1511 = vpack.c.bf16 %v1482, %v1481
      %v1512 = vpack.c.bf16 %v1484, %v1483
      %v1513 = vpack.c.bf16 %v1486, %v1485
      %v1514 = vpack.c.bf16 %v1488, %v1487
      %v1515 = vpack.c.bf16 %v1490, %v1489
      %v1516 = vpack.c.bf16 %v1492, %v1491
      %v1517 = vpack.c.bf16 %v1494, %v1493
      %v1518 = vpack.c.bf16 %v1496, %v1495
      %v1519 = vpack.c.bf16 %v1498, %v1497
      %v1520 = vpack.c.bf16 %v1500, %v1499
      %v1521 = vpack.c.bf16 %v1502, %v1501
      %v1522 = vpack.c.bf16 %v1504, %v1503
      %v1523 = vpack.c.bf16 %v1506, %v1505
      %v1524 = vpack.c.bf16 %v1508, %v1507
      %s1525 = scalar_lea.vmem %s1, 16
      %v1526 = vld [vmem:[%s1525] sm:$0xf]
      %v1528 = vsel %vm212, %v1509, 0
      %v1531 = vsel %vm212, %v1510, 0
      %v1534 = vsel %vm212, %v1511, 0
      %v1537 = vsel %vm212, %v1512, 0
      %v1540 = vsel %vm212, %v1513, 0
      %v1543 = vsel %vm212, %v1514, 0
      %v1546 = vsel %vm212, %v1515, 0
      %v1549 = vsel %vm212, %v1516, 0
      %v1552 = vsel %vm212, %v1517, 0
      %v1555 = vsel %vm212, %v1518, 0
      %v1558 = vsel %vm212, %v1519, 0
      %v1561 = vsel %vm212, %v1520, 0
      %v1564 = vsel %vm212, %v1521, 0
      %v1567 = vsel %vm212, %v1522, 0
      %v1570 = vsel %vm212, %v1523, 0
      %v1573 = vsel %vm212, %v1524, 0
      %v1576 = vsel %vm512, %v1526, 0
      %1578 = vmatprep.subr.bf16.mxu0 0
      %1579 = vmatpush1.bf16.msra.mxu0 %v1576
      %1580 = vmatprep.subr.bf16.mxu0 0
      %1581 = vmatpush1.bf16.msra.mxu0 0
      %1582 = vmatprep.subr.bf16.mxu0 0
      %1583 = vmatpush1.bf16.msra.mxu0 0
      %1584 = vmatprep.subr.bf16.mxu0 0
      %1585 = vmatpush1.bf16.msra.mxu0 0
      %1586 = vmatprep.subr.bf16.mxu0 0
      %1587 = vmatpush1.bf16.msra.mxu0 0
      %1588 = vmatprep.subr.bf16.mxu0 0
      %1589 = vmatpush1.bf16.msra.mxu0 0
      %1590 = vmatprep.subr.bf16.mxu0 0
      %1591 = vmatpush1.bf16.msra.mxu0 0
      %1592 = vmatprep.subr.bf16.mxu0 0
      %1593 = vmatpush1.bf16.msra.mxu0 0
      %1594 = vmatprep.subr.bf16.mxu0 0
      %1595 = vmatpush1.bf16.msra.mxu0 0
      %1596 = vmatprep.subr.bf16.mxu0 0
      %1597 = vmatpush1.bf16.msra.mxu0 0
      %1598 = vmatprep.subr.bf16.mxu0 0
      %1599 = vmatpush1.bf16.msra.mxu0 0
      %1600 = vmatprep.subr.bf16.mxu0 0
      %1601 = vmatpush1.bf16.msra.mxu0 0
      %1602 = vmatprep.subr.bf16.mxu0 0
      %1603 = vmatpush1.bf16.msra.mxu0 0
      %1604 = vmatprep.subr.bf16.mxu0 0
      %1605 = vmatpush1.bf16.msra.mxu0 0
      %1606 = vmatprep.subr.bf16.mxu0 0
      %1607 = vmatpush1.bf16.msra.mxu0 0
      %1608 = vmatprep.subr.bf16.mxu0 0
      %1609 = vmatpush1.bf16.msra.mxu0 0
      %1610 = vmatprep.mubr.bf16.mxu0 0
      %1611 = vmatmul.mubr.bf16.gmra.mrb[0].mxu0 %v1528
      %v1612 = vpop.f32.mrb[0].mxu0
      %v1613 = vadd.f32 0.0, %v1612
      %v1614 = vpop.f32.mrb[0].mxu0
      %v1615 = vpop.f32.mrb[0].mxu0
      %v1616 = vadd.f32 0.0, %v1615
      %v1617 = vpop.f32.mrb[0].mxu0
      %1618 = vmatprep.mubr.bf16.mxu0 0
      %1619 = vmatmul.mubr.bf16.gmra.mrb[0].mxu0 %v1531
      %v1620 = vpop.f32.mrb[0].mxu0
      %v1621 = vadd.f32 0.0, %v1620
      %v1622 = vpop.f32.mrb[0].mxu0
      %v1623 = vpop.f32.mrb[0].mxu0
      %v1624 = vadd.f32 0.0, %v1623
      %v1625 = vpop.f32.mrb[0].mxu0
      %1626 = vmatprep.mubr.bf16.mxu0 0
      %1627 = vmatmul.mubr.bf16.gmra.mrb[0].mxu0 %v1534
      %v1628 = vpop.f32.mrb[0].mxu0
      %v1629 = vadd.f32 0.0, %v1628
      %v1630 = vpop.f32.mrb[0].mxu0
      %v1631 = vpop.f32.mrb[0].mxu0
      %v1632 = vadd.f32 0.0, %v1631
      %v1633 = vpop.f32.mrb[0].mxu0
      %1634 = vmatprep.mubr.bf16.mxu0 0
      %1635 = vmatmul.mubr.bf16.gmra.mrb[0].mxu0 %v1537
      %v1636 = vpop.f32.mrb[0].mxu0
      %v1637 = vadd.f32 0.0, %v1636
      %v1638 = vpop.f32.mrb[0].mxu0
      %v1639 = vpop.f32.mrb[0].mxu0
      %v1640 = vadd.f32 0.0, %v1639
      %v1641 = vpop.f32.mrb[0].mxu0
      %1642 = vmatprep.mubr.bf16.mxu0 0
      %1643 = vmatmul.mubr.bf16.gmra.mrb[0].mxu0 %v1540
      %v1644 = vpop.f32.mrb[0].mxu0
      %v1645 = vadd.f32 0.0, %v1644
      %v1646 = vpop.f32.mrb[0].mxu0
      %v1647 = vpop.f32.mrb[0].mxu0
      %v1648 = vadd.f32 0.0, %v1647
      %v1649 = vpop.f32.mrb[0].mxu0
      %1650 = vmatprep.mubr.bf16.mxu0 0
      %1651 = vmatmul.mubr.bf16.gmra.mrb[0].mxu0 %v1543
      %v1652 = vpop.f32.mrb[0].mxu0
      %v1653 = vadd.f32 0.0, %v1652
      %v1654 = vpop.f32.mrb[0].mxu0
      %v1655 = vpop.f32.mrb[0].mxu0
      %v1656 = vadd.f32 0.0, %v1655
      %v1657 = vpop.f32.mrb[0].mxu0
      %1658 = vmatprep.mubr.bf16.mxu0 0
      %1659 = vmatmul.mubr.bf16.gmra.mrb[0].mxu0 %v1546
      %v1660 = vpop.f32.mrb[0].mxu0
      %v1661 = vadd.f32 0.0, %v1660
      %v1662 = vpop.f32.mrb[0].mxu0
      %v1663 = vpop.f32.mrb[0].mxu0
      %v1664 = vadd.f32 0.0, %v1663
      %v1665 = vpop.f32.mrb[0].mxu0
      %1666 = vmatprep.mubr.bf16.mxu0 0
      %1667 = vmatmul.mubr.bf16.gmra.mrb[0].mxu0 %v1549
      %v1668 = vpop.f32.mrb[0].mxu0
      %v1669 = vadd.f32 0.0, %v1668
      %v1670 = vpop.f32.mrb[0].mxu0
      %v1671 = vpop.f32.mrb[0].mxu0
      %v1672 = vadd.f32 0.0, %v1671
      %v1673 = vpop.f32.mrb[0].mxu0
      %1674 = vmatprep.mubr.bf16.mxu0 0
      %1675 = vmatmul.mubr.bf16.gmra.mrb[0].mxu0 %v1552
      %v1676 = vpop.f32.mrb[0].mxu0
      %v1677 = vadd.f32 0.0, %v1676
      %v1678 = vpop.f32.mrb[0].mxu0
      %v1679 = vpop.f32.mrb[0].mxu0
      %v1680 = vadd.f32 0.0, %v1679
      %v1681 = vpop.f32.mrb[0].mxu0
      %1682 = vmatprep.mubr.bf16.mxu0 0
      %1683 = vmatmul.mubr.bf16.gmra.mrb[0].mxu0 %v1555
      %v1684 = vpop.f32.mrb[0].mxu0
      %v1685 = vadd.f32 0.0, %v1684
      %v1686 = vpop.f32.mrb[0].mxu0
      %v1687 = vpop.f32.mrb[0].mxu0
      %v1688 = vadd.f32 0.0, %v1687
      %v1689 = vpop.f32.mrb[0].mxu0
      %1690 = vmatprep.mubr.bf16.mxu0 0
      %1691 = vmatmul.mubr.bf16.gmra.mrb[0].mxu0 %v1558
      %v1692 = vpop.f32.mrb[0].mxu0
      %v1693 = vadd.f32 0.0, %v1692
      %v1694 = vpop.f32.mrb[0].mxu0
      %v1695 = vpop.f32.mrb[0].mxu0
      %v1696 = vadd.f32 0.0, %v1695
      %v1697 = vpop.f32.mrb[0].mxu0
      %1698 = vmatprep.mubr.bf16.mxu0 0
      %1699 = vmatmul.mubr.bf16.gmra.mrb[0].mxu0 %v1561
      %v1700 = vpop.f32.mrb[0].mxu0
      %v1701 = vadd.f32 0.0, %v1700
      %v1702 = vpop.f32.mrb[0].mxu0
      %v1703 = vpop.f32.mrb[0].mxu0
      %v1704 = vadd.f32 0.0, %v1703
      %v1705 = vpop.f32.mrb[0].mxu0
      %1706 = vmatprep.mubr.bf16.mxu0 0
      %1707 = vmatmul.mubr.bf16.gmra.mrb[0].mxu0 %v1564
      %v1708 = vpop.f32.mrb[0].mxu0
      %v1709 = vadd.f32 0.0, %v1708
      %v1710 = vpop.f32.mrb[0].mxu0
      %v1711 = vpop.f32.mrb[0].mxu0
      %v1712 = vadd.f32 0.0, %v1711
      %v1713 = vpop.f32.mrb[0].mxu0
      %1714 = vmatprep.mubr.bf16.mxu0 0
      %1715 = vmatmul.mubr.bf16.gmra.mrb[0].mxu0 %v1567
      %v1716 = vpop.f32.mrb[0].mxu0
      %v1717 = vadd.f32 0.0, %v1716
      %v1718 = vpop.f32.mrb[0].mxu0
      %v1719 = vpop.f32.mrb[0].mxu0
      %v1720 = vadd.f32 0.0, %v1719
      %v1721 = vpop.f32.mrb[0].mxu0
      %1722 = vmatprep.mubr.bf16.mxu0 0
      %1723 = vmatmul.mubr.bf16.gmra.mrb[0].mxu0 %v1570
      %v1724 = vpop.f32.mrb[0].mxu0
      %v1725 = vadd.f32 0.0, %v1724
      %v1726 = vpop.f32.mrb[0].mxu0
      %v1727 = vpop.f32.mrb[0].mxu0
      %v1728 = vadd.f32 0.0, %v1727
      %v1729 = vpop.f32.mrb[0].mxu0
      %1730 = vmatprep.mubr.bf16.mxu0 0
      %1731 = vmatmul.mubr.bf16.gmra.mrb[0].mxu0 %v1573
      %v1732 = vpop.f32.mrb[0].mxu0
      %v1733 = vadd.f32 0.0, %v1732
      %v1734 = vpop.f32.mrb[0].mxu0
      %v1735 = vpop.f32.mrb[0].mxu0
      %v1736 = vadd.f32 0.0, %v1735
      %v1737 = vpop.f32.mrb[0].mxu0
      %1738 = vdwg.mxu0
      %v1739 = vadd.f32 %v1445, %v1613
      %v1740 = vadd.f32 %v1446, %v1616
      %v1741 = vadd.f32 %v1447, %v1621
      %v1742 = vadd.f32 %v1448, %v1624
      %v1743 = vadd.f32 %v1449, %v1629
      %v1744 = vadd.f32 %v1450, %v1632
      %v1745 = vadd.f32 %v1451, %v1637
      %v1746 = vadd.f32 %v1452, %v1640
      %v1747 = vadd.f32 %v1453, %v1645
      %v1748 = vadd.f32 %v1454, %v1648
      %v1749 = vadd.f32 %v1455, %v1653
      %v1750 = vadd.f32 %v1456, %v1656
      %v1751 = vadd.f32 %v1457, %v1661
      %v1752 = vadd.f32 %v1458, %v1664
      %v1753 = vadd.f32 %v1459, %v1669
      %v1754 = vadd.f32 %v1460, %v1672
      %v1755 = vadd.f32 %v1461, %v1677
      %v1756 = vadd.f32 %v1462, %v1680
      %v1757 = vadd.f32 %v1463, %v1685
      %v1758 = vadd.f32 %v1464, %v1688
      %v1759 = vadd.f32 %v1465, %v1693
      %v1760 = vadd.f32 %v1466, %v1696
      %v1761 = vadd.f32 %v1467, %v1701
      %v1762 = vadd.f32 %v1468, %v1704
      %v1763 = vadd.f32 %v1469, %v1709
      %v1764 = vadd.f32 %v1470, %v1712
      %v1765 = vadd.f32 %v1471, %v1717
      %v1766 = vadd.f32 %v1472, %v1720
      %v1767 = vadd.f32 %v1473, %v1725
      %v1768 = vadd.f32 %v1474, %v1728
      %v1769 = vadd.f32 %v1475, %v1733
      %v1770 = vadd.f32 %v1476, %v1736
      %v1771 = vld [vmem:[%s2] sm:$0xf]
      %v1773 = vsel %vm512, %v1771, 0
      %1775 = vmatprep.subr.bf16.mxu0 0
      %1776 = vmatpush1.bf16.msra.mxu0 %v1773
      %1777 = vmatprep.subr.bf16.mxu0 0
      %1778 = vmatpush1.bf16.msra.mxu0 0
      %1779 = vmatprep.subr.bf16.mxu0 0
      %1780 = vmatpush1.bf16.msra.mxu0 0
      %1781 = vmatprep.subr.bf16.mxu0 0
      %1782 = vmatpush1.bf16.msra.mxu0 0
      %1783 = vmatprep.subr.bf16.mxu0 0
      %1784 = vmatpush1.bf16.msra.mxu0 0
      %1785 = vmatprep.subr.bf16.mxu0 0
      %1786 = vmatpush1.bf16.msra.mxu0 0
      %1787 = vmatprep.subr.bf16.mxu0 0
      %1788 = vmatpush1.bf16.msra.mxu0 0
      %1789 = vmatprep.subr.bf16.mxu0 0
      %1790 = vmatpush1.bf16.msra.mxu0 0
      %1791 = vmatprep.subr.bf16.mxu0 0
      %1792 = vmatpush1.bf16.msra.mxu0 0
      %1793 = vmatprep.subr.bf16.mxu0 0
      %1794 = vmatpush1.bf16.msra.mxu0 0
      %1795 = vmatprep.subr.bf16.mxu0 0
      %1796 = vmatpush1.bf16.msra.mxu0 0
      %1797 = vmatprep.subr.bf16.mxu0 0
      %1798 = vmatpush1.bf16.msra.mxu0 0
      %1799 = vmatprep.subr.bf16.mxu0 0
      %1800 = vmatpush1.bf16.msra.mxu0 0
      %1801 = vmatprep.subr.bf16.mxu0 0
      %1802 = vmatpush1.bf16.msra.mxu0 0
      %1803 = vmatprep.subr.bf16.mxu0 0
      %1804 = vmatpush1.bf16.msra.mxu0 0
      %1805 = vmatprep.subr.bf16.mxu0 0
      %1806 = vmatpush1.bf16.msra.mxu0 0
      %1807 = vmatprep.mubr.bf16.mxu0 0
      %1808 = vmatmul.mubr.bf16.gmra.mrb[0].mxu0 %v1528
      %v1809 = vpop.f32.mrb[0].mxu0
      %v1810 = vadd.f32 0.0, %v1809
      %v1811 = vpop.f32.mrb[0].mxu0
      %v1812 = vpop.f32.mrb[0].mxu0
      %v1813 = vadd.f32 0.0, %v1812
      %v1814 = vpop.f32.mrb[0].mxu0
      %1815 = vmatprep.mubr.bf16.mxu0 0
      %1816 = vmatmul.mubr.bf16.gmra.mrb[0].mxu0 %v1531
      %v1817 = vpop.f32.mrb[0].mxu0
      %v1818 = vadd.f32 0.0, %v1817
      %v1819 = vpop.f32.mrb[0].mxu0
      %v1820 = vpop.f32.mrb[0].mxu0
      %v1821 = vadd.f32 0.0, %v1820
      %v1822 = vpop.f32.mrb[0].mxu0
      %1823 = vmatprep.mubr.bf16.mxu0 0
      %1824 = vmatmul.mubr.bf16.gmra.mrb[0].mxu0 %v1534
      %v1825 = vpop.f32.mrb[0].mxu0
      %v1826 = vadd.f32 0.0, %v1825
      %v1827 = vpop.f32.mrb[0].mxu0
      %v1828 = vpop.f32.mrb[0].mxu0
      %v1829 = vadd.f32 0.0, %v1828
      %v1830 = vpop.f32.mrb[0].mxu0
      %1831 = vmatprep.mubr.bf16.mxu0 0
      %1832 = vmatmul.mubr.bf16.gmra.mrb[0].mxu0 %v1537
      %v1833 = vpop.f32.mrb[0].mxu0
      %v1834 = vadd.f32 0.0, %v1833
      %v1835 = vpop.f32.mrb[0].mxu0
      %v1836 = vpop.f32.mrb[0].mxu0
      %v1837 = vadd.f32 0.0, %v1836
      %v1838 = vpop.f32.mrb[0].mxu0
      %1839 = vmatprep.mubr.bf16.mxu0 0
      %1840 = vmatmul.mubr.bf16.gmra.mrb[0].mxu0 %v1540
      %v1841 = vpop.f32.mrb[0].mxu0
      %v1842 = vadd.f32 0.0, %v1841
      %v1843 = vpop.f32.mrb[0].mxu0
      %v1844 = vpop.f32.mrb[0].mxu0
      %v1845 = vadd.f32 0.0, %v1844
      %v1846 = vpop.f32.mrb[0].mxu0
      %1847 = vmatprep.mubr.bf16.mxu0 0
      %1848 = vmatmul.mubr.bf16.gmra.mrb[0].mxu0 %v1543
      %v1849 = vpop.f32.mrb[0].mxu0
      %v1850 = vadd.f32 0.0, %v1849
      %v1851 = vpop.f32.mrb[0].mxu0
      %v1852 = vpop.f32.mrb[0].mxu0
      %v1853 = vadd.f32 0.0, %v1852
      %v1854 = vpop.f32.mrb[0].mxu0
      %1855 = vmatprep.mubr.bf16.mxu0 0
      %1856 = vmatmul.mubr.bf16.gmra.mrb[0].mxu0 %v1546
      %v1857 = vpop.f32.mrb[0].mxu0
      %v1858 = vadd.f32 0.0, %v1857
      %v1859 = vpop.f32.mrb[0].mxu0
      %v1860 = vpop.f32.mrb[0].mxu0
      %v1861 = vadd.f32 0.0, %v1860
      %v1862 = vpop.f32.mrb[0].mxu0
      %1863 = vmatprep.mubr.bf16.mxu0 0
      %1864 = vmatmul.mubr.bf16.gmra.mrb[0].mxu0 %v1549
      %v1865 = vpop.f32.mrb[0].mxu0
      %v1866 = vadd.f32 0.0, %v1865
      %v1867 = vpop.f32.mrb[0].mxu0
      %v1868 = vpop.f32.mrb[0].mxu0
      %v1869 = vadd.f32 0.0, %v1868
      %v1870 = vpop.f32.mrb[0].mxu0
      %1871 = vmatprep.mubr.bf16.mxu0 0
      %1872 = vmatmul.mubr.bf16.gmra.mrb[0].mxu0 %v1552
      %v1873 = vpop.f32.mrb[0].mxu0
      %v1874 = vadd.f32 0.0, %v1873
      %v1875 = vpop.f32.mrb[0].mxu0
      %v1876 = vpop.f32.mrb[0].mxu0
      %v1877 = vadd.f32 0.0, %v1876
      %v1878 = vpop.f32.mrb[0].mxu0
      %1879 = vmatprep.mubr.bf16.mxu0 0
      %1880 = vmatmul.mubr.bf16.gmra.mrb[0].mxu0 %v1555
      %v1881 = vpop.f32.mrb[0].mxu0
      %v1882 = vadd.f32 0.0, %v1881
      %v1883 = vpop.f32.mrb[0].mxu0
      %v1884 = vpop.f32.mrb[0].mxu0
      %v1885 = vadd.f32 0.0, %v1884
      %v1886 = vpop.f32.mrb[0].mxu0
      %1887 = vmatprep.mubr.bf16.mxu0 0
      %1888 = vmatmul.mubr.bf16.gmra.mrb[0].mxu0 %v1558
      %v1889 = vpop.f32.mrb[0].mxu0
      %v1890 = vadd.f32 0.0, %v1889
      %v1891 = vpop.f32.mrb[0].mxu0
      %v1892 = vpop.f32.mrb[0].mxu0
      %v1893 = vadd.f32 0.0, %v1892
      %v1894 = vpop.f32.mrb[0].mxu0
      %1895 = vmatprep.mubr.bf16.mxu0 0
      %1896 = vmatmul.mubr.bf16.gmra.mrb[0].mxu0 %v1561
      %v1897 = vpop.f32.mrb[0].mxu0
      %v1898 = vadd.f32 0.0, %v1897
      %v1899 = vpop.f32.mrb[0].mxu0
      %v1900 = vpop.f32.mrb[0].mxu0
      %v1901 = vadd.f32 0.0, %v1900
      %v1902 = vpop.f32.mrb[0].mxu0
      %1903 = vmatprep.mubr.bf16.mxu0 0
      %1904 = vmatmul.mubr.bf16.gmra.mrb[0].mxu0 %v1564
      %v1905 = vpop.f32.mrb[0].mxu0
      %v1906 = vadd.f32 0.0, %v1905
      %v1907 = vpop.f32.mrb[0].mxu0
      %v1908 = vpop.f32.mrb[0].mxu0
      %v1909 = vadd.f32 0.0, %v1908
      %v1910 = vpop.f32.mrb[0].mxu0
      %1911 = vmatprep.mubr.bf16.mxu0 0
      %1912 = vmatmul.mubr.bf16.gmra.mrb[0].mxu0 %v1567
      %v1913 = vpop.f32.mrb[0].mxu0
      %v1914 = vadd.f32 0.0, %v1913
      %v1915 = vpop.f32.mrb[0].mxu0
      %v1916 = vpop.f32.mrb[0].mxu0
      %v1917 = vadd.f32 0.0, %v1916
      %v1918 = vpop.f32.mrb[0].mxu0
      %1919 = vmatprep.mubr.bf16.mxu0 0
      %1920 = vmatmul.mubr.bf16.gmra.mrb[0].mxu0 %v1570
      %v1921 = vpop.f32.mrb[0].mxu0
      %v1922 = vadd.f32 0.0, %v1921
      %v1923 = vpop.f32.mrb[0].mxu0
      %v1924 = vpop.f32.mrb[0].mxu0
      %v1925 = vadd.f32 0.0, %v1924
      %v1926 = vpop.f32.mrb[0].mxu0
      %1927 = vmatprep.mubr.bf16.mxu0 0
      %1928 = vmatmul.mubr.bf16.gmra.mrb[0].mxu0 %v1573
      %v1929 = vpop.f32.mrb[0].mxu0
      %v1930 = vadd.f32 0.0, %v1929
      %v1931 = vpop.f32.mrb[0].mxu0
      %v1932 = vpop.f32.mrb[0].mxu0
      %v1933 = vadd.f32 0.0, %v1932
      %v1934 = vpop.f32.mrb[0].mxu0
      %1935 = vdwg.mxu0
      %v1936 = vpack.c.bf16 %v1813, %v1810
      %v1937 = vpack.c.bf16 %v1821, %v1818
      %v1938 = vpack.c.bf16 %v1829, %v1826
      %v1939 = vpack.c.bf16 %v1837, %v1834
      %v1940 = vpack.c.bf16 %v1845, %v1842
      %v1941 = vpack.c.bf16 %v1853, %v1850
      %v1942 = vpack.c.bf16 %v1861, %v1858
      %v1943 = vpack.c.bf16 %v1869, %v1866
      %v1944 = vpack.c.bf16 %v1877, %v1874
      %v1945 = vpack.c.bf16 %v1885, %v1882
      %v1946 = vpack.c.bf16 %v1893, %v1890
      %v1947 = vpack.c.bf16 %v1901, %v1898
      %v1948 = vpack.c.bf16 %v1909, %v1906
      %v1949 = vpack.c.bf16 %v1917, %v1914
      %v1950 = vpack.c.bf16 %v1925, %v1922
      %v1951 = vpack.c.bf16 %v1933, %v1930
      %v1968 = vunpack.c.l.b16 %v1936
      %v1969 = vunpack.c.h.b16 %v1936
      %v1970 = vunpack.c.l.b16 %v1937
      %v1971 = vunpack.c.h.b16 %v1937
      %v1972 = vunpack.c.l.b16 %v1938
      %v1973 = vunpack.c.h.b16 %v1938
      %v1974 = vunpack.c.l.b16 %v1939
      %v1975 = vunpack.c.h.b16 %v1939
      %v1976 = vunpack.c.l.b16 %v1940
      %v1977 = vunpack.c.h.b16 %v1940
      %v1978 = vunpack.c.l.b16 %v1941
      %v1979 = vunpack.c.h.b16 %v1941
      %v1980 = vunpack.c.l.b16 %v1942
      %v1981 = vunpack.c.h.b16 %v1942
      %v1982 = vunpack.c.l.b16 %v1943
      %v1983 = vunpack.c.h.b16 %v1943
      %v1984 = vunpack.c.l.b16 %v1944
      %v1985 = vunpack.c.h.b16 %v1944
      %v1986 = vunpack.c.l.b16 %v1945
      %v1987 = vunpack.c.h.b16 %v1945
      %v1988 = vunpack.c.l.b16 %v1946
      %v1989 = vunpack.c.h.b16 %v1946
      %v1990 = vunpack.c.l.b16 %v1947
      %v1991 = vunpack.c.h.b16 %v1947
      %v1992 = vunpack.c.l.b16 %v1948
      %v1993 = vunpack.c.h.b16 %v1948
      %v1994 = vunpack.c.l.b16 %v1949
      %v1995 = vunpack.c.h.b16 %v1949
      %v1996 = vunpack.c.l.b16 %v1950
      %v1997 = vunpack.c.h.b16 %v1950
      %v1998 = vunpack.c.l.b16 %v1951
      %v1999 = vunpack.c.h.b16 %v1951
      %v2000 = vpack.c.b16 %v1968, %v1968
      %v2001 = vpack.c.b16 %v1969, %v1969
      %v2002 = vpack.c.b16 %v1970, %v1970
      %v2003 = vpack.c.b16 %v1971, %v1971
      %v2004 = vpack.c.b16 %v1972, %v1972
      %v2005 = vpack.c.b16 %v1973, %v1973
      %v2006 = vpack.c.b16 %v1974, %v1974
      %v2007 = vpack.c.b16 %v1975, %v1975
      %v2008 = vpack.c.b16 %v1976, %v1976
      %v2009 = vpack.c.b16 %v1977, %v1977
      %v2010 = vpack.c.b16 %v1978, %v1978
      %v2011 = vpack.c.b16 %v1979, %v1979
      %v2012 = vpack.c.b16 %v1980, %v1980
      %v2013 = vpack.c.b16 %v1981, %v1981
      %v2014 = vpack.c.b16 %v1982, %v1982
      %v2015 = vpack.c.b16 %v1983, %v1983
      %v2016 = vpack.c.b16 %v1984, %v1984
      %v2017 = vpack.c.b16 %v1985, %v1985
      %v2018 = vpack.c.b16 %v1986, %v1986
      %v2019 = vpack.c.b16 %v1987, %v1987
      %v2020 = vpack.c.b16 %v1988, %v1988
      %v2021 = vpack.c.b16 %v1989, %v1989
      %v2022 = vpack.c.b16 %v1990, %v1990
      %v2023 = vpack.c.b16 %v1991, %v1991
      %v2024 = vpack.c.b16 %v1992, %v1992
      %v2025 = vpack.c.b16 %v1993, %v1993
      %v2026 = vpack.c.b16 %v1994, %v1994
      %v2027 = vpack.c.b16 %v1995, %v1995
      %v2028 = vpack.c.b16 %v1996, %v1996
      %v2029 = vpack.c.b16 %v1997, %v1997
      %v2030 = vpack.c.b16 %v1998, %v1998
      %v2031 = vpack.c.b16 %v1999, %v1999
      %vm2064 = vcmask 125952
      %2065 = vst.msk [vmem:[%s210] sm:$0xf] %vm2064, %v2000
      %2066 = vst.msk [vmem:[%s210 + $0x4] sm:$0xf] %vm2064, %v2001
      %2067 = vst.msk [vmem:[%s210 + $0x8] sm:$0xf] %vm2064, %v2002
      %2068 = vst.msk [vmem:[%s210 + $0xc] sm:$0xf] %vm2064, %v2003
      %2069 = vst.msk [vmem:[%s210 + $0x10] sm:$0xf] %vm2064, %v2004
      %2070 = vst.msk [vmem:[%s210 + $0x14] sm:$0xf] %vm2064, %v2005
      %2071 = vst.msk [vmem:[%s210 + $0x18] sm:$0xf] %vm2064, %v2006
      %2072 = vst.msk [vmem:[%s210 + $0x1c] sm:$0xf] %vm2064, %v2007
      %2073 = vst.msk [vmem:[%s210 + $0x20] sm:$0xf] %vm2064, %v2008
      %2074 = vst.msk [vmem:[%s210 + $0x24] sm:$0xf] %vm2064, %v2009
      %2075 = vst.msk [vmem:[%s210 + $0x28] sm:$0xf] %vm2064, %v2010
      %2076 = vst.msk [vmem:[%s210 + $0x2c] sm:$0xf] %vm2064, %v2011
      %2077 = vst.msk [vmem:[%s210 + $0x30] sm:$0xf] %vm2064, %v2012
      %2078 = vst.msk [vmem:[%s210 + $0x34] sm:$0xf] %vm2064, %v2013
      %2079 = vst.msk [vmem:[%s210 + $0x38] sm:$0xf] %vm2064, %v2014
      %2080 = vst.msk [vmem:[%s210 + $0x3c] sm:$0xf] %vm2064, %v2015
      %2081 = vst.msk [vmem:[%s210 + $0x40] sm:$0xf] %vm2064, %v2016
      %2082 = vst.msk [vmem:[%s210 + $0x44] sm:$0xf] %vm2064, %v2017
      %2083 = vst.msk [vmem:[%s210 + $0x48] sm:$0xf] %vm2064, %v2018
      %2084 = vst.msk [vmem:[%s210 + $0x4c] sm:$0xf] %vm2064, %v2019
      %2085 = vst.msk [vmem:[%s210 + $0x50] sm:$0xf] %vm2064, %v2020
      %2086 = vst.msk [vmem:[%s210 + $0x54] sm:$0xf] %vm2064, %v2021
      %2087 = vst.msk [vmem:[%s210 + $0x58] sm:$0xf] %vm2064, %v2022
      %2088 = vst.msk [vmem:[%s210 + $0x5c] sm:$0xf] %vm2064, %v2023
      %2089 = vst.msk [vmem:[%s210 + $0x60] sm:$0xf] %vm2064, %v2024
      %2090 = vst.msk [vmem:[%s210 + $0x64] sm:$0xf] %vm2064, %v2025
      %2091 = vst.msk [vmem:[%s210 + $0x68] sm:$0xf] %vm2064, %v2026
      %2092 = vst.msk [vmem:[%s210 + $0x6c] sm:$0xf] %vm2064, %v2027
      %2093 = vst.msk [vmem:[%s210 + $0x70] sm:$0xf] %vm2064, %v2028
      %2094 = vst.msk [vmem:[%s210 + $0x74] sm:$0xf] %vm2064, %v2029
      %2095 = vst.msk [vmem:[%s210 + $0x78] sm:$0xf] %vm2064, %v2030
      %2096 = vst.msk [vmem:[%s210 + $0x7c] sm:$0xf] %vm2064, %v2031
      %v2097 = vld [vmem:[%s332 + $0x2] sm:$0xff]
      %v2098 = vld [vmem:[%s332 + $0xa] sm:$0xff]
      %v2099 = vld [vmem:[%s332 + $0x1a] sm:$0xff]
      %v2100 = vld [vmem:[%s332 + $0x22] sm:$0xff]
      %v2101 = vld [vmem:[%s332 + $0x32] sm:$0xff]
      %v2102 = vld [vmem:[%s332 + $0x3a] sm:$0xff]
      %v2103 = vld [vmem:[%s332 + $0x4a] sm:$0xff]
      %v2104 = vld [vmem:[%s332 + $0x52] sm:$0xff]
      %v2105 = vld [vmem:[%s332 + $0x62] sm:$0xff]
      %v2106 = vld [vmem:[%s332 + $0x6a] sm:$0xff]
      %v2107 = vld [vmem:[%s332 + $0x7a] sm:$0xff]
      %v2108 = vld [vmem:[%s332 + $0x82] sm:$0xff]
      %v2109 = vld [vmem:[%s332 + $0x92] sm:$0xff]
      %v2110 = vld [vmem:[%s332 + $0x9a] sm:$0xff]
      %v2111 = vld [vmem:[%s332 + $0xaa] sm:$0xff]
      %v2112 = vld [vmem:[%s332 + $0xb2] sm:$0xff]
      %v2113 = vld [vmem:[%s332 + $0xc2] sm:$0xff]
      %v2114 = vld [vmem:[%s332 + $0xca] sm:$0xff]
      %v2115 = vld [vmem:[%s332 + $0xda] sm:$0xff]
      %v2116 = vld [vmem:[%s332 + $0xe2] sm:$0xff]
      %v2117 = vld [vmem:[%s332 + $0xf2] sm:$0xff]
      %v2118 = vld [vmem:[%s332 + $0xfa] sm:$0xff]
      %v2119 = vld [vmem:[%s332 + $0x10a] sm:$0xff]
      %v2120 = vld [vmem:[%s332 + $0x112] sm:$0xff]
      %v2121 = vld [vmem:[%s332 + $0x122] sm:$0xff]
      %v2122 = vld [vmem:[%s332 + $0x12a] sm:$0xff]
      %v2123 = vld [vmem:[%s332 + $0x13a] sm:$0xff]
      %v2124 = vld [vmem:[%s332 + $0x142] sm:$0xff]
      %v2125 = vld [vmem:[%s332 + $0x152] sm:$0xff]
      %v2126 = vld [vmem:[%s332 + $0x15a] sm:$0xff]
      %v2127 = vld [vmem:[%s332 + $0x16a] sm:$0xff]
      %v2128 = vld [vmem:[%s332 + $0x172] sm:$0xff]
      %v2129 = vpack.c.bf16 %v2098, %v2097
      %v2130 = vpack.c.bf16 %v2100, %v2099
      %v2131 = vpack.c.bf16 %v2102, %v2101
      %v2132 = vpack.c.bf16 %v2104, %v2103
      %v2133 = vpack.c.bf16 %v2106, %v2105
      %v2134 = vpack.c.bf16 %v2108, %v2107
      %v2135 = vpack.c.bf16 %v2110, %v2109
      %v2136 = vpack.c.bf16 %v2112, %v2111
      %v2137 = vpack.c.bf16 %v2114, %v2113
      %v2138 = vpack.c.bf16 %v2116, %v2115
      %v2139 = vpack.c.bf16 %v2118, %v2117
      %v2140 = vpack.c.bf16 %v2120, %v2119
      %v2141 = vpack.c.bf16 %v2122, %v2121
      %v2142 = vpack.c.bf16 %v2124, %v2123
      %v2143 = vpack.c.bf16 %v2126, %v2125
      %v2144 = vpack.c.bf16 %v2128, %v2127
      %s2145 = scalar_lea.vmem %s1, 20
      %v2146 = vld [vmem:[%s2145] sm:$0xf]
      %v2148 = vsel %vm212, %v2129, 0
      %v2151 = vsel %vm212, %v2130, 0
      %v2154 = vsel %vm212, %v2131, 0
      %v2157 = vsel %vm212, %v2132, 0
      %v2160 = vsel %vm212, %v2133, 0
      %v2163 = vsel %vm212, %v2134, 0
      %v2166 = vsel %vm212, %v2135, 0
      %v2169 = vsel %vm212, %v2136, 0
      %v2172 = vsel %vm212, %v2137, 0
      %v2175 = vsel %vm212, %v2138, 0
      %v2178 = vsel %vm212, %v2139, 0
      %v2181 = vsel %vm212, %v2140, 0
      %v2184 = vsel %vm212, %v2141, 0
      %v2187 = vsel %vm212, %v2142, 0
      %v2190 = vsel %vm212, %v2143, 0
      %v2193 = vsel %vm212, %v2144, 0
      %v2196 = vsel %vm512, %v2146, 0
      %2198 = vmatprep.subr.bf16.mxu0 0
      %2199 = vmatpush1.bf16.msra.mxu0 %v2196
      %2200 = vmatprep.subr.bf16.mxu0 0
      %2201 = vmatpush1.bf16.msra.mxu0 0
      %2202 = vmatprep.subr.bf16.mxu0 0
      %2203 = vmatpush1.bf16.msra.mxu0 0
      %2204 = vmatprep.subr.bf16.mxu0 0
      %2205 = vmatpush1.bf16.msra.mxu0 0
      %2206 = vmatprep.subr.bf16.mxu0 0
      %2207 = vmatpush1.bf16.msra.mxu0 0
      %2208 = vmatprep.subr.bf16.mxu0 0
      %2209 = vmatpush1.bf16.msra.mxu0 0
      %2210 = vmatprep.subr.bf16.mxu0 0
      %2211 = vmatpush1.bf16.msra.mxu0 0
      %2212 = vmatprep.subr.bf16.mxu0 0
      %2213 = vmatpush1.bf16.msra.mxu0 0
      %2214 = vmatprep.subr.bf16.mxu0 0
      %2215 = vmatpush1.bf16.msra.mxu0 0
      %2216 = vmatprep.subr.bf16.mxu0 0
      %2217 = vmatpush1.bf16.msra.mxu0 0
      %2218 = vmatprep.subr.bf16.mxu0 0
      %2219 = vmatpush1.bf16.msra.mxu0 0
      %2220 = vmatprep.subr.bf16.mxu0 0
      %2221 = vmatpush1.bf16.msra.mxu0 0
      %2222 = vmatprep.subr.bf16.mxu0 0
      %2223 = vmatpush1.bf16.msra.mxu0 0
      %2224 = vmatprep.subr.bf16.mxu0 0
      %2225 = vmatpush1.bf16.msra.mxu0 0
      %2226 = vmatprep.subr.bf16.mxu0 0
      %2227 = vmatpush1.bf16.msra.mxu0 0
      %2228 = vmatprep.subr.bf16.mxu0 0
      %2229 = vmatpush1.bf16.msra.mxu0 0
      %2230 = vmatprep.mubr.bf16.mxu0 0
      %2231 = vmatmul.mubr.bf16.gmra.mrb[0].mxu0 %v2148
      %v2232 = vpop.f32.mrb[0].mxu0
      %v2233 = vadd.f32 0.0, %v2232
      %v2234 = vpop.f32.mrb[0].mxu0
      %v2235 = vpop.f32.mrb[0].mxu0
      %v2236 = vadd.f32 0.0, %v2235
      %v2237 = vpop.f32.mrb[0].mxu0
      %2238 = vmatprep.mubr.bf16.mxu0 0
      %2239 = vmatmul.mubr.bf16.gmra.mrb[0].mxu0 %v2151
      %v2240 = vpop.f32.mrb[0].mxu0
      %v2241 = vadd.f32 0.0, %v2240
      %v2242 = vpop.f32.mrb[0].mxu0
      %v2243 = vpop.f32.mrb[0].mxu0
      %v2244 = vadd.f32 0.0, %v2243
      %v2245 = vpop.f32.mrb[0].mxu0
      %2246 = vmatprep.mubr.bf16.mxu0 0
      %2247 = vmatmul.mubr.bf16.gmra.mrb[0].mxu0 %v2154
      %v2248 = vpop.f32.mrb[0].mxu0
      %v2249 = vadd.f32 0.0, %v2248
      %v2250 = vpop.f32.mrb[0].mxu0
      %v2251 = vpop.f32.mrb[0].mxu0
      %v2252 = vadd.f32 0.0, %v2251
      %v2253 = vpop.f32.mrb[0].mxu0
      %2254 = vmatprep.mubr.bf16.mxu0 0
      %2255 = vmatmul.mubr.bf16.gmra.mrb[0].mxu0 %v2157
      %v2256 = vpop.f32.mrb[0].mxu0
      %v2257 = vadd.f32 0.0, %v2256
      %v2258 = vpop.f32.mrb[0].mxu0
      %v2259 = vpop.f32.mrb[0].mxu0
      %v2260 = vadd.f32 0.0, %v2259
      %v2261 = vpop.f32.mrb[0].mxu0
      %2262 = vmatprep.mubr.bf16.mxu0 0
      %2263 = vmatmul.mubr.bf16.gmra.mrb[0].mxu0 %v2160
      %v2264 = vpop.f32.mrb[0].mxu0
      %v2265 = vadd.f32 0.0, %v2264
      %v2266 = vpop.f32.mrb[0].mxu0
      %v2267 = vpop.f32.mrb[0].mxu0
      %v2268 = vadd.f32 0.0, %v2267
      %v2269 = vpop.f32.mrb[0].mxu0
      %2270 = vmatprep.mubr.bf16.mxu0 0
      %2271 = vmatmul.mubr.bf16.gmra.mrb[0].mxu0 %v2163
      %v2272 = vpop.f32.mrb[0].mxu0
      %v2273 = vadd.f32 0.0, %v2272
      %v2274 = vpop.f32.mrb[0].mxu0
      %v2275 = vpop.f32.mrb[0].mxu0
      %v2276 = vadd.f32 0.0, %v2275
      %v2277 = vpop.f32.mrb[0].mxu0
      %2278 = vmatprep.mubr.bf16.mxu0 0
      %2279 = vmatmul.mubr.bf16.gmra.mrb[0].mxu0 %v2166
      %v2280 = vpop.f32.mrb[0].mxu0
      %v2281 = vadd.f32 0.0, %v2280
      %v2282 = vpop.f32.mrb[0].mxu0
      %v2283 = vpop.f32.mrb[0].mxu0
      %v2284 = vadd.f32 0.0, %v2283
      %v2285 = vpop.f32.mrb[0].mxu0
      %2286 = vmatprep.mubr.bf16.mxu0 0
      %2287 = vmatmul.mubr.bf16.gmra.mrb[0].mxu0 %v2169
      %v2288 = vpop.f32.mrb[0].mxu0
      %v2289 = vadd.f32 0.0, %v2288
      %v2290 = vpop.f32.mrb[0].mxu0
      %v2291 = vpop.f32.mrb[0].mxu0
      %v2292 = vadd.f32 0.0, %v2291
      %v2293 = vpop.f32.mrb[0].mxu0
      %2294 = vmatprep.mubr.bf16.mxu0 0
      %2295 = vmatmul.mubr.bf16.gmra.mrb[0].mxu0 %v2172
      %v2296 = vpop.f32.mrb[0].mxu0
      %v2297 = vadd.f32 0.0, %v2296
      %v2298 = vpop.f32.mrb[0].mxu0
      %v2299 = vpop.f32.mrb[0].mxu0
      %v2300 = vadd.f32 0.0, %v2299
      %v2301 = vpop.f32.mrb[0].mxu0
      %2302 = vmatprep.mubr.bf16.mxu0 0
      %2303 = vmatmul.mubr.bf16.gmra.mrb[0].mxu0 %v2175
      %v2304 = vpop.f32.mrb[0].mxu0
      %v2305 = vadd.f32 0.0, %v2304
      %v2306 = vpop.f32.mrb[0].mxu0
      %v2307 = vpop.f32.mrb[0].mxu0
      %v2308 = vadd.f32 0.0, %v2307
      %v2309 = vpop.f32.mrb[0].mxu0
      %2310 = vmatprep.mubr.bf16.mxu0 0
      %2311 = vmatmul.mubr.bf16.gmra.mrb[0].mxu0 %v2178
      %v2312 = vpop.f32.mrb[0].mxu0
      %v2313 = vadd.f32 0.0, %v2312
      %v2314 = vpop.f32.mrb[0].mxu0
      %v2315 = vpop.f32.mrb[0].mxu0
      %v2316 = vadd.f32 0.0, %v2315
      %v2317 = vpop.f32.mrb[0].mxu0
      %2318 = vmatprep.mubr.bf16.mxu0 0
      %2319 = vmatmul.mubr.bf16.gmra.mrb[0].mxu0 %v2181
      %v2320 = vpop.f32.mrb[0].mxu0
      %v2321 = vadd.f32 0.0, %v2320
      %v2322 = vpop.f32.mrb[0].mxu0
      %v2323 = vpop.f32.mrb[0].mxu0
      %v2324 = vadd.f32 0.0, %v2323
      %v2325 = vpop.f32.mrb[0].mxu0
      %2326 = vmatprep.mubr.bf16.mxu0 0
      %2327 = vmatmul.mubr.bf16.gmra.mrb[0].mxu0 %v2184
      %v2328 = vpop.f32.mrb[0].mxu0
      %v2329 = vadd.f32 0.0, %v2328
      %v2330 = vpop.f32.mrb[0].mxu0
      %v2331 = vpop.f32.mrb[0].mxu0
      %v2332 = vadd.f32 0.0, %v2331
      %v2333 = vpop.f32.mrb[0].mxu0
      %2334 = vmatprep.mubr.bf16.mxu0 0
      %2335 = vmatmul.mubr.bf16.gmra.mrb[0].mxu0 %v2187
      %v2336 = vpop.f32.mrb[0].mxu0
      %v2337 = vadd.f32 0.0, %v2336
      %v2338 = vpop.f32.mrb[0].mxu0
      %v2339 = vpop.f32.mrb[0].mxu0
      %v2340 = vadd.f32 0.0, %v2339
      %v2341 = vpop.f32.mrb[0].mxu0
      %2342 = vmatprep.mubr.bf16.mxu0 0
      %2343 = vmatmul.mubr.bf16.gmra.mrb[0].mxu0 %v2190
      %v2344 = vpop.f32.mrb[0].mxu0
      %v2345 = vadd.f32 0.0, %v2344
      %v2346 = vpop.f32.mrb[0].mxu0
      %v2347 = vpop.f32.mrb[0].mxu0
      %v2348 = vadd.f32 0.0, %v2347
      %v2349 = vpop.f32.mrb[0].mxu0
      %2350 = vmatprep.mubr.bf16.mxu0 0
      %2351 = vmatmul.mubr.bf16.gmra.mrb[0].mxu0 %v2193
      %v2352 = vpop.f32.mrb[0].mxu0
      %v2353 = vadd.f32 0.0, %v2352
      %v2354 = vpop.f32.mrb[0].mxu0
      %v2355 = vpop.f32.mrb[0].mxu0
      %v2356 = vadd.f32 0.0, %v2355
      %v2357 = vpop.f32.mrb[0].mxu0
      %2358 = vdwg.mxu0
      %v2359 = vadd.f32 %v1739, %v2233
      %v2360 = vadd.f32 %v1740, %v2236
      %v2361 = vadd.f32 %v1741, %v2241
      %v2362 = vadd.f32 %v1742, %v2244
      %v2363 = vadd.f32 %v1743, %v2249
      %v2364 = vadd.f32 %v1744, %v2252
      %v2365 = vadd.f32 %v1745, %v2257
      %v2366 = vadd.f32 %v1746, %v2260
      %v2367 = vadd.f32 %v1747, %v2265
      %v2368 = vadd.f32 %v1748, %v2268
      %v2369 = vadd.f32 %v1749, %v2273
      %v2370 = vadd.f32 %v1750, %v2276
      %v2371 = vadd.f32 %v1751, %v2281
      %v2372 = vadd.f32 %v1752, %v2284
      %v2373 = vadd.f32 %v1753, %v2289
      %v2374 = vadd.f32 %v1754, %v2292
      %v2375 = vadd.f32 %v1755, %v2297
      %v2376 = vadd.f32 %v1756, %v2300
      %v2377 = vadd.f32 %v1757, %v2305
      %v2378 = vadd.f32 %v1758, %v2308
      %v2379 = vadd.f32 %v1759, %v2313
      %v2380 = vadd.f32 %v1760, %v2316
      %v2381 = vadd.f32 %v1761, %v2321
      %v2382 = vadd.f32 %v1762, %v2324
      %v2383 = vadd.f32 %v1763, %v2329
      %v2384 = vadd.f32 %v1764, %v2332
      %v2385 = vadd.f32 %v1765, %v2337
      %v2386 = vadd.f32 %v1766, %v2340
      %v2387 = vadd.f32 %v1767, %v2345
      %v2388 = vadd.f32 %v1768, %v2348
      %v2389 = vadd.f32 %v1769, %v2353
      %v2390 = vadd.f32 %v1770, %v2356
      %s2391 = scalar_lea.vmem [#allocation2], 48
      %v2392 = vld [vmem:[%s2391] sm:$0xff]
      %v2393 = vld [vmem:[%s2391 + $0x8] sm:$0xff]
      %v2394 = vld [vmem:[%s2391 + $0x18] sm:$0xff]
      %v2395 = vld [vmem:[%s2391 + $0x20] sm:$0xff]
      %v2396 = vld [vmem:[%s2391 + $0x30] sm:$0xff]
      %v2397 = vld [vmem:[%s2391 + $0x38] sm:$0xff]
      %v2398 = vld [vmem:[%s2391 + $0x48] sm:$0xff]
      %v2399 = vld [vmem:[%s2391 + $0x50] sm:$0xff]
      %v2400 = vld [vmem:[%s2391 + $0x60] sm:$0xff]
      %v2401 = vld [vmem:[%s2391 + $0x68] sm:$0xff]
      %v2402 = vld [vmem:[%s2391 + $0x78] sm:$0xff]
      %v2403 = vld [vmem:[%s2391 + $0x80] sm:$0xff]
      %v2404 = vld [vmem:[%s2391 + $0x90] sm:$0xff]
      %v2405 = vld [vmem:[%s2391 + $0x98] sm:$0xff]
      %v2406 = vld [vmem:[%s2391 + $0xa8] sm:$0xff]
      %v2407 = vld [vmem:[%s2391 + $0xb0] sm:$0xff]
      %v2408 = vld [vmem:[%s2391 + $0xc0] sm:$0xff]
      %v2409 = vld [vmem:[%s2391 + $0xc8] sm:$0xff]
      %v2410 = vld [vmem:[%s2391 + $0xd8] sm:$0xff]
      %v2411 = vld [vmem:[%s2391 + $0xe0] sm:$0xff]
      %v2412 = vld [vmem:[%s2391 + $0xf0] sm:$0xff]
      %v2413 = vld [vmem:[%s2391 + $0xf8] sm:$0xff]
      %v2414 = vld [vmem:[%s2391 + $0x108] sm:$0xff]
      %v2415 = vld [vmem:[%s2391 + $0x110] sm:$0xff]
      %v2416 = vld [vmem:[%s2391 + $0x120] sm:$0xff]
      %v2417 = vld [vmem:[%s2391 + $0x128] sm:$0xff]
      %v2418 = vld [vmem:[%s2391 + $0x138] sm:$0xff]
      %v2419 = vld [vmem:[%s2391 + $0x140] sm:$0xff]
      %v2420 = vld [vmem:[%s2391 + $0x150] sm:$0xff]
      %v2421 = vld [vmem:[%s2391 + $0x158] sm:$0xff]
      %v2422 = vld [vmem:[%s2391 + $0x168] sm:$0xff]
      %v2423 = vld [vmem:[%s2391 + $0x170] sm:$0xff]
      %v2424 = vpack.c.bf16 %v2393, %v2392
      %v2425 = vpack.c.bf16 %v2395, %v2394
      %v2426 = vpack.c.bf16 %v2397, %v2396
      %v2427 = vpack.c.bf16 %v2399, %v2398
      %v2428 = vpack.c.bf16 %v2401, %v2400
      %v2429 = vpack.c.bf16 %v2403, %v2402
      %v2430 = vpack.c.bf16 %v2405, %v2404
      %v2431 = vpack.c.bf16 %v2407, %v2406
      %v2432 = vpack.c.bf16 %v2409, %v2408
      %v2433 = vpack.c.bf16 %v2411, %v2410
      %v2434 = vpack.c.bf16 %v2413, %v2412
      %v2435 = vpack.c.bf16 %v2415, %v2414
      %v2436 = vpack.c.bf16 %v2417, %v2416
      %v2437 = vpack.c.bf16 %v2419, %v2418
      %v2438 = vpack.c.bf16 %v2421, %v2420
      %v2439 = vpack.c.bf16 %v2423, %v2422
      %s2440 = scalar_lea.vmem %s1, 24
      %v2441 = vld [vmem:[%s2440] sm:$0xf]
      %v2443 = vsel %vm212, %v2424, 0
      %v2446 = vsel %vm212, %v2425, 0
      %v2449 = vsel %vm212, %v2426, 0
      %v2452 = vsel %vm212, %v2427, 0
      %v2455 = vsel %vm212, %v2428, 0
      %v2458 = vsel %vm212, %v2429, 0
      %v2461 = vsel %vm212, %v2430, 0
      %v2464 = vsel %vm212, %v2431, 0
      %v2467 = vsel %vm212, %v2432, 0
      %v2470 = vsel %vm212, %v2433, 0
      %v2473 = vsel %vm212, %v2434, 0
      %v2476 = vsel %vm212, %v2435, 0
      %v2479 = vsel %vm212, %v2436, 0
      %v2482 = vsel %vm212, %v2437, 0
      %v2485 = vsel %vm212, %v2438, 0
      %v2488 = vsel %vm212, %v2439, 0
      %v2491 = vsel %vm512, %v2441, 0
      %2493 = vmatprep.subr.bf16.mxu0 0
      %2494 = vmatpush1.bf16.msra.mxu0 %v2491
      %2495 = vmatprep.subr.bf16.mxu0 0
      %2496 = vmatpush1.bf16.msra.mxu0 0
      %2497 = vmatprep.subr.bf16.mxu0 0
      %2498 = vmatpush1.bf16.msra.mxu0 0
      %2499 = vmatprep.subr.bf16.mxu0 0
      %2500 = vmatpush1.bf16.msra.mxu0 0
      %2501 = vmatprep.subr.bf16.mxu0 0
      %2502 = vmatpush1.bf16.msra.mxu0 0
      %2503 = vmatprep.subr.bf16.mxu0 0
      %2504 = vmatpush1.bf16.msra.mxu0 0
      %2505 = vmatprep.subr.bf16.mxu0 0
      %2506 = vmatpush1.bf16.msra.mxu0 0
      %2507 = vmatprep.subr.bf16.mxu0 0
      %2508 = vmatpush1.bf16.msra.mxu0 0
      %2509 = vmatprep.subr.bf16.mxu0 0
      %2510 = vmatpush1.bf16.msra.mxu0 0
      %2511 = vmatprep.subr.bf16.mxu0 0
      %2512 = vmatpush1.bf16.msra.mxu0 0
      %2513 = vmatprep.subr.bf16.mxu0 0
      %2514 = vmatpush1.bf16.msra.mxu0 0
      %2515 = vmatprep.subr.bf16.mxu0 0
      %2516 = vmatpush1.bf16.msra.mxu0 0
      %2517 = vmatprep.subr.bf16.mxu0 0
      %2518 = vmatpush1.bf16.msra.mxu0 0
      %2519 = vmatprep.subr.bf16.mxu0 0
      %2520 = vmatpush1.bf16.msra.mxu0 0
      %2521 = vmatprep.subr.bf16.mxu0 0
      %2522 = vmatpush1.bf16.msra.mxu0 0
      %2523 = vmatprep.subr.bf16.mxu0 0
      %2524 = vmatpush1.bf16.msra.mxu0 0
      %2525 = vmatprep.mubr.bf16.mxu0 0
      %2526 = vmatmul.mubr.bf16.gmra.mrb[0].mxu0 %v2443
      %v2527 = vpop.f32.mrb[0].mxu0
      %v2528 = vadd.f32 0.0, %v2527
      %v2529 = vpop.f32.mrb[0].mxu0
      %v2530 = vpop.f32.mrb[0].mxu0
      %v2531 = vadd.f32 0.0, %v2530
      %v2532 = vpop.f32.mrb[0].mxu0
      %2533 = vmatprep.mubr.bf16.mxu0 0
      %2534 = vmatmul.mubr.bf16.gmra.mrb[0].mxu0 %v2446
      %v2535 = vpop.f32.mrb[0].mxu0
      %v2536 = vadd.f32 0.0, %v2535
      %v2537 = vpop.f32.mrb[0].mxu0
      %v2538 = vpop.f32.mrb[0].mxu0
      %v2539 = vadd.f32 0.0, %v2538
      %v2540 = vpop.f32.mrb[0].mxu0
      %2541 = vmatprep.mubr.bf16.mxu0 0
      %2542 = vmatmul.mubr.bf16.gmra.mrb[0].mxu0 %v2449
      %v2543 = vpop.f32.mrb[0].mxu0
      %v2544 = vadd.f32 0.0, %v2543
      %v2545 = vpop.f32.mrb[0].mxu0
      %v2546 = vpop.f32.mrb[0].mxu0
      %v2547 = vadd.f32 0.0, %v2546
      %v2548 = vpop.f32.mrb[0].mxu0
      %2549 = vmatprep.mubr.bf16.mxu0 0
      %2550 = vmatmul.mubr.bf16.gmra.mrb[0].mxu0 %v2452
      %v2551 = vpop.f32.mrb[0].mxu0
      %v2552 = vadd.f32 0.0, %v2551
      %v2553 = vpop.f32.mrb[0].mxu0
      %v2554 = vpop.f32.mrb[0].mxu0
      %v2555 = vadd.f32 0.0, %v2554
      %v2556 = vpop.f32.mrb[0].mxu0
      %2557 = vmatprep.mubr.bf16.mxu0 0
      %2558 = vmatmul.mubr.bf16.gmra.mrb[0].mxu0 %v2455
      %v2559 = vpop.f32.mrb[0].mxu0
      %v2560 = vadd.f32 0.0, %v2559
      %v2561 = vpop.f32.mrb[0].mxu0
      %v2562 = vpop.f32.mrb[0].mxu0
      %v2563 = vadd.f32 0.0, %v2562
      %v2564 = vpop.f32.mrb[0].mxu0
      %2565 = vmatprep.mubr.bf16.mxu0 0
      %2566 = vmatmul.mubr.bf16.gmra.mrb[0].mxu0 %v2458
      %v2567 = vpop.f32.mrb[0].mxu0
      %v2568 = vadd.f32 0.0, %v2567
      %v2569 = vpop.f32.mrb[0].mxu0
      %v2570 = vpop.f32.mrb[0].mxu0
      %v2571 = vadd.f32 0.0, %v2570
      %v2572 = vpop.f32.mrb[0].mxu0
      %2573 = vmatprep.mubr.bf16.mxu0 0
      %2574 = vmatmul.mubr.bf16.gmra.mrb[0].mxu0 %v2461
      %v2575 = vpop.f32.mrb[0].mxu0
      %v2576 = vadd.f32 0.0, %v2575
      %v2577 = vpop.f32.mrb[0].mxu0
      %v2578 = vpop.f32.mrb[0].mxu0
      %v2579 = vadd.f32 0.0, %v2578
      %v2580 = vpop.f32.mrb[0].mxu0
      %2581 = vmatprep.mubr.bf16.mxu0 0
      %2582 = vmatmul.mubr.bf16.gmra.mrb[0].mxu0 %v2464
      %v2583 = vpop.f32.mrb[0].mxu0
      %v2584 = vadd.f32 0.0, %v2583
      %v2585 = vpop.f32.mrb[0].mxu0
      %v2586 = vpop.f32.mrb[0].mxu0
      %v2587 = vadd.f32 0.0, %v2586
      %v2588 = vpop.f32.mrb[0].mxu0
      %2589 = vmatprep.mubr.bf16.mxu0 0
      %2590 = vmatmul.mubr.bf16.gmra.mrb[0].mxu0 %v2467
      %v2591 = vpop.f32.mrb[0].mxu0
      %v2592 = vadd.f32 0.0, %v2591
      %v2593 = vpop.f32.mrb[0].mxu0
      %v2594 = vpop.f32.mrb[0].mxu0
      %v2595 = vadd.f32 0.0, %v2594
      %v2596 = vpop.f32.mrb[0].mxu0
      %2597 = vmatprep.mubr.bf16.mxu0 0
      %2598 = vmatmul.mubr.bf16.gmra.mrb[0].mxu0 %v2470
      %v2599 = vpop.f32.mrb[0].mxu0
      %v2600 = vadd.f32 0.0, %v2599
      %v2601 = vpop.f32.mrb[0].mxu0
      %v2602 = vpop.f32.mrb[0].mxu0
      %v2603 = vadd.f32 0.0, %v2602
      %v2604 = vpop.f32.mrb[0].mxu0
      %2605 = vmatprep.mubr.bf16.mxu0 0
      %2606 = vmatmul.mubr.bf16.gmra.mrb[0].mxu0 %v2473
      %v2607 = vpop.f32.mrb[0].mxu0
      %v2608 = vadd.f32 0.0, %v2607
      %v2609 = vpop.f32.mrb[0].mxu0
      %v2610 = vpop.f32.mrb[0].mxu0
      %v2611 = vadd.f32 0.0, %v2610
      %v2612 = vpop.f32.mrb[0].mxu0
      %2613 = vmatprep.mubr.bf16.mxu0 0
      %2614 = vmatmul.mubr.bf16.gmra.mrb[0].mxu0 %v2476
      %v2615 = vpop.f32.mrb[0].mxu0
      %v2616 = vadd.f32 0.0, %v2615
      %v2617 = vpop.f32.mrb[0].mxu0
      %v2618 = vpop.f32.mrb[0].mxu0
      %v2619 = vadd.f32 0.0, %v2618
      %v2620 = vpop.f32.mrb[0].mxu0
      %2621 = vmatprep.mubr.bf16.mxu0 0
      %2622 = vmatmul.mubr.bf16.gmra.mrb[0].mxu0 %v2479
      %v2623 = vpop.f32.mrb[0].mxu0
      %v2624 = vadd.f32 0.0, %v2623
      %v2625 = vpop.f32.mrb[0].mxu0
      %v2626 = vpop.f32.mrb[0].mxu0
      %v2627 = vadd.f32 0.0, %v2626
      %v2628 = vpop.f32.mrb[0].mxu0
      %2629 = vmatprep.mubr.bf16.mxu0 0
      %2630 = vmatmul.mubr.bf16.gmra.mrb[0].mxu0 %v2482
      %v2631 = vpop.f32.mrb[0].mxu0
      %v2632 = vadd.f32 0.0, %v2631
      %v2633 = vpop.f32.mrb[0].mxu0
      %v2634 = vpop.f32.mrb[0].mxu0
      %v2635 = vadd.f32 0.0, %v2634
      %v2636 = vpop.f32.mrb[0].mxu0
      %2637 = vmatprep.mubr.bf16.mxu0 0
      %2638 = vmatmul.mubr.bf16.gmra.mrb[0].mxu0 %v2485
      %v2639 = vpop.f32.mrb[0].mxu0
      %v2640 = vadd.f32 0.0, %v2639
      %v2641 = vpop.f32.mrb[0].mxu0
      %v2642 = vpop.f32.mrb[0].mxu0
      %v2643 = vadd.f32 0.0, %v2642
      %v2644 = vpop.f32.mrb[0].mxu0
      %2645 = vmatprep.mubr.bf16.mxu0 0
      %2646 = vmatmul.mubr.bf16.gmra.mrb[0].mxu0 %v2488
      %v2647 = vpop.f32.mrb[0].mxu0
      %v2648 = vadd.f32 0.0, %v2647
      %v2649 = vpop.f32.mrb[0].mxu0
      %v2650 = vpop.f32.mrb[0].mxu0
      %v2651 = vadd.f32 0.0, %v2650
      %v2652 = vpop.f32.mrb[0].mxu0
      %2653 = vdwg.mxu0
      %v2654 = vadd.f32 %v2359, %v2528
      %v2655 = vadd.f32 %v2360, %v2531
      %v2656 = vadd.f32 %v2361, %v2536
      %v2657 = vadd.f32 %v2362, %v2539
      %v2658 = vadd.f32 %v2363, %v2544
      %v2659 = vadd.f32 %v2364, %v2547
      %v2660 = vadd.f32 %v2365, %v2552
      %v2661 = vadd.f32 %v2366, %v2555
      %v2662 = vadd.f32 %v2367, %v2560
      %v2663 = vadd.f32 %v2368, %v2563
      %v2664 = vadd.f32 %v2369, %v2568
      %v2665 = vadd.f32 %v2370, %v2571
      %v2666 = vadd.f32 %v2371, %v2576
      %v2667 = vadd.f32 %v2372, %v2579
      %v2668 = vadd.f32 %v2373, %v2584
      %v2669 = vadd.f32 %v2374, %v2587
      %v2670 = vadd.f32 %v2375, %v2592
      %v2671 = vadd.f32 %v2376, %v2595
      %v2672 = vadd.f32 %v2377, %v2600
      %v2673 = vadd.f32 %v2378, %v2603
      %v2674 = vadd.f32 %v2379, %v2608
      %v2675 = vadd.f32 %v2380, %v2611
      %v2676 = vadd.f32 %v2381, %v2616
      %v2677 = vadd.f32 %v2382, %v2619
      %v2678 = vadd.f32 %v2383, %v2624
      %v2679 = vadd.f32 %v2384, %v2627
      %v2680 = vadd.f32 %v2385, %v2632
      %v2681 = vadd.f32 %v2386, %v2635
      %v2682 = vadd.f32 %v2387, %v2640
      %v2683 = vadd.f32 %v2388, %v2643
      %v2684 = vadd.f32 %v2389, %v2648
      %v2685 = vadd.f32 %v2390, %v2651
      %v2686 = vld [vmem:[%s2391 + $0x1] sm:$0xff]
      %v2687 = vld [vmem:[%s2391 + $0x9] sm:$0xff]
      %v2688 = vld [vmem:[%s2391 + $0x19] sm:$0xff]
      %v2689 = vld [vmem:[%s2391 + $0x21] sm:$0xff]
      %v2690 = vld [vmem:[%s2391 + $0x31] sm:$0xff]
      %v2691 = vld [vmem:[%s2391 + $0x39] sm:$0xff]
      %v2692 = vld [vmem:[%s2391 + $0x49] sm:$0xff]
      %v2693 = vld [vmem:[%s2391 + $0x51] sm:$0xff]
      %v2694 = vld [vmem:[%s2391 + $0x61] sm:$0xff]
      %v2695 = vld [vmem:[%s2391 + $0x69] sm:$0xff]
      %v2696 = vld [vmem:[%s2391 + $0x79] sm:$0xff]
      %v2697 = vld [vmem:[%s2391 + $0x81] sm:$0xff]
      %v2698 = vld [vmem:[%s2391 + $0x91] sm:$0xff]
      %v2699 = vld [vmem:[%s2391 + $0x99] sm:$0xff]
      %v2700 = vld [vmem:[%s2391 + $0xa9] sm:$0xff]
      %v2701 = vld [vmem:[%s2391 + $0xb1] sm:$0xff]
      %v2702 = vld [vmem:[%s2391 + $0xc1] sm:$0xff]
      %v2703 = vld [vmem:[%s2391 + $0xc9] sm:$0xff]
      %v2704 = vld [vmem:[%s2391 + $0xd9] sm:$0xff]
      %v2705 = vld [vmem:[%s2391 + $0xe1] sm:$0xff]
      %v2706 = vld [vmem:[%s2391 + $0xf1] sm:$0xff]
      %v2707 = vld [vmem:[%s2391 + $0xf9] sm:$0xff]
      %v2708 = vld [vmem:[%s2391 + $0x109] sm:$0xff]
      %v2709 = vld [vmem:[%s2391 + $0x111] sm:$0xff]
      %v2710 = vld [vmem:[%s2391 + $0x121] sm:$0xff]
      %v2711 = vld [vmem:[%s2391 + $0x129] sm:$0xff]
      %v2712 = vld [vmem:[%s2391 + $0x139] sm:$0xff]
      %v2713 = vld [vmem:[%s2391 + $0x141] sm:$0xff]
      %v2714 = vld [vmem:[%s2391 + $0x151] sm:$0xff]
      %v2715 = vld [vmem:[%s2391 + $0x159] sm:$0xff]
      %v2716 = vld [vmem:[%s2391 + $0x169] sm:$0xff]
      %v2717 = vld [vmem:[%s2391 + $0x171] sm:$0xff]
      %v2718 = vpack.c.bf16 %v2687, %v2686
      %v2719 = vpack.c.bf16 %v2689, %v2688
      %v2720 = vpack.c.bf16 %v2691, %v2690
      %v2721 = vpack.c.bf16 %v2693, %v2692
      %v2722 = vpack.c.bf16 %v2695, %v2694
      %v2723 = vpack.c.bf16 %v2697, %v2696
      %v2724 = vpack.c.bf16 %v2699, %v2698
      %v2725 = vpack.c.bf16 %v2701, %v2700
      %v2726 = vpack.c.bf16 %v2703, %v2702
      %v2727 = vpack.c.bf16 %v2705, %v2704
      %v2728 = vpack.c.bf16 %v2707, %v2706
      %v2729 = vpack.c.bf16 %v2709, %v2708
      %v2730 = vpack.c.bf16 %v2711, %v2710
      %v2731 = vpack.c.bf16 %v2713, %v2712
      %v2732 = vpack.c.bf16 %v2715, %v2714
      %v2733 = vpack.c.bf16 %v2717, %v2716
      %s2734 = scalar_lea.vmem %s1, 28
      %v2735 = vld [vmem:[%s2734] sm:$0xf]
      %v2737 = vsel %vm212, %v2718, 0
      %v2740 = vsel %vm212, %v2719, 0
      %v2743 = vsel %vm212, %v2720, 0
      %v2746 = vsel %vm212, %v2721, 0
      %v2749 = vsel %vm212, %v2722, 0
      %v2752 = vsel %vm212, %v2723, 0
      %v2755 = vsel %vm212, %v2724, 0
      %v2758 = vsel %vm212, %v2725, 0
      %v2761 = vsel %vm212, %v2726, 0
      %v2764 = vsel %vm212, %v2727, 0
      %v2767 = vsel %vm212, %v2728, 0
      %v2770 = vsel %vm212, %v2729, 0
      %v2773 = vsel %vm212, %v2730, 0
      %v2776 = vsel %vm212, %v2731, 0
      %v2779 = vsel %vm212, %v2732, 0
      %v2782 = vsel %vm212, %v2733, 0
      %v2785 = vsel %vm512, %v2735, 0
      %2787 = vmatprep.subr.bf16.mxu0 0
      %2788 = vmatpush1.bf16.msra.mxu0 %v2785
      %2789 = vmatprep.subr.bf16.mxu0 0
      %2790 = vmatpush1.bf16.msra.mxu0 0
      %2791 = vmatprep.subr.bf16.mxu0 0
      %2792 = vmatpush1.bf16.msra.mxu0 0
      %2793 = vmatprep.subr.bf16.mxu0 0
      %2794 = vmatpush1.bf16.msra.mxu0 0
      %2795 = vmatprep.subr.bf16.mxu0 0
      %2796 = vmatpush1.bf16.msra.mxu0 0
      %2797 = vmatprep.subr.bf16.mxu0 0
      %2798 = vmatpush1.bf16.msra.mxu0 0
      %2799 = vmatprep.subr.bf16.mxu0 0
      %2800 = vmatpush1.bf16.msra.mxu0 0
      %2801 = vmatprep.subr.bf16.mxu0 0
      %2802 = vmatpush1.bf16.msra.mxu0 0
      %2803 = vmatprep.subr.bf16.mxu0 0
      %2804 = vmatpush1.bf16.msra.mxu0 0
      %2805 = vmatprep.subr.bf16.mxu0 0
      %2806 = vmatpush1.bf16.msra.mxu0 0
      %2807 = vmatprep.subr.bf16.mxu0 0
      %2808 = vmatpush1.bf16.msra.mxu0 0
      %2809 = vmatprep.subr.bf16.mxu0 0
      %2810 = vmatpush1.bf16.msra.mxu0 0
      %2811 = vmatprep.subr.bf16.mxu0 0
      %2812 = vmatpush1.bf16.msra.mxu0 0
      %2813 = vmatprep.subr.bf16.mxu0 0
      %2814 = vmatpush1.bf16.msra.mxu0 0
      %2815 = vmatprep.subr.bf16.mxu0 0
      %2816 = vmatpush1.bf16.msra.mxu0 0
      %2817 = vmatprep.subr.bf16.mxu0 0
      %2818 = vmatpush1.bf16.msra.mxu0 0
      %2819 = vmatprep.mubr.bf16.mxu0 0
      %2820 = vmatmul.mubr.bf16.gmra.mrb[0].mxu0 %v2737
      %v2821 = vpop.f32.mrb[0].mxu0
      %v2822 = vadd.f32 0.0, %v2821
      %v2823 = vpop.f32.mrb[0].mxu0
      %v2824 = vpop.f32.mrb[0].mxu0
      %v2825 = vadd.f32 0.0, %v2824
      %v2826 = vpop.f32.mrb[0].mxu0
      %2827 = vmatprep.mubr.bf16.mxu0 0
      %2828 = vmatmul.mubr.bf16.gmra.mrb[0].mxu0 %v2740
      %v2829 = vpop.f32.mrb[0].mxu0
      %v2830 = vadd.f32 0.0, %v2829
      %v2831 = vpop.f32.mrb[0].mxu0
      %v2832 = vpop.f32.mrb[0].mxu0
      %v2833 = vadd.f32 0.0, %v2832
      %v2834 = vpop.f32.mrb[0].mxu0
      %2835 = vmatprep.mubr.bf16.mxu0 0
      %2836 = vmatmul.mubr.bf16.gmra.mrb[0].mxu0 %v2743
      %v2837 = vpop.f32.mrb[0].mxu0
      %v2838 = vadd.f32 0.0, %v2837
      %v2839 = vpop.f32.mrb[0].mxu0
      %v2840 = vpop.f32.mrb[0].mxu0
      %v2841 = vadd.f32 0.0, %v2840
      %v2842 = vpop.f32.mrb[0].mxu0
      %2843 = vmatprep.mubr.bf16.mxu0 0
      %2844 = vmatmul.mubr.bf16.gmra.mrb[0].mxu0 %v2746
      %v2845 = vpop.f32.mrb[0].mxu0
      %v2846 = vadd.f32 0.0, %v2845
      %v2847 = vpop.f32.mrb[0].mxu0
      %v2848 = vpop.f32.mrb[0].mxu0
      %v2849 = vadd.f32 0.0, %v2848
      %v2850 = vpop.f32.mrb[0].mxu0
      %2851 = vmatprep.mubr.bf16.mxu0 0
      %2852 = vmatmul.mubr.bf16.gmra.mrb[0].mxu0 %v2749
      %v2853 = vpop.f32.mrb[0].mxu0
      %v2854 = vadd.f32 0.0, %v2853
      %v2855 = vpop.f32.mrb[0].mxu0
      %v2856 = vpop.f32.mrb[0].mxu0
      %v2857 = vadd.f32 0.0, %v2856
      %v2858 = vpop.f32.mrb[0].mxu0
      %2859 = vmatprep.mubr.bf16.mxu0 0
      %2860 = vmatmul.mubr.bf16.gmra.mrb[0].mxu0 %v2752
      %v2861 = vpop.f32.mrb[0].mxu0
      %v2862 = vadd.f32 0.0, %v2861
      %v2863 = vpop.f32.mrb[0].mxu0
      %v2864 = vpop.f32.mrb[0].mxu0
      %v2865 = vadd.f32 0.0, %v2864
      %v2866 = vpop.f32.mrb[0].mxu0
      %2867 = vmatprep.mubr.bf16.mxu0 0
      %2868 = vmatmul.mubr.bf16.gmra.mrb[0].mxu0 %v2755
      %v2869 = vpop.f32.mrb[0].mxu0
      %v2870 = vadd.f32 0.0, %v2869
      %v2871 = vpop.f32.mrb[0].mxu0
      %v2872 = vpop.f32.mrb[0].mxu0
      %v2873 = vadd.f32 0.0, %v2872
      %v2874 = vpop.f32.mrb[0].mxu0
      %2875 = vmatprep.mubr.bf16.mxu0 0
      %2876 = vmatmul.mubr.bf16.gmra.mrb[0].mxu0 %v2758
      %v2877 = vpop.f32.mrb[0].mxu0
      %v2878 = vadd.f32 0.0, %v2877
      %v2879 = vpop.f32.mrb[0].mxu0
      %v2880 = vpop.f32.mrb[0].mxu0
      %v2881 = vadd.f32 0.0, %v2880
      %v2882 = vpop.f32.mrb[0].mxu0
      %2883 = vmatprep.mubr.bf16.mxu0 0
      %2884 = vmatmul.mubr.bf16.gmra.mrb[0].mxu0 %v2761
      %v2885 = vpop.f32.mrb[0].mxu0
      %v2886 = vadd.f32 0.0, %v2885
      %v2887 = vpop.f32.mrb[0].mxu0
      %v2888 = vpop.f32.mrb[0].mxu0
      %v2889 = vadd.f32 0.0, %v2888
      %v2890 = vpop.f32.mrb[0].mxu0
      %2891 = vmatprep.mubr.bf16.mxu0 0
      %2892 = vmatmul.mubr.bf16.gmra.mrb[0].mxu0 %v2764
      %v2893 = vpop.f32.mrb[0].mxu0
      %v2894 = vadd.f32 0.0, %v2893
      %v2895 = vpop.f32.mrb[0].mxu0
      %v2896 = vpop.f32.mrb[0].mxu0
      %v2897 = vadd.f32 0.0, %v2896
      %v2898 = vpop.f32.mrb[0].mxu0
      %2899 = vmatprep.mubr.bf16.mxu0 0
      %2900 = vmatmul.mubr.bf16.gmra.mrb[0].mxu0 %v2767
      %v2901 = vpop.f32.mrb[0].mxu0
      %v2902 = vadd.f32 0.0, %v2901
      %v2903 = vpop.f32.mrb[0].mxu0
      %v2904 = vpop.f32.mrb[0].mxu0
      %v2905 = vadd.f32 0.0, %v2904
      %v2906 = vpop.f32.mrb[0].mxu0
      %2907 = vmatprep.mubr.bf16.mxu0 0
      %2908 = vmatmul.mubr.bf16.gmra.mrb[0].mxu0 %v2770
      %v2909 = vpop.f32.mrb[0].mxu0
      %v2910 = vadd.f32 0.0, %v2909
      %v2911 = vpop.f32.mrb[0].mxu0
      %v2912 = vpop.f32.mrb[0].mxu0
      %v2913 = vadd.f32 0.0, %v2912
      %v2914 = vpop.f32.mrb[0].mxu0
      %2915 = vmatprep.mubr.bf16.mxu0 0
      %2916 = vmatmul.mubr.bf16.gmra.mrb[0].mxu0 %v2773
      %v2917 = vpop.f32.mrb[0].mxu0
      %v2918 = vadd.f32 0.0, %v2917
      %v2919 = vpop.f32.mrb[0].mxu0
      %v2920 = vpop.f32.mrb[0].mxu0
      %v2921 = vadd.f32 0.0, %v2920
      %v2922 = vpop.f32.mrb[0].mxu0
      %2923 = vmatprep.mubr.bf16.mxu0 0
      %2924 = vmatmul.mubr.bf16.gmra.mrb[0].mxu0 %v2776
      %v2925 = vpop.f32.mrb[0].mxu0
      %v2926 = vadd.f32 0.0, %v2925
      %v2927 = vpop.f32.mrb[0].mxu0
      %v2928 = vpop.f32.mrb[0].mxu0
      %v2929 = vadd.f32 0.0, %v2928
      %v2930 = vpop.f32.mrb[0].mxu0
      %2931 = vmatprep.mubr.bf16.mxu0 0
      %2932 = vmatmul.mubr.bf16.gmra.mrb[0].mxu0 %v2779
      %v2933 = vpop.f32.mrb[0].mxu0
      %v2934 = vadd.f32 0.0, %v2933
      %v2935 = vpop.f32.mrb[0].mxu0
      %v2936 = vpop.f32.mrb[0].mxu0
      %v2937 = vadd.f32 0.0, %v2936
      %v2938 = vpop.f32.mrb[0].mxu0
      %2939 = vmatprep.mubr.bf16.mxu0 0
      %2940 = vmatmul.mubr.bf16.gmra.mrb[0].mxu0 %v2782
      %v2941 = vpop.f32.mrb[0].mxu0
      %v2942 = vadd.f32 0.0, %v2941
      %v2943 = vpop.f32.mrb[0].mxu0
      %v2944 = vpop.f32.mrb[0].mxu0
      %v2945 = vadd.f32 0.0, %v2944
      %v2946 = vpop.f32.mrb[0].mxu0
      %2947 = vdwg.mxu0
      %v2948 = vadd.f32 %v2654, %v2822
      %v2949 = vadd.f32 %v2655, %v2825
      %v2950 = vadd.f32 %v2656, %v2830
      %v2951 = vadd.f32 %v2657, %v2833
      %v2952 = vadd.f32 %v2658, %v2838
      %v2953 = vadd.f32 %v2659, %v2841
      %v2954 = vadd.f32 %v2660, %v2846
      %v2955 = vadd.f32 %v2661, %v2849
      %v2956 = vadd.f32 %v2662, %v2854
      %v2957 = vadd.f32 %v2663, %v2857
      %v2958 = vadd.f32 %v2664, %v2862
      %v2959 = vadd.f32 %v2665, %v2865
      %v2960 = vadd.f32 %v2666, %v2870
      %v2961 = vadd.f32 %v2667, %v2873
      %v2962 = vadd.f32 %v2668, %v2878
      %v2963 = vadd.f32 %v2669, %v2881
      %v2964 = vadd.f32 %v2670, %v2886
      %v2965 = vadd.f32 %v2671, %v2889
      %v2966 = vadd.f32 %v2672, %v2894
      %v2967 = vadd.f32 %v2673, %v2897
      %v2968 = vadd.f32 %v2674, %v2902
      %v2969 = vadd.f32 %v2675, %v2905
      %v2970 = vadd.f32 %v2676, %v2910
      %v2971 = vadd.f32 %v2677, %v2913
      %v2972 = vadd.f32 %v2678, %v2918
      %v2973 = vadd.f32 %v2679, %v2921
      %v2974 = vadd.f32 %v2680, %v2926
      %v2975 = vadd.f32 %v2681, %v2929
      %v2976 = vadd.f32 %v2682, %v2934
      %v2977 = vadd.f32 %v2683, %v2937
      %v2978 = vadd.f32 %v2684, %v2942
      %v2979 = vadd.f32 %v2685, %v2945
      %v2980 = vld [vmem:[%s2391 + $0x2] sm:$0xff]
      %v2981 = vld [vmem:[%s2391 + $0xa] sm:$0xff]
      %v2982 = vld [vmem:[%s2391 + $0x1a] sm:$0xff]
      %v2983 = vld [vmem:[%s2391 + $0x22] sm:$0xff]
      %v2984 = vld [vmem:[%s2391 + $0x32] sm:$0xff]
      %v2985 = vld [vmem:[%s2391 + $0x3a] sm:$0xff]
      %v2986 = vld [vmem:[%s2391 + $0x4a] sm:$0xff]
      %v2987 = vld [vmem:[%s2391 + $0x52] sm:$0xff]
      %v2988 = vld [vmem:[%s2391 + $0x62] sm:$0xff]
      %v2989 = vld [vmem:[%s2391 + $0x6a] sm:$0xff]
      %v2990 = vld [vmem:[%s2391 + $0x7a] sm:$0xff]
      %v2991 = vld [vmem:[%s2391 + $0x82] sm:$0xff]
      %v2992 = vld [vmem:[%s2391 + $0x92] sm:$0xff]
      %v2993 = vld [vmem:[%s2391 + $0x9a] sm:$0xff]
      %v2994 = vld [vmem:[%s2391 + $0xaa] sm:$0xff]
      %v2995 = vld [vmem:[%s2391 + $0xb2] sm:$0xff]
      %v2996 = vld [vmem:[%s2391 + $0xc2] sm:$0xff]
      %v2997 = vld [vmem:[%s2391 + $0xca] sm:$0xff]
      %v2998 = vld [vmem:[%s2391 + $0xda] sm:$0xff]
      %v2999 = vld [vmem:[%s2391 + $0xe2] sm:$0xff]
      %v3000 = vld [vmem:[%s2391 + $0xf2] sm:$0xff]
      %v3001 = vld [vmem:[%s2391 + $0xfa] sm:$0xff]
      %v3002 = vld [vmem:[%s2391 + $0x10a] sm:$0xff]
      %v3003 = vld [vmem:[%s2391 + $0x112] sm:$0xff]
      %v3004 = vld [vmem:[%s2391 + $0x122] sm:$0xff]
      %v3005 = vld [vmem:[%s2391 + $0x12a] sm:$0xff]
      %v3006 = vld [vmem:[%s2391 + $0x13a] sm:$0xff]
      %v3007 = vld [vmem:[%s2391 + $0x142] sm:$0xff]
      %v3008 = vld [vmem:[%s2391 + $0x152] sm:$0xff]
      %v3009 = vld [vmem:[%s2391 + $0x15a] sm:$0xff]
      %v3010 = vld [vmem:[%s2391 + $0x16a] sm:$0xff]
      %v3011 = vld [vmem:[%s2391 + $0x172] sm:$0xff]
      %v3012 = vpack.c.bf16 %v2981, %v2980
      %v3013 = vpack.c.bf16 %v2983, %v2982
      %v3014 = vpack.c.bf16 %v2985, %v2984
      %v3015 = vpack.c.bf16 %v2987, %v2986
      %v3016 = vpack.c.bf16 %v2989, %v2988
      %v3017 = vpack.c.bf16 %v2991, %v2990
      %v3018 = vpack.c.bf16 %v2993, %v2992
      %v3019 = vpack.c.bf16 %v2995, %v2994
      %v3020 = vpack.c.bf16 %v2997, %v2996
      %v3021 = vpack.c.bf16 %v2999, %v2998
      %v3022 = vpack.c.bf16 %v3001, %v3000
      %v3023 = vpack.c.bf16 %v3003, %v3002
      %v3024 = vpack.c.bf16 %v3005, %v3004
      %v3025 = vpack.c.bf16 %v3007, %v3006
      %v3026 = vpack.c.bf16 %v3009, %v3008
      %v3027 = vpack.c.bf16 %v3011, %v3010
      %s3028 = scalar_lea.vmem %s1, 32
      %v3029 = vld [vmem:[%s3028] sm:$0xf]
      %v3031 = vsel %vm212, %v3012, 0
      %v3034 = vsel %vm212, %v3013, 0
      %v3037 = vsel %vm212, %v3014, 0
      %v3040 = vsel %vm212, %v3015, 0
      %v3043 = vsel %vm212, %v3016, 0
      %v3046 = vsel %vm212, %v3017, 0
      %v3049 = vsel %vm212, %v3018, 0
      %v3052 = vsel %vm212, %v3019, 0
      %v3055 = vsel %vm212, %v3020, 0
      %v3058 = vsel %vm212, %v3021, 0
      %v3061 = vsel %vm212, %v3022, 0
      %v3064 = vsel %vm212, %v3023, 0
      %v3067 = vsel %vm212, %v3024, 0
      %v3070 = vsel %vm212, %v3025, 0
      %v3073 = vsel %vm212, %v3026, 0
      %v3076 = vsel %vm212, %v3027, 0
      %v3079 = vsel %vm512, %v3029, 0
      %3081 = vmatprep.subr.bf16.mxu0 0
      %3082 = vmatpush1.bf16.msra.mxu0 %v3079
      %3083 = vmatprep.subr.bf16.mxu0 0
      %3084 = vmatpush1.bf16.msra.mxu0 0
      %3085 = vmatprep.subr.bf16.mxu0 0
      %3086 = vmatpush1.bf16.msra.mxu0 0
      %3087 = vmatprep.subr.bf16.mxu0 0
      %3088 = vmatpush1.bf16.msra.mxu0 0
      %3089 = vmatprep.subr.bf16.mxu0 0
      %3090 = vmatpush1.bf16.msra.mxu0 0
      %3091 = vmatprep.subr.bf16.mxu0 0
      %3092 = vmatpush1.bf16.msra.mxu0 0
      %3093 = vmatprep.subr.bf16.mxu0 0
      %3094 = vmatpush1.bf16.msra.mxu0 0
      %3095 = vmatprep.subr.bf16.mxu0 0
      %3096 = vmatpush1.bf16.msra.mxu0 0
      %3097 = vmatprep.subr.bf16.mxu0 0
      %3098 = vmatpush1.bf16.msra.mxu0 0
      %3099 = vmatprep.subr.bf16.mxu0 0
      %3100 = vmatpush1.bf16.msra.mxu0 0
      %3101 = vmatprep.subr.bf16.mxu0 0
      %3102 = vmatpush1.bf16.msra.mxu0 0
      %3103 = vmatprep.subr.bf16.mxu0 0
      %3104 = vmatpush1.bf16.msra.mxu0 0
      %3105 = vmatprep.subr.bf16.mxu0 0
      %3106 = vmatpush1.bf16.msra.mxu0 0
      %3107 = vmatprep.subr.bf16.mxu0 0
      %3108 = vmatpush1.bf16.msra.mxu0 0
      %3109 = vmatprep.subr.bf16.mxu0 0
      %3110 = vmatpush1.bf16.msra.mxu0 0
      %3111 = vmatprep.subr.bf16.mxu0 0
      %3112 = vmatpush1.bf16.msra.mxu0 0
      %3113 = vmatprep.mubr.bf16.mxu0 0
      %3114 = vmatmul.mubr.bf16.gmra.mrb[0].mxu0 %v3031
      %v3115 = vpop.f32.mrb[0].mxu0
      %v3116 = vadd.f32 0.0, %v3115
      %v3117 = vpop.f32.mrb[0].mxu0
      %v3118 = vpop.f32.mrb[0].mxu0
      %v3119 = vadd.f32 0.0, %v3118
      %v3120 = vpop.f32.mrb[0].mxu0
      %3121 = vmatprep.mubr.bf16.mxu0 0
      %3122 = vmatmul.mubr.bf16.gmra.mrb[0].mxu0 %v3034
      %v3123 = vpop.f32.mrb[0].mxu0
      %v3124 = vadd.f32 0.0, %v3123
      %v3125 = vpop.f32.mrb[0].mxu0
      %v3126 = vpop.f32.mrb[0].mxu0
      %v3127 = vadd.f32 0.0, %v3126
      %v3128 = vpop.f32.mrb[0].mxu0
      %3129 = vmatprep.mubr.bf16.mxu0 0
      %3130 = vmatmul.mubr.bf16.gmra.mrb[0].mxu0 %v3037
      %v3131 = vpop.f32.mrb[0].mxu0
      %v3132 = vadd.f32 0.0, %v3131
      %v3133 = vpop.f32.mrb[0].mxu0
      %v3134 = vpop.f32.mrb[0].mxu0
      %v3135 = vadd.f32 0.0, %v3134
      %v3136 = vpop.f32.mrb[0].mxu0
      %3137 = vmatprep.mubr.bf16.mxu0 0
      %3138 = vmatmul.mubr.bf16.gmra.mrb[0].mxu0 %v3040
      %v3139 = vpop.f32.mrb[0].mxu0
      %v3140 = vadd.f32 0.0, %v3139
      %v3141 = vpop.f32.mrb[0].mxu0
      %v3142 = vpop.f32.mrb[0].mxu0
      %v3143 = vadd.f32 0.0, %v3142
      %v3144 = vpop.f32.mrb[0].mxu0
      %3145 = vmatprep.mubr.bf16.mxu0 0
      %3146 = vmatmul.mubr.bf16.gmra.mrb[0].mxu0 %v3043
      %v3147 = vpop.f32.mrb[0].mxu0
      %v3148 = vadd.f32 0.0, %v3147
      %v3149 = vpop.f32.mrb[0].mxu0
      %v3150 = vpop.f32.mrb[0].mxu0
      %v3151 = vadd.f32 0.0, %v3150
      %v3152 = vpop.f32.mrb[0].mxu0
      %3153 = vmatprep.mubr.bf16.mxu0 0
      %3154 = vmatmul.mubr.bf16.gmra.mrb[0].mxu0 %v3046
      %v3155 = vpop.f32.mrb[0].mxu0
      %v3156 = vadd.f32 0.0, %v3155
      %v3157 = vpop.f32.mrb[0].mxu0
      %v3158 = vpop.f32.mrb[0].mxu0
      %v3159 = vadd.f32 0.0, %v3158
      %v3160 = vpop.f32.mrb[0].mxu0
      %3161 = vmatprep.mubr.bf16.mxu0 0
      %3162 = vmatmul.mubr.bf16.gmra.mrb[0].mxu0 %v3049
      %v3163 = vpop.f32.mrb[0].mxu0
      %v3164 = vadd.f32 0.0, %v3163
      %v3165 = vpop.f32.mrb[0].mxu0
      %v3166 = vpop.f32.mrb[0].mxu0
      %v3167 = vadd.f32 0.0, %v3166
      %v3168 = vpop.f32.mrb[0].mxu0
      %3169 = vmatprep.mubr.bf16.mxu0 0
      %3170 = vmatmul.mubr.bf16.gmra.mrb[0].mxu0 %v3052
      %v3171 = vpop.f32.mrb[0].mxu0
      %v3172 = vadd.f32 0.0, %v3171
      %v3173 = vpop.f32.mrb[0].mxu0
      %v3174 = vpop.f32.mrb[0].mxu0
      %v3175 = vadd.f32 0.0, %v3174
      %v3176 = vpop.f32.mrb[0].mxu0
      %3177 = vmatprep.mubr.bf16.mxu0 0
      %3178 = vmatmul.mubr.bf16.gmra.mrb[0].mxu0 %v3055
      %v3179 = vpop.f32.mrb[0].mxu0
      %v3180 = vadd.f32 0.0, %v3179
      %v3181 = vpop.f32.mrb[0].mxu0
      %v3182 = vpop.f32.mrb[0].mxu0
      %v3183 = vadd.f32 0.0, %v3182
      %v3184 = vpop.f32.mrb[0].mxu0
      %3185 = vmatprep.mubr.bf16.mxu0 0
      %3186 = vmatmul.mubr.bf16.gmra.mrb[0].mxu0 %v3058
      %v3187 = vpop.f32.mrb[0].mxu0
      %v3188 = vadd.f32 0.0, %v3187
      %v3189 = vpop.f32.mrb[0].mxu0
      %v3190 = vpop.f32.mrb[0].mxu0
      %v3191 = vadd.f32 0.0, %v3190
      %v3192 = vpop.f32.mrb[0].mxu0
      %3193 = vmatprep.mubr.bf16.mxu0 0
      %3194 = vmatmul.mubr.bf16.gmra.mrb[0].mxu0 %v3061
      %v3195 = vpop.f32.mrb[0].mxu0
      %v3196 = vadd.f32 0.0, %v3195
      %v3197 = vpop.f32.mrb[0].mxu0
      %v3198 = vpop.f32.mrb[0].mxu0
      %v3199 = vadd.f32 0.0, %v3198
      %v3200 = vpop.f32.mrb[0].mxu0
      %3201 = vmatprep.mubr.bf16.mxu0 0
      %3202 = vmatmul.mubr.bf16.gmra.mrb[0].mxu0 %v3064
      %v3203 = vpop.f32.mrb[0].mxu0
      %v3204 = vadd.f32 0.0, %v3203
      %v3205 = vpop.f32.mrb[0].mxu0
      %v3206 = vpop.f32.mrb[0].mxu0
      %v3207 = vadd.f32 0.0, %v3206
      %v3208 = vpop.f32.mrb[0].mxu0
      %3209 = vmatprep.mubr.bf16.mxu0 0
      %3210 = vmatmul.mubr.bf16.gmra.mrb[0].mxu0 %v3067
      %v3211 = vpop.f32.mrb[0].mxu0
      %v3212 = vadd.f32 0.0, %v3211
      %v3213 = vpop.f32.mrb[0].mxu0
      %v3214 = vpop.f32.mrb[0].mxu0
      %v3215 = vadd.f32 0.0, %v3214
      %v3216 = vpop.f32.mrb[0].mxu0
      %3217 = vmatprep.mubr.bf16.mxu0 0
      %3218 = vmatmul.mubr.bf16.gmra.mrb[0].mxu0 %v3070
      %v3219 = vpop.f32.mrb[0].mxu0
      %v3220 = vadd.f32 0.0, %v3219
      %v3221 = vpop.f32.mrb[0].mxu0
      %v3222 = vpop.f32.mrb[0].mxu0
      %v3223 = vadd.f32 0.0, %v3222
      %v3224 = vpop.f32.mrb[0].mxu0
      %3225 = vmatprep.mubr.bf16.mxu0 0
      %3226 = vmatmul.mubr.bf16.gmra.mrb[0].mxu0 %v3073
      %v3227 = vpop.f32.mrb[0].mxu0
      %v3228 = vadd.f32 0.0, %v3227
      %v3229 = vpop.f32.mrb[0].mxu0
      %v3230 = vpop.f32.mrb[0].mxu0
      %v3231 = vadd.f32 0.0, %v3230
      %v3232 = vpop.f32.mrb[0].mxu0
      %3233 = vmatprep.mubr.bf16.mxu0 0
      %3234 = vmatmul.mubr.bf16.gmra.mrb[0].mxu0 %v3076
      %v3235 = vpop.f32.mrb[0].mxu0
      %v3236 = vadd.f32 0.0, %v3235
      %v3237 = vpop.f32.mrb[0].mxu0
      %v3238 = vpop.f32.mrb[0].mxu0
      %v3239 = vadd.f32 0.0, %v3238
      %v3240 = vpop.f32.mrb[0].mxu0
      %3241 = vdwg.mxu0
      %v3242 = vadd.f32 %v2948, %v3116
      %v3243 = vadd.f32 %v2949, %v3119
      %v3244 = vadd.f32 %v2950, %v3124
      %v3245 = vadd.f32 %v2951, %v3127
      %v3246 = vadd.f32 %v2952, %v3132
      %v3247 = vadd.f32 %v2953, %v3135
      %v3248 = vadd.f32 %v2954, %v3140
      %v3249 = vadd.f32 %v2955, %v3143
      %v3250 = vadd.f32 %v2956, %v3148
      %v3251 = vadd.f32 %v2957, %v3151
      %v3252 = vadd.f32 %v2958, %v3156
      %v3253 = vadd.f32 %v2959, %v3159
      %v3254 = vadd.f32 %v2960, %v3164
      %v3255 = vadd.f32 %v2961, %v3167
      %v3256 = vadd.f32 %v2962, %v3172
      %v3257 = vadd.f32 %v2963, %v3175
      %v3258 = vadd.f32 %v2964, %v3180
      %v3259 = vadd.f32 %v2965, %v3183
      %v3260 = vadd.f32 %v2966, %v3188
      %v3261 = vadd.f32 %v2967, %v3191
      %v3262 = vadd.f32 %v2968, %v3196
      %v3263 = vadd.f32 %v2969, %v3199
      %v3264 = vadd.f32 %v2970, %v3204
      %v3265 = vadd.f32 %v2971, %v3207
      %v3266 = vadd.f32 %v2972, %v3212
      %v3267 = vadd.f32 %v2973, %v3215
      %v3268 = vadd.f32 %v2974, %v3220
      %v3269 = vadd.f32 %v2975, %v3223
      %v3270 = vadd.f32 %v2976, %v3228
      %v3271 = vadd.f32 %v2977, %v3231
      %v3272 = vadd.f32 %v2978, %v3236
      %v3273 = vadd.f32 %v2979, %v3239
      %v3274 = vpack.c.bf16 %v3243, %v3242
      %v3275 = vpack.c.bf16 %v3245, %v3244
      %v3276 = vpack.c.bf16 %v3247, %v3246
      %v3277 = vpack.c.bf16 %v3249, %v3248
      %v3278 = vpack.c.bf16 %v3251, %v3250
      %v3279 = vpack.c.bf16 %v3253, %v3252
      %v3280 = vpack.c.bf16 %v3255, %v3254
      %v3281 = vpack.c.bf16 %v3257, %v3256
      %v3282 = vpack.c.bf16 %v3259, %v3258
      %v3283 = vpack.c.bf16 %v3261, %v3260
      %v3284 = vpack.c.bf16 %v3263, %v3262
      %v3285 = vpack.c.bf16 %v3265, %v3264
      %v3286 = vpack.c.bf16 %v3267, %v3266
      %v3287 = vpack.c.bf16 %v3269, %v3268
      %v3288 = vpack.c.bf16 %v3271, %v3270
      %v3289 = vpack.c.bf16 %v3273, %v3272
      %v3306 = vunpack.c.l.b16 %v3274
      %v3307 = vunpack.c.h.b16 %v3274
      %v3308 = vunpack.c.l.b16 %v3275
      %v3309 = vunpack.c.h.b16 %v3275
      %v3310 = vunpack.c.l.b16 %v3276
      %v3311 = vunpack.c.h.b16 %v3276
      %v3312 = vunpack.c.l.b16 %v3277
      %v3313 = vunpack.c.h.b16 %v3277
      %v3314 = vunpack.c.l.b16 %v3278
      %v3315 = vunpack.c.h.b16 %v3278
      %v3316 = vunpack.c.l.b16 %v3279
      %v3317 = vunpack.c.h.b16 %v3279
      %v3318 = vunpack.c.l.b16 %v3280
      %v3319 = vunpack.c.h.b16 %v3280
      %v3320 = vunpack.c.l.b16 %v3281
      %v3321 = vunpack.c.h.b16 %v3281
      %v3322 = vunpack.c.l.b16 %v3282
      %v3323 = vunpack.c.h.b16 %v3282
      %v3324 = vunpack.c.l.b16 %v3283
      %v3325 = vunpack.c.h.b16 %v3283
      %v3326 = vunpack.c.l.b16 %v3284
      %v3327 = vunpack.c.h.b16 %v3284
      %v3328 = vunpack.c.l.b16 %v3285
      %v3329 = vunpack.c.h.b16 %v3285
      %v3330 = vunpack.c.l.b16 %v3286
      %v3331 = vunpack.c.h.b16 %v3286
      %v3332 = vunpack.c.l.b16 %v3287
      %v3333 = vunpack.c.h.b16 %v3287
      %v3334 = vunpack.c.l.b16 %v3288
      %v3335 = vunpack.c.h.b16 %v3288
      %v3336 = vunpack.c.l.b16 %v3289
      %v3337 = vunpack.c.h.b16 %v3289
      %v3338 = vpack.c.b16 %v3306, %v3306
      %v3339 = vpack.c.b16 %v3307, %v3307
      %v3340 = vpack.c.b16 %v3308, %v3308
      %v3341 = vpack.c.b16 %v3309, %v3309
      %v3342 = vpack.c.b16 %v3310, %v3310
      %v3343 = vpack.c.b16 %v3311, %v3311
      %v3344 = vpack.c.b16 %v3312, %v3312
      %v3345 = vpack.c.b16 %v3313, %v3313
      %v3346 = vpack.c.b16 %v3314, %v3314
      %v3347 = vpack.c.b16 %v3315, %v3315
      %v3348 = vpack.c.b16 %v3316, %v3316
      %v3349 = vpack.c.b16 %v3317, %v3317
      %v3350 = vpack.c.b16 %v3318, %v3318
      %v3351 = vpack.c.b16 %v3319, %v3319
      %v3352 = vpack.c.b16 %v3320, %v3320
      %v3353 = vpack.c.b16 %v3321, %v3321
      %v3354 = vpack.c.b16 %v3322, %v3322
      %v3355 = vpack.c.b16 %v3323, %v3323
      %v3356 = vpack.c.b16 %v3324, %v3324
      %v3357 = vpack.c.b16 %v3325, %v3325
      %v3358 = vpack.c.b16 %v3326, %v3326
      %v3359 = vpack.c.b16 %v3327, %v3327
      %v3360 = vpack.c.b16 %v3328, %v3328
      %v3361 = vpack.c.b16 %v3329, %v3329
      %v3362 = vpack.c.b16 %v3330, %v3330
      %v3363 = vpack.c.b16 %v3331, %v3331
      %v3364 = vpack.c.b16 %v3332, %v3332
      %v3365 = vpack.c.b16 %v3333, %v3333
      %v3366 = vpack.c.b16 %v3334, %v3334
      %v3367 = vpack.c.b16 %v3335, %v3335
      %v3368 = vpack.c.b16 %v3336, %v3336
      %v3369 = vpack.c.b16 %v3337, %v3337
      %3402 = vst.msk [vmem:[%s205] sm:$0xf] %vm2064, %v3338
      %3403 = vst.msk [vmem:[%s205 + $0x4] sm:$0xf] %vm2064, %v3339
      %3404 = vst.msk [vmem:[%s205 + $0x8] sm:$0xf] %vm2064, %v3340
      %3405 = vst.msk [vmem:[%s205 + $0xc] sm:$0xf] %vm2064, %v3341
      %3406 = vst.msk [vmem:[%s205 + $0x10] sm:$0xf] %vm2064, %v3342
      %3407 = vst.msk [vmem:[%s205 + $0x14] sm:$0xf] %vm2064, %v3343
      %3408 = vst.msk [vmem:[%s205 + $0x18] sm:$0xf] %vm2064, %v3344
      %3409 = vst.msk [vmem:[%s205 + $0x1c] sm:$0xf] %vm2064, %v3345
      %3410 = vst.msk [vmem:[%s205 + $0x20] sm:$0xf] %vm2064, %v3346
      %3411 = vst.msk [vmem:[%s205 + $0x24] sm:$0xf] %vm2064, %v3347
      %3412 = vst.msk [vmem:[%s205 + $0x28] sm:$0xf] %vm2064, %v3348
      %3413 = vst.msk [vmem:[%s205 + $0x2c] sm:$0xf] %vm2064, %v3349
      %3414 = vst.msk [vmem:[%s205 + $0x30] sm:$0xf] %vm2064, %v3350
      %3415 = vst.msk [vmem:[%s205 + $0x34] sm:$0xf] %vm2064, %v3351
      %3416 = vst.msk [vmem:[%s205 + $0x38] sm:$0xf] %vm2064, %v3352
      %3417 = vst.msk [vmem:[%s205 + $0x3c] sm:$0xf] %vm2064, %v3353
      %3418 = vst.msk [vmem:[%s205 + $0x40] sm:$0xf] %vm2064, %v3354
      %3419 = vst.msk [vmem:[%s205 + $0x44] sm:$0xf] %vm2064, %v3355
      %3420 = vst.msk [vmem:[%s205 + $0x48] sm:$0xf] %vm2064, %v3356
      %3421 = vst.msk [vmem:[%s205 + $0x4c] sm:$0xf] %vm2064, %v3357
      %3422 = vst.msk [vmem:[%s205 + $0x50] sm:$0xf] %vm2064, %v3358
      %3423 = vst.msk [vmem:[%s205 + $0x54] sm:$0xf] %vm2064, %v3359
      %3424 = vst.msk [vmem:[%s205 + $0x58] sm:$0xf] %vm2064, %v3360
      %3425 = vst.msk [vmem:[%s205 + $0x5c] sm:$0xf] %vm2064, %v3361
      %3426 = vst.msk [vmem:[%s205 + $0x60] sm:$0xf] %vm2064, %v3362
      %3427 = vst.msk [vmem:[%s205 + $0x64] sm:$0xf] %vm2064, %v3363
      %3428 = vst.msk [vmem:[%s205 + $0x68] sm:$0xf] %vm2064, %v3364
      %3429 = vst.msk [vmem:[%s205 + $0x6c] sm:$0xf] %vm2064, %v3365
      %3430 = vst.msk [vmem:[%s205 + $0x70] sm:$0xf] %vm2064, %v3366
      %3431 = vst.msk [vmem:[%s205 + $0x74] sm:$0xf] %vm2064, %v3367
      %3432 = vst.msk [vmem:[%s205 + $0x78] sm:$0xf] %vm2064, %v3368
      %3433 = vst.msk [vmem:[%s205 + $0x7c] sm:$0xf] %vm2064, %v3369
      %p3434 = scmp.lt.s32.totalorder %s16, 1
      %s3435 = scalar_select %p3434, %s16, 1
      %s3436 = smul.addr %s3435, 32
      %s3437 = smul.addr %s3436, 4
      %s3438 = scalar_lea.vmem %s3, %s3437
      %p3439 = scmp.lt.s32.totalorder %s16, 1
      %s3440 = scalar_select %p3439, %s16, 1
      %s3441 = smul.addr %s3440, 32
      %s3442 = smul.addr %s3441, 4
      %s3443 = scalar_lea.vmem %s4, %s3442
      // Predicated region
      $region33: #{basic_block_forward.5} parent=31 // pred_check
        %p3444 = pneg %p102
      $region34: #{basic_block_forward.5} parent=31 // pred_check_branch
        %3446 = sbr.rel (%p3444) target = $region36
      $region35: #{basic_block_forward.5} parent=31 // pred_region
        _
      $region36: #{basic_block_forward.5} parent=31 // pred_fallthru
        _
      // Predicated region
      $region37: #{basic_block_forward.5} parent=31 // pred_check
        %p3447 = pneg %p128
      $region38: #{basic_block_forward.5} parent=31 // pred_check_branch
        %3449 = sbr.rel (%p3447) target = $region40
      $region39: #{basic_block_forward.5} parent=31 // pred_region
        _
      $region40: #{basic_block_forward.5} parent=31 // pred_fallthru
        _
    $region32: #{basic_block_forward.5} parent=5 // pred_fallthru
      _
    %p3450 = scmp.le.s32.totalorder 2, %s11
    // Predicated region
    $region41: #{basic_block_forward.5} parent=5 // pred_check
      %p3451 = pneg %p3450
    $region42: #{basic_block_forward.5} parent=5 // pred_check_branch
      %3453 = sbr.rel (%p3451) target = $region44
    $region43: #{basic_block_forward.5} parent=5 // pred_region
      %s3454 = ssub.s32 %s11, 2
      // Predicated region
      $region45: #{basic_block_forward.5} parent=43 // pred_check
        %p3455 = pneg %p108
      $region46: #{basic_block_forward.5} parent=43 // pred_check_branch
        %3457 = sbr.rel (%p3455) target = $region48
      $region47: #{basic_block_forward.5} parent=43 // pred_region
        %p3458 = scmp.lt.s32.totalorder %s17, 1
        %s3459 = scalar_select %p3458, %s17, 1
        %s3460 = smul.addr %s3459, 32
        %s3461 = smul.addr %s3460, 4
        %s3462 = scalar_lea.vmem %s3, %s3461
      $region48: #{basic_block_forward.5} parent=43 // pred_fallthru
        _
      // Predicated region
      $region49: #{basic_block_forward.5} parent=43 // pred_check
        %p3463 = pneg %p134
      $region50: #{basic_block_forward.5} parent=43 // pred_check_branch
        %3465 = sbr.rel (%p3463) target = $region52
      $region51: #{basic_block_forward.5} parent=43 // pred_region
        %p3466 = scmp.lt.s32.totalorder %s17, 1
        %s3467 = scalar_select %p3466, %s17, 1
        %s3468 = smul.addr %s3467, 32
        %s3469 = smul.addr %s3468, 4
        %s3470 = scalar_lea.vmem %s4, %s3469
      $region52: #{basic_block_forward.5} parent=43 // pred_fallthru
        _
    $region44: #{basic_block_forward.5} parent=5 // pred_fallthru
      _
  $region6: #{basic_block_forward.5} parent=0 // loop_footer
    %s15 = sadd.s32 1, %s11
  $region7: #{basic_block_forward.5} parent=0 // loop_footer_branch
    %10 = sbr.rel target = $region3
  $region8: #{basic_block_forward.5} parent=0 // loop_exit
    _

// kernel: basic_block_forward.7
$region0: #{basic_block_forward.7}
  #allocation0 [shape = 'u32[]', space=smem, size = 0x4, offset = 0x4, fixed_abs, tag = 'smem constant byte address 0x4 - core index']
  #allocation1 [shape = 'u32[144,128]{1,0:T(1,128)}', space=vmem, size = 0x12000, scoped, tag = 'internal scratch']
  #allocation2 [shape = 'f32[18,18,16]{2,1,0:T(8,128)}', space=vmem, size = 0x36000, scoped, tag = 'scratch operand']
  %s0 = inlined_call_operand.vmem [shape: bf16[2,16,16,16], index: 0, kind: input, shape index: {}]
  %s1 = inlined_call_operand.vmem [shape: bf16[9,16,16], index: 1, kind: input, shape index: {}]
  %s2 = inlined_call_operand.vmem [shape: bf16[2,256,16], index: 2, kind: output, shape index: {}]
  %s3 = sld [smem:[#allocation0]]
  $region41: #{basic_block_forward.7} parent=0
    _
  %s5 = ssub.s32 1, %s3
  %s6 = scalar_select 0, %s5, %s3
  loop: start=0, step=1, limit=4
  $region2: #{basic_block_forward.7} parent=0 // loop_pre_header
    _
  $region3: #{basic_block_forward.7} parent=0 // loop_header
    %s8 = sphi 0, %s12
    %p9 = scmp.ge.s32.totalorder %s8, 4
    %s18 = sphi 0, %s20
    %s21 = sphi 0, %s18
    %s22 = sphi 0, %s21
    %s38 = sphi 0, %s22
    %s42 = sphi 0, %s42
    %s44 = sphi 0, %s42
    %s45 = sphi 0, %s44
    %s59 = sphi 0, %s45
    %s65 = sphi 0, %s67
    %s68 = sphi 0, %s65
    %s69 = sphi 0, %s68
    %s85 = sphi 0, %s69
  $region4: #{basic_block_forward.7} parent=0 // loop_header_branch
    %11 = sbr.rel (%p9) target = $region8
  $region5: #{basic_block_forward.7} parent=0 // loop_body
    %s13 = ssub.s32 %s8, 1
    %s14 = ssub.s32 %s8, 2
    %s15 = sadd.s32 %s8, 1
    %s16 = ssub.s32 %s8, %s15
    %p17 = scmp.eq.s32.totalorder %s16, 0
    %s19 = sadd.s32 %s18, 1
    %s20 = scalar_select %p17, %s18, %s19
    %p23 = pneg %p17
    %p24 = scmp.eq.s32.totalorder %s8, 1
    %p25 = por %p23, %p24
    %p26 = scmp.ne.s32.totalorder %s18, %s21
    %p27 = scmp.eq.s32.totalorder %s8, 0
    %p28 = por %p26, %p27
    %p29 = scmp.ne.s32.totalorder %s18, %s21
    %p30 = scmp.eq.s32.totalorder %s13, 1
    %p31 = por %p29, %p30
    %p32 = scmp.ne.s32.totalorder %s21, %s22
    %p33 = scmp.eq.s32.totalorder %s13, 0
    %p34 = por %p32, %p33
    %p35 = scmp.ne.s32.totalorder %s21, %s22
    %p36 = scmp.eq.s32.totalorder %s14, 1
    %p37 = por %p35, %p36
    %p39 = scmp.ne.s32.totalorder %s22, %s38
    %p40 = scmp.eq.s32.totalorder %s14, 0
    %p41 = por %p39, %p40
    %s43 = sadd.s32 %s42, 1
    %p46 = scmp.eq.s32.totalorder %s8, 1
    %p47 = scmp.ne.s32.totalorder %s42, %s44
    %p48 = scmp.eq.s32.totalorder %s8, 0
    %p49 = por %p47, %p48
    %p50 = scmp.ne.s32.totalorder %s42, %s44
    %p51 = scmp.eq.s32.totalorder %s13, 1
    %p52 = por %p50, %p51
    %p53 = scmp.ne.s32.totalorder %s44, %s45
    %p54 = scmp.eq.s32.totalorder %s13, 0
    %p55 = por %p53, %p54
    %p56 = scmp.ne.s32.totalorder %s44, %s45
    %p57 = scmp.eq.s32.totalorder %s14, 1
    %p58 = por %p56, %p57
    %p60 = scmp.ne.s32.totalorder %s45, %s59
    %p61 = scmp.eq.s32.totalorder %s14, 0
    %p62 = por %p60, %p61
    %s63 = ssub.s32 %s8, %s15
    %p64 = scmp.eq.s32.totalorder %s63, 0
    %s66 = sadd.s32 %s65, 1
    %s67 = scalar_select %p64, %s65, %s66
    %p70 = pneg %p64
    %p71 = scmp.eq.s32.totalorder %s8, 1
    %p72 = por %p70, %p71
    %p73 = scmp.ne.s32.totalorder %s65, %s68
    %p74 = scmp.eq.s32.totalorder %s8, 0
    %p75 = por %p73, %p74
    %p76 = scmp.ne.s32.totalorder %s65, %s68
    %p77 = scmp.eq.s32.totalorder %s13, 1
    %p78 = por %p76, %p77
    %p79 = scmp.ne.s32.totalorder %s68, %s69
    %p80 = scmp.eq.s32.totalorder %s13, 0
    %p81 = por %p79, %p80
    %p82 = scmp.ne.s32.totalorder %s68, %s69
    %p83 = scmp.eq.s32.totalorder %s14, 1
    %p84 = por %p82, %p83
    %p86 = scmp.ne.s32.totalorder %s69, %s85
    %p87 = scmp.eq.s32.totalorder %s14, 0
    %p88 = por %p86, %p87
    %p89 = scmp.le.s32.totalorder 1, %s8
    %p90 = scmp.lt.s32.totalorder %s8, 3
    %p91 = pnand %p89, %p90
    %p92 = pneg %p91
    // Predicated region
    $region9: #{basic_block_forward.7} parent=5 // pred_check
      _
    $region10: #{basic_block_forward.7} parent=5 // pred_check_branch
      %94 = sbr.rel (%p91) target = $region12
    $region11: #{basic_block_forward.7} parent=5 // pred_region
      %s95 = ssub.s32 %s8, 1
      // Predicated region
      $region13: #{basic_block_forward.7} parent=11 // pred_check
        %p96 = pneg %p55
      $region14: #{basic_block_forward.7} parent=11 // pred_check_branch
        %98 = sbr.rel (%p96) target = $region16
      $region15: #{basic_block_forward.7} parent=11 // pred_region
        _
      $region16: #{basic_block_forward.7} parent=11 // pred_fallthru
        _
    $region12: #{basic_block_forward.7} parent=5 // pred_fallthru
      _
    %p99 = scmp.lt.s32.totalorder %s8, 2
    // Predicated region
    $region17: #{basic_block_forward.7} parent=5 // pred_check
      %p100 = pneg %p99
    $region18: #{basic_block_forward.7} parent=5 // pred_check_branch
      %102 = sbr.rel (%p100) target = $region20
    $region19: #{basic_block_forward.7} parent=5 // pred_region
      // Predicated region
      $region21: #{basic_block_forward.7} parent=19 // pred_check
        %p103 = pneg %p28
      $region22: #{basic_block_forward.7} parent=19 // pred_check_branch
        %105 = sbr.rel (%p103) target = $region24
      $region23: #{basic_block_forward.7} parent=19 // pred_region
        %p106 = scmp.lt.s32.totalorder %s8, 1
        %s107 = scalar_select %p106, %s8, 1
        %s108 = smul.addr %s107, 32
        %s109 = smul.addr %s108, 4
        %s110 = scalar_lea.vmem %s0, %s109
      $region24: #{basic_block_forward.7} parent=19 // pred_fallthru
        _
    $region20: #{basic_block_forward.7} parent=5 // pred_fallthru
      _
    %p111 = scmp.le.s32.totalorder 1, %s8
    %p112 = scmp.lt.s32.totalorder %s8, 3
    %p113 = pnand %p111, %p112
    %p114 = pneg %p113
    // Predicated region
    $region25: #{basic_block_forward.7} parent=5 // pred_check
      _
    $region26: #{basic_block_forward.7} parent=5 // pred_check_branch
      %116 = sbr.rel (%p113) target = $region28
    $region27: #{basic_block_forward.7} parent=5 // pred_region
      %s117 = ssub.s32 %s8, 1
      %p118 = scmp.lt.s32.totalorder %s13, 1
      %s119 = scalar_select %p118, %s13, 1
      %s120 = smul.addr %s119, 32
      %s121 = smul.addr %s120, 4
      %s122 = scalar_lea.vmem %s0, %s121
      %p123 = pneg %p34
      %p124 = pneg %p31
      %p125 = pneg %p55
      %p126 = pneg %p52
      %p127 = pneg %p81
      %p128 = pneg %p78
      %p129 = scmp.lt.s32.totalorder %s13, 1
      %s130 = scalar_select %p129, %s13, 1
      %s131 = smul.addr %s130, 32
      %s132 = smul.addr %s131, 4
      %s133 = scalar_lea.vmem %s2, %s132
      %p134 = scmp.lt.s32.totalorder %s13, 1
      %s135 = scalar_select %p134, %s13, 1
      %s136 = smul.addr %s135, 32
      %s137 = smul.addr %s136, 4
      %s138 = scalar_lea.vmem %s0, %s137
      %p139 = scmp.lt.s32.totalorder %s13, 1
      %s140 = scalar_select %p139, %s13, 1
      %s141 = smul.addr %s140, 32
      %s142 = smul.addr %s141, 4
      %s143 = scalar_lea.vmem %s2, %s142
      %vm145 = vcmask 130048
      %146 = vst.msk [vmem:[#allocation2] sm:$0xff] %vm145, 0.0
      %147 = vst.msk [vmem:[#allocation2 + $0x8] sm:$0xff] %vm145, 0.0
      %vm148 = vcmask 123904
      %149 = vst.msk [vmem:[#allocation2 + $0x10] sm:$0x3] %vm148, 0.0
      %150 = vst.msk [vmem:[#allocation2 + $0x18] sm:$0xff] %vm145, 0.0
      %151 = vst.msk [vmem:[#allocation2 + $0x20] sm:$0xff] %vm145, 0.0
      %152 = vst.msk [vmem:[#allocation2 + $0x28] sm:$0x3] %vm148, 0.0
      %153 = vst.msk [vmem:[#allocation2 + $0x30] sm:$0xff] %vm145, 0.0
      %154 = vst.msk [vmem:[#allocation2 + $0x38] sm:$0xff] %vm145, 0.0
      %155 = vst.msk [vmem:[#allocation2 + $0x40] sm:$0x3] %vm148, 0.0
      %156 = vst.msk [vmem:[#allocation2 + $0x48] sm:$0xff] %vm145, 0.0
      %157 = vst.msk [vmem:[#allocation2 + $0x50] sm:$0xff] %vm145, 0.0
      %158 = vst.msk [vmem:[#allocation2 + $0x58] sm:$0x3] %vm148, 0.0
      %159 = vst.msk [vmem:[#allocation2 + $0x60] sm:$0xff] %vm145, 0.0
      %160 = vst.msk [vmem:[#allocation2 + $0x68] sm:$0xff] %vm145, 0.0
      %161 = vst.msk [vmem:[#allocation2 + $0x70] sm:$0x3] %vm148, 0.0
      %162 = vst.msk [vmem:[#allocation2 + $0x78] sm:$0xff] %vm145, 0.0
      %163 = vst.msk [vmem:[#allocation2 + $0x80] sm:$0xff] %vm145, 0.0
      %164 = vst.msk [vmem:[#allocation2 + $0x88] sm:$0x3] %vm148, 0.0
      %165 = vst.msk [vmem:[#allocation2 + $0x90] sm:$0xff] %vm145, 0.0
      %166 = vst.msk [vmem:[#allocation2 + $0x98] sm:$0xff] %vm145, 0.0
      %167 = vst.msk [vmem:[#allocation2 + $0xa0] sm:$0x3] %vm148, 0.0
      %168 = vst.msk [vmem:[#allocation2 + $0xa8] sm:$0xff] %vm145, 0.0
      %169 = vst.msk [vmem:[#allocation2 + $0xb0] sm:$0xff] %vm145, 0.0
      %170 = vst.msk [vmem:[#allocation2 + $0xb8] sm:$0x3] %vm148, 0.0
      %171 = vst.msk [vmem:[#allocation2 + $0xc0] sm:$0xff] %vm145, 0.0
      %172 = vst.msk [vmem:[#allocation2 + $0xc8] sm:$0xff] %vm145, 0.0
      %173 = vst.msk [vmem:[#allocation2 + $0xd0] sm:$0x3] %vm148, 0.0
      %174 = vst.msk [vmem:[#allocation2 + $0xd8] sm:$0xff] %vm145, 0.0
      %175 = vst.msk [vmem:[#allocation2 + $0xe0] sm:$0xff] %vm145, 0.0
      %176 = vst.msk [vmem:[#allocation2 + $0xe8] sm:$0x3] %vm148, 0.0
      %177 = vst.msk [vmem:[#allocation2 + $0xf0] sm:$0xff] %vm145, 0.0
      %178 = vst.msk [vmem:[#allocation2 + $0xf8] sm:$0xff] %vm145, 0.0
      %179 = vst.msk [vmem:[#allocation2 + $0x100] sm:$0x3] %vm148, 0.0
      %180 = vst.msk [vmem:[#allocation2 + $0x108] sm:$0xff] %vm145, 0.0
      %181 = vst.msk [vmem:[#allocation2 + $0x110] sm:$0xff] %vm145, 0.0
      %182 = vst.msk [vmem:[#allocation2 + $0x118] sm:$0x3] %vm148, 0.0
      %183 = vst.msk [vmem:[#allocation2 + $0x120] sm:$0xff] %vm145, 0.0
      %184 = vst.msk [vmem:[#allocation2 + $0x128] sm:$0xff] %vm145, 0.0
      %185 = vst.msk [vmem:[#allocation2 + $0x130] sm:$0x3] %vm148, 0.0
      %186 = vst.msk [vmem:[#allocation2 + $0x138] sm:$0xff] %vm145, 0.0
      %187 = vst.msk [vmem:[#allocation2 + $0x140] sm:$0xff] %vm145, 0.0
      %188 = vst.msk [vmem:[#allocation2 + $0x148] sm:$0x3] %vm148, 0.0
      %189 = vst.msk [vmem:[#allocation2 + $0x150] sm:$0xff] %vm145, 0.0
      %190 = vst.msk [vmem:[#allocation2 + $0x158] sm:$0xff] %vm145, 0.0
      %191 = vst.msk [vmem:[#allocation2 + $0x160] sm:$0x3] %vm148, 0.0
      %192 = vst.msk [vmem:[#allocation2 + $0x168] sm:$0xff] %vm145, 0.0
      %193 = vst.msk [vmem:[#allocation2 + $0x170] sm:$0xff] %vm145, 0.0
      %194 = vst.msk [vmem:[#allocation2 + $0x178] sm:$0x3] %vm148, 0.0
      %195 = vst.msk [vmem:[#allocation2 + $0x180] sm:$0xff] %vm145, 0.0
      %196 = vst.msk [vmem:[#allocation2 + $0x188] sm:$0xff] %vm145, 0.0
      %197 = vst.msk [vmem:[#allocation2 + $0x190] sm:$0x3] %vm148, 0.0
      %198 = vst.msk [vmem:[#allocation2 + $0x198] sm:$0xff] %vm145, 0.0
      %199 = vst.msk [vmem:[#allocation2 + $0x1a0] sm:$0xff] %vm145, 0.0
      %200 = vst.msk [vmem:[#allocation2 + $0x1a8] sm:$0x3] %vm148, 0.0
      %v201 = vld [vmem:[%s138] sm:$0xf]
      %v202 = vld [vmem:[%s138 + $0x4] sm:$0xf]
      %v203 = vld [vmem:[%s138 + $0x8] sm:$0xf]
      %v204 = vld [vmem:[%s138 + $0xc] sm:$0xf]
      %v205 = vld [vmem:[%s138 + $0x10] sm:$0xf]
      %v206 = vld [vmem:[%s138 + $0x14] sm:$0xf]
      %v207 = vld [vmem:[%s138 + $0x18] sm:$0xf]
      %v208 = vld [vmem:[%s138 + $0x1c] sm:$0xf]
      %v209 = vld [vmem:[%s138 + $0x20] sm:$0xf]
      %v210 = vld [vmem:[%s138 + $0x24] sm:$0xf]
      %v211 = vld [vmem:[%s138 + $0x28] sm:$0xf]
      %v212 = vld [vmem:[%s138 + $0x2c] sm:$0xf]
      %v213 = vld [vmem:[%s138 + $0x30] sm:$0xf]
      %v214 = vld [vmem:[%s138 + $0x34] sm:$0xf]
      %v215 = vld [vmem:[%s138 + $0x38] sm:$0xf]
      %v216 = vld [vmem:[%s138 + $0x3c] sm:$0xf]
      %v217 = vld [vmem:[%s138 + $0x40] sm:$0xf]
      %v218 = vld [vmem:[%s138 + $0x44] sm:$0xf]
      %v219 = vld [vmem:[%s138 + $0x48] sm:$0xf]
      %v220 = vld [vmem:[%s138 + $0x4c] sm:$0xf]
      %v221 = vld [vmem:[%s138 + $0x50] sm:$0xf]
      %v222 = vld [vmem:[%s138 + $0x54] sm:$0xf]
      %v223 = vld [vmem:[%s138 + $0x58] sm:$0xf]
      %v224 = vld [vmem:[%s138 + $0x5c] sm:$0xf]
      %v225 = vld [vmem:[%s138 + $0x60] sm:$0xf]
      %v226 = vld [vmem:[%s138 + $0x64] sm:$0xf]
      %v227 = vld [vmem:[%s138 + $0x68] sm:$0xf]
      %v228 = vld [vmem:[%s138 + $0x6c] sm:$0xf]
      %v229 = vld [vmem:[%s138 + $0x70] sm:$0xf]
      %v230 = vld [vmem:[%s138 + $0x74] sm:$0xf]
      %v231 = vld [vmem:[%s138 + $0x78] sm:$0xf]
      %v232 = vld [vmem:[%s138 + $0x7c] sm:$0xf]
      %v233 = vunpack.c.l.bf16 %v201
      %v234 = vunpack.c.l.bf16 %v202
      %v235 = vunpack.c.l.bf16 %v203
      %v236 = vunpack.c.l.bf16 %v204
      %v237 = vunpack.c.l.bf16 %v205
      %v238 = vunpack.c.l.bf16 %v206
      %v239 = vunpack.c.l.bf16 %v207
      %v240 = vunpack.c.l.bf16 %v208
      %v241 = vunpack.c.l.bf16 %v209
      %v242 = vunpack.c.l.bf16 %v210
      %v243 = vunpack.c.l.bf16 %v211
      %v244 = vunpack.c.l.bf16 %v212
      %v245 = vunpack.c.l.bf16 %v213
      %v246 = vunpack.c.l.bf16 %v214
      %v247 = vunpack.c.l.bf16 %v215
      %v248 = vunpack.c.l.bf16 %v216
      %v249 = vunpack.c.l.bf16 %v217
      %v250 = vunpack.c.l.bf16 %v218
      %v251 = vunpack.c.l.bf16 %v219
      %v252 = vunpack.c.l.bf16 %v220
      %v253 = vunpack.c.l.bf16 %v221
      %v254 = vunpack.c.l.bf16 %v222
      %v255 = vunpack.c.l.bf16 %v223
      %v256 = vunpack.c.l.bf16 %v224
      %v257 = vunpack.c.l.bf16 %v225
      %v258 = vunpack.c.l.bf16 %v226
      %v259 = vunpack.c.l.bf16 %v227
      %v260 = vunpack.c.l.bf16 %v228
      %v261 = vunpack.c.l.bf16 %v229
      %v262 = vunpack.c.l.bf16 %v230
      %v263 = vunpack.c.l.bf16 %v231
      %v264 = vunpack.c.l.bf16 %v232
      %s265 = scalar_lea.vmem [#allocation2], 24
      %266 = vst.msk [vmem:[%s265 + $0x1] sm:$0xff] %vm145, %v233
      %267 = vst.msk [vmem:[%s265 + $0x9] sm:$0xff] %vm145, %v234
      %268 = vst.msk [vmem:[%s265 + $0x19] sm:$0xff] %vm145, %v235
      %269 = vst.msk [vmem:[%s265 + $0x21] sm:$0xff] %vm145, %v236
      %270 = vst.msk [vmem:[%s265 + $0x31] sm:$0xff] %vm145, %v237
      %271 = vst.msk [vmem:[%s265 + $0x39] sm:$0xff] %vm145, %v238
      %272 = vst.msk [vmem:[%s265 + $0x49] sm:$0xff] %vm145, %v239
      %273 = vst.msk [vmem:[%s265 + $0x51] sm:$0xff] %vm145, %v240
      %274 = vst.msk [vmem:[%s265 + $0x61] sm:$0xff] %vm145, %v241
      %275 = vst.msk [vmem:[%s265 + $0x69] sm:$0xff] %vm145, %v242
      %276 = vst.msk [vmem:[%s265 + $0x79] sm:$0xff] %vm145, %v243
      %277 = vst.msk [vmem:[%s265 + $0x81] sm:$0xff] %vm145, %v244
      %278 = vst.msk [vmem:[%s265 + $0x91] sm:$0xff] %vm145, %v245
      %279 = vst.msk [vmem:[%s265 + $0x99] sm:$0xff] %vm145, %v246
      %280 = vst.msk [vmem:[%s265 + $0xa9] sm:$0xff] %vm145, %v247
      %281 = vst.msk [vmem:[%s265 + $0xb1] sm:$0xff] %vm145, %v248
      %282 = vst.msk [vmem:[%s265 + $0xc1] sm:$0xff] %vm145, %v249
      %283 = vst.msk [vmem:[%s265 + $0xc9] sm:$0xff] %vm145, %v250
      %284 = vst.msk [vmem:[%s265 + $0xd9] sm:$0xff] %vm145, %v251
      %285 = vst.msk [vmem:[%s265 + $0xe1] sm:$0xff] %vm145, %v252
      %286 = vst.msk [vmem:[%s265 + $0xf1] sm:$0xff] %vm145, %v253
      %287 = vst.msk [vmem:[%s265 + $0xf9] sm:$0xff] %vm145, %v254
      %288 = vst.msk [vmem:[%s265 + $0x109] sm:$0xff] %vm145, %v255
      %289 = vst.msk [vmem:[%s265 + $0x111] sm:$0xff] %vm145, %v256
      %290 = vst.msk [vmem:[%s265 + $0x121] sm:$0xff] %vm145, %v257
      %291 = vst.msk [vmem:[%s265 + $0x129] sm:$0xff] %vm145, %v258
      %292 = vst.msk [vmem:[%s265 + $0x139] sm:$0xff] %vm145, %v259
      %293 = vst.msk [vmem:[%s265 + $0x141] sm:$0xff] %vm145, %v260
      %294 = vst.msk [vmem:[%s265 + $0x151] sm:$0xff] %vm145, %v261
      %295 = vst.msk [vmem:[%s265 + $0x159] sm:$0xff] %vm145, %v262
      %296 = vst.msk [vmem:[%s265 + $0x169] sm:$0xff] %vm145, %v263
      %297 = vst.msk [vmem:[%s265 + $0x171] sm:$0xff] %vm145, %v264
      %v298 = vld [vmem:[#allocation2] sm:$0xff]
      %v299 = vld [vmem:[#allocation2 + $0x8] sm:$0xff]
      %v300 = vld [vmem:[#allocation2 + $0x18] sm:$0xff]
      %v301 = vld [vmem:[#allocation2 + $0x20] sm:$0xff]
      %v302 = vld [vmem:[#allocation2 + $0x30] sm:$0xff]
      %v303 = vld [vmem:[#allocation2 + $0x38] sm:$0xff]
      %v304 = vld [vmem:[#allocation2 + $0x48] sm:$0xff]
      %v305 = vld [vmem:[#allocation2 + $0x50] sm:$0xff]
      %v306 = vld [vmem:[#allocation2 + $0x60] sm:$0xff]
      %v307 = vld [vmem:[#allocation2 + $0x68] sm:$0xff]
      %v308 = vld [vmem:[#allocation2 + $0x78] sm:$0xff]
      %v309 = vld [vmem:[#allocation2 + $0x80] sm:$0xff]
      %v310 = vld [vmem:[#allocation2 + $0x90] sm:$0xff]
      %v311 = vld [vmem:[#allocation2 + $0x98] sm:$0xff]
      %v312 = vld [vmem:[#allocation2 + $0xa8] sm:$0xff]
      %v313 = vld [vmem:[#allocation2 + $0xb0] sm:$0xff]
      %v314 = vld [vmem:[#allocation2 + $0xc0] sm:$0xff]
      %v315 = vld [vmem:[#allocation2 + $0xc8] sm:$0xff]
      %v316 = vld [vmem:[#allocation2 + $0xd8] sm:$0xff]
      %v317 = vld [vmem:[#allocation2 + $0xe0] sm:$0xff]
      %v318 = vld [vmem:[#allocation2 + $0xf0] sm:$0xff]
      %v319 = vld [vmem:[#allocation2 + $0xf8] sm:$0xff]
      %v320 = vld [vmem:[#allocation2 + $0x108] sm:$0xff]
      %v321 = vld [vmem:[#allocation2 + $0x110] sm:$0xff]
      %v322 = vld [vmem:[#allocation2 + $0x120] sm:$0xff]
      %v323 = vld [vmem:[#allocation2 + $0x128] sm:$0xff]
      %v324 = vld [vmem:[#allocation2 + $0x138] sm:$0xff]
      %v325 = vld [vmem:[#allocation2 + $0x140] sm:$0xff]
      %v326 = vld [vmem:[#allocation2 + $0x150] sm:$0xff]
      %v327 = vld [vmem:[#allocation2 + $0x158] sm:$0xff]
      %v328 = vld [vmem:[#allocation2 + $0x168] sm:$0xff]
      %v329 = vld [vmem:[#allocation2 + $0x170] sm:$0xff]
      %v330 = vpack.c.bf16 %v299, %v298
      %v331 = vpack.c.bf16 %v301, %v300
      %v332 = vpack.c.bf16 %v303, %v302
      %v333 = vpack.c.bf16 %v305, %v304
      %v334 = vpack.c.bf16 %v307, %v306
      %v335 = vpack.c.bf16 %v309, %v308
      %v336 = vpack.c.bf16 %v311, %v310
      %v337 = vpack.c.bf16 %v313, %v312
      %v338 = vpack.c.bf16 %v315, %v314
      %v339 = vpack.c.bf16 %v317, %v316
      %v340 = vpack.c.bf16 %v319, %v318
      %v341 = vpack.c.bf16 %v321, %v320
      %v342 = vpack.c.bf16 %v323, %v322
      %v343 = vpack.c.bf16 %v325, %v324
      %v344 = vpack.c.bf16 %v327, %v326
      %v345 = vpack.c.bf16 %v329, %v328
      %v346 = vld [vmem:[%s1] sm:$0xf]
      %v347 = vld [vmem:[%s1 + $0x4] sm:$0xf]
      %v348 = vld [vmem:[#allocation2 + $0x1] sm:$0xff]
      %v349 = vld [vmem:[#allocation2 + $0x9] sm:$0xff]
      %v350 = vld [vmem:[#allocation2 + $0x19] sm:$0xff]
      %v351 = vld [vmem:[#allocation2 + $0x21] sm:$0xff]
      %v352 = vld [vmem:[#allocation2 + $0x31] sm:$0xff]
      %v353 = vld [vmem:[#allocation2 + $0x39] sm:$0xff]
      %v354 = vld [vmem:[#allocation2 + $0x49] sm:$0xff]
      %v355 = vld [vmem:[#allocation2 + $0x51] sm:$0xff]
      %v356 = vld [vmem:[#allocation2 + $0x61] sm:$0xff]
      %v357 = vld [vmem:[#allocation2 + $0x69] sm:$0xff]
      %v358 = vld [vmem:[#allocation2 + $0x79] sm:$0xff]
      %v359 = vld [vmem:[#allocation2 + $0x81] sm:$0xff]
      %v360 = vld [vmem:[#allocation2 + $0x91] sm:$0xff]
      %v361 = vld [vmem:[#allocation2 + $0x99] sm:$0xff]
      %v362 = vld [vmem:[#allocation2 + $0xa9] sm:$0xff]
      %v363 = vld [vmem:[#allocation2 + $0xb1] sm:$0xff]
      %v364 = vld [vmem:[#allocation2 + $0xc1] sm:$0xff]
      %v365 = vld [vmem:[#allocation2 + $0xc9] sm:$0xff]
      %v366 = vld [vmem:[#allocation2 + $0xd9] sm:$0xff]
      %v367 = vld [vmem:[#allocation2 + $0xe1] sm:$0xff]
      %v368 = vld [vmem:[#allocation2 + $0xf1] sm:$0xff]
      %v369 = vld [vmem:[#allocation2 + $0xf9] sm:$0xff]
      %v370 = vld [vmem:[#allocation2 + $0x109] sm:$0xff]
      %v371 = vld [vmem:[#allocation2 + $0x111] sm:$0xff]
      %v372 = vld [vmem:[#allocation2 + $0x121] sm:$0xff]
      %v373 = vld [vmem:[#allocation2 + $0x129] sm:$0xff]
      %v374 = vld [vmem:[#allocation2 + $0x139] sm:$0xff]
      %v375 = vld [vmem:[#allocation2 + $0x141] sm:$0xff]
      %v376 = vld [vmem:[#allocation2 + $0x151] sm:$0xff]
      %v377 = vld [vmem:[#allocation2 + $0x159] sm:$0xff]
      %v378 = vld [vmem:[#allocation2 + $0x169] sm:$0xff]
      %v379 = vld [vmem:[#allocation2 + $0x171] sm:$0xff]
      %v380 = vpack.c.bf16 %v349, %v348
      %v381 = vpack.c.bf16 %v351, %v350
      %v382 = vpack.c.bf16 %v353, %v352
      %v383 = vpack.c.bf16 %v355, %v354
      %v384 = vpack.c.bf16 %v357, %v356
      %v385 = vpack.c.bf16 %v359, %v358
      %v386 = vpack.c.bf16 %v361, %v360
      %v387 = vpack.c.bf16 %v363, %v362
      %v388 = vpack.c.bf16 %v365, %v364
      %v389 = vpack.c.bf16 %v367, %v366
      %v390 = vpack.c.bf16 %v369, %v368
      %v391 = vpack.c.bf16 %v371, %v370
      %v392 = vpack.c.bf16 %v373, %v372
      %v393 = vpack.c.bf16 %v375, %v374
      %v394 = vpack.c.bf16 %v377, %v376
      %v395 = vpack.c.bf16 %v379, %v378
      %s396 = scalar_lea.vmem %s1, 8
      %v397 = vld [vmem:[%s396] sm:$0xf]
      %v398 = vld [vmem:[%s396 + $0x4] sm:$0xf]
      %v401 = vunpack.c.l.b16 %v397
      %v402 = vunpack.c.l.b16 %v398
      %v403 = vpack.c.b16 %v402, %v401
      %v406 = vsel %vm145, %v380, 0
      %v409 = vsel %vm145, %v381, 0
      %v412 = vsel %vm145, %v382, 0
      %v415 = vsel %vm145, %v383, 0
      %v418 = vsel %vm145, %v384, 0
      %v421 = vsel %vm145, %v385, 0
      %v424 = vsel %vm145, %v386, 0
      %v427 = vsel %vm145, %v387, 0
      %v430 = vsel %vm145, %v388, 0
      %v433 = vsel %vm145, %v389, 0
      %v436 = vsel %vm145, %v390, 0
      %v439 = vsel %vm145, %v391, 0
      %v442 = vsel %vm145, %v392, 0
      %v445 = vsel %vm145, %v393, 0
      %v448 = vsel %vm145, %v394, 0
      %v451 = vsel %vm145, %v395, 0
      %453 = vmatprep.subr.bf16.mxu0 0
      %454 = vmatpush1.bf16.msra.mxu0 %v403
      %455 = vmatprep.subr.bf16.mxu0 0
      %456 = vmatpush1.bf16.msra.mxu0 0
      %457 = vmatprep.subr.bf16.mxu0 0
      %458 = vmatpush1.bf16.msra.mxu0 0
      %459 = vmatprep.subr.bf16.mxu0 0
      %460 = vmatpush1.bf16.msra.mxu0 0
      %461 = vmatprep.subr.bf16.mxu0 0
      %462 = vmatpush1.bf16.msra.mxu0 0
      %463 = vmatprep.subr.bf16.mxu0 0
      %464 = vmatpush1.bf16.msra.mxu0 0
      %465 = vmatprep.subr.bf16.mxu0 0
      %466 = vmatpush1.bf16.msra.mxu0 0
      %467 = vmatprep.subr.bf16.mxu0 0
      %468 = vmatpush1.bf16.msra.mxu0 0
      %469 = vmatprep.subr.bf16.mxu0 0
      %470 = vmatpush1.bf16.msra.mxu0 0
      %471 = vmatprep.subr.bf16.mxu0 0
      %472 = vmatpush1.bf16.msra.mxu0 0
      %473 = vmatprep.subr.bf16.mxu0 0
      %474 = vmatpush1.bf16.msra.mxu0 0
      %475 = vmatprep.subr.bf16.mxu0 0
      %476 = vmatpush1.bf16.msra.mxu0 0
      %477 = vmatprep.subr.bf16.mxu0 0
      %478 = vmatpush1.bf16.msra.mxu0 0
      %479 = vmatprep.subr.bf16.mxu0 0
      %480 = vmatpush1.bf16.msra.mxu0 0
      %481 = vmatprep.subr.bf16.mxu0 0
      %482 = vmatpush1.bf16.msra.mxu0 0
      %483 = vmatprep.subr.bf16.mxu0 0
      %484 = vmatpush1.bf16.msra.mxu0 0
      %485 = vmatprep.mubr.bf16.mxu0 0
      %486 = vmatmul.mubr.bf16.gmra.mrb[0].mxu0 %v406
      %v487 = vpop.f32.mrb[0].mxu0
      %v488 = vadd.f32 0.0, %v487
      %v489 = vpop.f32.mrb[0].mxu0
      %v490 = vpop.f32.mrb[0].mxu0
      %v491 = vadd.f32 0.0, %v490
      %v492 = vpop.f32.mrb[0].mxu0
      %493 = vmatprep.mubr.bf16.mxu0 0
      %494 = vmatmul.mubr.bf16.gmra.mrb[0].mxu0 %v409
      %v495 = vpop.f32.mrb[0].mxu0
      %v496 = vadd.f32 0.0, %v495
      %v497 = vpop.f32.mrb[0].mxu0
      %v498 = vpop.f32.mrb[0].mxu0
      %v499 = vadd.f32 0.0, %v498
      %v500 = vpop.f32.mrb[0].mxu0
      %501 = vmatprep.mubr.bf16.mxu0 0
      %502 = vmatmul.mubr.bf16.gmra.mrb[0].mxu0 %v412
      %v503 = vpop.f32.mrb[0].mxu0
      %v504 = vadd.f32 0.0, %v503
      %v505 = vpop.f32.mrb[0].mxu0
      %v506 = vpop.f32.mrb[0].mxu0
      %v507 = vadd.f32 0.0, %v506
      %v508 = vpop.f32.mrb[0].mxu0
      %509 = vmatprep.mubr.bf16.mxu0 0
      %510 = vmatmul.mubr.bf16.gmra.mrb[0].mxu0 %v415
      %v511 = vpop.f32.mrb[0].mxu0
      %v512 = vadd.f32 0.0, %v511
      %v513 = vpop.f32.mrb[0].mxu0
      %v514 = vpop.f32.mrb[0].mxu0
      %v515 = vadd.f32 0.0, %v514
      %v516 = vpop.f32.mrb[0].mxu0
      %517 = vmatprep.mubr.bf16.mxu0 0
      %518 = vmatmul.mubr.bf16.gmra.mrb[0].mxu0 %v418
      %v519 = vpop.f32.mrb[0].mxu0
      %v520 = vadd.f32 0.0, %v519
      %v521 = vpop.f32.mrb[0].mxu0
      %v522 = vpop.f32.mrb[0].mxu0
      %v523 = vadd.f32 0.0, %v522
      %v524 = vpop.f32.mrb[0].mxu0
      %525 = vmatprep.mubr.bf16.mxu0 0
      %526 = vmatmul.mubr.bf16.gmra.mrb[0].mxu0 %v421
      %v527 = vpop.f32.mrb[0].mxu0
      %v528 = vadd.f32 0.0, %v527
      %v529 = vpop.f32.mrb[0].mxu0
      %v530 = vpop.f32.mrb[0].mxu0
      %v531 = vadd.f32 0.0, %v530
      %v532 = vpop.f32.mrb[0].mxu0
      %533 = vmatprep.mubr.bf16.mxu0 0
      %534 = vmatmul.mubr.bf16.gmra.mrb[0].mxu0 %v424
      %v535 = vpop.f32.mrb[0].mxu0
      %v536 = vadd.f32 0.0, %v535
      %v537 = vpop.f32.mrb[0].mxu0
      %v538 = vpop.f32.mrb[0].mxu0
      %v539 = vadd.f32 0.0, %v538
      %v540 = vpop.f32.mrb[0].mxu0
      %541 = vmatprep.mubr.bf16.mxu0 0
      %542 = vmatmul.mubr.bf16.gmra.mrb[0].mxu0 %v427
      %v543 = vpop.f32.mrb[0].mxu0
      %v544 = vadd.f32 0.0, %v543
      %v545 = vpop.f32.mrb[0].mxu0
      %v546 = vpop.f32.mrb[0].mxu0
      %v547 = vadd.f32 0.0, %v546
      %v548 = vpop.f32.mrb[0].mxu0
      %549 = vmatprep.mubr.bf16.mxu0 0
      %550 = vmatmul.mubr.bf16.gmra.mrb[0].mxu0 %v430
      %v551 = vpop.f32.mrb[0].mxu0
      %v552 = vadd.f32 0.0, %v551
      %v553 = vpop.f32.mrb[0].mxu0
      %v554 = vpop.f32.mrb[0].mxu0
      %v555 = vadd.f32 0.0, %v554
      %v556 = vpop.f32.mrb[0].mxu0
      %557 = vmatprep.mubr.bf16.mxu0 0
      %558 = vmatmul.mubr.bf16.gmra.mrb[0].mxu0 %v433
      %v559 = vpop.f32.mrb[0].mxu0
      %v560 = vadd.f32 0.0, %v559
      %v561 = vpop.f32.mrb[0].mxu0
      %v562 = vpop.f32.mrb[0].mxu0
      %v563 = vadd.f32 0.0, %v562
      %v564 = vpop.f32.mrb[0].mxu0
      %565 = vmatprep.mubr.bf16.mxu0 0
      %566 = vmatmul.mubr.bf16.gmra.mrb[0].mxu0 %v436
      %v567 = vpop.f32.mrb[0].mxu0
      %v568 = vadd.f32 0.0, %v567
      %v569 = vpop.f32.mrb[0].mxu0
      %v570 = vpop.f32.mrb[0].mxu0
      %v571 = vadd.f32 0.0, %v570
      %v572 = vpop.f32.mrb[0].mxu0
      %573 = vmatprep.mubr.bf16.mxu0 0
      %574 = vmatmul.mubr.bf16.gmra.mrb[0].mxu0 %v439
      %v575 = vpop.f32.mrb[0].mxu0
      %v576 = vadd.f32 0.0, %v575
      %v577 = vpop.f32.mrb[0].mxu0
      %v578 = vpop.f32.mrb[0].mxu0
      %v579 = vadd.f32 0.0, %v578
      %v580 = vpop.f32.mrb[0].mxu0
      %581 = vmatprep.mubr.bf16.mxu0 0
      %582 = vmatmul.mubr.bf16.gmra.mrb[0].mxu0 %v442
      %v583 = vpop.f32.mrb[0].mxu0
      %v584 = vadd.f32 0.0, %v583
      %v585 = vpop.f32.mrb[0].mxu0
      %v586 = vpop.f32.mrb[0].mxu0
      %v587 = vadd.f32 0.0, %v586
      %v588 = vpop.f32.mrb[0].mxu0
      %589 = vmatprep.mubr.bf16.mxu0 0
      %590 = vmatmul.mubr.bf16.gmra.mrb[0].mxu0 %v445
      %v591 = vpop.f32.mrb[0].mxu0
      %v592 = vadd.f32 0.0, %v591
      %v593 = vpop.f32.mrb[0].mxu0
      %v594 = vpop.f32.mrb[0].mxu0
      %v595 = vadd.f32 0.0, %v594
      %v596 = vpop.f32.mrb[0].mxu0
      %597 = vmatprep.mubr.bf16.mxu0 0
      %598 = vmatmul.mubr.bf16.gmra.mrb[0].mxu0 %v448
      %v599 = vpop.f32.mrb[0].mxu0
      %v600 = vadd.f32 0.0, %v599
      %v601 = vpop.f32.mrb[0].mxu0
      %v602 = vpop.f32.mrb[0].mxu0
      %v603 = vadd.f32 0.0, %v602
      %v604 = vpop.f32.mrb[0].mxu0
      %605 = vmatprep.mubr.bf16.mxu0 0
      %606 = vmatmul.mubr.bf16.gmra.mrb[0].mxu0 %v451
      %v607 = vpop.f32.mrb[0].mxu0
      %v608 = vadd.f32 0.0, %v607
      %v609 = vpop.f32.mrb[0].mxu0
      %v610 = vpop.f32.mrb[0].mxu0
      %v611 = vadd.f32 0.0, %v610
      %v612 = vpop.f32.mrb[0].mxu0
      %613 = vdwg.mxu0
      %v616 = vunpack.c.l.b16 %v346
      %v617 = vunpack.c.l.b16 %v347
      %v618 = vpack.c.b16 %v617, %v616
      %v621 = vsel %vm145, %v330, 0
      %v624 = vsel %vm145, %v331, 0
      %v627 = vsel %vm145, %v332, 0
      %v630 = vsel %vm145, %v333, 0
      %v633 = vsel %vm145, %v334, 0
      %v636 = vsel %vm145, %v335, 0
      %v639 = vsel %vm145, %v336, 0
      %v642 = vsel %vm145, %v337, 0
      %v645 = vsel %vm145, %v338, 0
      %v648 = vsel %vm145, %v339, 0
      %v651 = vsel %vm145, %v340, 0
      %v654 = vsel %vm145, %v341, 0
      %v657 = vsel %vm145, %v342, 0
      %v660 = vsel %vm145, %v343, 0
      %v663 = vsel %vm145, %v344, 0
      %v666 = vsel %vm145, %v345, 0
      %668 = vmatprep.subr.bf16.mxu0 0
      %669 = vmatpush1.bf16.msra.mxu0 %v618
      %670 = vmatprep.subr.bf16.mxu0 0
      %671 = vmatpush1.bf16.msra.mxu0 0
      %672 = vmatprep.subr.bf16.mxu0 0
      %673 = vmatpush1.bf16.msra.mxu0 0
      %674 = vmatprep.subr.bf16.mxu0 0
      %675 = vmatpush1.bf16.msra.mxu0 0
      %676 = vmatprep.subr.bf16.mxu0 0
      %677 = vmatpush1.bf16.msra.mxu0 0
      %678 = vmatprep.subr.bf16.mxu0 0
      %679 = vmatpush1.bf16.msra.mxu0 0
      %680 = vmatprep.subr.bf16.mxu0 0
      %681 = vmatpush1.bf16.msra.mxu0 0
      %682 = vmatprep.subr.bf16.mxu0 0
      %683 = vmatpush1.bf16.msra.mxu0 0
      %684 = vmatprep.subr.bf16.mxu0 0
      %685 = vmatpush1.bf16.msra.mxu0 0
      %686 = vmatprep.subr.bf16.mxu0 0
      %687 = vmatpush1.bf16.msra.mxu0 0
      %688 = vmatprep.subr.bf16.mxu0 0
      %689 = vmatpush1.bf16.msra.mxu0 0
      %690 = vmatprep.subr.bf16.mxu0 0
      %691 = vmatpush1.bf16.msra.mxu0 0
      %692 = vmatprep.subr.bf16.mxu0 0
      %693 = vmatpush1.bf16.msra.mxu0 0
      %694 = vmatprep.subr.bf16.mxu0 0
      %695 = vmatpush1.bf16.msra.mxu0 0
      %696 = vmatprep.subr.bf16.mxu0 0
      %697 = vmatpush1.bf16.msra.mxu0 0
      %698 = vmatprep.subr.bf16.mxu0 0
      %699 = vmatpush1.bf16.msra.mxu0 0
      %700 = vmatprep.mubr.bf16.mxu0 0
      %701 = vmatmul.mubr.bf16.gmra.mrb[0].mxu0 %v621
      %v702 = vpop.f32.mrb[0].mxu0
      %v703 = vadd.f32 %v488, %v702
      %v704 = vpop.f32.mrb[0].mxu0
      %v705 = vpop.f32.mrb[0].mxu0
      %v706 = vadd.f32 %v491, %v705
      %v707 = vpop.f32.mrb[0].mxu0
      %708 = vmatprep.mubr.bf16.mxu0 0
      %709 = vmatmul.mubr.bf16.gmra.mrb[0].mxu0 %v624
      %v710 = vpop.f32.mrb[0].mxu0
      %v711 = vadd.f32 %v496, %v710
      %v712 = vpop.f32.mrb[0].mxu0
      %v713 = vpop.f32.mrb[0].mxu0
      %v714 = vadd.f32 %v499, %v713
      %v715 = vpop.f32.mrb[0].mxu0
      %716 = vmatprep.mubr.bf16.mxu0 0
      %717 = vmatmul.mubr.bf16.gmra.mrb[0].mxu0 %v627
      %v718 = vpop.f32.mrb[0].mxu0
      %v719 = vadd.f32 %v504, %v718
      %v720 = vpop.f32.mrb[0].mxu0
      %v721 = vpop.f32.mrb[0].mxu0
      %v722 = vadd.f32 %v507, %v721
      %v723 = vpop.f32.mrb[0].mxu0
      %724 = vmatprep.mubr.bf16.mxu0 0
      %725 = vmatmul.mubr.bf16.gmra.mrb[0].mxu0 %v630
      %v726 = vpop.f32.mrb[0].mxu0
      %v727 = vadd.f32 %v512, %v726
      %v728 = vpop.f32.mrb[0].mxu0
      %v729 = vpop.f32.mrb[0].mxu0
      %v730 = vadd.f32 %v515, %v729
      %v731 = vpop.f32.mrb[0].mxu0
      %732 = vmatprep.mubr.bf16.mxu0 0
      %733 = vmatmul.mubr.bf16.gmra.mrb[0].mxu0 %v633
      %v734 = vpop.f32.mrb[0].mxu0
      %v735 = vadd.f32 %v520, %v734
      %v736 = vpop.f32.mrb[0].mxu0
      %v737 = vpop.f32.mrb[0].mxu0
      %v738 = vadd.f32 %v523, %v737
      %v739 = vpop.f32.mrb[0].mxu0
      %740 = vmatprep.mubr.bf16.mxu0 0
      %741 = vmatmul.mubr.bf16.gmra.mrb[0].mxu0 %v636
      %v742 = vpop.f32.mrb[0].mxu0
      %v743 = vadd.f32 %v528, %v742
      %v744 = vpop.f32.mrb[0].mxu0
      %v745 = vpop.f32.mrb[0].mxu0
      %v746 = vadd.f32 %v531, %v745
      %v747 = vpop.f32.mrb[0].mxu0
      %748 = vmatprep.mubr.bf16.mxu0 0
      %749 = vmatmul.mubr.bf16.gmra.mrb[0].mxu0 %v639
      %v750 = vpop.f32.mrb[0].mxu0
      %v751 = vadd.f32 %v536, %v750
      %v752 = vpop.f32.mrb[0].mxu0
      %v753 = vpop.f32.mrb[0].mxu0
      %v754 = vadd.f32 %v539, %v753
      %v755 = vpop.f32.mrb[0].mxu0
      %756 = vmatprep.mubr.bf16.mxu0 0
      %757 = vmatmul.mubr.bf16.gmra.mrb[0].mxu0 %v642
      %v758 = vpop.f32.mrb[0].mxu0
      %v759 = vadd.f32 %v544, %v758
      %v760 = vpop.f32.mrb[0].mxu0
      %v761 = vpop.f32.mrb[0].mxu0
      %v762 = vadd.f32 %v547, %v761
      %v763 = vpop.f32.mrb[0].mxu0
      %764 = vmatprep.mubr.bf16.mxu0 0
      %765 = vmatmul.mubr.bf16.gmra.mrb[0].mxu0 %v645
      %v766 = vpop.f32.mrb[0].mxu0
      %v767 = vadd.f32 %v552, %v766
      %v768 = vpop.f32.mrb[0].mxu0
      %v769 = vpop.f32.mrb[0].mxu0
      %v770 = vadd.f32 %v555, %v769
      %v771 = vpop.f32.mrb[0].mxu0
      %772 = vmatprep.mubr.bf16.mxu0 0
      %773 = vmatmul.mubr.bf16.gmra.mrb[0].mxu0 %v648
      %v774 = vpop.f32.mrb[0].mxu0
      %v775 = vadd.f32 %v560, %v774
      %v776 = vpop.f32.mrb[0].mxu0
      %v777 = vpop.f32.mrb[0].mxu0
      %v778 = vadd.f32 %v563, %v777
      %v779 = vpop.f32.mrb[0].mxu0
      %780 = vmatprep.mubr.bf16.mxu0 0
      %781 = vmatmul.mubr.bf16.gmra.mrb[0].mxu0 %v651
      %v782 = vpop.f32.mrb[0].mxu0
      %v783 = vadd.f32 %v568, %v782
      %v784 = vpop.f32.mrb[0].mxu0
      %v785 = vpop.f32.mrb[0].mxu0
      %v786 = vadd.f32 %v571, %v785
      %v787 = vpop.f32.mrb[0].mxu0
      %788 = vmatprep.mubr.bf16.mxu0 0
      %789 = vmatmul.mubr.bf16.gmra.mrb[0].mxu0 %v654
      %v790 = vpop.f32.mrb[0].mxu0
      %v791 = vadd.f32 %v576, %v790
      %v792 = vpop.f32.mrb[0].mxu0
      %v793 = vpop.f32.mrb[0].mxu0
      %v794 = vadd.f32 %v579, %v793
      %v795 = vpop.f32.mrb[0].mxu0
      %796 = vmatprep.mubr.bf16.mxu0 0
      %797 = vmatmul.mubr.bf16.gmra.mrb[0].mxu0 %v657
      %v798 = vpop.f32.mrb[0].mxu0
      %v799 = vadd.f32 %v584, %v798
      %v800 = vpop.f32.mrb[0].mxu0
      %v801 = vpop.f32.mrb[0].mxu0
      %v802 = vadd.f32 %v587, %v801
      %v803 = vpop.f32.mrb[0].mxu0
      %804 = vmatprep.mubr.bf16.mxu0 0
      %805 = vmatmul.mubr.bf16.gmra.mrb[0].mxu0 %v660
      %v806 = vpop.f32.mrb[0].mxu0
      %v807 = vadd.f32 %v592, %v806
      %v808 = vpop.f32.mrb[0].mxu0
      %v809 = vpop.f32.mrb[0].mxu0
      %v810 = vadd.f32 %v595, %v809
      %v811 = vpop.f32.mrb[0].mxu0
      %812 = vmatprep.mubr.bf16.mxu0 0
      %813 = vmatmul.mubr.bf16.gmra.mrb[0].mxu0 %v663
      %v814 = vpop.f32.mrb[0].mxu0
      %v815 = vadd.f32 %v600, %v814
      %v816 = vpop.f32.mrb[0].mxu0
      %v817 = vpop.f32.mrb[0].mxu0
      %v818 = vadd.f32 %v603, %v817
      %v819 = vpop.f32.mrb[0].mxu0
      %820 = vmatprep.mubr.bf16.mxu0 0
      %821 = vmatmul.mubr.bf16.gmra.mrb[0].mxu0 %v666
      %v822 = vpop.f32.mrb[0].mxu0
      %v823 = vadd.f32 %v608, %v822
      %v824 = vpop.f32.mrb[0].mxu0
      %v825 = vpop.f32.mrb[0].mxu0
      %v826 = vadd.f32 %v611, %v825
      %v827 = vpop.f32.mrb[0].mxu0
      %828 = vdwg.mxu0
      %v829 = vld [vmem:[#allocation2 + $0x2] sm:$0xff]
      %v830 = vld [vmem:[#allocation2 + $0xa] sm:$0xff]
      %v831 = vld [vmem:[#allocation2 + $0x1a] sm:$0xff]
      %v832 = vld [vmem:[#allocation2 + $0x22] sm:$0xff]
      %v833 = vld [vmem:[#allocation2 + $0x32] sm:$0xff]
      %v834 = vld [vmem:[#allocation2 + $0x3a] sm:$0xff]
      %v835 = vld [vmem:[#allocation2 + $0x4a] sm:$0xff]
      %v836 = vld [vmem:[#allocation2 + $0x52] sm:$0xff]
      %v837 = vld [vmem:[#allocation2 + $0x62] sm:$0xff]
      %v838 = vld [vmem:[#allocation2 + $0x6a] sm:$0xff]
      %v839 = vld [vmem:[#allocation2 + $0x7a] sm:$0xff]
      %v840 = vld [vmem:[#allocation2 + $0x82] sm:$0xff]
      %v841 = vld [vmem:[#allocation2 + $0x92] sm:$0xff]
      %v842 = vld [vmem:[#allocation2 + $0x9a] sm:$0xff]
      %v843 = vld [vmem:[#allocation2 + $0xaa] sm:$0xff]
      %v844 = vld [vmem:[#allocation2 + $0xb2] sm:$0xff]
      %v845 = vld [vmem:[#allocation2 + $0xc2] sm:$0xff]
      %v846 = vld [vmem:[#allocation2 + $0xca] sm:$0xff]
      %v847 = vld [vmem:[#allocation2 + $0xda] sm:$0xff]
      %v848 = vld [vmem:[#allocation2 + $0xe2] sm:$0xff]
      %v849 = vld [vmem:[#allocation2 + $0xf2] sm:$0xff]
      %v850 = vld [vmem:[#allocation2 + $0xfa] sm:$0xff]
      %v851 = vld [vmem:[#allocation2 + $0x10a] sm:$0xff]
      %v852 = vld [vmem:[#allocation2 + $0x112] sm:$0xff]
      %v853 = vld [vmem:[#allocation2 + $0x122] sm:$0xff]
      %v854 = vld [vmem:[#allocation2 + $0x12a] sm:$0xff]
      %v855 = vld [vmem:[#allocation2 + $0x13a] sm:$0xff]
      %v856 = vld [vmem:[#allocation2 + $0x142] sm:$0xff]
      %v857 = vld [vmem:[#allocation2 + $0x152] sm:$0xff]
      %v858 = vld [vmem:[#allocation2 + $0x15a] sm:$0xff]
      %v859 = vld [vmem:[#allocation2 + $0x16a] sm:$0xff]
      %v860 = vld [vmem:[#allocation2 + $0x172] sm:$0xff]
      %v861 = vpack.c.bf16 %v830, %v829
      %v862 = vpack.c.bf16 %v832, %v831
      %v863 = vpack.c.bf16 %v834, %v833
      %v864 = vpack.c.bf16 %v836, %v835
      %v865 = vpack.c.bf16 %v838, %v837
      %v866 = vpack.c.bf16 %v840, %v839
      %v867 = vpack.c.bf16 %v842, %v841
      %v868 = vpack.c.bf16 %v844, %v843
      %v869 = vpack.c.bf16 %v846, %v845
      %v870 = vpack.c.bf16 %v848, %v847
      %v871 = vpack.c.bf16 %v850, %v849
      %v872 = vpack.c.bf16 %v852, %v851
      %v873 = vpack.c.bf16 %v854, %v853
      %v874 = vpack.c.bf16 %v856, %v855
      %v875 = vpack.c.bf16 %v858, %v857
      %v876 = vpack.c.bf16 %v860, %v859
      %s877 = scalar_lea.vmem %s1, 16
      %v878 = vld [vmem:[%s877] sm:$0xf]
      %v879 = vld [vmem:[%s877 + $0x4] sm:$0xf]
      %v882 = vunpack.c.l.b16 %v878
      %v883 = vunpack.c.l.b16 %v879
      %v884 = vpack.c.b16 %v883, %v882
      %v887 = vsel %vm145, %v861, 0
      %v890 = vsel %vm145, %v862, 0
      %v893 = vsel %vm145, %v863, 0
      %v896 = vsel %vm145, %v864, 0
      %v899 = vsel %vm145, %v865, 0
      %v902 = vsel %vm145, %v866, 0
      %v905 = vsel %vm145, %v867, 0
      %v908 = vsel %vm145, %v868, 0
      %v911 = vsel %vm145, %v869, 0
      %v914 = vsel %vm145, %v870, 0
      %v917 = vsel %vm145, %v871, 0
      %v920 = vsel %vm145, %v872, 0
      %v923 = vsel %vm145, %v873, 0
      %v926 = vsel %vm145, %v874, 0
      %v929 = vsel %vm145, %v875, 0
      %v932 = vsel %vm145, %v876, 0
      %934 = vmatprep.subr.bf16.mxu0 0
      %935 = vmatpush1.bf16.msra.mxu0 %v884
      %936 = vmatprep.subr.bf16.mxu0 0
      %937 = vmatpush1.bf16.msra.mxu0 0
      %938 = vmatprep.subr.bf16.mxu0 0
      %939 = vmatpush1.bf16.msra.mxu0 0
      %940 = vmatprep.subr.bf16.mxu0 0
      %941 = vmatpush1.bf16.msra.mxu0 0
      %942 = vmatprep.subr.bf16.mxu0 0
      %943 = vmatpush1.bf16.msra.mxu0 0
      %944 = vmatprep.subr.bf16.mxu0 0
      %945 = vmatpush1.bf16.msra.mxu0 0
      %946 = vmatprep.subr.bf16.mxu0 0
      %947 = vmatpush1.bf16.msra.mxu0 0
      %948 = vmatprep.subr.bf16.mxu0 0
      %949 = vmatpush1.bf16.msra.mxu0 0
      %950 = vmatprep.subr.bf16.mxu0 0
      %951 = vmatpush1.bf16.msra.mxu0 0
      %952 = vmatprep.subr.bf16.mxu0 0
      %953 = vmatpush1.bf16.msra.mxu0 0
      %954 = vmatprep.subr.bf16.mxu0 0
      %955 = vmatpush1.bf16.msra.mxu0 0
      %956 = vmatprep.subr.bf16.mxu0 0
      %957 = vmatpush1.bf16.msra.mxu0 0
      %958 = vmatprep.subr.bf16.mxu0 0
      %959 = vmatpush1.bf16.msra.mxu0 0
      %960 = vmatprep.subr.bf16.mxu0 0
      %961 = vmatpush1.bf16.msra.mxu0 0
      %962 = vmatprep.subr.bf16.mxu0 0
      %963 = vmatpush1.bf16.msra.mxu0 0
      %964 = vmatprep.subr.bf16.mxu0 0
      %965 = vmatpush1.bf16.msra.mxu0 0
      %966 = vmatprep.mubr.bf16.mxu0 0
      %967 = vmatmul.mubr.bf16.gmra.mrb[0].mxu0 %v887
      %v968 = vpop.f32.mrb[0].mxu0
      %v969 = vadd.f32 0.0, %v968
      %v970 = vpop.f32.mrb[0].mxu0
      %v971 = vpop.f32.mrb[0].mxu0
      %v972 = vadd.f32 0.0, %v971
      %v973 = vpop.f32.mrb[0].mxu0
      %974 = vmatprep.mubr.bf16.mxu0 0
      %975 = vmatmul.mubr.bf16.gmra.mrb[0].mxu0 %v890
      %v976 = vpop.f32.mrb[0].mxu0
      %v977 = vadd.f32 0.0, %v976
      %v978 = vpop.f32.mrb[0].mxu0
      %v979 = vpop.f32.mrb[0].mxu0
      %v980 = vadd.f32 0.0, %v979
      %v981 = vpop.f32.mrb[0].mxu0
      %982 = vmatprep.mubr.bf16.mxu0 0
      %983 = vmatmul.mubr.bf16.gmra.mrb[0].mxu0 %v893
      %v984 = vpop.f32.mrb[0].mxu0
      %v985 = vadd.f32 0.0, %v984
      %v986 = vpop.f32.mrb[0].mxu0
      %v987 = vpop.f32.mrb[0].mxu0
      %v988 = vadd.f32 0.0, %v987
      %v989 = vpop.f32.mrb[0].mxu0
      %990 = vmatprep.mubr.bf16.mxu0 0
      %991 = vmatmul.mubr.bf16.gmra.mrb[0].mxu0 %v896
      %v992 = vpop.f32.mrb[0].mxu0
      %v993 = vadd.f32 0.0, %v992
      %v994 = vpop.f32.mrb[0].mxu0
      %v995 = vpop.f32.mrb[0].mxu0
      %v996 = vadd.f32 0.0, %v995
      %v997 = vpop.f32.mrb[0].mxu0
      %998 = vmatprep.mubr.bf16.mxu0 0
      %999 = vmatmul.mubr.bf16.gmra.mrb[0].mxu0 %v899
      %v1000 = vpop.f32.mrb[0].mxu0
      %v1001 = vadd.f32 0.0, %v1000
      %v1002 = vpop.f32.mrb[0].mxu0
      %v1003 = vpop.f32.mrb[0].mxu0
      %v1004 = vadd.f32 0.0, %v1003
      %v1005 = vpop.f32.mrb[0].mxu0
      %1006 = vmatprep.mubr.bf16.mxu0 0
      %1007 = vmatmul.mubr.bf16.gmra.mrb[0].mxu0 %v902
      %v1008 = vpop.f32.mrb[0].mxu0
      %v1009 = vadd.f32 0.0, %v1008
      %v1010 = vpop.f32.mrb[0].mxu0
      %v1011 = vpop.f32.mrb[0].mxu0
      %v1012 = vadd.f32 0.0, %v1011
      %v1013 = vpop.f32.mrb[0].mxu0
      %1014 = vmatprep.mubr.bf16.mxu0 0
      %1015 = vmatmul.mubr.bf16.gmra.mrb[0].mxu0 %v905
      %v1016 = vpop.f32.mrb[0].mxu0
      %v1017 = vadd.f32 0.0, %v1016
      %v1018 = vpop.f32.mrb[0].mxu0
      %v1019 = vpop.f32.mrb[0].mxu0
      %v1020 = vadd.f32 0.0, %v1019
      %v1021 = vpop.f32.mrb[0].mxu0
      %1022 = vmatprep.mubr.bf16.mxu0 0
      %1023 = vmatmul.mubr.bf16.gmra.mrb[0].mxu0 %v908
      %v1024 = vpop.f32.mrb[0].mxu0
      %v1025 = vadd.f32 0.0, %v1024
      %v1026 = vpop.f32.mrb[0].mxu0
      %v1027 = vpop.f32.mrb[0].mxu0
      %v1028 = vadd.f32 0.0, %v1027
      %v1029 = vpop.f32.mrb[0].mxu0
      %1030 = vmatprep.mubr.bf16.mxu0 0
      %1031 = vmatmul.mubr.bf16.gmra.mrb[0].mxu0 %v911
      %v1032 = vpop.f32.mrb[0].mxu0
      %v1033 = vadd.f32 0.0, %v1032
      %v1034 = vpop.f32.mrb[0].mxu0
      %v1035 = vpop.f32.mrb[0].mxu0
      %v1036 = vadd.f32 0.0, %v1035
      %v1037 = vpop.f32.mrb[0].mxu0
      %1038 = vmatprep.mubr.bf16.mxu0 0
      %1039 = vmatmul.mubr.bf16.gmra.mrb[0].mxu0 %v914
      %v1040 = vpop.f32.mrb[0].mxu0
      %v1041 = vadd.f32 0.0, %v1040
      %v1042 = vpop.f32.mrb[0].mxu0
      %v1043 = vpop.f32.mrb[0].mxu0
      %v1044 = vadd.f32 0.0, %v1043
      %v1045 = vpop.f32.mrb[0].mxu0
      %1046 = vmatprep.mubr.bf16.mxu0 0
      %1047 = vmatmul.mubr.bf16.gmra.mrb[0].mxu0 %v917
      %v1048 = vpop.f32.mrb[0].mxu0
      %v1049 = vadd.f32 0.0, %v1048
      %v1050 = vpop.f32.mrb[0].mxu0
      %v1051 = vpop.f32.mrb[0].mxu0
      %v1052 = vadd.f32 0.0, %v1051
      %v1053 = vpop.f32.mrb[0].mxu0
      %1054 = vmatprep.mubr.bf16.mxu0 0
      %1055 = vmatmul.mubr.bf16.gmra.mrb[0].mxu0 %v920
      %v1056 = vpop.f32.mrb[0].mxu0
      %v1057 = vadd.f32 0.0, %v1056
      %v1058 = vpop.f32.mrb[0].mxu0
      %v1059 = vpop.f32.mrb[0].mxu0
      %v1060 = vadd.f32 0.0, %v1059
      %v1061 = vpop.f32.mrb[0].mxu0
      %1062 = vmatprep.mubr.bf16.mxu0 0
      %1063 = vmatmul.mubr.bf16.gmra.mrb[0].mxu0 %v923
      %v1064 = vpop.f32.mrb[0].mxu0
      %v1065 = vadd.f32 0.0, %v1064
      %v1066 = vpop.f32.mrb[0].mxu0
      %v1067 = vpop.f32.mrb[0].mxu0
      %v1068 = vadd.f32 0.0, %v1067
      %v1069 = vpop.f32.mrb[0].mxu0
      %1070 = vmatprep.mubr.bf16.mxu0 0
      %1071 = vmatmul.mubr.bf16.gmra.mrb[0].mxu0 %v926
      %v1072 = vpop.f32.mrb[0].mxu0
      %v1073 = vadd.f32 0.0, %v1072
      %v1074 = vpop.f32.mrb[0].mxu0
      %v1075 = vpop.f32.mrb[0].mxu0
      %v1076 = vadd.f32 0.0, %v1075
      %v1077 = vpop.f32.mrb[0].mxu0
      %1078 = vmatprep.mubr.bf16.mxu0 0
      %1079 = vmatmul.mubr.bf16.gmra.mrb[0].mxu0 %v929
      %v1080 = vpop.f32.mrb[0].mxu0
      %v1081 = vadd.f32 0.0, %v1080
      %v1082 = vpop.f32.mrb[0].mxu0
      %v1083 = vpop.f32.mrb[0].mxu0
      %v1084 = vadd.f32 0.0, %v1083
      %v1085 = vpop.f32.mrb[0].mxu0
      %1086 = vmatprep.mubr.bf16.mxu0 0
      %1087 = vmatmul.mubr.bf16.gmra.mrb[0].mxu0 %v932
      %v1088 = vpop.f32.mrb[0].mxu0
      %v1089 = vadd.f32 0.0, %v1088
      %v1090 = vpop.f32.mrb[0].mxu0
      %v1091 = vpop.f32.mrb[0].mxu0
      %v1092 = vadd.f32 0.0, %v1091
      %v1093 = vpop.f32.mrb[0].mxu0
      %1094 = vdwg.mxu0
      %v1095 = vadd.f32 %v703, %v969
      %v1096 = vadd.f32 %v706, %v972
      %v1097 = vadd.f32 %v711, %v977
      %v1098 = vadd.f32 %v714, %v980
      %v1099 = vadd.f32 %v719, %v985
      %v1100 = vadd.f32 %v722, %v988
      %v1101 = vadd.f32 %v727, %v993
      %v1102 = vadd.f32 %v730, %v996
      %v1103 = vadd.f32 %v735, %v1001
      %v1104 = vadd.f32 %v738, %v1004
      %v1105 = vadd.f32 %v743, %v1009
      %v1106 = vadd.f32 %v746, %v1012
      %v1107 = vadd.f32 %v751, %v1017
      %v1108 = vadd.f32 %v754, %v1020
      %v1109 = vadd.f32 %v759, %v1025
      %v1110 = vadd.f32 %v762, %v1028
      %v1111 = vadd.f32 %v767, %v1033
      %v1112 = vadd.f32 %v770, %v1036
      %v1113 = vadd.f32 %v775, %v1041
      %v1114 = vadd.f32 %v778, %v1044
      %v1115 = vadd.f32 %v783, %v1049
      %v1116 = vadd.f32 %v786, %v1052
      %v1117 = vadd.f32 %v791, %v1057
      %v1118 = vadd.f32 %v794, %v1060
      %v1119 = vadd.f32 %v799, %v1065
      %v1120 = vadd.f32 %v802, %v1068
      %v1121 = vadd.f32 %v807, %v1073
      %v1122 = vadd.f32 %v810, %v1076
      %v1123 = vadd.f32 %v815, %v1081
      %v1124 = vadd.f32 %v818, %v1084
      %v1125 = vadd.f32 %v823, %v1089
      %v1126 = vadd.f32 %v826, %v1092
      %v1127 = vld [vmem:[%s265] sm:$0xff]
      %v1128 = vld [vmem:[%s265 + $0x8] sm:$0xff]
      %v1129 = vld [vmem:[%s265 + $0x18] sm:$0xff]
      %v1130 = vld [vmem:[%s265 + $0x20] sm:$0xff]
      %v1131 = vld [vmem:[%s265 + $0x30] sm:$0xff]
      %v1132 = vld [vmem:[%s265 + $0x38] sm:$0xff]
      %v1133 = vld [vmem:[%s265 + $0x48] sm:$0xff]
      %v1134 = vld [vmem:[%s265 + $0x50] sm:$0xff]
      %v1135 = vld [vmem:[%s265 + $0x60] sm:$0xff]
      %v1136 = vld [vmem:[%s265 + $0x68] sm:$0xff]
      %v1137 = vld [vmem:[%s265 + $0x78] sm:$0xff]
      %v1138 = vld [vmem:[%s265 + $0x80] sm:$0xff]
      %v1139 = vld [vmem:[%s265 + $0x90] sm:$0xff]
      %v1140 = vld [vmem:[%s265 + $0x98] sm:$0xff]
      %v1141 = vld [vmem:[%s265 + $0xa8] sm:$0xff]
      %v1142 = vld [vmem:[%s265 + $0xb0] sm:$0xff]
      %v1143 = vld [vmem:[%s265 + $0xc0] sm:$0xff]
      %v1144 = vld [vmem:[%s265 + $0xc8] sm:$0xff]
      %v1145 = vld [vmem:[%s265 + $0xd8] sm:$0xff]
      %v1146 = vld [vmem:[%s265 + $0xe0] sm:$0xff]
      %v1147 = vld [vmem:[%s265 + $0xf0] sm:$0xff]
      %v1148 = vld [vmem:[%s265 + $0xf8] sm:$0xff]
      %v1149 = vld [vmem:[%s265 + $0x108] sm:$0xff]
      %v1150 = vld [vmem:[%s265 + $0x110] sm:$0xff]
      %v1151 = vld [vmem:[%s265 + $0x120] sm:$0xff]
      %v1152 = vld [vmem:[%s265 + $0x128] sm:$0xff]
      %v1153 = vld [vmem:[%s265 + $0x138] sm:$0xff]
      %v1154 = vld [vmem:[%s265 + $0x140] sm:$0xff]
      %v1155 = vld [vmem:[%s265 + $0x150] sm:$0xff]
      %v1156 = vld [vmem:[%s265 + $0x158] sm:$0xff]
      %v1157 = vld [vmem:[%s265 + $0x168] sm:$0xff]
      %v1158 = vld [vmem:[%s265 + $0x170] sm:$0xff]
      %v1159 = vpack.c.bf16 %v1128, %v1127
      %v1160 = vpack.c.bf16 %v1130, %v1129
      %v1161 = vpack.c.bf16 %v1132, %v1131
      %v1162 = vpack.c.bf16 %v1134, %v1133
      %v1163 = vpack.c.bf16 %v1136, %v1135
      %v1164 = vpack.c.bf16 %v1138, %v1137
      %v1165 = vpack.c.bf16 %v1140, %v1139
      %v1166 = vpack.c.bf16 %v1142, %v1141
      %v1167 = vpack.c.bf16 %v1144, %v1143
      %v1168 = vpack.c.bf16 %v1146, %v1145
      %v1169 = vpack.c.bf16 %v1148, %v1147
      %v1170 = vpack.c.bf16 %v1150, %v1149
      %v1171 = vpack.c.bf16 %v1152, %v1151
      %v1172 = vpack.c.bf16 %v1154, %v1153
      %v1173 = vpack.c.bf16 %v1156, %v1155
      %v1174 = vpack.c.bf16 %v1158, %v1157
      %s1175 = scalar_lea.vmem %s1, 24
      %v1176 = vld [vmem:[%s1175] sm:$0xf]
      %v1177 = vld [vmem:[%s1175 + $0x4] sm:$0xf]
      %v1180 = vunpack.c.l.b16 %v1176
      %v1181 = vunpack.c.l.b16 %v1177
      %v1182 = vpack.c.b16 %v1181, %v1180
      %v1185 = vsel %vm145, %v1159, 0
      %v1188 = vsel %vm145, %v1160, 0
      %v1191 = vsel %vm145, %v1161, 0
      %v1194 = vsel %vm145, %v1162, 0
      %v1197 = vsel %vm145, %v1163, 0
      %v1200 = vsel %vm145, %v1164, 0
      %v1203 = vsel %vm145, %v1165, 0
      %v1206 = vsel %vm145, %v1166, 0
      %v1209 = vsel %vm145, %v1167, 0
      %v1212 = vsel %vm145, %v1168, 0
      %v1215 = vsel %vm145, %v1169, 0
      %v1218 = vsel %vm145, %v1170, 0
      %v1221 = vsel %vm145, %v1171, 0
      %v1224 = vsel %vm145, %v1172, 0
      %v1227 = vsel %vm145, %v1173, 0
      %v1230 = vsel %vm145, %v1174, 0
      %1232 = vmatprep.subr.bf16.mxu0 0
      %1233 = vmatpush1.bf16.msra.mxu0 %v1182
      %1234 = vmatprep.subr.bf16.mxu0 0
      %1235 = vmatpush1.bf16.msra.mxu0 0
      %1236 = vmatprep.subr.bf16.mxu0 0
      %1237 = vmatpush1.bf16.msra.mxu0 0
      %1238 = vmatprep.subr.bf16.mxu0 0
      %1239 = vmatpush1.bf16.msra.mxu0 0
      %1240 = vmatprep.subr.bf16.mxu0 0
      %1241 = vmatpush1.bf16.msra.mxu0 0
      %1242 = vmatprep.subr.bf16.mxu0 0
      %1243 = vmatpush1.bf16.msra.mxu0 0
      %1244 = vmatprep.subr.bf16.mxu0 0
      %1245 = vmatpush1.bf16.msra.mxu0 0
      %1246 = vmatprep.subr.bf16.mxu0 0
      %1247 = vmatpush1.bf16.msra.mxu0 0
      %1248 = vmatprep.subr.bf16.mxu0 0
      %1249 = vmatpush1.bf16.msra.mxu0 0
      %1250 = vmatprep.subr.bf16.mxu0 0
      %1251 = vmatpush1.bf16.msra.mxu0 0
      %1252 = vmatprep.subr.bf16.mxu0 0
      %1253 = vmatpush1.bf16.msra.mxu0 0
      %1254 = vmatprep.subr.bf16.mxu0 0
      %1255 = vmatpush1.bf16.msra.mxu0 0
      %1256 = vmatprep.subr.bf16.mxu0 0
      %1257 = vmatpush1.bf16.msra.mxu0 0
      %1258 = vmatprep.subr.bf16.mxu0 0
      %1259 = vmatpush1.bf16.msra.mxu0 0
      %1260 = vmatprep.subr.bf16.mxu0 0
      %1261 = vmatpush1.bf16.msra.mxu0 0
      %1262 = vmatprep.subr.bf16.mxu0 0
      %1263 = vmatpush1.bf16.msra.mxu0 0
      %1264 = vmatprep.mubr.bf16.mxu0 0
      %1265 = vmatmul.mubr.bf16.gmra.mrb[0].mxu0 %v1185
      %v1266 = vpop.f32.mrb[0].mxu0
      %v1267 = vadd.f32 0.0, %v1266
      %v1268 = vpop.f32.mrb[0].mxu0
      %v1269 = vpop.f32.mrb[0].mxu0
      %v1270 = vadd.f32 0.0, %v1269
      %v1271 = vpop.f32.mrb[0].mxu0
      %1272 = vmatprep.mubr.bf16.mxu0 0
      %1273 = vmatmul.mubr.bf16.gmra.mrb[0].mxu0 %v1188
      %v1274 = vpop.f32.mrb[0].mxu0
      %v1275 = vadd.f32 0.0, %v1274
      %v1276 = vpop.f32.mrb[0].mxu0
      %v1277 = vpop.f32.mrb[0].mxu0
      %v1278 = vadd.f32 0.0, %v1277
      %v1279 = vpop.f32.mrb[0].mxu0
      %1280 = vmatprep.mubr.bf16.mxu0 0
      %1281 = vmatmul.mubr.bf16.gmra.mrb[0].mxu0 %v1191
      %v1282 = vpop.f32.mrb[0].mxu0
      %v1283 = vadd.f32 0.0, %v1282
      %v1284 = vpop.f32.mrb[0].mxu0
      %v1285 = vpop.f32.mrb[0].mxu0
      %v1286 = vadd.f32 0.0, %v1285
      %v1287 = vpop.f32.mrb[0].mxu0
      %1288 = vmatprep.mubr.bf16.mxu0 0
      %1289 = vmatmul.mubr.bf16.gmra.mrb[0].mxu0 %v1194
      %v1290 = vpop.f32.mrb[0].mxu0
      %v1291 = vadd.f32 0.0, %v1290
      %v1292 = vpop.f32.mrb[0].mxu0
      %v1293 = vpop.f32.mrb[0].mxu0
      %v1294 = vadd.f32 0.0, %v1293
      %v1295 = vpop.f32.mrb[0].mxu0
      %1296 = vmatprep.mubr.bf16.mxu0 0
      %1297 = vmatmul.mubr.bf16.gmra.mrb[0].mxu0 %v1197
      %v1298 = vpop.f32.mrb[0].mxu0
      %v1299 = vadd.f32 0.0, %v1298
      %v1300 = vpop.f32.mrb[0].mxu0
      %v1301 = vpop.f32.mrb[0].mxu0
      %v1302 = vadd.f32 0.0, %v1301
      %v1303 = vpop.f32.mrb[0].mxu0
      %1304 = vmatprep.mubr.bf16.mxu0 0
      %1305 = vmatmul.mubr.bf16.gmra.mrb[0].mxu0 %v1200
      %v1306 = vpop.f32.mrb[0].mxu0
      %v1307 = vadd.f32 0.0, %v1306
      %v1308 = vpop.f32.mrb[0].mxu0
      %v1309 = vpop.f32.mrb[0].mxu0
      %v1310 = vadd.f32 0.0, %v1309
      %v1311 = vpop.f32.mrb[0].mxu0
      %1312 = vmatprep.mubr.bf16.mxu0 0
      %1313 = vmatmul.mubr.bf16.gmra.mrb[0].mxu0 %v1203
      %v1314 = vpop.f32.mrb[0].mxu0
      %v1315 = vadd.f32 0.0, %v1314
      %v1316 = vpop.f32.mrb[0].mxu0
      %v1317 = vpop.f32.mrb[0].mxu0
      %v1318 = vadd.f32 0.0, %v1317
      %v1319 = vpop.f32.mrb[0].mxu0
      %1320 = vmatprep.mubr.bf16.mxu0 0
      %1321 = vmatmul.mubr.bf16.gmra.mrb[0].mxu0 %v1206
      %v1322 = vpop.f32.mrb[0].mxu0
      %v1323 = vadd.f32 0.0, %v1322
      %v1324 = vpop.f32.mrb[0].mxu0
      %v1325 = vpop.f32.mrb[0].mxu0
      %v1326 = vadd.f32 0.0, %v1325
      %v1327 = vpop.f32.mrb[0].mxu0
      %1328 = vmatprep.mubr.bf16.mxu0 0
      %1329 = vmatmul.mubr.bf16.gmra.mrb[0].mxu0 %v1209
      %v1330 = vpop.f32.mrb[0].mxu0
      %v1331 = vadd.f32 0.0, %v1330
      %v1332 = vpop.f32.mrb[0].mxu0
      %v1333 = vpop.f32.mrb[0].mxu0
      %v1334 = vadd.f32 0.0, %v1333
      %v1335 = vpop.f32.mrb[0].mxu0
      %1336 = vmatprep.mubr.bf16.mxu0 0
      %1337 = vmatmul.mubr.bf16.gmra.mrb[0].mxu0 %v1212
      %v1338 = vpop.f32.mrb[0].mxu0
      %v1339 = vadd.f32 0.0, %v1338
      %v1340 = vpop.f32.mrb[0].mxu0
      %v1341 = vpop.f32.mrb[0].mxu0
      %v1342 = vadd.f32 0.0, %v1341
      %v1343 = vpop.f32.mrb[0].mxu0
      %1344 = vmatprep.mubr.bf16.mxu0 0
      %1345 = vmatmul.mubr.bf16.gmra.mrb[0].mxu0 %v1215
      %v1346 = vpop.f32.mrb[0].mxu0
      %v1347 = vadd.f32 0.0, %v1346
      %v1348 = vpop.f32.mrb[0].mxu0
      %v1349 = vpop.f32.mrb[0].mxu0
      %v1350 = vadd.f32 0.0, %v1349
      %v1351 = vpop.f32.mrb[0].mxu0
      %1352 = vmatprep.mubr.bf16.mxu0 0
      %1353 = vmatmul.mubr.bf16.gmra.mrb[0].mxu0 %v1218
      %v1354 = vpop.f32.mrb[0].mxu0
      %v1355 = vadd.f32 0.0, %v1354
      %v1356 = vpop.f32.mrb[0].mxu0
      %v1357 = vpop.f32.mrb[0].mxu0
      %v1358 = vadd.f32 0.0, %v1357
      %v1359 = vpop.f32.mrb[0].mxu0
      %1360 = vmatprep.mubr.bf16.mxu0 0
      %1361 = vmatmul.mubr.bf16.gmra.mrb[0].mxu0 %v1221
      %v1362 = vpop.f32.mrb[0].mxu0
      %v1363 = vadd.f32 0.0, %v1362
      %v1364 = vpop.f32.mrb[0].mxu0
      %v1365 = vpop.f32.mrb[0].mxu0
      %v1366 = vadd.f32 0.0, %v1365
      %v1367 = vpop.f32.mrb[0].mxu0
      %1368 = vmatprep.mubr.bf16.mxu0 0
      %1369 = vmatmul.mubr.bf16.gmra.mrb[0].mxu0 %v1224
      %v1370 = vpop.f32.mrb[0].mxu0
      %v1371 = vadd.f32 0.0, %v1370
      %v1372 = vpop.f32.mrb[0].mxu0
      %v1373 = vpop.f32.mrb[0].mxu0
      %v1374 = vadd.f32 0.0, %v1373
      %v1375 = vpop.f32.mrb[0].mxu0
      %1376 = vmatprep.mubr.bf16.mxu0 0
      %1377 = vmatmul.mubr.bf16.gmra.mrb[0].mxu0 %v1227
      %v1378 = vpop.f32.mrb[0].mxu0
      %v1379 = vadd.f32 0.0, %v1378
      %v1380 = vpop.f32.mrb[0].mxu0
      %v1381 = vpop.f32.mrb[0].mxu0
      %v1382 = vadd.f32 0.0, %v1381
      %v1383 = vpop.f32.mrb[0].mxu0
      %1384 = vmatprep.mubr.bf16.mxu0 0
      %1385 = vmatmul.mubr.bf16.gmra.mrb[0].mxu0 %v1230
      %v1386 = vpop.f32.mrb[0].mxu0
      %v1387 = vadd.f32 0.0, %v1386
      %v1388 = vpop.f32.mrb[0].mxu0
      %v1389 = vpop.f32.mrb[0].mxu0
      %v1390 = vadd.f32 0.0, %v1389
      %v1391 = vpop.f32.mrb[0].mxu0
      %1392 = vdwg.mxu0
      %v1393 = vadd.f32 %v1095, %v1267
      %v1394 = vadd.f32 %v1096, %v1270
      %v1395 = vadd.f32 %v1097, %v1275
      %v1396 = vadd.f32 %v1098, %v1278
      %v1397 = vadd.f32 %v1099, %v1283
      %v1398 = vadd.f32 %v1100, %v1286
      %v1399 = vadd.f32 %v1101, %v1291
      %v1400 = vadd.f32 %v1102, %v1294
      %v1401 = vadd.f32 %v1103, %v1299
      %v1402 = vadd.f32 %v1104, %v1302
      %v1403 = vadd.f32 %v1105, %v1307
      %v1404 = vadd.f32 %v1106, %v1310
      %v1405 = vadd.f32 %v1107, %v1315
      %v1406 = vadd.f32 %v1108, %v1318
      %v1407 = vadd.f32 %v1109, %v1323
      %v1408 = vadd.f32 %v1110, %v1326
      %v1409 = vadd.f32 %v1111, %v1331
      %v1410 = vadd.f32 %v1112, %v1334
      %v1411 = vadd.f32 %v1113, %v1339
      %v1412 = vadd.f32 %v1114, %v1342
      %v1413 = vadd.f32 %v1115, %v1347
      %v1414 = vadd.f32 %v1116, %v1350
      %v1415 = vadd.f32 %v1117, %v1355
      %v1416 = vadd.f32 %v1118, %v1358
      %v1417 = vadd.f32 %v1119, %v1363
      %v1418 = vadd.f32 %v1120, %v1366
      %v1419 = vadd.f32 %v1121, %v1371
      %v1420 = vadd.f32 %v1122, %v1374
      %v1421 = vadd.f32 %v1123, %v1379
      %v1422 = vadd.f32 %v1124, %v1382
      %v1423 = vadd.f32 %v1125, %v1387
      %v1424 = vadd.f32 %v1126, %v1390
      %v1425 = vld [vmem:[%s265 + $0x1] sm:$0xff]
      %v1426 = vld [vmem:[%s265 + $0x9] sm:$0xff]
      %v1427 = vld [vmem:[%s265 + $0x19] sm:$0xff]
      %v1428 = vld [vmem:[%s265 + $0x21] sm:$0xff]
      %v1429 = vld [vmem:[%s265 + $0x31] sm:$0xff]
      %v1430 = vld [vmem:[%s265 + $0x39] sm:$0xff]
      %v1431 = vld [vmem:[%s265 + $0x49] sm:$0xff]
      %v1432 = vld [vmem:[%s265 + $0x51] sm:$0xff]
      %v1433 = vld [vmem:[%s265 + $0x61] sm:$0xff]
      %v1434 = vld [vmem:[%s265 + $0x69] sm:$0xff]
      %v1435 = vld [vmem:[%s265 + $0x79] sm:$0xff]
      %v1436 = vld [vmem:[%s265 + $0x81] sm:$0xff]
      %v1437 = vld [vmem:[%s265 + $0x91] sm:$0xff]
      %v1438 = vld [vmem:[%s265 + $0x99] sm:$0xff]
      %v1439 = vld [vmem:[%s265 + $0xa9] sm:$0xff]
      %v1440 = vld [vmem:[%s265 + $0xb1] sm:$0xff]
      %v1441 = vld [vmem:[%s265 + $0xc1] sm:$0xff]
      %v1442 = vld [vmem:[%s265 + $0xc9] sm:$0xff]
      %v1443 = vld [vmem:[%s265 + $0xd9] sm:$0xff]
      %v1444 = vld [vmem:[%s265 + $0xe1] sm:$0xff]
      %v1445 = vld [vmem:[%s265 + $0xf1] sm:$0xff]
      %v1446 = vld [vmem:[%s265 + $0xf9] sm:$0xff]
      %v1447 = vld [vmem:[%s265 + $0x109] sm:$0xff]
      %v1448 = vld [vmem:[%s265 + $0x111] sm:$0xff]
      %v1449 = vld [vmem:[%s265 + $0x121] sm:$0xff]
      %v1450 = vld [vmem:[%s265 + $0x129] sm:$0xff]
      %v1451 = vld [vmem:[%s265 + $0x139] sm:$0xff]
      %v1452 = vld [vmem:[%s265 + $0x141] sm:$0xff]
      %v1453 = vld [vmem:[%s265 + $0x151] sm:$0xff]
      %v1454 = vld [vmem:[%s265 + $0x159] sm:$0xff]
      %v1455 = vld [vmem:[%s265 + $0x169] sm:$0xff]
      %v1456 = vld [vmem:[%s265 + $0x171] sm:$0xff]
      %v1457 = vpack.c.bf16 %v1426, %v1425
      %v1458 = vpack.c.bf16 %v1428, %v1427
      %v1459 = vpack.c.bf16 %v1430, %v1429
      %v1460 = vpack.c.bf16 %v1432, %v1431
      %v1461 = vpack.c.bf16 %v1434, %v1433
      %v1462 = vpack.c.bf16 %v1436, %v1435
      %v1463 = vpack.c.bf16 %v1438, %v1437
      %v1464 = vpack.c.bf16 %v1440, %v1439
      %v1465 = vpack.c.bf16 %v1442, %v1441
      %v1466 = vpack.c.bf16 %v1444, %v1443
      %v1467 = vpack.c.bf16 %v1446, %v1445
      %v1468 = vpack.c.bf16 %v1448, %v1447
      %v1469 = vpack.c.bf16 %v1450, %v1449
      %v1470 = vpack.c.bf16 %v1452, %v1451
      %v1471 = vpack.c.bf16 %v1454, %v1453
      %v1472 = vpack.c.bf16 %v1456, %v1455
      %s1473 = scalar_lea.vmem %s1, 32
      %v1474 = vld [vmem:[%s1473] sm:$0xf]
      %v1475 = vld [vmem:[%s1473 + $0x4] sm:$0xf]
      %v1478 = vunpack.c.l.b16 %v1474
      %v1479 = vunpack.c.l.b16 %v1475
      %v1480 = vpack.c.b16 %v1479, %v1478
      %v1483 = vsel %vm145, %v1457, 0
      %v1486 = vsel %vm145, %v1458, 0
      %v1489 = vsel %vm145, %v1459, 0
      %v1492 = vsel %vm145, %v1460, 0
      %v1495 = vsel %vm145, %v1461, 0
      %v1498 = vsel %vm145, %v1462, 0
      %v1501 = vsel %vm145, %v1463, 0
      %v1504 = vsel %vm145, %v1464, 0
      %v1507 = vsel %vm145, %v1465, 0
      %v1510 = vsel %vm145, %v1466, 0
      %v1513 = vsel %vm145, %v1467, 0
      %v1516 = vsel %vm145, %v1468, 0
      %v1519 = vsel %vm145, %v1469, 0
      %v1522 = vsel %vm145, %v1470, 0
      %v1525 = vsel %vm145, %v1471, 0
      %v1528 = vsel %vm145, %v1472, 0
      %1530 = vmatprep.subr.bf16.mxu0 0
      %1531 = vmatpush1.bf16.msra.mxu0 %v1480
      %1532 = vmatprep.subr.bf16.mxu0 0
      %1533 = vmatpush1.bf16.msra.mxu0 0
      %1534 = vmatprep.subr.bf16.mxu0 0
      %1535 = vmatpush1.bf16.msra.mxu0 0
      %1536 = vmatprep.subr.bf16.mxu0 0
      %1537 = vmatpush1.bf16.msra.mxu0 0
      %1538 = vmatprep.subr.bf16.mxu0 0
      %1539 = vmatpush1.bf16.msra.mxu0 0
      %1540 = vmatprep.subr.bf16.mxu0 0
      %1541 = vmatpush1.bf16.msra.mxu0 0
      %1542 = vmatprep.subr.bf16.mxu0 0
      %1543 = vmatpush1.bf16.msra.mxu0 0
      %1544 = vmatprep.subr.bf16.mxu0 0
      %1545 = vmatpush1.bf16.msra.mxu0 0
      %1546 = vmatprep.subr.bf16.mxu0 0
      %1547 = vmatpush1.bf16.msra.mxu0 0
      %1548 = vmatprep.subr.bf16.mxu0 0
      %1549 = vmatpush1.bf16.msra.mxu0 0
      %1550 = vmatprep.subr.bf16.mxu0 0
      %1551 = vmatpush1.bf16.msra.mxu0 0
      %1552 = vmatprep.subr.bf16.mxu0 0
      %1553 = vmatpush1.bf16.msra.mxu0 0
      %1554 = vmatprep.subr.bf16.mxu0 0
      %1555 = vmatpush1.bf16.msra.mxu0 0
      %1556 = vmatprep.subr.bf16.mxu0 0
      %1557 = vmatpush1.bf16.msra.mxu0 0
      %1558 = vmatprep.subr.bf16.mxu0 0
      %1559 = vmatpush1.bf16.msra.mxu0 0
      %1560 = vmatprep.subr.bf16.mxu0 0
      %1561 = vmatpush1.bf16.msra.mxu0 0
      %1562 = vmatprep.mubr.bf16.mxu0 0
      %1563 = vmatmul.mubr.bf16.gmra.mrb[0].mxu0 %v1483
      %v1564 = vpop.f32.mrb[0].mxu0
      %v1565 = vadd.f32 0.0, %v1564
      %v1566 = vpop.f32.mrb[0].mxu0
      %v1567 = vpop.f32.mrb[0].mxu0
      %v1568 = vadd.f32 0.0, %v1567
      %v1569 = vpop.f32.mrb[0].mxu0
      %1570 = vmatprep.mubr.bf16.mxu0 0
      %1571 = vmatmul.mubr.bf16.gmra.mrb[0].mxu0 %v1486
      %v1572 = vpop.f32.mrb[0].mxu0
      %v1573 = vadd.f32 0.0, %v1572
      %v1574 = vpop.f32.mrb[0].mxu0
      %v1575 = vpop.f32.mrb[0].mxu0
      %v1576 = vadd.f32 0.0, %v1575
      %v1577 = vpop.f32.mrb[0].mxu0
      %1578 = vmatprep.mubr.bf16.mxu0 0
      %1579 = vmatmul.mubr.bf16.gmra.mrb[0].mxu0 %v1489
      %v1580 = vpop.f32.mrb[0].mxu0
      %v1581 = vadd.f32 0.0, %v1580
      %v1582 = vpop.f32.mrb[0].mxu0
      %v1583 = vpop.f32.mrb[0].mxu0
      %v1584 = vadd.f32 0.0, %v1583
      %v1585 = vpop.f32.mrb[0].mxu0
      %1586 = vmatprep.mubr.bf16.mxu0 0
      %1587 = vmatmul.mubr.bf16.gmra.mrb[0].mxu0 %v1492
      %v1588 = vpop.f32.mrb[0].mxu0
      %v1589 = vadd.f32 0.0, %v1588
      %v1590 = vpop.f32.mrb[0].mxu0
      %v1591 = vpop.f32.mrb[0].mxu0
      %v1592 = vadd.f32 0.0, %v1591
      %v1593 = vpop.f32.mrb[0].mxu0
      %1594 = vmatprep.mubr.bf16.mxu0 0
      %1595 = vmatmul.mubr.bf16.gmra.mrb[0].mxu0 %v1495
      %v1596 = vpop.f32.mrb[0].mxu0
      %v1597 = vadd.f32 0.0, %v1596
      %v1598 = vpop.f32.mrb[0].mxu0
      %v1599 = vpop.f32.mrb[0].mxu0
      %v1600 = vadd.f32 0.0, %v1599
      %v1601 = vpop.f32.mrb[0].mxu0
      %1602 = vmatprep.mubr.bf16.mxu0 0
      %1603 = vmatmul.mubr.bf16.gmra.mrb[0].mxu0 %v1498
      %v1604 = vpop.f32.mrb[0].mxu0
      %v1605 = vadd.f32 0.0, %v1604
      %v1606 = vpop.f32.mrb[0].mxu0
      %v1607 = vpop.f32.mrb[0].mxu0
      %v1608 = vadd.f32 0.0, %v1607
      %v1609 = vpop.f32.mrb[0].mxu0
      %1610 = vmatprep.mubr.bf16.mxu0 0
      %1611 = vmatmul.mubr.bf16.gmra.mrb[0].mxu0 %v1501
      %v1612 = vpop.f32.mrb[0].mxu0
      %v1613 = vadd.f32 0.0, %v1612
      %v1614 = vpop.f32.mrb[0].mxu0
      %v1615 = vpop.f32.mrb[0].mxu0
      %v1616 = vadd.f32 0.0, %v1615
      %v1617 = vpop.f32.mrb[0].mxu0
      %1618 = vmatprep.mubr.bf16.mxu0 0
      %1619 = vmatmul.mubr.bf16.gmra.mrb[0].mxu0 %v1504
      %v1620 = vpop.f32.mrb[0].mxu0
      %v1621 = vadd.f32 0.0, %v1620
      %v1622 = vpop.f32.mrb[0].mxu0
      %v1623 = vpop.f32.mrb[0].mxu0
      %v1624 = vadd.f32 0.0, %v1623
      %v1625 = vpop.f32.mrb[0].mxu0
      %1626 = vmatprep.mubr.bf16.mxu0 0
      %1627 = vmatmul.mubr.bf16.gmra.mrb[0].mxu0 %v1507
      %v1628 = vpop.f32.mrb[0].mxu0
      %v1629 = vadd.f32 0.0, %v1628
      %v1630 = vpop.f32.mrb[0].mxu0
      %v1631 = vpop.f32.mrb[0].mxu0
      %v1632 = vadd.f32 0.0, %v1631
      %v1633 = vpop.f32.mrb[0].mxu0
      %1634 = vmatprep.mubr.bf16.mxu0 0
      %1635 = vmatmul.mubr.bf16.gmra.mrb[0].mxu0 %v1510
      %v1636 = vpop.f32.mrb[0].mxu0
      %v1637 = vadd.f32 0.0, %v1636
      %v1638 = vpop.f32.mrb[0].mxu0
      %v1639 = vpop.f32.mrb[0].mxu0
      %v1640 = vadd.f32 0.0, %v1639
      %v1641 = vpop.f32.mrb[0].mxu0
      %1642 = vmatprep.mubr.bf16.mxu0 0
      %1643 = vmatmul.mubr.bf16.gmra.mrb[0].mxu0 %v1513
      %v1644 = vpop.f32.mrb[0].mxu0
      %v1645 = vadd.f32 0.0, %v1644
      %v1646 = vpop.f32.mrb[0].mxu0
      %v1647 = vpop.f32.mrb[0].mxu0
      %v1648 = vadd.f32 0.0, %v1647
      %v1649 = vpop.f32.mrb[0].mxu0
      %1650 = vmatprep.mubr.bf16.mxu0 0
      %1651 = vmatmul.mubr.bf16.gmra.mrb[0].mxu0 %v1516
      %v1652 = vpop.f32.mrb[0].mxu0
      %v1653 = vadd.f32 0.0, %v1652
      %v1654 = vpop.f32.mrb[0].mxu0
      %v1655 = vpop.f32.mrb[0].mxu0
      %v1656 = vadd.f32 0.0, %v1655
      %v1657 = vpop.f32.mrb[0].mxu0
      %1658 = vmatprep.mubr.bf16.mxu0 0
      %1659 = vmatmul.mubr.bf16.gmra.mrb[0].mxu0 %v1519
      %v1660 = vpop.f32.mrb[0].mxu0
      %v1661 = vadd.f32 0.0, %v1660
      %v1662 = vpop.f32.mrb[0].mxu0
      %v1663 = vpop.f32.mrb[0].mxu0
      %v1664 = vadd.f32 0.0, %v1663
      %v1665 = vpop.f32.mrb[0].mxu0
      %1666 = vmatprep.mubr.bf16.mxu0 0
      %1667 = vmatmul.mubr.bf16.gmra.mrb[0].mxu0 %v1522
      %v1668 = vpop.f32.mrb[0].mxu0
      %v1669 = vadd.f32 0.0, %v1668
      %v1670 = vpop.f32.mrb[0].mxu0
      %v1671 = vpop.f32.mrb[0].mxu0
      %v1672 = vadd.f32 0.0, %v1671
      %v1673 = vpop.f32.mrb[0].mxu0
      %1674 = vmatprep.mubr.bf16.mxu0 0
      %1675 = vmatmul.mubr.bf16.gmra.mrb[0].mxu0 %v1525
      %v1676 = vpop.f32.mrb[0].mxu0
      %v1677 = vadd.f32 0.0, %v1676
      %v1678 = vpop.f32.mrb[0].mxu0
      %v1679 = vpop.f32.mrb[0].mxu0
      %v1680 = vadd.f32 0.0, %v1679
      %v1681 = vpop.f32.mrb[0].mxu0
      %1682 = vmatprep.mubr.bf16.mxu0 0
      %1683 = vmatmul.mubr.bf16.gmra.mrb[0].mxu0 %v1528
      %v1684 = vpop.f32.mrb[0].mxu0
      %v1685 = vadd.f32 0.0, %v1684
      %v1686 = vpop.f32.mrb[0].mxu0
      %v1687 = vpop.f32.mrb[0].mxu0
      %v1688 = vadd.f32 0.0, %v1687
      %v1689 = vpop.f32.mrb[0].mxu0
      %1690 = vdwg.mxu0
      %v1691 = vadd.f32 %v1393, %v1565
      %v1692 = vadd.f32 %v1394, %v1568
      %v1693 = vadd.f32 %v1395, %v1573
      %v1694 = vadd.f32 %v1396, %v1576
      %v1695 = vadd.f32 %v1397, %v1581
      %v1696 = vadd.f32 %v1398, %v1584
      %v1697 = vadd.f32 %v1399, %v1589
      %v1698 = vadd.f32 %v1400, %v1592
      %v1699 = vadd.f32 %v1401, %v1597
      %v1700 = vadd.f32 %v1402, %v1600
      %v1701 = vadd.f32 %v1403, %v1605
      %v1702 = vadd.f32 %v1404, %v1608
      %v1703 = vadd.f32 %v1405, %v1613
      %v1704 = vadd.f32 %v1406, %v1616
      %v1705 = vadd.f32 %v1407, %v1621
      %v1706 = vadd.f32 %v1408, %v1624
      %v1707 = vadd.f32 %v1409, %v1629
      %v1708 = vadd.f32 %v1410, %v1632
      %v1709 = vadd.f32 %v1411, %v1637
      %v1710 = vadd.f32 %v1412, %v1640
      %v1711 = vadd.f32 %v1413, %v1645
      %v1712 = vadd.f32 %v1414, %v1648
      %v1713 = vadd.f32 %v1415, %v1653
      %v1714 = vadd.f32 %v1416, %v1656
      %v1715 = vadd.f32 %v1417, %v1661
      %v1716 = vadd.f32 %v1418, %v1664
      %v1717 = vadd.f32 %v1419, %v1669
      %v1718 = vadd.f32 %v1420, %v1672
      %v1719 = vadd.f32 %v1421, %v1677
      %v1720 = vadd.f32 %v1422, %v1680
      %v1721 = vadd.f32 %v1423, %v1685
      %v1722 = vadd.f32 %v1424, %v1688
      %v1723 = vld [vmem:[%s265 + $0x2] sm:$0xff]
      %v1724 = vld [vmem:[%s265 + $0xa] sm:$0xff]
      %v1725 = vld [vmem:[%s265 + $0x1a] sm:$0xff]
      %v1726 = vld [vmem:[%s265 + $0x22] sm:$0xff]
      %v1727 = vld [vmem:[%s265 + $0x32] sm:$0xff]
      %v1728 = vld [vmem:[%s265 + $0x3a] sm:$0xff]
      %v1729 = vld [vmem:[%s265 + $0x4a] sm:$0xff]
      %v1730 = vld [vmem:[%s265 + $0x52] sm:$0xff]
      %v1731 = vld [vmem:[%s265 + $0x62] sm:$0xff]
      %v1732 = vld [vmem:[%s265 + $0x6a] sm:$0xff]
      %v1733 = vld [vmem:[%s265 + $0x7a] sm:$0xff]
      %v1734 = vld [vmem:[%s265 + $0x82] sm:$0xff]
      %v1735 = vld [vmem:[%s265 + $0x92] sm:$0xff]
      %v1736 = vld [vmem:[%s265 + $0x9a] sm:$0xff]
      %v1737 = vld [vmem:[%s265 + $0xaa] sm:$0xff]
      %v1738 = vld [vmem:[%s265 + $0xb2] sm:$0xff]
      %v1739 = vld [vmem:[%s265 + $0xc2] sm:$0xff]
      %v1740 = vld [vmem:[%s265 + $0xca] sm:$0xff]
      %v1741 = vld [vmem:[%s265 + $0xda] sm:$0xff]
      %v1742 = vld [vmem:[%s265 + $0xe2] sm:$0xff]
      %v1743 = vld [vmem:[%s265 + $0xf2] sm:$0xff]
      %v1744 = vld [vmem:[%s265 + $0xfa] sm:$0xff]
      %v1745 = vld [vmem:[%s265 + $0x10a] sm:$0xff]
      %v1746 = vld [vmem:[%s265 + $0x112] sm:$0xff]
      %v1747 = vld [vmem:[%s265 + $0x122] sm:$0xff]
      %v1748 = vld [vmem:[%s265 + $0x12a] sm:$0xff]
      %v1749 = vld [vmem:[%s265 + $0x13a] sm:$0xff]
      %v1750 = vld [vmem:[%s265 + $0x142] sm:$0xff]
      %v1751 = vld [vmem:[%s265 + $0x152] sm:$0xff]
      %v1752 = vld [vmem:[%s265 + $0x15a] sm:$0xff]
      %v1753 = vld [vmem:[%s265 + $0x16a] sm:$0xff]
      %v1754 = vld [vmem:[%s265 + $0x172] sm:$0xff]
      %v1755 = vpack.c.bf16 %v1724, %v1723
      %v1756 = vpack.c.bf16 %v1726, %v1725
      %v1757 = vpack.c.bf16 %v1728, %v1727
      %v1758 = vpack.c.bf16 %v1730, %v1729
      %v1759 = vpack.c.bf16 %v1732, %v1731
      %v1760 = vpack.c.bf16 %v1734, %v1733
      %v1761 = vpack.c.bf16 %v1736, %v1735
      %v1762 = vpack.c.bf16 %v1738, %v1737
      %v1763 = vpack.c.bf16 %v1740, %v1739
      %v1764 = vpack.c.bf16 %v1742, %v1741
      %v1765 = vpack.c.bf16 %v1744, %v1743
      %v1766 = vpack.c.bf16 %v1746, %v1745
      %v1767 = vpack.c.bf16 %v1748, %v1747
      %v1768 = vpack.c.bf16 %v1750, %v1749
      %v1769 = vpack.c.bf16 %v1752, %v1751
      %v1770 = vpack.c.bf16 %v1754, %v1753
      %s1771 = scalar_lea.vmem %s1, 40
      %v1772 = vld [vmem:[%s1771] sm:$0xf]
      %v1773 = vld [vmem:[%s1771 + $0x4] sm:$0xf]
      %v1776 = vunpack.c.l.b16 %v1772
      %v1777 = vunpack.c.l.b16 %v1773
      %v1778 = vpack.c.b16 %v1777, %v1776
      %v1781 = vsel %vm145, %v1755, 0
      %v1784 = vsel %vm145, %v1756, 0
      %v1787 = vsel %vm145, %v1757, 0
      %v1790 = vsel %vm145, %v1758, 0
      %v1793 = vsel %vm145, %v1759, 0
      %v1796 = vsel %vm145, %v1760, 0
      %v1799 = vsel %vm145, %v1761, 0
      %v1802 = vsel %vm145, %v1762, 0
      %v1805 = vsel %vm145, %v1763, 0
      %v1808 = vsel %vm145, %v1764, 0
      %v1811 = vsel %vm145, %v1765, 0
      %v1814 = vsel %vm145, %v1766, 0
      %v1817 = vsel %vm145, %v1767, 0
      %v1820 = vsel %vm145, %v1768, 0
      %v1823 = vsel %vm145, %v1769, 0
      %v1826 = vsel %vm145, %v1770, 0
      %1828 = vmatprep.subr.bf16.mxu0 0
      %1829 = vmatpush1.bf16.msra.mxu0 %v1778
      %1830 = vmatprep.subr.bf16.mxu0 0
      %1831 = vmatpush1.bf16.msra.mxu0 0
      %1832 = vmatprep.subr.bf16.mxu0 0
      %1833 = vmatpush1.bf16.msra.mxu0 0
      %1834 = vmatprep.subr.bf16.mxu0 0
      %1835 = vmatpush1.bf16.msra.mxu0 0
      %1836 = vmatprep.subr.bf16.mxu0 0
      %1837 = vmatpush1.bf16.msra.mxu0 0
      %1838 = vmatprep.subr.bf16.mxu0 0
      %1839 = vmatpush1.bf16.msra.mxu0 0
      %1840 = vmatprep.subr.bf16.mxu0 0
      %1841 = vmatpush1.bf16.msra.mxu0 0
      %1842 = vmatprep.subr.bf16.mxu0 0
      %1843 = vmatpush1.bf16.msra.mxu0 0
      %1844 = vmatprep.subr.bf16.mxu0 0
      %1845 = vmatpush1.bf16.msra.mxu0 0
      %1846 = vmatprep.subr.bf16.mxu0 0
      %1847 = vmatpush1.bf16.msra.mxu0 0
      %1848 = vmatprep.subr.bf16.mxu0 0
      %1849 = vmatpush1.bf16.msra.mxu0 0
      %1850 = vmatprep.subr.bf16.mxu0 0
      %1851 = vmatpush1.bf16.msra.mxu0 0
      %1852 = vmatprep.subr.bf16.mxu0 0
      %1853 = vmatpush1.bf16.msra.mxu0 0
      %1854 = vmatprep.subr.bf16.mxu0 0
      %1855 = vmatpush1.bf16.msra.mxu0 0
      %1856 = vmatprep.subr.bf16.mxu0 0
      %1857 = vmatpush1.bf16.msra.mxu0 0
      %1858 = vmatprep.subr.bf16.mxu0 0
      %1859 = vmatpush1.bf16.msra.mxu0 0
      %1860 = vmatprep.mubr.bf16.mxu0 0
      %1861 = vmatmul.mubr.bf16.gmra.mrb[0].mxu0 %v1781
      %v1862 = vpop.f32.mrb[0].mxu0
      %v1863 = vadd.f32 0.0, %v1862
      %v1864 = vpop.f32.mrb[0].mxu0
      %v1865 = vpop.f32.mrb[0].mxu0
      %v1866 = vadd.f32 0.0, %v1865
      %v1867 = vpop.f32.mrb[0].mxu0
      %1868 = vmatprep.mubr.bf16.mxu0 0
      %1869 = vmatmul.mubr.bf16.gmra.mrb[0].mxu0 %v1784
      %v1870 = vpop.f32.mrb[0].mxu0
      %v1871 = vadd.f32 0.0, %v1870
      %v1872 = vpop.f32.mrb[0].mxu0
      %v1873 = vpop.f32.mrb[0].mxu0
      %v1874 = vadd.f32 0.0, %v1873
      %v1875 = vpop.f32.mrb[0].mxu0
      %1876 = vmatprep.mubr.bf16.mxu0 0
      %1877 = vmatmul.mubr.bf16.gmra.mrb[0].mxu0 %v1787
      %v1878 = vpop.f32.mrb[0].mxu0
      %v1879 = vadd.f32 0.0, %v1878
      %v1880 = vpop.f32.mrb[0].mxu0
      %v1881 = vpop.f32.mrb[0].mxu0
      %v1882 = vadd.f32 0.0, %v1881
      %v1883 = vpop.f32.mrb[0].mxu0
      %1884 = vmatprep.mubr.bf16.mxu0 0
      %1885 = vmatmul.mubr.bf16.gmra.mrb[0].mxu0 %v1790
      %v1886 = vpop.f32.mrb[0].mxu0
      %v1887 = vadd.f32 0.0, %v1886
      %v1888 = vpop.f32.mrb[0].mxu0
      %v1889 = vpop.f32.mrb[0].mxu0
      %v1890 = vadd.f32 0.0, %v1889
      %v1891 = vpop.f32.mrb[0].mxu0
      %1892 = vmatprep.mubr.bf16.mxu0 0
      %1893 = vmatmul.mubr.bf16.gmra.mrb[0].mxu0 %v1793
      %v1894 = vpop.f32.mrb[0].mxu0
      %v1895 = vadd.f32 0.0, %v1894
      %v1896 = vpop.f32.mrb[0].mxu0
      %v1897 = vpop.f32.mrb[0].mxu0
      %v1898 = vadd.f32 0.0, %v1897
      %v1899 = vpop.f32.mrb[0].mxu0
      %1900 = vmatprep.mubr.bf16.mxu0 0
      %1901 = vmatmul.mubr.bf16.gmra.mrb[0].mxu0 %v1796
      %v1902 = vpop.f32.mrb[0].mxu0
      %v1903 = vadd.f32 0.0, %v1902
      %v1904 = vpop.f32.mrb[0].mxu0
      %v1905 = vpop.f32.mrb[0].mxu0
      %v1906 = vadd.f32 0.0, %v1905
      %v1907 = vpop.f32.mrb[0].mxu0
      %1908 = vmatprep.mubr.bf16.mxu0 0
      %1909 = vmatmul.mubr.bf16.gmra.mrb[0].mxu0 %v1799
      %v1910 = vpop.f32.mrb[0].mxu0
      %v1911 = vadd.f32 0.0, %v1910
      %v1912 = vpop.f32.mrb[0].mxu0
      %v1913 = vpop.f32.mrb[0].mxu0
      %v1914 = vadd.f32 0.0, %v1913
      %v1915 = vpop.f32.mrb[0].mxu0
      %1916 = vmatprep.mubr.bf16.mxu0 0
      %1917 = vmatmul.mubr.bf16.gmra.mrb[0].mxu0 %v1802
      %v1918 = vpop.f32.mrb[0].mxu0
      %v1919 = vadd.f32 0.0, %v1918
      %v1920 = vpop.f32.mrb[0].mxu0
      %v1921 = vpop.f32.mrb[0].mxu0
      %v1922 = vadd.f32 0.0, %v1921
      %v1923 = vpop.f32.mrb[0].mxu0
      %1924 = vmatprep.mubr.bf16.mxu0 0
      %1925 = vmatmul.mubr.bf16.gmra.mrb[0].mxu0 %v1805
      %v1926 = vpop.f32.mrb[0].mxu0
      %v1927 = vadd.f32 0.0, %v1926
      %v1928 = vpop.f32.mrb[0].mxu0
      %v1929 = vpop.f32.mrb[0].mxu0
      %v1930 = vadd.f32 0.0, %v1929
      %v1931 = vpop.f32.mrb[0].mxu0
      %1932 = vmatprep.mubr.bf16.mxu0 0
      %1933 = vmatmul.mubr.bf16.gmra.mrb[0].mxu0 %v1808
      %v1934 = vpop.f32.mrb[0].mxu0
      %v1935 = vadd.f32 0.0, %v1934
      %v1936 = vpop.f32.mrb[0].mxu0
      %v1937 = vpop.f32.mrb[0].mxu0
      %v1938 = vadd.f32 0.0, %v1937
      %v1939 = vpop.f32.mrb[0].mxu0
      %1940 = vmatprep.mubr.bf16.mxu0 0
      %1941 = vmatmul.mubr.bf16.gmra.mrb[0].mxu0 %v1811
      %v1942 = vpop.f32.mrb[0].mxu0
      %v1943 = vadd.f32 0.0, %v1942
      %v1944 = vpop.f32.mrb[0].mxu0
      %v1945 = vpop.f32.mrb[0].mxu0
      %v1946 = vadd.f32 0.0, %v1945
      %v1947 = vpop.f32.mrb[0].mxu0
      %1948 = vmatprep.mubr.bf16.mxu0 0
      %1949 = vmatmul.mubr.bf16.gmra.mrb[0].mxu0 %v1814
      %v1950 = vpop.f32.mrb[0].mxu0
      %v1951 = vadd.f32 0.0, %v1950
      %v1952 = vpop.f32.mrb[0].mxu0
      %v1953 = vpop.f32.mrb[0].mxu0
      %v1954 = vadd.f32 0.0, %v1953
      %v1955 = vpop.f32.mrb[0].mxu0
      %1956 = vmatprep.mubr.bf16.mxu0 0
      %1957 = vmatmul.mubr.bf16.gmra.mrb[0].mxu0 %v1817
      %v1958 = vpop.f32.mrb[0].mxu0
      %v1959 = vadd.f32 0.0, %v1958
      %v1960 = vpop.f32.mrb[0].mxu0
      %v1961 = vpop.f32.mrb[0].mxu0
      %v1962 = vadd.f32 0.0, %v1961
      %v1963 = vpop.f32.mrb[0].mxu0
      %1964 = vmatprep.mubr.bf16.mxu0 0
      %1965 = vmatmul.mubr.bf16.gmra.mrb[0].mxu0 %v1820
      %v1966 = vpop.f32.mrb[0].mxu0
      %v1967 = vadd.f32 0.0, %v1966
      %v1968 = vpop.f32.mrb[0].mxu0
      %v1969 = vpop.f32.mrb[0].mxu0
      %v1970 = vadd.f32 0.0, %v1969
      %v1971 = vpop.f32.mrb[0].mxu0
      %1972 = vmatprep.mubr.bf16.mxu0 0
      %1973 = vmatmul.mubr.bf16.gmra.mrb[0].mxu0 %v1823
      %v1974 = vpop.f32.mrb[0].mxu0
      %v1975 = vadd.f32 0.0, %v1974
      %v1976 = vpop.f32.mrb[0].mxu0
      %v1977 = vpop.f32.mrb[0].mxu0
      %v1978 = vadd.f32 0.0, %v1977
      %v1979 = vpop.f32.mrb[0].mxu0
      %1980 = vmatprep.mubr.bf16.mxu0 0
      %1981 = vmatmul.mubr.bf16.gmra.mrb[0].mxu0 %v1826
      %v1982 = vpop.f32.mrb[0].mxu0
      %v1983 = vadd.f32 0.0, %v1982
      %v1984 = vpop.f32.mrb[0].mxu0
      %v1985 = vpop.f32.mrb[0].mxu0
      %v1986 = vadd.f32 0.0, %v1985
      %v1987 = vpop.f32.mrb[0].mxu0
      %1988 = vdwg.mxu0
      %v1989 = vadd.f32 %v1691, %v1863
      %v1990 = vadd.f32 %v1692, %v1866
      %v1991 = vadd.f32 %v1693, %v1871
      %v1992 = vadd.f32 %v1694, %v1874
      %v1993 = vadd.f32 %v1695, %v1879
      %v1994 = vadd.f32 %v1696, %v1882
      %v1995 = vadd.f32 %v1697, %v1887
      %v1996 = vadd.f32 %v1698, %v1890
      %v1997 = vadd.f32 %v1699, %v1895
      %v1998 = vadd.f32 %v1700, %v1898
      %v1999 = vadd.f32 %v1701, %v1903
      %v2000 = vadd.f32 %v1702, %v1906
      %v2001 = vadd.f32 %v1703, %v1911
      %v2002 = vadd.f32 %v1704, %v1914
      %v2003 = vadd.f32 %v1705, %v1919
      %v2004 = vadd.f32 %v1706, %v1922
      %v2005 = vadd.f32 %v1707, %v1927
      %v2006 = vadd.f32 %v1708, %v1930
      %v2007 = vadd.f32 %v1709, %v1935
      %v2008 = vadd.f32 %v1710, %v1938
      %v2009 = vadd.f32 %v1711, %v1943
      %v2010 = vadd.f32 %v1712, %v1946
      %v2011 = vadd.f32 %v1713, %v1951
      %v2012 = vadd.f32 %v1714, %v1954
      %v2013 = vadd.f32 %v1715, %v1959
      %v2014 = vadd.f32 %v1716, %v1962
      %v2015 = vadd.f32 %v1717, %v1967
      %v2016 = vadd.f32 %v1718, %v1970
      %v2017 = vadd.f32 %v1719, %v1975
      %v2018 = vadd.f32 %v1720, %v1978
      %v2019 = vadd.f32 %v1721, %v1983
      %v2020 = vadd.f32 %v1722, %v1986
      %s2021 = scalar_lea.vmem [#allocation2], 48
      %v2022 = vld [vmem:[%s2021] sm:$0xff]
      %v2023 = vld [vmem:[%s2021 + $0x8] sm:$0xff]
      %v2024 = vld [vmem:[%s2021 + $0x18] sm:$0xff]
      %v2025 = vld [vmem:[%s2021 + $0x20] sm:$0xff]
      %v2026 = vld [vmem:[%s2021 + $0x30] sm:$0xff]
      %v2027 = vld [vmem:[%s2021 + $0x38] sm:$0xff]
      %v2028 = vld [vmem:[%s2021 + $0x48] sm:$0xff]
      %v2029 = vld [vmem:[%s2021 + $0x50] sm:$0xff]
      %v2030 = vld [vmem:[%s2021 + $0x60] sm:$0xff]
      %v2031 = vld [vmem:[%s2021 + $0x68] sm:$0xff]
      %v2032 = vld [vmem:[%s2021 + $0x78] sm:$0xff]
      %v2033 = vld [vmem:[%s2021 + $0x80] sm:$0xff]
      %v2034 = vld [vmem:[%s2021 + $0x90] sm:$0xff]
      %v2035 = vld [vmem:[%s2021 + $0x98] sm:$0xff]
      %v2036 = vld [vmem:[%s2021 + $0xa8] sm:$0xff]
      %v2037 = vld [vmem:[%s2021 + $0xb0] sm:$0xff]
      %v2038 = vld [vmem:[%s2021 + $0xc0] sm:$0xff]
      %v2039 = vld [vmem:[%s2021 + $0xc8] sm:$0xff]
      %v2040 = vld [vmem:[%s2021 + $0xd8] sm:$0xff]
      %v2041 = vld [vmem:[%s2021 + $0xe0] sm:$0xff]
      %v2042 = vld [vmem:[%s2021 + $0xf0] sm:$0xff]
      %v2043 = vld [vmem:[%s2021 + $0xf8] sm:$0xff]
      %v2044 = vld [vmem:[%s2021 + $0x108] sm:$0xff]
      %v2045 = vld [vmem:[%s2021 + $0x110] sm:$0xff]
      %v2046 = vld [vmem:[%s2021 + $0x120] sm:$0xff]
      %v2047 = vld [vmem:[%s2021 + $0x128] sm:$0xff]
      %v2048 = vld [vmem:[%s2021 + $0x138] sm:$0xff]
      %v2049 = vld [vmem:[%s2021 + $0x140] sm:$0xff]
      %v2050 = vld [vmem:[%s2021 + $0x150] sm:$0xff]
      %v2051 = vld [vmem:[%s2021 + $0x158] sm:$0xff]
      %v2052 = vld [vmem:[%s2021 + $0x168] sm:$0xff]
      %v2053 = vld [vmem:[%s2021 + $0x170] sm:$0xff]
      %v2054 = vpack.c.bf16 %v2023, %v2022
      %v2055 = vpack.c.bf16 %v2025, %v2024
      %v2056 = vpack.c.bf16 %v2027, %v2026
      %v2057 = vpack.c.bf16 %v2029, %v2028
      %v2058 = vpack.c.bf16 %v2031, %v2030
      %v2059 = vpack.c.bf16 %v2033, %v2032
      %v2060 = vpack.c.bf16 %v2035, %v2034
      %v2061 = vpack.c.bf16 %v2037, %v2036
      %v2062 = vpack.c.bf16 %v2039, %v2038
      %v2063 = vpack.c.bf16 %v2041, %v2040
      %v2064 = vpack.c.bf16 %v2043, %v2042
      %v2065 = vpack.c.bf16 %v2045, %v2044
      %v2066 = vpack.c.bf16 %v2047, %v2046
      %v2067 = vpack.c.bf16 %v2049, %v2048
      %v2068 = vpack.c.bf16 %v2051, %v2050
      %v2069 = vpack.c.bf16 %v2053, %v2052
      %s2070 = scalar_lea.vmem %s1, 48
      %v2071 = vld [vmem:[%s2070] sm:$0xf]
      %v2072 = vld [vmem:[%s2070 + $0x4] sm:$0xf]
      %v2075 = vunpack.c.l.b16 %v2071
      %v2076 = vunpack.c.l.b16 %v2072
      %v2077 = vpack.c.b16 %v2076, %v2075
      %v2080 = vsel %vm145, %v2054, 0
      %v2083 = vsel %vm145, %v2055, 0
      %v2086 = vsel %vm145, %v2056, 0
      %v2089 = vsel %vm145, %v2057, 0
      %v2092 = vsel %vm145, %v2058, 0
      %v2095 = vsel %vm145, %v2059, 0
      %v2098 = vsel %vm145, %v2060, 0
      %v2101 = vsel %vm145, %v2061, 0
      %v2104 = vsel %vm145, %v2062, 0
      %v2107 = vsel %vm145, %v2063, 0
      %v2110 = vsel %vm145, %v2064, 0
      %v2113 = vsel %vm145, %v2065, 0
      %v2116 = vsel %vm145, %v2066, 0
      %v2119 = vsel %vm145, %v2067, 0
      %v2122 = vsel %vm145, %v2068, 0
      %v2125 = vsel %vm145, %v2069, 0
      %2127 = vmatprep.subr.bf16.mxu0 0
      %2128 = vmatpush1.bf16.msra.mxu0 %v2077
      %2129 = vmatprep.subr.bf16.mxu0 0
      %2130 = vmatpush1.bf16.msra.mxu0 0
      %2131 = vmatprep.subr.bf16.mxu0 0
      %2132 = vmatpush1.bf16.msra.mxu0 0
      %2133 = vmatprep.subr.bf16.mxu0 0
      %2134 = vmatpush1.bf16.msra.mxu0 0
      %2135 = vmatprep.subr.bf16.mxu0 0
      %2136 = vmatpush1.bf16.msra.mxu0 0
      %2137 = vmatprep.subr.bf16.mxu0 0
      %2138 = vmatpush1.bf16.msra.mxu0 0
      %2139 = vmatprep.subr.bf16.mxu0 0
      %2140 = vmatpush1.bf16.msra.mxu0 0
      %2141 = vmatprep.subr.bf16.mxu0 0
      %2142 = vmatpush1.bf16.msra.mxu0 0
      %2143 = vmatprep.subr.bf16.mxu0 0
      %2144 = vmatpush1.bf16.msra.mxu0 0
      %2145 = vmatprep.subr.bf16.mxu0 0
      %2146 = vmatpush1.bf16.msra.mxu0 0
      %2147 = vmatprep.subr.bf16.mxu0 0
      %2148 = vmatpush1.bf16.msra.mxu0 0
      %2149 = vmatprep.subr.bf16.mxu0 0
      %2150 = vmatpush1.bf16.msra.mxu0 0
      %2151 = vmatprep.subr.bf16.mxu0 0
      %2152 = vmatpush1.bf16.msra.mxu0 0
      %2153 = vmatprep.subr.bf16.mxu0 0
      %2154 = vmatpush1.bf16.msra.mxu0 0
      %2155 = vmatprep.subr.bf16.mxu0 0
      %2156 = vmatpush1.bf16.msra.mxu0 0
      %2157 = vmatprep.subr.bf16.mxu0 0
      %2158 = vmatpush1.bf16.msra.mxu0 0
      %2159 = vmatprep.mubr.bf16.mxu0 0
      %2160 = vmatmul.mubr.bf16.gmra.mrb[0].mxu0 %v2080
      %v2161 = vpop.f32.mrb[0].mxu0
      %v2162 = vadd.f32 0.0, %v2161
      %v2163 = vpop.f32.mrb[0].mxu0
      %v2164 = vpop.f32.mrb[0].mxu0
      %v2165 = vadd.f32 0.0, %v2164
      %v2166 = vpop.f32.mrb[0].mxu0
      %2167 = vmatprep.mubr.bf16.mxu0 0
      %2168 = vmatmul.mubr.bf16.gmra.mrb[0].mxu0 %v2083
      %v2169 = vpop.f32.mrb[0].mxu0
      %v2170 = vadd.f32 0.0, %v2169
      %v2171 = vpop.f32.mrb[0].mxu0
      %v2172 = vpop.f32.mrb[0].mxu0
      %v2173 = vadd.f32 0.0, %v2172
      %v2174 = vpop.f32.mrb[0].mxu0
      %2175 = vmatprep.mubr.bf16.mxu0 0
      %2176 = vmatmul.mubr.bf16.gmra.mrb[0].mxu0 %v2086
      %v2177 = vpop.f32.mrb[0].mxu0
      %v2178 = vadd.f32 0.0, %v2177
      %v2179 = vpop.f32.mrb[0].mxu0
      %v2180 = vpop.f32.mrb[0].mxu0
      %v2181 = vadd.f32 0.0, %v2180
      %v2182 = vpop.f32.mrb[0].mxu0
      %2183 = vmatprep.mubr.bf16.mxu0 0
      %2184 = vmatmul.mubr.bf16.gmra.mrb[0].mxu0 %v2089
      %v2185 = vpop.f32.mrb[0].mxu0
      %v2186 = vadd.f32 0.0, %v2185
      %v2187 = vpop.f32.mrb[0].mxu0
      %v2188 = vpop.f32.mrb[0].mxu0
      %v2189 = vadd.f32 0.0, %v2188
      %v2190 = vpop.f32.mrb[0].mxu0
      %2191 = vmatprep.mubr.bf16.mxu0 0
      %2192 = vmatmul.mubr.bf16.gmra.mrb[0].mxu0 %v2092
      %v2193 = vpop.f32.mrb[0].mxu0
      %v2194 = vadd.f32 0.0, %v2193
      %v2195 = vpop.f32.mrb[0].mxu0
      %v2196 = vpop.f32.mrb[0].mxu0
      %v2197 = vadd.f32 0.0, %v2196
      %v2198 = vpop.f32.mrb[0].mxu0
      %2199 = vmatprep.mubr.bf16.mxu0 0
      %2200 = vmatmul.mubr.bf16.gmra.mrb[0].mxu0 %v2095
      %v2201 = vpop.f32.mrb[0].mxu0
      %v2202 = vadd.f32 0.0, %v2201
      %v2203 = vpop.f32.mrb[0].mxu0
      %v2204 = vpop.f32.mrb[0].mxu0
      %v2205 = vadd.f32 0.0, %v2204
      %v2206 = vpop.f32.mrb[0].mxu0
      %2207 = vmatprep.mubr.bf16.mxu0 0
      %2208 = vmatmul.mubr.bf16.gmra.mrb[0].mxu0 %v2098
      %v2209 = vpop.f32.mrb[0].mxu0
      %v2210 = vadd.f32 0.0, %v2209
      %v2211 = vpop.f32.mrb[0].mxu0
      %v2212 = vpop.f32.mrb[0].mxu0
      %v2213 = vadd.f32 0.0, %v2212
      %v2214 = vpop.f32.mrb[0].mxu0
      %2215 = vmatprep.mubr.bf16.mxu0 0
      %2216 = vmatmul.mubr.bf16.gmra.mrb[0].mxu0 %v2101
      %v2217 = vpop.f32.mrb[0].mxu0
      %v2218 = vadd.f32 0.0, %v2217
      %v2219 = vpop.f32.mrb[0].mxu0
      %v2220 = vpop.f32.mrb[0].mxu0
      %v2221 = vadd.f32 0.0, %v2220
      %v2222 = vpop.f32.mrb[0].mxu0
      %2223 = vmatprep.mubr.bf16.mxu0 0
      %2224 = vmatmul.mubr.bf16.gmra.mrb[0].mxu0 %v2104
      %v2225 = vpop.f32.mrb[0].mxu0
      %v2226 = vadd.f32 0.0, %v2225
      %v2227 = vpop.f32.mrb[0].mxu0
      %v2228 = vpop.f32.mrb[0].mxu0
      %v2229 = vadd.f32 0.0, %v2228
      %v2230 = vpop.f32.mrb[0].mxu0
      %2231 = vmatprep.mubr.bf16.mxu0 0
      %2232 = vmatmul.mubr.bf16.gmra.mrb[0].mxu0 %v2107
      %v2233 = vpop.f32.mrb[0].mxu0
      %v2234 = vadd.f32 0.0, %v2233
      %v2235 = vpop.f32.mrb[0].mxu0
      %v2236 = vpop.f32.mrb[0].mxu0
      %v2237 = vadd.f32 0.0, %v2236
      %v2238 = vpop.f32.mrb[0].mxu0
      %2239 = vmatprep.mubr.bf16.mxu0 0
      %2240 = vmatmul.mubr.bf16.gmra.mrb[0].mxu0 %v2110
      %v2241 = vpop.f32.mrb[0].mxu0
      %v2242 = vadd.f32 0.0, %v2241
      %v2243 = vpop.f32.mrb[0].mxu0
      %v2244 = vpop.f32.mrb[0].mxu0
      %v2245 = vadd.f32 0.0, %v2244
      %v2246 = vpop.f32.mrb[0].mxu0
      %2247 = vmatprep.mubr.bf16.mxu0 0
      %2248 = vmatmul.mubr.bf16.gmra.mrb[0].mxu0 %v2113
      %v2249 = vpop.f32.mrb[0].mxu0
      %v2250 = vadd.f32 0.0, %v2249
      %v2251 = vpop.f32.mrb[0].mxu0
      %v2252 = vpop.f32.mrb[0].mxu0
      %v2253 = vadd.f32 0.0, %v2252
      %v2254 = vpop.f32.mrb[0].mxu0
      %2255 = vmatprep.mubr.bf16.mxu0 0
      %2256 = vmatmul.mubr.bf16.gmra.mrb[0].mxu0 %v2116
      %v2257 = vpop.f32.mrb[0].mxu0
      %v2258 = vadd.f32 0.0, %v2257
      %v2259 = vpop.f32.mrb[0].mxu0
      %v2260 = vpop.f32.mrb[0].mxu0
      %v2261 = vadd.f32 0.0, %v2260
      %v2262 = vpop.f32.mrb[0].mxu0
      %2263 = vmatprep.mubr.bf16.mxu0 0
      %2264 = vmatmul.mubr.bf16.gmra.mrb[0].mxu0 %v2119
      %v2265 = vpop.f32.mrb[0].mxu0
      %v2266 = vadd.f32 0.0, %v2265
      %v2267 = vpop.f32.mrb[0].mxu0
      %v2268 = vpop.f32.mrb[0].mxu0
      %v2269 = vadd.f32 0.0, %v2268
      %v2270 = vpop.f32.mrb[0].mxu0
      %2271 = vmatprep.mubr.bf16.mxu0 0
      %2272 = vmatmul.mubr.bf16.gmra.mrb[0].mxu0 %v2122
      %v2273 = vpop.f32.mrb[0].mxu0
      %v2274 = vadd.f32 0.0, %v2273
      %v2275 = vpop.f32.mrb[0].mxu0
      %v2276 = vpop.f32.mrb[0].mxu0
      %v2277 = vadd.f32 0.0, %v2276
      %v2278 = vpop.f32.mrb[0].mxu0
      %2279 = vmatprep.mubr.bf16.mxu0 0
      %2280 = vmatmul.mubr.bf16.gmra.mrb[0].mxu0 %v2125
      %v2281 = vpop.f32.mrb[0].mxu0
      %v2282 = vadd.f32 0.0, %v2281
      %v2283 = vpop.f32.mrb[0].mxu0
      %v2284 = vpop.f32.mrb[0].mxu0
      %v2285 = vadd.f32 0.0, %v2284
      %v2286 = vpop.f32.mrb[0].mxu0
      %2287 = vdwg.mxu0
      %v2288 = vadd.f32 %v1989, %v2162
      %v2289 = vadd.f32 %v1990, %v2165
      %v2290 = vadd.f32 %v1991, %v2170
      %v2291 = vadd.f32 %v1992, %v2173
      %v2292 = vadd.f32 %v1993, %v2178
      %v2293 = vadd.f32 %v1994, %v2181
      %v2294 = vadd.f32 %v1995, %v2186
      %v2295 = vadd.f32 %v1996, %v2189
      %v2296 = vadd.f32 %v1997, %v2194
      %v2297 = vadd.f32 %v1998, %v2197
      %v2298 = vadd.f32 %v1999, %v2202
      %v2299 = vadd.f32 %v2000, %v2205
      %v2300 = vadd.f32 %v2001, %v2210
      %v2301 = vadd.f32 %v2002, %v2213
      %v2302 = vadd.f32 %v2003, %v2218
      %v2303 = vadd.f32 %v2004, %v2221
      %v2304 = vadd.f32 %v2005, %v2226
      %v2305 = vadd.f32 %v2006, %v2229
      %v2306 = vadd.f32 %v2007, %v2234
      %v2307 = vadd.f32 %v2008, %v2237
      %v2308 = vadd.f32 %v2009, %v2242
      %v2309 = vadd.f32 %v2010, %v2245
      %v2310 = vadd.f32 %v2011, %v2250
      %v2311 = vadd.f32 %v2012, %v2253
      %v2312 = vadd.f32 %v2013, %v2258
      %v2313 = vadd.f32 %v2014, %v2261
      %v2314 = vadd.f32 %v2015, %v2266
      %v2315 = vadd.f32 %v2016, %v2269
      %v2316 = vadd.f32 %v2017, %v2274
      %v2317 = vadd.f32 %v2018, %v2277
      %v2318 = vadd.f32 %v2019, %v2282
      %v2319 = vadd.f32 %v2020, %v2285
      %v2320 = vld [vmem:[%s2021 + $0x1] sm:$0xff]
      %v2321 = vld [vmem:[%s2021 + $0x9] sm:$0xff]
      %v2322 = vld [vmem:[%s2021 + $0x19] sm:$0xff]
      %v2323 = vld [vmem:[%s2021 + $0x21] sm:$0xff]
      %v2324 = vld [vmem:[%s2021 + $0x31] sm:$0xff]
      %v2325 = vld [vmem:[%s2021 + $0x39] sm:$0xff]
      %v2326 = vld [vmem:[%s2021 + $0x49] sm:$0xff]
      %v2327 = vld [vmem:[%s2021 + $0x51] sm:$0xff]
      %v2328 = vld [vmem:[%s2021 + $0x61] sm:$0xff]
      %v2329 = vld [vmem:[%s2021 + $0x69] sm:$0xff]
      %v2330 = vld [vmem:[%s2021 + $0x79] sm:$0xff]
      %v2331 = vld [vmem:[%s2021 + $0x81] sm:$0xff]
      %v2332 = vld [vmem:[%s2021 + $0x91] sm:$0xff]
      %v2333 = vld [vmem:[%s2021 + $0x99] sm:$0xff]
      %v2334 = vld [vmem:[%s2021 + $0xa9] sm:$0xff]
      %v2335 = vld [vmem:[%s2021 + $0xb1] sm:$0xff]
      %v2336 = vld [vmem:[%s2021 + $0xc1] sm:$0xff]
      %v2337 = vld [vmem:[%s2021 + $0xc9] sm:$0xff]
      %v2338 = vld [vmem:[%s2021 + $0xd9] sm:$0xff]
      %v2339 = vld [vmem:[%s2021 + $0xe1] sm:$0xff]
      %v2340 = vld [vmem:[%s2021 + $0xf1] sm:$0xff]
      %v2341 = vld [vmem:[%s2021 + $0xf9] sm:$0xff]
      %v2342 = vld [vmem:[%s2021 + $0x109] sm:$0xff]
      %v2343 = vld [vmem:[%s2021 + $0x111] sm:$0xff]
      %v2344 = vld [vmem:[%s2021 + $0x121] sm:$0xff]
      %v2345 = vld [vmem:[%s2021 + $0x129] sm:$0xff]
      %v2346 = vld [vmem:[%s2021 + $0x139] sm:$0xff]
      %v2347 = vld [vmem:[%s2021 + $0x141] sm:$0xff]
      %v2348 = vld [vmem:[%s2021 + $0x151] sm:$0xff]
      %v2349 = vld [vmem:[%s2021 + $0x159] sm:$0xff]
      %v2350 = vld [vmem:[%s2021 + $0x169] sm:$0xff]
      %v2351 = vld [vmem:[%s2021 + $0x171] sm:$0xff]
      %v2352 = vpack.c.bf16 %v2321, %v2320
      %v2353 = vpack.c.bf16 %v2323, %v2322
      %v2354 = vpack.c.bf16 %v2325, %v2324
      %v2355 = vpack.c.bf16 %v2327, %v2326
      %v2356 = vpack.c.bf16 %v2329, %v2328
      %v2357 = vpack.c.bf16 %v2331, %v2330
      %v2358 = vpack.c.bf16 %v2333, %v2332
      %v2359 = vpack.c.bf16 %v2335, %v2334
      %v2360 = vpack.c.bf16 %v2337, %v2336
      %v2361 = vpack.c.bf16 %v2339, %v2338
      %v2362 = vpack.c.bf16 %v2341, %v2340
      %v2363 = vpack.c.bf16 %v2343, %v2342
      %v2364 = vpack.c.bf16 %v2345, %v2344
      %v2365 = vpack.c.bf16 %v2347, %v2346
      %v2366 = vpack.c.bf16 %v2349, %v2348
      %v2367 = vpack.c.bf16 %v2351, %v2350
      %s2368 = scalar_lea.vmem %s1, 56
      %v2369 = vld [vmem:[%s2368] sm:$0xf]
      %v2370 = vld [vmem:[%s2368 + $0x4] sm:$0xf]
      %v2373 = vunpack.c.l.b16 %v2369
      %v2374 = vunpack.c.l.b16 %v2370
      %v2375 = vpack.c.b16 %v2374, %v2373
      %v2378 = vsel %vm145, %v2352, 0
      %v2381 = vsel %vm145, %v2353, 0
      %v2384 = vsel %vm145, %v2354, 0
      %v2387 = vsel %vm145, %v2355, 0
      %v2390 = vsel %vm145, %v2356, 0
      %v2393 = vsel %vm145, %v2357, 0
      %v2396 = vsel %vm145, %v2358, 0
      %v2399 = vsel %vm145, %v2359, 0
      %v2402 = vsel %vm145, %v2360, 0
      %v2405 = vsel %vm145, %v2361, 0
      %v2408 = vsel %vm145, %v2362, 0
      %v2411 = vsel %vm145, %v2363, 0
      %v2414 = vsel %vm145, %v2364, 0
      %v2417 = vsel %vm145, %v2365, 0
      %v2420 = vsel %vm145, %v2366, 0
      %v2423 = vsel %vm145, %v2367, 0
      %2425 = vmatprep.subr.bf16.mxu0 0
      %2426 = vmatpush1.bf16.msra.mxu0 %v2375
      %2427 = vmatprep.subr.bf16.mxu0 0
      %2428 = vmatpush1.bf16.msra.mxu0 0
      %2429 = vmatprep.subr.bf16.mxu0 0
      %2430 = vmatpush1.bf16.msra.mxu0 0
      %2431 = vmatprep.subr.bf16.mxu0 0
      %2432 = vmatpush1.bf16.msra.mxu0 0
      %2433 = vmatprep.subr.bf16.mxu0 0
      %2434 = vmatpush1.bf16.msra.mxu0 0
      %2435 = vmatprep.subr.bf16.mxu0 0
      %2436 = vmatpush1.bf16.msra.mxu0 0
      %2437 = vmatprep.subr.bf16.mxu0 0
      %2438 = vmatpush1.bf16.msra.mxu0 0
      %2439 = vmatprep.subr.bf16.mxu0 0
      %2440 = vmatpush1.bf16.msra.mxu0 0
      %2441 = vmatprep.subr.bf16.mxu0 0
      %2442 = vmatpush1.bf16.msra.mxu0 0
      %2443 = vmatprep.subr.bf16.mxu0 0
      %2444 = vmatpush1.bf16.msra.mxu0 0
      %2445 = vmatprep.subr.bf16.mxu0 0
      %2446 = vmatpush1.bf16.msra.mxu0 0
      %2447 = vmatprep.subr.bf16.mxu0 0
      %2448 = vmatpush1.bf16.msra.mxu0 0
      %2449 = vmatprep.subr.bf16.mxu0 0
      %2450 = vmatpush1.bf16.msra.mxu0 0
      %2451 = vmatprep.subr.bf16.mxu0 0
      %2452 = vmatpush1.bf16.msra.mxu0 0
      %2453 = vmatprep.subr.bf16.mxu0 0
      %2454 = vmatpush1.bf16.msra.mxu0 0
      %2455 = vmatprep.subr.bf16.mxu0 0
      %2456 = vmatpush1.bf16.msra.mxu0 0
      %2457 = vmatprep.mubr.bf16.mxu0 0
      %2458 = vmatmul.mubr.bf16.gmra.mrb[0].mxu0 %v2378
      %v2459 = vpop.f32.mrb[0].mxu0
      %v2460 = vadd.f32 0.0, %v2459
      %v2461 = vpop.f32.mrb[0].mxu0
      %v2462 = vpop.f32.mrb[0].mxu0
      %v2463 = vadd.f32 0.0, %v2462
      %v2464 = vpop.f32.mrb[0].mxu0
      %2465 = vmatprep.mubr.bf16.mxu0 0
      %2466 = vmatmul.mubr.bf16.gmra.mrb[0].mxu0 %v2381
      %v2467 = vpop.f32.mrb[0].mxu0
      %v2468 = vadd.f32 0.0, %v2467
      %v2469 = vpop.f32.mrb[0].mxu0
      %v2470 = vpop.f32.mrb[0].mxu0
      %v2471 = vadd.f32 0.0, %v2470
      %v2472 = vpop.f32.mrb[0].mxu0
      %2473 = vmatprep.mubr.bf16.mxu0 0
      %2474 = vmatmul.mubr.bf16.gmra.mrb[0].mxu0 %v2384
      %v2475 = vpop.f32.mrb[0].mxu0
      %v2476 = vadd.f32 0.0, %v2475
      %v2477 = vpop.f32.mrb[0].mxu0
      %v2478 = vpop.f32.mrb[0].mxu0
      %v2479 = vadd.f32 0.0, %v2478
      %v2480 = vpop.f32.mrb[0].mxu0
      %2481 = vmatprep.mubr.bf16.mxu0 0
      %2482 = vmatmul.mubr.bf16.gmra.mrb[0].mxu0 %v2387
      %v2483 = vpop.f32.mrb[0].mxu0
      %v2484 = vadd.f32 0.0, %v2483
      %v2485 = vpop.f32.mrb[0].mxu0
      %v2486 = vpop.f32.mrb[0].mxu0
      %v2487 = vadd.f32 0.0, %v2486
      %v2488 = vpop.f32.mrb[0].mxu0
      %2489 = vmatprep.mubr.bf16.mxu0 0
      %2490 = vmatmul.mubr.bf16.gmra.mrb[0].mxu0 %v2390
      %v2491 = vpop.f32.mrb[0].mxu0
      %v2492 = vadd.f32 0.0, %v2491
      %v2493 = vpop.f32.mrb[0].mxu0
      %v2494 = vpop.f32.mrb[0].mxu0
      %v2495 = vadd.f32 0.0, %v2494
      %v2496 = vpop.f32.mrb[0].mxu0
      %2497 = vmatprep.mubr.bf16.mxu0 0
      %2498 = vmatmul.mubr.bf16.gmra.mrb[0].mxu0 %v2393
      %v2499 = vpop.f32.mrb[0].mxu0
      %v2500 = vadd.f32 0.0, %v2499
      %v2501 = vpop.f32.mrb[0].mxu0
      %v2502 = vpop.f32.mrb[0].mxu0
      %v2503 = vadd.f32 0.0, %v2502
      %v2504 = vpop.f32.mrb[0].mxu0
      %2505 = vmatprep.mubr.bf16.mxu0 0
      %2506 = vmatmul.mubr.bf16.gmra.mrb[0].mxu0 %v2396
      %v2507 = vpop.f32.mrb[0].mxu0
      %v2508 = vadd.f32 0.0, %v2507
      %v2509 = vpop.f32.mrb[0].mxu0
      %v2510 = vpop.f32.mrb[0].mxu0
      %v2511 = vadd.f32 0.0, %v2510
      %v2512 = vpop.f32.mrb[0].mxu0
      %2513 = vmatprep.mubr.bf16.mxu0 0
      %2514 = vmatmul.mubr.bf16.gmra.mrb[0].mxu0 %v2399
      %v2515 = vpop.f32.mrb[0].mxu0
      %v2516 = vadd.f32 0.0, %v2515
      %v2517 = vpop.f32.mrb[0].mxu0
      %v2518 = vpop.f32.mrb[0].mxu0
      %v2519 = vadd.f32 0.0, %v2518
      %v2520 = vpop.f32.mrb[0].mxu0
      %2521 = vmatprep.mubr.bf16.mxu0 0
      %2522 = vmatmul.mubr.bf16.gmra.mrb[0].mxu0 %v2402
      %v2523 = vpop.f32.mrb[0].mxu0
      %v2524 = vadd.f32 0.0, %v2523
      %v2525 = vpop.f32.mrb[0].mxu0
      %v2526 = vpop.f32.mrb[0].mxu0
      %v2527 = vadd.f32 0.0, %v2526
      %v2528 = vpop.f32.mrb[0].mxu0
      %2529 = vmatprep.mubr.bf16.mxu0 0
      %2530 = vmatmul.mubr.bf16.gmra.mrb[0].mxu0 %v2405
      %v2531 = vpop.f32.mrb[0].mxu0
      %v2532 = vadd.f32 0.0, %v2531
      %v2533 = vpop.f32.mrb[0].mxu0
      %v2534 = vpop.f32.mrb[0].mxu0
      %v2535 = vadd.f32 0.0, %v2534
      %v2536 = vpop.f32.mrb[0].mxu0
      %2537 = vmatprep.mubr.bf16.mxu0 0
      %2538 = vmatmul.mubr.bf16.gmra.mrb[0].mxu0 %v2408
      %v2539 = vpop.f32.mrb[0].mxu0
      %v2540 = vadd.f32 0.0, %v2539
      %v2541 = vpop.f32.mrb[0].mxu0
      %v2542 = vpop.f32.mrb[0].mxu0
      %v2543 = vadd.f32 0.0, %v2542
      %v2544 = vpop.f32.mrb[0].mxu0
      %2545 = vmatprep.mubr.bf16.mxu0 0
      %2546 = vmatmul.mubr.bf16.gmra.mrb[0].mxu0 %v2411
      %v2547 = vpop.f32.mrb[0].mxu0
      %v2548 = vadd.f32 0.0, %v2547
      %v2549 = vpop.f32.mrb[0].mxu0
      %v2550 = vpop.f32.mrb[0].mxu0
      %v2551 = vadd.f32 0.0, %v2550
      %v2552 = vpop.f32.mrb[0].mxu0
      %2553 = vmatprep.mubr.bf16.mxu0 0
      %2554 = vmatmul.mubr.bf16.gmra.mrb[0].mxu0 %v2414
      %v2555 = vpop.f32.mrb[0].mxu0
      %v2556 = vadd.f32 0.0, %v2555
      %v2557 = vpop.f32.mrb[0].mxu0
      %v2558 = vpop.f32.mrb[0].mxu0
      %v2559 = vadd.f32 0.0, %v2558
      %v2560 = vpop.f32.mrb[0].mxu0
      %2561 = vmatprep.mubr.bf16.mxu0 0
      %2562 = vmatmul.mubr.bf16.gmra.mrb[0].mxu0 %v2417
      %v2563 = vpop.f32.mrb[0].mxu0
      %v2564 = vadd.f32 0.0, %v2563
      %v2565 = vpop.f32.mrb[0].mxu0
      %v2566 = vpop.f32.mrb[0].mxu0
      %v2567 = vadd.f32 0.0, %v2566
      %v2568 = vpop.f32.mrb[0].mxu0
      %2569 = vmatprep.mubr.bf16.mxu0 0
      %2570 = vmatmul.mubr.bf16.gmra.mrb[0].mxu0 %v2420
      %v2571 = vpop.f32.mrb[0].mxu0
      %v2572 = vadd.f32 0.0, %v2571
      %v2573 = vpop.f32.mrb[0].mxu0
      %v2574 = vpop.f32.mrb[0].mxu0
      %v2575 = vadd.f32 0.0, %v2574
      %v2576 = vpop.f32.mrb[0].mxu0
      %2577 = vmatprep.mubr.bf16.mxu0 0
      %2578 = vmatmul.mubr.bf16.gmra.mrb[0].mxu0 %v2423
      %v2579 = vpop.f32.mrb[0].mxu0
      %v2580 = vadd.f32 0.0, %v2579
      %v2581 = vpop.f32.mrb[0].mxu0
      %v2582 = vpop.f32.mrb[0].mxu0
      %v2583 = vadd.f32 0.0, %v2582
      %v2584 = vpop.f32.mrb[0].mxu0
      %2585 = vdwg.mxu0
      %v2586 = vadd.f32 %v2288, %v2460
      %v2587 = vadd.f32 %v2289, %v2463
      %v2588 = vadd.f32 %v2290, %v2468
      %v2589 = vadd.f32 %v2291, %v2471
      %v2590 = vadd.f32 %v2292, %v2476
      %v2591 = vadd.f32 %v2293, %v2479
      %v2592 = vadd.f32 %v2294, %v2484
      %v2593 = vadd.f32 %v2295, %v2487
      %v2594 = vadd.f32 %v2296, %v2492
      %v2595 = vadd.f32 %v2297, %v2495
      %v2596 = vadd.f32 %v2298, %v2500
      %v2597 = vadd.f32 %v2299, %v2503
      %v2598 = vadd.f32 %v2300, %v2508
      %v2599 = vadd.f32 %v2301, %v2511
      %v2600 = vadd.f32 %v2302, %v2516
      %v2601 = vadd.f32 %v2303, %v2519
      %v2602 = vadd.f32 %v2304, %v2524
      %v2603 = vadd.f32 %v2305, %v2527
      %v2604 = vadd.f32 %v2306, %v2532
      %v2605 = vadd.f32 %v2307, %v2535
      %v2606 = vadd.f32 %v2308, %v2540
      %v2607 = vadd.f32 %v2309, %v2543
      %v2608 = vadd.f32 %v2310, %v2548
      %v2609 = vadd.f32 %v2311, %v2551
      %v2610 = vadd.f32 %v2312, %v2556
      %v2611 = vadd.f32 %v2313, %v2559
      %v2612 = vadd.f32 %v2314, %v2564
      %v2613 = vadd.f32 %v2315, %v2567
      %v2614 = vadd.f32 %v2316, %v2572
      %v2615 = vadd.f32 %v2317, %v2575
      %v2616 = vadd.f32 %v2318, %v2580
      %v2617 = vadd.f32 %v2319, %v2583
      %v2618 = vld [vmem:[%s2021 + $0x2] sm:$0xff]
      %v2619 = vld [vmem:[%s2021 + $0xa] sm:$0xff]
      %v2620 = vld [vmem:[%s2021 + $0x1a] sm:$0xff]
      %v2621 = vld [vmem:[%s2021 + $0x22] sm:$0xff]
      %v2622 = vld [vmem:[%s2021 + $0x32] sm:$0xff]
      %v2623 = vld [vmem:[%s2021 + $0x3a] sm:$0xff]
      %v2624 = vld [vmem:[%s2021 + $0x4a] sm:$0xff]
      %v2625 = vld [vmem:[%s2021 + $0x52] sm:$0xff]
      %v2626 = vld [vmem:[%s2021 + $0x62] sm:$0xff]
      %v2627 = vld [vmem:[%s2021 + $0x6a] sm:$0xff]
      %v2628 = vld [vmem:[%s2021 + $0x7a] sm:$0xff]
      %v2629 = vld [vmem:[%s2021 + $0x82] sm:$0xff]
      %v2630 = vld [vmem:[%s2021 + $0x92] sm:$0xff]
      %v2631 = vld [vmem:[%s2021 + $0x9a] sm:$0xff]
      %v2632 = vld [vmem:[%s2021 + $0xaa] sm:$0xff]
      %v2633 = vld [vmem:[%s2021 + $0xb2] sm:$0xff]
      %v2634 = vld [vmem:[%s2021 + $0xc2] sm:$0xff]
      %v2635 = vld [vmem:[%s2021 + $0xca] sm:$0xff]
      %v2636 = vld [vmem:[%s2021 + $0xda] sm:$0xff]
      %v2637 = vld [vmem:[%s2021 + $0xe2] sm:$0xff]
      %v2638 = vld [vmem:[%s2021 + $0xf2] sm:$0xff]
      %v2639 = vld [vmem:[%s2021 + $0xfa] sm:$0xff]
      %v2640 = vld [vmem:[%s2021 + $0x10a] sm:$0xff]
      %v2641 = vld [vmem:[%s2021 + $0x112] sm:$0xff]
      %v2642 = vld [vmem:[%s2021 + $0x122] sm:$0xff]
      %v2643 = vld [vmem:[%s2021 + $0x12a] sm:$0xff]
      %v2644 = vld [vmem:[%s2021 + $0x13a] sm:$0xff]
      %v2645 = vld [vmem:[%s2021 + $0x142] sm:$0xff]
      %v2646 = vld [vmem:[%s2021 + $0x152] sm:$0xff]
      %v2647 = vld [vmem:[%s2021 + $0x15a] sm:$0xff]
      %v2648 = vld [vmem:[%s2021 + $0x16a] sm:$0xff]
      %v2649 = vld [vmem:[%s2021 + $0x172] sm:$0xff]
      %v2650 = vpack.c.bf16 %v2619, %v2618
      %v2651 = vpack.c.bf16 %v2621, %v2620
      %v2652 = vpack.c.bf16 %v2623, %v2622
      %v2653 = vpack.c.bf16 %v2625, %v2624
      %v2654 = vpack.c.bf16 %v2627, %v2626
      %v2655 = vpack.c.bf16 %v2629, %v2628
      %v2656 = vpack.c.bf16 %v2631, %v2630
      %v2657 = vpack.c.bf16 %v2633, %v2632
      %v2658 = vpack.c.bf16 %v2635, %v2634
      %v2659 = vpack.c.bf16 %v2637, %v2636
      %v2660 = vpack.c.bf16 %v2639, %v2638
      %v2661 = vpack.c.bf16 %v2641, %v2640
      %v2662 = vpack.c.bf16 %v2643, %v2642
      %v2663 = vpack.c.bf16 %v2645, %v2644
      %v2664 = vpack.c.bf16 %v2647, %v2646
      %v2665 = vpack.c.bf16 %v2649, %v2648
      %s2666 = scalar_lea.vmem %s1, 64
      %v2667 = vld [vmem:[%s2666] sm:$0xf]
      %v2668 = vld [vmem:[%s2666 + $0x4] sm:$0xf]
      %v2671 = vunpack.c.l.b16 %v2667
      %v2672 = vunpack.c.l.b16 %v2668
      %v2673 = vpack.c.b16 %v2672, %v2671
      %v2676 = vsel %vm145, %v2650, 0
      %v2679 = vsel %vm145, %v2651, 0
      %v2682 = vsel %vm145, %v2652, 0
      %v2685 = vsel %vm145, %v2653, 0
      %v2688 = vsel %vm145, %v2654, 0
      %v2691 = vsel %vm145, %v2655, 0
      %v2694 = vsel %vm145, %v2656, 0
      %v2697 = vsel %vm145, %v2657, 0
      %v2700 = vsel %vm145, %v2658, 0
      %v2703 = vsel %vm145, %v2659, 0
      %v2706 = vsel %vm145, %v2660, 0
      %v2709 = vsel %vm145, %v2661, 0
      %v2712 = vsel %vm145, %v2662, 0
      %v2715 = vsel %vm145, %v2663, 0
      %v2718 = vsel %vm145, %v2664, 0
      %v2721 = vsel %vm145, %v2665, 0
      %2723 = vmatprep.subr.bf16.mxu0 0
      %2724 = vmatpush1.bf16.msra.mxu0 %v2673
      %2725 = vmatprep.subr.bf16.mxu0 0
      %2726 = vmatpush1.bf16.msra.mxu0 0
      %2727 = vmatprep.subr.bf16.mxu0 0
      %2728 = vmatpush1.bf16.msra.mxu0 0
      %2729 = vmatprep.subr.bf16.mxu0 0
      %2730 = vmatpush1.bf16.msra.mxu0 0
      %2731 = vmatprep.subr.bf16.mxu0 0
      %2732 = vmatpush1.bf16.msra.mxu0 0
      %2733 = vmatprep.subr.bf16.mxu0 0
      %2734 = vmatpush1.bf16.msra.mxu0 0
      %2735 = vmatprep.subr.bf16.mxu0 0
      %2736 = vmatpush1.bf16.msra.mxu0 0
      %2737 = vmatprep.subr.bf16.mxu0 0
      %2738 = vmatpush1.bf16.msra.mxu0 0
      %2739 = vmatprep.subr.bf16.mxu0 0
      %2740 = vmatpush1.bf16.msra.mxu0 0
      %2741 = vmatprep.subr.bf16.mxu0 0
      %2742 = vmatpush1.bf16.msra.mxu0 0
      %2743 = vmatprep.subr.bf16.mxu0 0
      %2744 = vmatpush1.bf16.msra.mxu0 0
      %2745 = vmatprep.subr.bf16.mxu0 0
      %2746 = vmatpush1.bf16.msra.mxu0 0
      %2747 = vmatprep.subr.bf16.mxu0 0
      %2748 = vmatpush1.bf16.msra.mxu0 0
      %2749 = vmatprep.subr.bf16.mxu0 0
      %2750 = vmatpush1.bf16.msra.mxu0 0
      %2751 = vmatprep.subr.bf16.mxu0 0
      %2752 = vmatpush1.bf16.msra.mxu0 0
      %2753 = vmatprep.subr.bf16.mxu0 0
      %2754 = vmatpush1.bf16.msra.mxu0 0
      %2755 = vmatprep.mubr.bf16.mxu0 0
      %2756 = vmatmul.mubr.bf16.gmra.mrb[0].mxu0 %v2676
      %v2757 = vpop.f32.mrb[0].mxu0
      %v2758 = vadd.f32 0.0, %v2757
      %v2759 = vpop.f32.mrb[0].mxu0
      %v2760 = vpop.f32.mrb[0].mxu0
      %v2761 = vadd.f32 0.0, %v2760
      %v2762 = vpop.f32.mrb[0].mxu0
      %2763 = vmatprep.mubr.bf16.mxu0 0
      %2764 = vmatmul.mubr.bf16.gmra.mrb[0].mxu0 %v2679
      %v2765 = vpop.f32.mrb[0].mxu0
      %v2766 = vadd.f32 0.0, %v2765
      %v2767 = vpop.f32.mrb[0].mxu0
      %v2768 = vpop.f32.mrb[0].mxu0
      %v2769 = vadd.f32 0.0, %v2768
      %v2770 = vpop.f32.mrb[0].mxu0
      %2771 = vmatprep.mubr.bf16.mxu0 0
      %2772 = vmatmul.mubr.bf16.gmra.mrb[0].mxu0 %v2682
      %v2773 = vpop.f32.mrb[0].mxu0
      %v2774 = vadd.f32 0.0, %v2773
      %v2775 = vpop.f32.mrb[0].mxu0
      %v2776 = vpop.f32.mrb[0].mxu0
      %v2777 = vadd.f32 0.0, %v2776
      %v2778 = vpop.f32.mrb[0].mxu0
      %2779 = vmatprep.mubr.bf16.mxu0 0
      %2780 = vmatmul.mubr.bf16.gmra.mrb[0].mxu0 %v2685
      %v2781 = vpop.f32.mrb[0].mxu0
      %v2782 = vadd.f32 0.0, %v2781
      %v2783 = vpop.f32.mrb[0].mxu0
      %v2784 = vpop.f32.mrb[0].mxu0
      %v2785 = vadd.f32 0.0, %v2784
      %v2786 = vpop.f32.mrb[0].mxu0
      %2787 = vmatprep.mubr.bf16.mxu0 0
      %2788 = vmatmul.mubr.bf16.gmra.mrb[0].mxu0 %v2688
      %v2789 = vpop.f32.mrb[0].mxu0
      %v2790 = vadd.f32 0.0, %v2789
      %v2791 = vpop.f32.mrb[0].mxu0
      %v2792 = vpop.f32.mrb[0].mxu0
      %v2793 = vadd.f32 0.0, %v2792
      %v2794 = vpop.f32.mrb[0].mxu0
      %2795 = vmatprep.mubr.bf16.mxu0 0
      %2796 = vmatmul.mubr.bf16.gmra.mrb[0].mxu0 %v2691
      %v2797 = vpop.f32.mrb[0].mxu0
      %v2798 = vadd.f32 0.0, %v2797
      %v2799 = vpop.f32.mrb[0].mxu0
      %v2800 = vpop.f32.mrb[0].mxu0
      %v2801 = vadd.f32 0.0, %v2800
      %v2802 = vpop.f32.mrb[0].mxu0
      %2803 = vmatprep.mubr.bf16.mxu0 0
      %2804 = vmatmul.mubr.bf16.gmra.mrb[0].mxu0 %v2694
      %v2805 = vpop.f32.mrb[0].mxu0
      %v2806 = vadd.f32 0.0, %v2805
      %v2807 = vpop.f32.mrb[0].mxu0
      %v2808 = vpop.f32.mrb[0].mxu0
      %v2809 = vadd.f32 0.0, %v2808
      %v2810 = vpop.f32.mrb[0].mxu0
      %2811 = vmatprep.mubr.bf16.mxu0 0
      %2812 = vmatmul.mubr.bf16.gmra.mrb[0].mxu0 %v2697
      %v2813 = vpop.f32.mrb[0].mxu0
      %v2814 = vadd.f32 0.0, %v2813
      %v2815 = vpop.f32.mrb[0].mxu0
      %v2816 = vpop.f32.mrb[0].mxu0
      %v2817 = vadd.f32 0.0, %v2816
      %v2818 = vpop.f32.mrb[0].mxu0
      %2819 = vmatprep.mubr.bf16.mxu0 0
      %2820 = vmatmul.mubr.bf16.gmra.mrb[0].mxu0 %v2700
      %v2821 = vpop.f32.mrb[0].mxu0
      %v2822 = vadd.f32 0.0, %v2821
      %v2823 = vpop.f32.mrb[0].mxu0
      %v2824 = vpop.f32.mrb[0].mxu0
      %v2825 = vadd.f32 0.0, %v2824
      %v2826 = vpop.f32.mrb[0].mxu0
      %2827 = vmatprep.mubr.bf16.mxu0 0
      %2828 = vmatmul.mubr.bf16.gmra.mrb[0].mxu0 %v2703
      %v2829 = vpop.f32.mrb[0].mxu0
      %v2830 = vadd.f32 0.0, %v2829
      %v2831 = vpop.f32.mrb[0].mxu0
      %v2832 = vpop.f32.mrb[0].mxu0
      %v2833 = vadd.f32 0.0, %v2832
      %v2834 = vpop.f32.mrb[0].mxu0
      %2835 = vmatprep.mubr.bf16.mxu0 0
      %2836 = vmatmul.mubr.bf16.gmra.mrb[0].mxu0 %v2706
      %v2837 = vpop.f32.mrb[0].mxu0
      %v2838 = vadd.f32 0.0, %v2837
      %v2839 = vpop.f32.mrb[0].mxu0
      %v2840 = vpop.f32.mrb[0].mxu0
      %v2841 = vadd.f32 0.0, %v2840
      %v2842 = vpop.f32.mrb[0].mxu0
      %2843 = vmatprep.mubr.bf16.mxu0 0
      %2844 = vmatmul.mubr.bf16.gmra.mrb[0].mxu0 %v2709
      %v2845 = vpop.f32.mrb[0].mxu0
      %v2846 = vadd.f32 0.0, %v2845
      %v2847 = vpop.f32.mrb[0].mxu0
      %v2848 = vpop.f32.mrb[0].mxu0
      %v2849 = vadd.f32 0.0, %v2848
      %v2850 = vpop.f32.mrb[0].mxu0
      %2851 = vmatprep.mubr.bf16.mxu0 0
      %2852 = vmatmul.mubr.bf16.gmra.mrb[0].mxu0 %v2712
      %v2853 = vpop.f32.mrb[0].mxu0
      %v2854 = vadd.f32 0.0, %v2853
      %v2855 = vpop.f32.mrb[0].mxu0
      %v2856 = vpop.f32.mrb[0].mxu0
      %v2857 = vadd.f32 0.0, %v2856
      %v2858 = vpop.f32.mrb[0].mxu0
      %2859 = vmatprep.mubr.bf16.mxu0 0
      %2860 = vmatmul.mubr.bf16.gmra.mrb[0].mxu0 %v2715
      %v2861 = vpop.f32.mrb[0].mxu0
      %v2862 = vadd.f32 0.0, %v2861
      %v2863 = vpop.f32.mrb[0].mxu0
      %v2864 = vpop.f32.mrb[0].mxu0
      %v2865 = vadd.f32 0.0, %v2864
      %v2866 = vpop.f32.mrb[0].mxu0
      %2867 = vmatprep.mubr.bf16.mxu0 0
      %2868 = vmatmul.mubr.bf16.gmra.mrb[0].mxu0 %v2718
      %v2869 = vpop.f32.mrb[0].mxu0
      %v2870 = vadd.f32 0.0, %v2869
      %v2871 = vpop.f32.mrb[0].mxu0
      %v2872 = vpop.f32.mrb[0].mxu0
      %v2873 = vadd.f32 0.0, %v2872
      %v2874 = vpop.f32.mrb[0].mxu0
      %2875 = vmatprep.mubr.bf16.mxu0 0
      %2876 = vmatmul.mubr.bf16.gmra.mrb[0].mxu0 %v2721
      %v2877 = vpop.f32.mrb[0].mxu0
      %v2878 = vadd.f32 0.0, %v2877
      %v2879 = vpop.f32.mrb[0].mxu0
      %v2880 = vpop.f32.mrb[0].mxu0
      %v2881 = vadd.f32 0.0, %v2880
      %v2882 = vpop.f32.mrb[0].mxu0
      %2883 = vdwg.mxu0
      %v2884 = vadd.f32 %v2586, %v2758
      %v2885 = vadd.f32 %v2587, %v2761
      %v2886 = vadd.f32 %v2588, %v2766
      %v2887 = vadd.f32 %v2589, %v2769
      %v2888 = vadd.f32 %v2590, %v2774
      %v2889 = vadd.f32 %v2591, %v2777
      %v2890 = vadd.f32 %v2592, %v2782
      %v2891 = vadd.f32 %v2593, %v2785
      %v2892 = vadd.f32 %v2594, %v2790
      %v2893 = vadd.f32 %v2595, %v2793
      %v2894 = vadd.f32 %v2596, %v2798
      %v2895 = vadd.f32 %v2597, %v2801
      %v2896 = vadd.f32 %v2598, %v2806
      %v2897 = vadd.f32 %v2599, %v2809
      %v2898 = vadd.f32 %v2600, %v2814
      %v2899 = vadd.f32 %v2601, %v2817
      %v2900 = vadd.f32 %v2602, %v2822
      %v2901 = vadd.f32 %v2603, %v2825
      %v2902 = vadd.f32 %v2604, %v2830
      %v2903 = vadd.f32 %v2605, %v2833
      %v2904 = vadd.f32 %v2606, %v2838
      %v2905 = vadd.f32 %v2607, %v2841
      %v2906 = vadd.f32 %v2608, %v2846
      %v2907 = vadd.f32 %v2609, %v2849
      %v2908 = vadd.f32 %v2610, %v2854
      %v2909 = vadd.f32 %v2611, %v2857
      %v2910 = vadd.f32 %v2612, %v2862
      %v2911 = vadd.f32 %v2613, %v2865
      %v2912 = vadd.f32 %v2614, %v2870
      %v2913 = vadd.f32 %v2615, %v2873
      %v2914 = vadd.f32 %v2616, %v2878
      %v2915 = vadd.f32 %v2617, %v2881
      %v2916 = vpack.c.bf16 %v2885, %v2884
      %v2917 = vpack.c.bf16 %v2887, %v2886
      %v2918 = vpack.c.bf16 %v2889, %v2888
      %v2919 = vpack.c.bf16 %v2891, %v2890
      %v2920 = vpack.c.bf16 %v2893, %v2892
      %v2921 = vpack.c.bf16 %v2895, %v2894
      %v2922 = vpack.c.bf16 %v2897, %v2896
      %v2923 = vpack.c.bf16 %v2899, %v2898
      %v2924 = vpack.c.bf16 %v2901, %v2900
      %v2925 = vpack.c.bf16 %v2903, %v2902
      %v2926 = vpack.c.bf16 %v2905, %v2904
      %v2927 = vpack.c.bf16 %v2907, %v2906
      %v2928 = vpack.c.bf16 %v2909, %v2908
      %v2929 = vpack.c.bf16 %v2911, %v2910
      %v2930 = vpack.c.bf16 %v2913, %v2912
      %v2931 = vpack.c.bf16 %v2915, %v2914
      %v2948 = vunpack.c.l.b16 %v2916
      %v2949 = vunpack.c.h.b16 %v2916
      %v2950 = vunpack.c.l.b16 %v2917
      %v2951 = vunpack.c.h.b16 %v2917
      %v2952 = vunpack.c.l.b16 %v2918
      %v2953 = vunpack.c.h.b16 %v2918
      %v2954 = vunpack.c.l.b16 %v2919
      %v2955 = vunpack.c.h.b16 %v2919
      %v2956 = vunpack.c.l.b16 %v2920
      %v2957 = vunpack.c.h.b16 %v2920
      %v2958 = vunpack.c.l.b16 %v2921
      %v2959 = vunpack.c.h.b16 %v2921
      %v2960 = vunpack.c.l.b16 %v2922
      %v2961 = vunpack.c.h.b16 %v2922
      %v2962 = vunpack.c.l.b16 %v2923
      %v2963 = vunpack.c.h.b16 %v2923
      %v2964 = vunpack.c.l.b16 %v2924
      %v2965 = vunpack.c.h.b16 %v2924
      %v2966 = vunpack.c.l.b16 %v2925
      %v2967 = vunpack.c.h.b16 %v2925
      %v2968 = vunpack.c.l.b16 %v2926
      %v2969 = vunpack.c.h.b16 %v2926
      %v2970 = vunpack.c.l.b16 %v2927
      %v2971 = vunpack.c.h.b16 %v2927
      %v2972 = vunpack.c.l.b16 %v2928
      %v2973 = vunpack.c.h.b16 %v2928
      %v2974 = vunpack.c.l.b16 %v2929
      %v2975 = vunpack.c.h.b16 %v2929
      %v2976 = vunpack.c.l.b16 %v2930
      %v2977 = vunpack.c.h.b16 %v2930
      %v2978 = vunpack.c.l.b16 %v2931
      %v2979 = vunpack.c.h.b16 %v2931
      %v2980 = vpack.c.b16 %v2948, %v2948
      %v2981 = vpack.c.b16 %v2949, %v2949
      %v2982 = vpack.c.b16 %v2950, %v2950
      %v2983 = vpack.c.b16 %v2951, %v2951
      %v2984 = vpack.c.b16 %v2952, %v2952
      %v2985 = vpack.c.b16 %v2953, %v2953
      %v2986 = vpack.c.b16 %v2954, %v2954
      %v2987 = vpack.c.b16 %v2955, %v2955
      %v2988 = vpack.c.b16 %v2956, %v2956
      %v2989 = vpack.c.b16 %v2957, %v2957
      %v2990 = vpack.c.b16 %v2958, %v2958
      %v2991 = vpack.c.b16 %v2959, %v2959
      %v2992 = vpack.c.b16 %v2960, %v2960
      %v2993 = vpack.c.b16 %v2961, %v2961
      %v2994 = vpack.c.b16 %v2962, %v2962
      %v2995 = vpack.c.b16 %v2963, %v2963
      %v2996 = vpack.c.b16 %v2964, %v2964
      %v2997 = vpack.c.b16 %v2965, %v2965
      %v2998 = vpack.c.b16 %v2966, %v2966
      %v2999 = vpack.c.b16 %v2967, %v2967
      %v3000 = vpack.c.b16 %v2968, %v2968
      %v3001 = vpack.c.b16 %v2969, %v2969
      %v3002 = vpack.c.b16 %v2970, %v2970
      %v3003 = vpack.c.b16 %v2971, %v2971
      %v3004 = vpack.c.b16 %v2972, %v2972
      %v3005 = vpack.c.b16 %v2973, %v2973
      %v3006 = vpack.c.b16 %v2974, %v2974
      %v3007 = vpack.c.b16 %v2975, %v2975
      %v3008 = vpack.c.b16 %v2976, %v2976
      %v3009 = vpack.c.b16 %v2977, %v2977
      %v3010 = vpack.c.b16 %v2978, %v2978
      %v3011 = vpack.c.b16 %v2979, %v2979
      %vm3044 = vcmask 125952
      %3045 = vst.msk [vmem:[%s143] sm:$0xf] %vm3044, %v2980
      %3046 = vst.msk [vmem:[%s143 + $0x4] sm:$0xf] %vm3044, %v2981
      %3047 = vst.msk [vmem:[%s143 + $0x8] sm:$0xf] %vm3044, %v2982
      %3048 = vst.msk [vmem:[%s143 + $0xc] sm:$0xf] %vm3044, %v2983
      %3049 = vst.msk [vmem:[%s143 + $0x10] sm:$0xf] %vm3044, %v2984
      %3050 = vst.msk [vmem:[%s143 + $0x14] sm:$0xf] %vm3044, %v2985
      %3051 = vst.msk [vmem:[%s143 + $0x18] sm:$0xf] %vm3044, %v2986
      %3052 = vst.msk [vmem:[%s143 + $0x1c] sm:$0xf] %vm3044, %v2987
      %3053 = vst.msk [vmem:[%s143 + $0x20] sm:$0xf] %vm3044, %v2988
      %3054 = vst.msk [vmem:[%s143 + $0x24] sm:$0xf] %vm3044, %v2989
      %3055 = vst.msk [vmem:[%s143 + $0x28] sm:$0xf] %vm3044, %v2990
      %3056 = vst.msk [vmem:[%s143 + $0x2c] sm:$0xf] %vm3044, %v2991
      %3057 = vst.msk [vmem:[%s143 + $0x30] sm:$0xf] %vm3044, %v2992
      %3058 = vst.msk [vmem:[%s143 + $0x34] sm:$0xf] %vm3044, %v2993
      %3059 = vst.msk [vmem:[%s143 + $0x38] sm:$0xf] %vm3044, %v2994
      %3060 = vst.msk [vmem:[%s143 + $0x3c] sm:$0xf] %vm3044, %v2995
      %3061 = vst.msk [vmem:[%s143 + $0x40] sm:$0xf] %vm3044, %v2996
      %3062 = vst.msk [vmem:[%s143 + $0x44] sm:$0xf] %vm3044, %v2997
      %3063 = vst.msk [vmem:[%s143 + $0x48] sm:$0xf] %vm3044, %v2998
      %3064 = vst.msk [vmem:[%s143 + $0x4c] sm:$0xf] %vm3044, %v2999
      %3065 = vst.msk [vmem:[%s143 + $0x50] sm:$0xf] %vm3044, %v3000
      %3066 = vst.msk [vmem:[%s143 + $0x54] sm:$0xf] %vm3044, %v3001
      %3067 = vst.msk [vmem:[%s143 + $0x58] sm:$0xf] %vm3044, %v3002
      %3068 = vst.msk [vmem:[%s143 + $0x5c] sm:$0xf] %vm3044, %v3003
      %3069 = vst.msk [vmem:[%s143 + $0x60] sm:$0xf] %vm3044, %v3004
      %3070 = vst.msk [vmem:[%s143 + $0x64] sm:$0xf] %vm3044, %v3005
      %3071 = vst.msk [vmem:[%s143 + $0x68] sm:$0xf] %vm3044, %v3006
      %3072 = vst.msk [vmem:[%s143 + $0x6c] sm:$0xf] %vm3044, %v3007
      %3073 = vst.msk [vmem:[%s143 + $0x70] sm:$0xf] %vm3044, %v3008
      %3074 = vst.msk [vmem:[%s143 + $0x74] sm:$0xf] %vm3044, %v3009
      %3075 = vst.msk [vmem:[%s143 + $0x78] sm:$0xf] %vm3044, %v3010
      %3076 = vst.msk [vmem:[%s143 + $0x7c] sm:$0xf] %vm3044, %v3011
      %p3077 = scmp.lt.s32.totalorder %s13, 1
      %s3078 = scalar_select %p3077, %s13, 1
      %s3079 = smul.addr %s3078, 32
      %s3080 = smul.addr %s3079, 4
      %s3081 = scalar_lea.vmem %s2, %s3080
      // Predicated region
      $region29: #{basic_block_forward.7} parent=27 // pred_check
        %p3082 = pneg %p78
      $region30: #{basic_block_forward.7} parent=27 // pred_check_branch
        %3084 = sbr.rel (%p3082) target = $region32
      $region31: #{basic_block_forward.7} parent=27 // pred_region
        _
      $region32: #{basic_block_forward.7} parent=27 // pred_fallthru
        _
    $region28: #{basic_block_forward.7} parent=5 // pred_fallthru
      _
    %p3085 = scmp.le.s32.totalorder 2, %s8
    // Predicated region
    $region33: #{basic_block_forward.7} parent=5 // pred_check
      %p3086 = pneg %p3085
    $region34: #{basic_block_forward.7} parent=5 // pred_check_branch
      %3088 = sbr.rel (%p3086) target = $region36
    $region35: #{basic_block_forward.7} parent=5 // pred_region
      %s3089 = ssub.s32 %s8, 2
      // Predicated region
      $region37: #{basic_block_forward.7} parent=35 // pred_check
        %p3090 = pneg %p84
      $region38: #{basic_block_forward.7} parent=35 // pred_check_branch
        %3092 = sbr.rel (%p3090) target = $region40
      $region39: #{basic_block_forward.7} parent=35 // pred_region
        %p3093 = scmp.lt.s32.totalorder %s14, 1
        %s3094 = scalar_select %p3093, %s14, 1
        %s3095 = smul.addr %s3094, 32
        %s3096 = smul.addr %s3095, 4
        %s3097 = scalar_lea.vmem %s2, %s3096
      $region40: #{basic_block_forward.7} parent=35 // pred_fallthru
        _
    $region36: #{basic_block_forward.7} parent=5 // pred_fallthru
      _
  $region6: #{basic_block_forward.7} parent=0 // loop_footer
    %s12 = sadd.s32 1, %s8
  $region7: #{basic_block_forward.7} parent=0 // loop_footer_branch
    %7 = sbr.rel target = $region3
  $region8: #{basic_block_forward.7} parent=0 // loop_exit
    _

</llo_original>
